<compile_context>
chip_gen: v6e
topology: v6e:2x2x1
jax: 0.10.0
libtpu: 0.0.40
codegen_flags: <defaults>
</compile_context>

<pallas_src>
import functools

import jax
import jax.numpy as jnp
from jax import lax
from jax.experimental import pallas as pl
from jax.experimental.pallas import tpu as pltpu


def _deconv_kernel(x_ref, w_ref, b_ref, o_ref, *, ksize, wp, tile_rows, out_w,
                   num_row_tiles, act, negative_slope):
    """One grid step: all Cout channels for `tile_rows` output rows of one image.

    x_ref : (1, Cin, Hp_pad*Wp)  flattened dilated+padded input plane (resident per n)
    w_ref : (K*K, Cout, Cin)     per-tap weight matrices (spatially flipped)
    b_ref : (Cout, 1)            bias
    o_ref : (1, Cout, tile_rows, OW)
    """
    cout = o_ref.shape[1]
    lane_len = tile_rows * wp

    if num_row_tiles == 1:
        row0 = 0                                   # fully static slices
    else:
        row0 = pl.program_id(1) * tile_rows

    # Flattened-lane trick: output flat index j = oh*Wp + ow; tap (kh, kw)
    # reads input flat index j + kh*Wp + kw, i.e. a contiguous lane slice of
    # the resident plane.  Accumulate K*K small dense matmuls in f32.
    acc = jnp.zeros((cout, lane_len), jnp.float32)
    t = 0
    for kh in range(ksize):
        for kw in range(ksize):
            start = (row0 + kh) * wp + kw
            xs = x_ref[0, :, pl.ds(start, lane_len)]            # (Cin, lane_len)
            acc = acc + jnp.dot(w_ref[t], xs,
                                preferred_element_type=jnp.float32)
            t += 1

    acc = acc + b_ref[...]                                      # (Cout, 1) broadcast
    if act:
        acc = jnp.where(acc >= 0, acc, negative_slope * acc)
    acc = acc.astype(o_ref.dtype)

    # Emit channel-major (NCHW) output directly; drop the K-1 junk columns of
    # each flattened row at store time (no post-kernel transpose/relayout).
    for r in range(tile_rows):
        o_ref[0, :, r, :] = acc[:, r * wp:r * wp + out_w]


def deconv_block_forward(x, weight, bias, *, stride=2, padding=0, act=True,
                         negative_slope=0.2, tile_rows=64):
    N, Cin, H, W = x.shape
    wCin, Cout, K, K2 = weight.shape
    assert wCin == Cin and K2 == K
    s = stride
    pd = K - 1 - padding
    if pd < 0:
        raise NotImplementedError("padding > kernel_size - 1 is not supported")
    # TODO(synk): output_padding (a ConvTranspose2d option) is not supported.

    OH = (H - 1) * s - 2 * padding + K
    OW = (W - 1) * s - 2 * padding + K
    Wp = OW + K - 1                       # padded row width of the dilated input

    # Output-row tiling: whole image per batch when small, otherwise bands of
    # `tile_rows` rows (multiple of 8 for the (8,128) block rule).  Smaller
    # tile_rows bounds VMEM (v7x has 64 MiB; each buffer ~ Cin*Hp_pad*Wp*4B +
    # Cout*TO*OW*4B, double-buffered).
    if tile_rows is None or tile_rows >= OH:
        TO, n_tiles = OH, 1
    else:
        TO = max(8, (tile_rows // 8) * 8)
        n_tiles = -(-OH // TO)
    Hp_pad = n_tiles * TO + K             # covers every tap of every row tile

    # Zero-dilated + padded input, built with a single scatter (one HBM pass,
    # ~s^2 * |x| bytes) — replaces the old 9x im2col materialization entirely.
    xp = jnp.zeros((N, Cin, Hp_pad, Wp), x.dtype)
    xp = xp.at[:, :, pd:pd + (H - 1) * s + 1:s,
               pd:pd + (W - 1) * s + 1:s].set(x)
    x_flat = xp.reshape(N, Cin, Hp_pad * Wp)          # free (contiguous) reshape

    # Per-tap weight matrices: wmat[kh*K+kw][co, ci] = weight[ci, co, K-1-kh, K-1-kw]
    wmat = (weight[:, :, ::-1, ::-1]
            .transpose(2, 3, 1, 0)
            .reshape(K * K, Cout, Cin)
            .astype(jnp.float32))
    bias2d = bias.reshape(Cout, 1).astype(jnp.float32)

    kernel = functools.partial(
        _deconv_kernel, ksize=K, wp=Wp, tile_rows=TO, out_w=OW,
        num_row_tiles=n_tiles, act=act, negative_slope=negative_slope)

    out = pl.pallas_call(
        kernel,
        out_shape=jax.ShapeDtypeStruct((N, Cout, OH, OW), x.dtype),
        grid_spec=pltpu.PrefetchScalarGridSpec(
            num_scalar_prefetch=0,
            grid=(N, n_tiles),
            in_specs=[
                # Whole flattened image plane per batch (re-used across row tiles).
                pl.BlockSpec((1, Cin, Hp_pad * Wp), lambda n, i: (n, 0, 0)),
                # Small constant operands, resident.
                pl.BlockSpec((K * K, Cout, Cin), lambda n, i: (0, 0, 0)),
                pl.BlockSpec((Cout, 1), lambda n, i: (0, 0)),
            ],
            out_specs=pl.BlockSpec((1, Cout, TO, OW), lambda n, i: (n, 0, i, 0)),
        ),
        compiler_params=pltpu.CompilerParams(
            dimension_semantics=("parallel", "arbitrary")),
    )(x_flat, wmat, bias2d)
    return out


def _reference(x, weight, bias, *, stride, padding, act, negative_slope):
    # Pure-JAX reference for the same ConvTranspose2d + LeakyReLU semantics.
    K = weight.shape[2]
    p = K - 1 - padding
    rhs = weight[:, :, ::-1, ::-1].transpose(1, 0, 2, 3)   # OIHW
    y = lax.conv_general_dilated(
        x, rhs, window_strides=(1, 1), padding=[(p, p), (p, p)],
        lhs_dilation=(stride, stride),
        dimension_numbers=('NCHW', 'OIHW', 'NCHW'))
    y = y + bias[None, :, None, None]
    if act:
        y = jnp.where(y >= 0, y, negative_slope * y)
    return y


if __name__ == "__main__":
    key = jax.random.PRNGKey(0)
    k_x, k_w, k_b = jax.random.split(key, 3)

    N, Cin, H, W = 2, 4, 16, 16
    Cout, K, stride, padding = 8, 3, 2, 0

    x = jax.random.normal(k_x, (N, Cin, H, W), dtype=jnp.float32)
    # Deterministic param init (uniform, torch-ConvTranspose2d-like scale).
    fan = Cin * K * K
    bound = 1.0 / (fan ** 0.5)
    weight = jax.random.uniform(k_w, (Cin, Cout, K, K), jnp.float32, -bound, bound)
    bias = jax.random.uniform(k_b, (Cout,), jnp.float32, -bound, bound)

    fwd = jax.jit(functools.partial(
        deconv_block_forward, stride=stride, padding=padding, act=True,
        negative_slope=0.2))
    y = fwd(x, weight, bias)
    y = jax.block_until_ready(y)

    y_ref = _reference(x, weight, bias, stride=stride, padding=padding,
                       act=True, negative_slope=0.2)
    assert y.shape == (N, Cout, (H - 1) * stride + K, (W - 1) * stride + K)
    assert jnp.allclose(y, y_ref, atol=1e-5, rtol=1e-5)

    print("KERNEL_OK")
</pallas_src>

<mosaic_0001>
module attributes {stable_mosaic.version = 11 : i64} {
  func.func @_deconv_kernel(%arg0: i32, %arg1: i32, %arg2: memref<1x4x1260xf32, #tpu.memory_space<vmem>>, %arg3: memref<9x8x4xf32, #tpu.memory_space<vmem>>, %arg4: memref<8x1xf32, #tpu.memory_space<vmem>>, %arg5: memref<1x8x33x33xf32, #tpu.memory_space<vmem>>) attributes {dimension_semantics = [#tpu.dimension_semantics<parallel>, #tpu.dimension_semantics<arbitrary>], iteration_bounds = array<i64: 2, 1>, scalar_prefetch = 0 : i64, scratch_operands = 0 : i64, tpu.core_type = #tpu.core_type<tc>, window_params = [{transform_indices = @transform_0, window_bounds = array<i64: 1, 4, 1260>}, {pipeline_mode = #tpu.pipeline_mode<synchronous>, transform_indices = @transform_1, window_bounds = array<i64: 9, 8, 4>}, {pipeline_mode = #tpu.pipeline_mode<synchronous>, transform_indices = @transform_2, window_bounds = array<i64: 8, 1>}, {transform_indices = @transform_3, window_bounds = array<i64: 1, 8, 33, 33>}]} {
    %cst = arith.constant 0.000000e+00 : f32
    %0 = vector.broadcast %cst : f32 to vector<8x1155xf32>
    %c0 = arith.constant 0 : index
    %c0_0 = arith.constant 0 : index
    %c0_1 = arith.constant 0 : index
    %1 = vector.load %arg2[%c0, %c0_0, %c0_1] : memref<1x4x1260xf32, #tpu.memory_space<vmem>>, vector<1x4x1155xf32>
    %2 = vector.shape_cast %1 : vector<1x4x1155xf32> to vector<4x1155xf32>
    %c0_2 = arith.constant 0 : index
    %c0_3 = arith.constant 0 : index
    %c0_4 = arith.constant 0 : index
    %3 = vector.load %arg3[%c0_2, %c0_3, %c0_4] : memref<9x8x4xf32, #tpu.memory_space<vmem>>, vector<1x8x4xf32>
    %4 = vector.shape_cast %3 : vector<1x8x4xf32> to vector<8x4xf32>
    %cst_5 = arith.constant dense<0.000000e+00> : vector<8x1155xf32>
    %5 = tpu.matmul %4, %2, %cst_5 {dimension_numbers = #tpu.dot_dimension_numbers<[1], [0], [0], [1], [0, 0, 1, 1], [], []>} : vector<8x4xf32>, vector<4x1155xf32>, vector<8x1155xf32> -> vector<8x1155xf32>
    %6 = arith.addf %0, %5 : vector<8x1155xf32>
    %c0_6 = arith.constant 0 : index
    %c0_7 = arith.constant 0 : index
    %c1 = arith.constant 1 : index
    %7 = vector.load %arg2[%c0_6, %c0_7, %c1] : memref<1x4x1260xf32, #tpu.memory_space<vmem>>, vector<1x4x1155xf32>
    %8 = vector.shape_cast %7 : vector<1x4x1155xf32> to vector<4x1155xf32>
    %c1_8 = arith.constant 1 : index
    %c0_9 = arith.constant 0 : index
    %c0_10 = arith.constant 0 : index
    %9 = vector.load %arg3[%c1_8, %c0_9, %c0_10] : memref<9x8x4xf32, #tpu.memory_space<vmem>>, vector<1x8x4xf32>
    %10 = vector.shape_cast %9 : vector<1x8x4xf32> to vector<8x4xf32>
    %cst_11 = arith.constant dense<0.000000e+00> : vector<8x1155xf32>
    %11 = tpu.matmul %10, %8, %cst_11 {dimension_numbers = #tpu.dot_dimension_numbers<[1], [0], [0], [1], [0, 0, 1, 1], [], []>} : vector<8x4xf32>, vector<4x1155xf32>, vector<8x1155xf32> -> vector<8x1155xf32>
    %12 = arith.addf %6, %11 : vector<8x1155xf32>
    %c0_12 = arith.constant 0 : index
    %c0_13 = arith.constant 0 : index
    %c2 = arith.constant 2 : index
    %13 = vector.load %arg2[%c0_12, %c0_13, %c2] : memref<1x4x1260xf32, #tpu.memory_space<vmem>>, vector<1x4x1155xf32>
    %14 = vector.shape_cast %13 : vector<1x4x1155xf32> to vector<4x1155xf32>
    %c2_14 = arith.constant 2 : index
    %c0_15 = arith.constant 0 : index
    %c0_16 = arith.constant 0 : index
    %15 = vector.load %arg3[%c2_14, %c0_15, %c0_16] : memref<9x8x4xf32, #tpu.memory_space<vmem>>, vector<1x8x4xf32>
    %16 = vector.shape_cast %15 : vector<1x8x4xf32> to vector<8x4xf32>
    %cst_17 = arith.constant dense<0.000000e+00> : vector<8x1155xf32>
    %17 = tpu.matmul %16, %14, %cst_17 {dimension_numbers = #tpu.dot_dimension_numbers<[1], [0], [0], [1], [0, 0, 1, 1], [], []>} : vector<8x4xf32>, vector<4x1155xf32>, vector<8x1155xf32> -> vector<8x1155xf32>
    %18 = arith.addf %12, %17 : vector<8x1155xf32>
    %c0_18 = arith.constant 0 : index
    %c0_19 = arith.constant 0 : index
    %c35 = arith.constant 35 : index
    %19 = vector.load %arg2[%c0_18, %c0_19, %c35] : memref<1x4x1260xf32, #tpu.memory_space<vmem>>, vector<1x4x1155xf32>
    %20 = vector.shape_cast %19 : vector<1x4x1155xf32> to vector<4x1155xf32>
    %c3 = arith.constant 3 : index
    %c0_20 = arith.constant 0 : index
    %c0_21 = arith.constant 0 : index
    %21 = vector.load %arg3[%c3, %c0_20, %c0_21] : memref<9x8x4xf32, #tpu.memory_space<vmem>>, vector<1x8x4xf32>
    %22 = vector.shape_cast %21 : vector<1x8x4xf32> to vector<8x4xf32>
    %cst_22 = arith.constant dense<0.000000e+00> : vector<8x1155xf32>
    %23 = tpu.matmul %22, %20, %cst_22 {dimension_numbers = #tpu.dot_dimension_numbers<[1], [0], [0], [1], [0, 0, 1, 1], [], []>} : vector<8x4xf32>, vector<4x1155xf32>, vector<8x1155xf32> -> vector<8x1155xf32>
    %24 = arith.addf %18, %23 : vector<8x1155xf32>
    %c0_23 = arith.constant 0 : index
    %c0_24 = arith.constant 0 : index
    %c36 = arith.constant 36 : index
    %25 = vector.load %arg2[%c0_23, %c0_24, %c36] : memref<1x4x1260xf32, #tpu.memory_space<vmem>>, vector<1x4x1155xf32>
    %26 = vector.shape_cast %25 : vector<1x4x1155xf32> to vector<4x1155xf32>
    %c4 = arith.constant 4 : index
    %c0_25 = arith.constant 0 : index
    %c0_26 = arith.constant 0 : index
    %27 = vector.load %arg3[%c4, %c0_25, %c0_26] : memref<9x8x4xf32, #tpu.memory_space<vmem>>, vector<1x8x4xf32>
    %28 = vector.shape_cast %27 : vector<1x8x4xf32> to vector<8x4xf32>
    %cst_27 = arith.constant dense<0.000000e+00> : vector<8x1155xf32>
    %29 = tpu.matmul %28, %26, %cst_27 {dimension_numbers = #tpu.dot_dimension_numbers<[1], [0], [0], [1], [0, 0, 1, 1], [], []>} : vector<8x4xf32>, vector<4x1155xf32>, vector<8x1155xf32> -> vector<8x1155xf32>
    %30 = arith.addf %24, %29 : vector<8x1155xf32>
    %c0_28 = arith.constant 0 : index
    %c0_29 = arith.constant 0 : index
    %c37 = arith.constant 37 : index
    %31 = vector.load %arg2[%c0_28, %c0_29, %c37] : memref<1x4x1260xf32, #tpu.memory_space<vmem>>, vector<1x4x1155xf32>
    %32 = vector.shape_cast %31 : vector<1x4x1155xf32> to vector<4x1155xf32>
    %c5 = arith.constant 5 : index
    %c0_30 = arith.constant 0 : index
    %c0_31 = arith.constant 0 : index
    %33 = vector.load %arg3[%c5, %c0_30, %c0_31] : memref<9x8x4xf32, #tpu.memory_space<vmem>>, vector<1x8x4xf32>
    %34 = vector.shape_cast %33 : vector<1x8x4xf32> to vector<8x4xf32>
    %cst_32 = arith.constant dense<0.000000e+00> : vector<8x1155xf32>
    %35 = tpu.matmul %34, %32, %cst_32 {dimension_numbers = #tpu.dot_dimension_numbers<[1], [0], [0], [1], [0, 0, 1, 1], [], []>} : vector<8x4xf32>, vector<4x1155xf32>, vector<8x1155xf32> -> vector<8x1155xf32>
    %36 = arith.addf %30, %35 : vector<8x1155xf32>
    %c0_33 = arith.constant 0 : index
    %c0_34 = arith.constant 0 : index
    %c70 = arith.constant 70 : index
    %37 = vector.load %arg2[%c0_33, %c0_34, %c70] : memref<1x4x1260xf32, #tpu.memory_space<vmem>>, vector<1x4x1155xf32>
    %38 = vector.shape_cast %37 : vector<1x4x1155xf32> to vector<4x1155xf32>
    %c6 = arith.constant 6 : index
    %c0_35 = arith.constant 0 : index
    %c0_36 = arith.constant 0 : index
    %39 = vector.load %arg3[%c6, %c0_35, %c0_36] : memref<9x8x4xf32, #tpu.memory_space<vmem>>, vector<1x8x4xf32>
    %40 = vector.shape_cast %39 : vector<1x8x4xf32> to vector<8x4xf32>
    %cst_37 = arith.constant dense<0.000000e+00> : vector<8x1155xf32>
    %41 = tpu.matmul %40, %38, %cst_37 {dimension_numbers = #tpu.dot_dimension_numbers<[1], [0], [0], [1], [0, 0, 1, 1], [], []>} : vector<8x4xf32>, vector<4x1155xf32>, vector<8x1155xf32> -> vector<8x1155xf32>
    %42 = arith.addf %36, %41 : vector<8x1155xf32>
    %c0_38 = arith.constant 0 : index
    %c0_39 = arith.constant 0 : index
    %c71 = arith.constant 71 : index
    %43 = vector.load %arg2[%c0_38, %c0_39, %c71] : memref<1x4x1260xf32, #tpu.memory_space<vmem>>, vector<1x4x1155xf32>
    %44 = vector.shape_cast %43 : vector<1x4x1155xf32> to vector<4x1155xf32>
    %c7 = arith.constant 7 : index
    %c0_40 = arith.constant 0 : index
    %c0_41 = arith.constant 0 : index
    %45 = vector.load %arg3[%c7, %c0_40, %c0_41] : memref<9x8x4xf32, #tpu.memory_space<vmem>>, vector<1x8x4xf32>
    %46 = vector.shape_cast %45 : vector<1x8x4xf32> to vector<8x4xf32>
    %cst_42 = arith.constant dense<0.000000e+00> : vector<8x1155xf32>
    %47 = tpu.matmul %46, %44, %cst_42 {dimension_numbers = #tpu.dot_dimension_numbers<[1], [0], [0], [1], [0, 0, 1, 1], [], []>} : vector<8x4xf32>, vector<4x1155xf32>, vector<8x1155xf32> -> vector<8x1155xf32>
    %48 = arith.addf %42, %47 : vector<8x1155xf32>
    %c0_43 = arith.constant 0 : index
    %c0_44 = arith.constant 0 : index
    %c72 = arith.constant 72 : index
    %49 = vector.load %arg2[%c0_43, %c0_44, %c72] : memref<1x4x1260xf32, #tpu.memory_space<vmem>>, vector<1x4x1155xf32>
    %50 = vector.shape_cast %49 : vector<1x4x1155xf32> to vector<4x1155xf32>
    %c8 = arith.constant 8 : index
    %c0_45 = arith.constant 0 : index
    %c0_46 = arith.constant 0 : index
    %51 = vector.load %arg3[%c8, %c0_45, %c0_46] : memref<9x8x4xf32, #tpu.memory_space<vmem>>, vector<1x8x4xf32>
    %52 = vector.shape_cast %51 : vector<1x8x4xf32> to vector<8x4xf32>
    %cst_47 = arith.constant dense<0.000000e+00> : vector<8x1155xf32>
    %53 = tpu.matmul %52, %50, %cst_47 {dimension_numbers = #tpu.dot_dimension_numbers<[1], [0], [0], [1], [0, 0, 1, 1], [], []>} : vector<8x4xf32>, vector<4x1155xf32>, vector<8x1155xf32> -> vector<8x1155xf32>
    %54 = arith.addf %48, %53 : vector<8x1155xf32>
    %c0_48 = arith.constant 0 : index
    %c0_49 = arith.constant 0 : index
    %55 = vector.load %arg4[%c0_48, %c0_49] : memref<8x1xf32, #tpu.memory_space<vmem>>, vector<8x1xf32>
    %56 = vector.broadcast %55 : vector<8x1xf32> to vector<8x1155xf32>
    %57 = arith.addf %54, %56 : vector<8x1155xf32>
    %cst_50 = arith.constant 0.000000e+00 : f32
    %58 = vector.broadcast %cst_50 : f32 to vector<8x1155xf32>
    %59 = arith.cmpf oge, %57, %58 : vector<8x1155xf32>
    %cst_51 = arith.constant 2.000000e-01 : f32
    %60 = vector.broadcast %cst_51 : f32 to vector<8x1155xf32>
    %61 = arith.mulf %60, %57 : vector<8x1155xf32>
    %62 = arith.select %59, %57, %61 : vector<8x1155xi1>, vector<8x1155xf32>
    %63 = vector.extract_strided_slice %62 {offsets = [0, 0], sizes = [8, 33], strides = [1, 1]} : vector<8x1155xf32> to vector<8x33xf32>
    %c0_52 = arith.constant 0 : index
    %c0_53 = arith.constant 0 : index
    %c0_54 = arith.constant 0 : index
    %c0_55 = arith.constant 0 : index
    %64 = vector.load %arg5[%c0_52, %c0_53, %c0_54, %c0_55] : memref<1x8x33x33xf32, #tpu.memory_space<vmem>>, vector<1x8x1x33xf32>
    %65 = vector.shape_cast %64 : vector<1x8x1x33xf32> to vector<8x33xf32>
    %66 = vector.shape_cast %63 : vector<8x33xf32> to vector<1x8x1x33xf32>
    tpu.vector_store %arg5[%c0_52, %c0_53, %c0_54, %c0_55], %66 {strides = array<i32>} : memref<1x8x33x33xf32, #tpu.memory_space<vmem>>, vector<1x8x1x33xf32>,
    %67 = vector.extract_strided_slice %62 {offsets = [0, 35], sizes = [8, 33], strides = [1, 1]} : vector<8x1155xf32> to vector<8x33xf32>
    %c0_56 = arith.constant 0 : index
    %c0_57 = arith.constant 0 : index
    %c1_58 = arith.constant 1 : index
    %c0_59 = arith.constant 0 : index
    %68 = vector.load %arg5[%c0_56, %c0_57, %c1_58, %c0_59] : memref<1x8x33x33xf32, #tpu.memory_space<vmem>>, vector<1x8x1x33xf32>
    %69 = vector.shape_cast %68 : vector<1x8x1x33xf32> to vector<8x33xf32>
    %70 = vector.shape_cast %67 : vector<8x33xf32> to vector<1x8x1x33xf32>
    tpu.vector_store %arg5[%c0_56, %c0_57, %c1_58, %c0_59], %70 {strides = array<i32>} : memref<1x8x33x33xf32, #tpu.memory_space<vmem>>, vector<1x8x1x33xf32>,
    %71 = vector.extract_strided_slice %62 {offsets = [0, 70], sizes = [8, 33], strides = [1, 1]} : vector<8x1155xf32> to vector<8x33xf32>
    %c0_60 = arith.constant 0 : index
    %c0_61 = arith.constant 0 : index
    %c2_62 = arith.constant 2 : index
    %c0_63 = arith.constant 0 : index
    %72 = vector.load %arg5[%c0_60, %c0_61, %c2_62, %c0_63] : memref<1x8x33x33xf32, #tpu.memory_space<vmem>>, vector<1x8x1x33xf32>
    %73 = vector.shape_cast %72 : vector<1x8x1x33xf32> to vector<8x33xf32>
    %74 = vector.shape_cast %71 : vector<8x33xf32> to vector<1x8x1x33xf32>
    tpu.vector_store %arg5[%c0_60, %c0_61, %c2_62, %c0_63], %74 {strides = array<i32>} : memref<1x8x33x33xf32, #tpu.memory_space<vmem>>, vector<1x8x1x33xf32>,
    %75 = vector.extract_strided_slice %62 {offsets = [0, 105], sizes = [8, 33], strides = [1, 1]} : vector<8x1155xf32> to vector<8x33xf32>
    %c0_64 = arith.constant 0 : index
    %c0_65 = arith.constant 0 : index
    %c3_66 = arith.constant 3 : index
    %c0_67 = arith.constant 0 : index
    %76 = vector.load %arg5[%c0_64, %c0_65, %c3_66, %c0_67] : memref<1x8x33x33xf32, #tpu.memory_space<vmem>>, vector<1x8x1x33xf32>
    %77 = vector.shape_cast %76 : vector<1x8x1x33xf32> to vector<8x33xf32>
    %78 = vector.shape_cast %75 : vector<8x33xf32> to vector<1x8x1x33xf32>
    tpu.vector_store %arg5[%c0_64, %c0_65, %c3_66, %c0_67], %78 {strides = array<i32>} : memref<1x8x33x33xf32, #tpu.memory_space<vmem>>, vector<1x8x1x33xf32>,
    %79 = vector.extract_strided_slice %62 {offsets = [0, 140], sizes = [8, 33], strides = [1, 1]} : vector<8x1155xf32> to vector<8x33xf32>
    %c0_68 = arith.constant 0 : index
    %c0_69 = arith.constant 0 : index
    %c4_70 = arith.constant 4 : index
    %c0_71 = arith.constant 0 : index
    %80 = vector.load %arg5[%c0_68, %c0_69, %c4_70, %c0_71] : memref<1x8x33x33xf32, #tpu.memory_space<vmem>>, vector<1x8x1x33xf32>
    %81 = vector.shape_cast %80 : vector<1x8x1x33xf32> to vector<8x33xf32>
    %82 = vector.shape_cast %79 : vector<8x33xf32> to vector<1x8x1x33xf32>
    tpu.vector_store %arg5[%c0_68, %c0_69, %c4_70, %c0_71], %82 {strides = array<i32>} : memref<1x8x33x33xf32, #tpu.memory_space<vmem>>, vector<1x8x1x33xf32>,
    %83 = vector.extract_strided_slice %62 {offsets = [0, 175], sizes = [8, 33], strides = [1, 1]} : vector<8x1155xf32> to vector<8x33xf32>
    %c0_72 = arith.constant 0 : index
    %c0_73 = arith.constant 0 : index
    %c5_74 = arith.constant 5 : index
    %c0_75 = arith.constant 0 : index
    %84 = vector.load %arg5[%c0_72, %c0_73, %c5_74, %c0_75] : memref<1x8x33x33xf32, #tpu.memory_space<vmem>>, vector<1x8x1x33xf32>
    %85 = vector.shape_cast %84 : vector<1x8x1x33xf32> to vector<8x33xf32>
    %86 = vector.shape_cast %83 : vector<8x33xf32> to vector<1x8x1x33xf32>
    tpu.vector_store %arg5[%c0_72, %c0_73, %c5_74, %c0_75], %86 {strides = array<i32>} : memref<1x8x33x33xf32, #tpu.memory_space<vmem>>, vector<1x8x1x33xf32>,
    %87 = vector.extract_strided_slice %62 {offsets = [0, 210], sizes = [8, 33], strides = [1, 1]} : vector<8x1155xf32> to vector<8x33xf32>
    %c0_76 = arith.constant 0 : index
    %c0_77 = arith.constant 0 : index
    %c6_78 = arith.constant 6 : index
    %c0_79 = arith.constant 0 : index
    %88 = vector.load %arg5[%c0_76, %c0_77, %c6_78, %c0_79] : memref<1x8x33x33xf32, #tpu.memory_space<vmem>>, vector<1x8x1x33xf32>
    %89 = vector.shape_cast %88 : vector<1x8x1x33xf32> to vector<8x33xf32>
    %90 = vector.shape_cast %87 : vector<8x33xf32> to vector<1x8x1x33xf32>
    tpu.vector_store %arg5[%c0_76, %c0_77, %c6_78, %c0_79], %90 {strides = array<i32>} : memref<1x8x33x33xf32, #tpu.memory_space<vmem>>, vector<1x8x1x33xf32>,
    %91 = vector.extract_strided_slice %62 {offsets = [0, 245], sizes = [8, 33], strides = [1, 1]} : vector<8x1155xf32> to vector<8x33xf32>
    %c0_80 = arith.constant 0 : index
    %c0_81 = arith.constant 0 : index
    %c7_82 = arith.constant 7 : index
    %c0_83 = arith.constant 0 : index
    %92 = vector.load %arg5[%c0_80, %c0_81, %c7_82, %c0_83] : memref<1x8x33x33xf32, #tpu.memory_space<vmem>>, vector<1x8x1x33xf32>
    %93 = vector.shape_cast %92 : vector<1x8x1x33xf32> to vector<8x33xf32>
    %94 = vector.shape_cast %91 : vector<8x33xf32> to vector<1x8x1x33xf32>
    tpu.vector_store %arg5[%c0_80, %c0_81, %c7_82, %c0_83], %94 {strides = array<i32>} : memref<1x8x33x33xf32, #tpu.memory_space<vmem>>, vector<1x8x1x33xf32>,
    %95 = vector.extract_strided_slice %62 {offsets = [0, 280], sizes = [8, 33], strides = [1, 1]} : vector<8x1155xf32> to vector<8x33xf32>
    %c0_84 = arith.constant 0 : index
    %c0_85 = arith.constant 0 : index
    %c8_86 = arith.constant 8 : index
    %c0_87 = arith.constant 0 : index
    %96 = vector.load %arg5[%c0_84, %c0_85, %c8_86, %c0_87] : memref<1x8x33x33xf32, #tpu.memory_space<vmem>>, vector<1x8x1x33xf32>
    %97 = vector.shape_cast %96 : vector<1x8x1x33xf32> to vector<8x33xf32>
    %98 = vector.shape_cast %95 : vector<8x33xf32> to vector<1x8x1x33xf32>
    tpu.vector_store %arg5[%c0_84, %c0_85, %c8_86, %c0_87], %98 {strides = array<i32>} : memref<1x8x33x33xf32, #tpu.memory_space<vmem>>, vector<1x8x1x33xf32>,
    %99 = vector.extract_strided_slice %62 {offsets = [0, 315], sizes = [8, 33], strides = [1, 1]} : vector<8x1155xf32> to vector<8x33xf32>
    %c0_88 = arith.constant 0 : index
    %c0_89 = arith.constant 0 : index
    %c9 = arith.constant 9 : index
    %c0_90 = arith.constant 0 : index
    %100 = vector.load %arg5[%c0_88, %c0_89, %c9, %c0_90] : memref<1x8x33x33xf32, #tpu.memory_space<vmem>>, vector<1x8x1x33xf32>
    %101 = vector.shape_cast %100 : vector<1x8x1x33xf32> to vector<8x33xf32>
    %102 = vector.shape_cast %99 : vector<8x33xf32> to vector<1x8x1x33xf32>
    tpu.vector_store %arg5[%c0_88, %c0_89, %c9, %c0_90], %102 {strides = array<i32>} : memref<1x8x33x33xf32, #tpu.memory_space<vmem>>, vector<1x8x1x33xf32>,
    %103 = vector.extract_strided_slice %62 {offsets = [0, 350], sizes = [8, 33], strides = [1, 1]} : vector<8x1155xf32> to vector<8x33xf32>
    %c0_91 = arith.constant 0 : index
    %c0_92 = arith.constant 0 : index
    %c10 = arith.constant 10 : index
    %c0_93 = arith.constant 0 : index
    %104 = vector.load %arg5[%c0_91, %c0_92, %c10, %c0_93] : memref<1x8x33x33xf32, #tpu.memory_space<vmem>>, vector<1x8x1x33xf32>
    %105 = vector.shape_cast %104 : vector<1x8x1x33xf32> to vector<8x33xf32>
    %106 = vector.shape_cast %103 : vector<8x33xf32> to vector<1x8x1x33xf32>
    tpu.vector_store %arg5[%c0_91, %c0_92, %c10, %c0_93], %106 {strides = array<i32>} : memref<1x8x33x33xf32, #tpu.memory_space<vmem>>, vector<1x8x1x33xf32>,
    %107 = vector.extract_strided_slice %62 {offsets = [0, 385], sizes = [8, 33], strides = [1, 1]} : vector<8x1155xf32> to vector<8x33xf32>
    %c0_94 = arith.constant 0 : index
    %c0_95 = arith.constant 0 : index
    %c11 = arith.constant 11 : index
    %c0_96 = arith.constant 0 : index
    %108 = vector.load %arg5[%c0_94, %c0_95, %c11, %c0_96] : memref<1x8x33x33xf32, #tpu.memory_space<vmem>>, vector<1x8x1x33xf32>
    %109 = vector.shape_cast %108 : vector<1x8x1x33xf32> to vector<8x33xf32>
    %110 = vector.shape_cast %107 : vector<8x33xf32> to vector<1x8x1x33xf32>
    tpu.vector_store %arg5[%c0_94, %c0_95, %c11, %c0_96], %110 {strides = array<i32>} : memref<1x8x33x33xf32, #tpu.memory_space<vmem>>, vector<1x8x1x33xf32>,
    %111 = vector.extract_strided_slice %62 {offsets = [0, 420], sizes = [8, 33], strides = [1, 1]} : vector<8x1155xf32> to vector<8x33xf32>
    %c0_97 = arith.constant 0 : index
    %c0_98 = arith.constant 0 : index
    %c12 = arith.constant 12 : index
    %c0_99 = arith.constant 0 : index
    %112 = vector.load %arg5[%c0_97, %c0_98, %c12, %c0_99] : memref<1x8x33x33xf32, #tpu.memory_space<vmem>>, vector<1x8x1x33xf32>
    %113 = vector.shape_cast %112 : vector<1x8x1x33xf32> to vector<8x33xf32>
    %114 = vector.shape_cast %111 : vector<8x33xf32> to vector<1x8x1x33xf32>
    tpu.vector_store %arg5[%c0_97, %c0_98, %c12, %c0_99], %114 {strides = array<i32>} : memref<1x8x33x33xf32, #tpu.memory_space<vmem>>, vector<1x8x1x33xf32>,
    %115 = vector.extract_strided_slice %62 {offsets = [0, 455], sizes = [8, 33], strides = [1, 1]} : vector<8x1155xf32> to vector<8x33xf32>
    %c0_100 = arith.constant 0 : index
    %c0_101 = arith.constant 0 : index
    %c13 = arith.constant 13 : index
    %c0_102 = arith.constant 0 : index
    %116 = vector.load %arg5[%c0_100, %c0_101, %c13, %c0_102] : memref<1x8x33x33xf32, #tpu.memory_space<vmem>>, vector<1x8x1x33xf32>
    %117 = vector.shape_cast %116 : vector<1x8x1x33xf32> to vector<8x33xf32>
    %118 = vector.shape_cast %115 : vector<8x33xf32> to vector<1x8x1x33xf32>
    tpu.vector_store %arg5[%c0_100, %c0_101, %c13, %c0_102], %118 {strides = array<i32>} : memref<1x8x33x33xf32, #tpu.memory_space<vmem>>, vector<1x8x1x33xf32>,
    %119 = vector.extract_strided_slice %62 {offsets = [0, 490], sizes = [8, 33], strides = [1, 1]} : vector<8x1155xf32> to vector<8x33xf32>
    %c0_103 = arith.constant 0 : index
    %c0_104 = arith.constant 0 : index
    %c14 = arith.constant 14 : index
    %c0_105 = arith.constant 0 : index
    %120 = vector.load %arg5[%c0_103, %c0_104, %c14, %c0_105] : memref<1x8x33x33xf32, #tpu.memory_space<vmem>>, vector<1x8x1x33xf32>
    %121 = vector.shape_cast %120 : vector<1x8x1x33xf32> to vector<8x33xf32>
    %122 = vector.shape_cast %119 : vector<8x33xf32> to vector<1x8x1x33xf32>
    tpu.vector_store %arg5[%c0_103, %c0_104, %c14, %c0_105], %122 {strides = array<i32>} : memref<1x8x33x33xf32, #tpu.memory_space<vmem>>, vector<1x8x1x33xf32>,
    %123 = vector.extract_strided_slice %62 {offsets = [0, 525], sizes = [8, 33], strides = [1, 1]} : vector<8x1155xf32> to vector<8x33xf32>
    %c0_106 = arith.constant 0 : index
    %c0_107 = arith.constant 0 : index
    %c15 = arith.constant 15 : index
    %c0_108 = arith.constant 0 : index
    %124 = vector.load %arg5[%c0_106, %c0_107, %c15, %c0_108] : memref<1x8x33x33xf32, #tpu.memory_space<vmem>>, vector<1x8x1x33xf32>
    %125 = vector.shape_cast %124 : vector<1x8x1x33xf32> to vector<8x33xf32>
    %126 = vector.shape_cast %123 : vector<8x33xf32> to vector<1x8x1x33xf32>
    tpu.vector_store %arg5[%c0_106, %c0_107, %c15, %c0_108], %126 {strides = array<i32>} : memref<1x8x33x33xf32, #tpu.memory_space<vmem>>, vector<1x8x1x33xf32>,
    %127 = vector.extract_strided_slice %62 {offsets = [0, 560], sizes = [8, 33], strides = [1, 1]} : vector<8x1155xf32> to vector<8x33xf32>
    %c0_109 = arith.constant 0 : index
    %c0_110 = arith.constant 0 : index
    %c16 = arith.constant 16 : index
    %c0_111 = arith.constant 0 : index
    %128 = vector.load %arg5[%c0_109, %c0_110, %c16, %c0_111] : memref<1x8x33x33xf32, #tpu.memory_space<vmem>>, vector<1x8x1x33xf32>
    %129 = vector.shape_cast %128 : vector<1x8x1x33xf32> to vector<8x33xf32>
    %130 = vector.shape_cast %127 : vector<8x33xf32> to vector<1x8x1x33xf32>
    tpu.vector_store %arg5[%c0_109, %c0_110, %c16, %c0_111], %130 {strides = array<i32>} : memref<1x8x33x33xf32, #tpu.memory_space<vmem>>, vector<1x8x1x33xf32>,
    %131 = vector.extract_strided_slice %62 {offsets = [0, 595], sizes = [8, 33], strides = [1, 1]} : vector<8x1155xf32> to vector<8x33xf32>
    %c0_112 = arith.constant 0 : index
    %c0_113 = arith.constant 0 : index
    %c17 = arith.constant 17 : index
    %c0_114 = arith.constant 0 : index
    %132 = vector.load %arg5[%c0_112, %c0_113, %c17, %c0_114] : memref<1x8x33x33xf32, #tpu.memory_space<vmem>>, vector<1x8x1x33xf32>
    %133 = vector.shape_cast %132 : vector<1x8x1x33xf32> to vector<8x33xf32>
    %134 = vector.shape_cast %131 : vector<8x33xf32> to vector<1x8x1x33xf32>
    tpu.vector_store %arg5[%c0_112, %c0_113, %c17, %c0_114], %134 {strides = array<i32>} : memref<1x8x33x33xf32, #tpu.memory_space<vmem>>, vector<1x8x1x33xf32>,
    %135 = vector.extract_strided_slice %62 {offsets = [0, 630], sizes = [8, 33], strides = [1, 1]} : vector<8x1155xf32> to vector<8x33xf32>
    %c0_115 = arith.constant 0 : index
    %c0_116 = arith.constant 0 : index
    %c18 = arith.constant 18 : index
    %c0_117 = arith.constant 0 : index
    %136 = vector.load %arg5[%c0_115, %c0_116, %c18, %c0_117] : memref<1x8x33x33xf32, #tpu.memory_space<vmem>>, vector<1x8x1x33xf32>
    %137 = vector.shape_cast %136 : vector<1x8x1x33xf32> to vector<8x33xf32>
    %138 = vector.shape_cast %135 : vector<8x33xf32> to vector<1x8x1x33xf32>
    tpu.vector_store %arg5[%c0_115, %c0_116, %c18, %c0_117], %138 {strides = array<i32>} : memref<1x8x33x33xf32, #tpu.memory_space<vmem>>, vector<1x8x1x33xf32>,
    %139 = vector.extract_strided_slice %62 {offsets = [0, 665], sizes = [8, 33], strides = [1, 1]} : vector<8x1155xf32> to vector<8x33xf32>
    %c0_118 = arith.constant 0 : index
    %c0_119 = arith.constant 0 : index
    %c19 = arith.constant 19 : index
    %c0_120 = arith.constant 0 : index
    %140 = vector.load %arg5[%c0_118, %c0_119, %c19, %c0_120] : memref<1x8x33x33xf32, #tpu.memory_space<vmem>>, vector<1x8x1x33xf32>
    %141 = vector.shape_cast %140 : vector<1x8x1x33xf32> to vector<8x33xf32>
    %142 = vector.shape_cast %139 : vector<8x33xf32> to vector<1x8x1x33xf32>
    tpu.vector_store %arg5[%c0_118, %c0_119, %c19, %c0_120], %142 {strides = array<i32>} : memref<1x8x33x33xf32, #tpu.memory_space<vmem>>, vector<1x8x1x33xf32>,
    %143 = vector.extract_strided_slice %62 {offsets = [0, 700], sizes = [8, 33], strides = [1, 1]} : vector<8x1155xf32> to vector<8x33xf32>
    %c0_121 = arith.constant 0 : index
    %c0_122 = arith.constant 0 : index
    %c20 = arith.constant 20 : index
    %c0_123 = arith.constant 0 : index
    %144 = vector.load %arg5[%c0_121, %c0_122, %c20, %c0_123] : memref<1x8x33x33xf32, #tpu.memory_space<vmem>>, vector<1x8x1x33xf32>
    %145 = vector.shape_cast %144 : vector<1x8x1x33xf32> to vector<8x33xf32>
    %146 = vector.shape_cast %143 : vector<8x33xf32> to vector<1x8x1x33xf32>
    tpu.vector_store %arg5[%c0_121, %c0_122, %c20, %c0_123], %146 {strides = array<i32>} : memref<1x8x33x33xf32, #tpu.memory_space<vmem>>, vector<1x8x1x33xf32>,
    %147 = vector.extract_strided_slice %62 {offsets = [0, 735], sizes = [8, 33], strides = [1, 1]} : vector<8x1155xf32> to vector<8x33xf32>
    %c0_124 = arith.constant 0 : index
    %c0_125 = arith.constant 0 : index
    %c21 = arith.constant 21 : index
    %c0_126 = arith.constant 0 : index
    %148 = vector.load %arg5[%c0_124, %c0_125, %c21, %c0_126] : memref<1x8x33x33xf32, #tpu.memory_space<vmem>>, vector<1x8x1x33xf32>
    %149 = vector.shape_cast %148 : vector<1x8x1x33xf32> to vector<8x33xf32>
    %150 = vector.shape_cast %147 : vector<8x33xf32> to vector<1x8x1x33xf32>
    tpu.vector_store %arg5[%c0_124, %c0_125, %c21, %c0_126], %150 {strides = array<i32>} : memref<1x8x33x33xf32, #tpu.memory_space<vmem>>, vector<1x8x1x33xf32>,
    %151 = vector.extract_strided_slice %62 {offsets = [0, 770], sizes = [8, 33], strides = [1, 1]} : vector<8x1155xf32> to vector<8x33xf32>
    %c0_127 = arith.constant 0 : index
    %c0_128 = arith.constant 0 : index
    %c22 = arith.constant 22 : index
    %c0_129 = arith.constant 0 : index
    %152 = vector.load %arg5[%c0_127, %c0_128, %c22, %c0_129] : memref<1x8x33x33xf32, #tpu.memory_space<vmem>>, vector<1x8x1x33xf32>
    %153 = vector.shape_cast %152 : vector<1x8x1x33xf32> to vector<8x33xf32>
    %154 = vector.shape_cast %151 : vector<8x33xf32> to vector<1x8x1x33xf32>
    tpu.vector_store %arg5[%c0_127, %c0_128, %c22, %c0_129], %154 {strides = array<i32>} : memref<1x8x33x33xf32, #tpu.memory_space<vmem>>, vector<1x8x1x33xf32>,
    %155 = vector.extract_strided_slice %62 {offsets = [0, 805], sizes = [8, 33], strides = [1, 1]} : vector<8x1155xf32> to vector<8x33xf32>
    %c0_130 = arith.constant 0 : index
    %c0_131 = arith.constant 0 : index
    %c23 = arith.constant 23 : index
    %c0_132 = arith.constant 0 : index
    %156 = vector.load %arg5[%c0_130, %c0_131, %c23, %c0_132] : memref<1x8x33x33xf32, #tpu.memory_space<vmem>>, vector<1x8x1x33xf32>
    %157 = vector.shape_cast %156 : vector<1x8x1x33xf32> to vector<8x33xf32>
    %158 = vector.shape_cast %155 : vector<8x33xf32> to vector<1x8x1x33xf32>
    tpu.vector_store %arg5[%c0_130, %c0_131, %c23, %c0_132], %158 {strides = array<i32>} : memref<1x8x33x33xf32, #tpu.memory_space<vmem>>, vector<1x8x1x33xf32>,
    %159 = vector.extract_strided_slice %62 {offsets = [0, 840], sizes = [8, 33], strides = [1, 1]} : vector<8x1155xf32> to vector<8x33xf32>
    %c0_133 = arith.constant 0 : index
    %c0_134 = arith.constant 0 : index
    %c24 = arith.constant 24 : index
    %c0_135 = arith.constant 0 : index
    %160 = vector.load %arg5[%c0_133, %c0_134, %c24, %c0_135] : memref<1x8x33x33xf32, #tpu.memory_space<vmem>>, vector<1x8x1x33xf32>
    %161 = vector.shape_cast %160 : vector<1x8x1x33xf32> to vector<8x33xf32>
    %162 = vector.shape_cast %159 : vector<8x33xf32> to vector<1x8x1x33xf32>
    tpu.vector_store %arg5[%c0_133, %c0_134, %c24, %c0_135], %162 {strides = array<i32>} : memref<1x8x33x33xf32, #tpu.memory_space<vmem>>, vector<1x8x1x33xf32>,
    %163 = vector.extract_strided_slice %62 {offsets = [0, 875], sizes = [8, 33], strides = [1, 1]} : vector<8x1155xf32> to vector<8x33xf32>
    %c0_136 = arith.constant 0 : index
    %c0_137 = arith.constant 0 : index
    %c25 = arith.constant 25 : index
    %c0_138 = arith.constant 0 : index
    %164 = vector.load %arg5[%c0_136, %c0_137, %c25, %c0_138] : memref<1x8x33x33xf32, #tpu.memory_space<vmem>>, vector<1x8x1x33xf32>
    %165 = vector.shape_cast %164 : vector<1x8x1x33xf32> to vector<8x33xf32>
    %166 = vector.shape_cast %163 : vector<8x33xf32> to vector<1x8x1x33xf32>
    tpu.vector_store %arg5[%c0_136, %c0_137, %c25, %c0_138], %166 {strides = array<i32>} : memref<1x8x33x33xf32, #tpu.memory_space<vmem>>, vector<1x8x1x33xf32>,
    %167 = vector.extract_strided_slice %62 {offsets = [0, 910], sizes = [8, 33], strides = [1, 1]} : vector<8x1155xf32> to vector<8x33xf32>
    %c0_139 = arith.constant 0 : index
    %c0_140 = arith.constant 0 : index
    %c26 = arith.constant 26 : index
    %c0_141 = arith.constant 0 : index
    %168 = vector.load %arg5[%c0_139, %c0_140, %c26, %c0_141] : memref<1x8x33x33xf32, #tpu.memory_space<vmem>>, vector<1x8x1x33xf32>
    %169 = vector.shape_cast %168 : vector<1x8x1x33xf32> to vector<8x33xf32>
    %170 = vector.shape_cast %167 : vector<8x33xf32> to vector<1x8x1x33xf32>
    tpu.vector_store %arg5[%c0_139, %c0_140, %c26, %c0_141], %170 {strides = array<i32>} : memref<1x8x33x33xf32, #tpu.memory_space<vmem>>, vector<1x8x1x33xf32>,
    %171 = vector.extract_strided_slice %62 {offsets = [0, 945], sizes = [8, 33], strides = [1, 1]} : vector<8x1155xf32> to vector<8x33xf32>
    %c0_142 = arith.constant 0 : index
    %c0_143 = arith.constant 0 : index
    %c27 = arith.constant 27 : index
    %c0_144 = arith.constant 0 : index
    %172 = vector.load %arg5[%c0_142, %c0_143, %c27, %c0_144] : memref<1x8x33x33xf32, #tpu.memory_space<vmem>>, vector<1x8x1x33xf32>
    %173 = vector.shape_cast %172 : vector<1x8x1x33xf32> to vector<8x33xf32>
    %174 = vector.shape_cast %171 : vector<8x33xf32> to vector<1x8x1x33xf32>
    tpu.vector_store %arg5[%c0_142, %c0_143, %c27, %c0_144], %174 {strides = array<i32>} : memref<1x8x33x33xf32, #tpu.memory_space<vmem>>, vector<1x8x1x33xf32>,
    %175 = vector.extract_strided_slice %62 {offsets = [0, 980], sizes = [8, 33], strides = [1, 1]} : vector<8x1155xf32> to vector<8x33xf32>
    %c0_145 = arith.constant 0 : index
    %c0_146 = arith.constant 0 : index
    %c28 = arith.constant 28 : index
    %c0_147 = arith.constant 0 : index
    %176 = vector.load %arg5[%c0_145, %c0_146, %c28, %c0_147] : memref<1x8x33x33xf32, #tpu.memory_space<vmem>>, vector<1x8x1x33xf32>
    %177 = vector.shape_cast %176 : vector<1x8x1x33xf32> to vector<8x33xf32>
    %178 = vector.shape_cast %175 : vector<8x33xf32> to vector<1x8x1x33xf32>
    tpu.vector_store %arg5[%c0_145, %c0_146, %c28, %c0_147], %178 {strides = array<i32>} : memref<1x8x33x33xf32, #tpu.memory_space<vmem>>, vector<1x8x1x33xf32>,
    %179 = vector.extract_strided_slice %62 {offsets = [0, 1015], sizes = [8, 33], strides = [1, 1]} : vector<8x1155xf32> to vector<8x33xf32>
    %c0_148 = arith.constant 0 : index
    %c0_149 = arith.constant 0 : index
    %c29 = arith.constant 29 : index
    %c0_150 = arith.constant 0 : index
    %180 = vector.load %arg5[%c0_148, %c0_149, %c29, %c0_150] : memref<1x8x33x33xf32, #tpu.memory_space<vmem>>, vector<1x8x1x33xf32>
    %181 = vector.shape_cast %180 : vector<1x8x1x33xf32> to vector<8x33xf32>
    %182 = vector.shape_cast %179 : vector<8x33xf32> to vector<1x8x1x33xf32>
    tpu.vector_store %arg5[%c0_148, %c0_149, %c29, %c0_150], %182 {strides = array<i32>} : memref<1x8x33x33xf32, #tpu.memory_space<vmem>>, vector<1x8x1x33xf32>,
    %183 = vector.extract_strided_slice %62 {offsets = [0, 1050], sizes = [8, 33], strides = [1, 1]} : vector<8x1155xf32> to vector<8x33xf32>
    %c0_151 = arith.constant 0 : index
    %c0_152 = arith.constant 0 : index
    %c30 = arith.constant 30 : index
    %c0_153 = arith.constant 0 : index
    %184 = vector.load %arg5[%c0_151, %c0_152, %c30, %c0_153] : memref<1x8x33x33xf32, #tpu.memory_space<vmem>>, vector<1x8x1x33xf32>
    %185 = vector.shape_cast %184 : vector<1x8x1x33xf32> to vector<8x33xf32>
    %186 = vector.shape_cast %183 : vector<8x33xf32> to vector<1x8x1x33xf32>
    tpu.vector_store %arg5[%c0_151, %c0_152, %c30, %c0_153], %186 {strides = array<i32>} : memref<1x8x33x33xf32, #tpu.memory_space<vmem>>, vector<1x8x1x33xf32>,
    %187 = vector.extract_strided_slice %62 {offsets = [0, 1085], sizes = [8, 33], strides = [1, 1]} : vector<8x1155xf32> to vector<8x33xf32>
    %c0_154 = arith.constant 0 : index
    %c0_155 = arith.constant 0 : index
    %c31 = arith.constant 31 : index
    %c0_156 = arith.constant 0 : index
    %188 = vector.load %arg5[%c0_154, %c0_155, %c31, %c0_156] : memref<1x8x33x33xf32, #tpu.memory_space<vmem>>, vector<1x8x1x33xf32>
    %189 = vector.shape_cast %188 : vector<1x8x1x33xf32> to vector<8x33xf32>
    %190 = vector.shape_cast %187 : vector<8x33xf32> to vector<1x8x1x33xf32>
    tpu.vector_store %arg5[%c0_154, %c0_155, %c31, %c0_156], %190 {strides = array<i32>} : memref<1x8x33x33xf32, #tpu.memory_space<vmem>>, vector<1x8x1x33xf32>,
    %191 = vector.extract_strided_slice %62 {offsets = [0, 1120], sizes = [8, 33], strides = [1, 1]} : vector<8x1155xf32> to vector<8x33xf32>
    %c0_157 = arith.constant 0 : index
    %c0_158 = arith.constant 0 : index
    %c32 = arith.constant 32 : index
    %c0_159 = arith.constant 0 : index
    %192 = vector.load %arg5[%c0_157, %c0_158, %c32, %c0_159] : memref<1x8x33x33xf32, #tpu.memory_space<vmem>>, vector<1x8x1x33xf32>
    %193 = vector.shape_cast %192 : vector<1x8x1x33xf32> to vector<8x33xf32>
    %194 = vector.shape_cast %191 : vector<8x33xf32> to vector<1x8x1x33xf32>
    tpu.vector_store %arg5[%c0_157, %c0_158, %c32, %c0_159], %194 {strides = array<i32>} : memref<1x8x33x33xf32, #tpu.memory_space<vmem>>, vector<1x8x1x33xf32>,
    return
  }
  func.func @transform_0(%arg0: i32, %arg1: i32) -> (i32, i32, i32) {
    %c0_i32 = arith.constant 0 : i32
    %c0_i32_0 = arith.constant 0 : i32
    %c0_i32_1 = arith.constant 0 : i32
    return %arg0, %c0_i32, %c0_i32_0 : i32, i32, i32
  }
  func.func @transform_1(%arg0: i32, %arg1: i32) -> (i32, i32, i32) {
    %c0_i32 = arith.constant 0 : i32
    %c0_i32_0 = arith.constant 0 : i32
    %c0_i32_1 = arith.constant 0 : i32
    %c0_i32_2 = arith.constant 0 : i32
    return %c0_i32, %c0_i32_0, %c0_i32_1 : i32, i32, i32
  }
  func.func @transform_2(%arg0: i32, %arg1: i32) -> (i32, i32) {
    %c0_i32 = arith.constant 0 : i32
    %c0_i32_0 = arith.constant 0 : i32
    %c0_i32_1 = arith.constant 0 : i32
    return %c0_i32, %c0_i32_0 : i32, i32
  }
  func.func @transform_3(%arg0: i32, %arg1: i32) -> (i32, i32, i32, i32) {
    %c0_i32 = arith.constant 0 : i32
    %c0_i32_0 = arith.constant 0 : i32
    %c0_i32_1 = arith.constant 0 : i32
    return %arg0, %c0_i32, %arg1, %c0_i32_0 : i32, i32, i32, i32
  }
}

</mosaic_0001>

<llo_original>
// kernel: deconv_block_forward.1
$region0: #{deconv_block_forward.1}
  #allocation0 [shape = 'u32[]', space=smem, size = 0x4, offset = 0x4, fixed_abs, tag = 'smem constant byte address 0x4 - core index']
  #allocation1 [shape = 'u32[144,128]{1,0:T(1,128)}', space=vmem, size = 0x12000, scoped, tag = 'internal scratch']
  %s0 = inlined_call_operand.vmem [shape: f32[2,4,1260], index: 0, kind: input, shape index: {}]
  %s1 = inlined_call_operand.vmem [shape: f32[9,8,4], index: 1, kind: input, shape index: {}]
  %s2 = inlined_call_operand.vmem [shape: f32[8,1], index: 2, kind: input, shape index: {}]
  %s3 = inlined_call_operand.vmem [shape: f32[2,8,33,33], index: 3, kind: output, shape index: {}]
  %s4 = sld [smem:[#allocation0]]
  $region45: #{deconv_block_forward.1} parent=0
    _
  %s6 = ssub.s32 1, %s4
  %s7 = scalar_select 0, %s6, %s4
  loop: start=0, step=1, limit=4
  $region2: #{deconv_block_forward.1} parent=0 // loop_pre_header
    _
  $region3: #{deconv_block_forward.1} parent=0 // loop_header
    %s9 = sphi 0, %s13
    %p10 = scmp.ge.s32.totalorder %s9, 4
    %s16 = sphi 0, %s28
    %s17 = sphi 0, %s24
    %s18 = sphi 0, %s16
    %s19 = sphi 0, %s17
    %s20 = sphi 0, %s18
    %s21 = sphi 0, %s19
    %s31 = sphi 0, %s33
    %s34 = sphi 0, %s31
    %s35 = sphi 0, %s34
    %s51 = sphi 0, %s35
    %s55 = sphi 0, %s55
    %s57 = sphi 0, %s55
    %s58 = sphi 0, %s57
    %s72 = sphi 0, %s58
    %s76 = sphi 0, %s76
    %s78 = sphi 0, %s76
    %s79 = sphi 0, %s78
    %s93 = sphi 0, %s79
    %s101 = sphi 0, %s103
    %s104 = sphi 0, %s101
    %s105 = sphi 0, %s104
    %s121 = sphi 0, %s105
  $region4: #{deconv_block_forward.1} parent=0 // loop_header_branch
    %12 = sbr.rel (%p10) target = $region8
  $region5: #{deconv_block_forward.1} parent=0 // loop_body
    %s14 = ssub.s32 %s9, 1
    %s15 = ssub.s32 %s9, 2
    %s22 = sadd.s32 1, %s17
    %p23 = scmp.ge.s32.totalorder %s22, 1
    %s24 = scalar_select %p23, 0, %s22
    %s25 = sadd.s32 1, %s16
    %s26 = scalar_select %p23, %s25, %s16
    %p27 = scmp.ge.s32.totalorder %s26, 2
    %s28 = scalar_select %p27, 0, %s26
    %s29 = ssub.s32 %s16, %s28
    %p30 = scmp.eq.s32.totalorder %s29, 0
    %s32 = sadd.s32 %s31, 1
    %s33 = scalar_select %p30, %s31, %s32
    %p36 = pneg %p30
    %p37 = scmp.eq.s32.totalorder %s9, 1
    %p38 = por %p36, %p37
    %p39 = scmp.ne.s32.totalorder %s31, %s34
    %p40 = scmp.eq.s32.totalorder %s9, 0
    %p41 = por %p39, %p40
    %p42 = scmp.ne.s32.totalorder %s31, %s34
    %p43 = scmp.eq.s32.totalorder %s14, 1
    %p44 = por %p42, %p43
    %p45 = scmp.ne.s32.totalorder %s34, %s35
    %p46 = scmp.eq.s32.totalorder %s14, 0
    %p47 = por %p45, %p46
    %p48 = scmp.ne.s32.totalorder %s34, %s35
    %p49 = scmp.eq.s32.totalorder %s15, 1
    %p50 = por %p48, %p49
    %p52 = scmp.ne.s32.totalorder %s35, %s51
    %p53 = scmp.eq.s32.totalorder %s15, 0
    %p54 = por %p52, %p53
    %s56 = sadd.s32 %s55, 1
    %p59 = scmp.eq.s32.totalorder %s9, 1
    %p60 = scmp.ne.s32.totalorder %s55, %s57
    %p61 = scmp.eq.s32.totalorder %s9, 0
    %p62 = por %p60, %p61
    %p63 = scmp.ne.s32.totalorder %s55, %s57
    %p64 = scmp.eq.s32.totalorder %s14, 1
    %p65 = por %p63, %p64
    %p66 = scmp.ne.s32.totalorder %s57, %s58
    %p67 = scmp.eq.s32.totalorder %s14, 0
    %p68 = por %p66, %p67
    %p69 = scmp.ne.s32.totalorder %s57, %s58
    %p70 = scmp.eq.s32.totalorder %s15, 1
    %p71 = por %p69, %p70
    %p73 = scmp.ne.s32.totalorder %s58, %s72
    %p74 = scmp.eq.s32.totalorder %s15, 0
    %p75 = por %p73, %p74
    %s77 = sadd.s32 %s76, 1
    %p80 = scmp.eq.s32.totalorder %s9, 1
    %p81 = scmp.ne.s32.totalorder %s76, %s78
    %p82 = scmp.eq.s32.totalorder %s9, 0
    %p83 = por %p81, %p82
    %p84 = scmp.ne.s32.totalorder %s76, %s78
    %p85 = scmp.eq.s32.totalorder %s14, 1
    %p86 = por %p84, %p85
    %p87 = scmp.ne.s32.totalorder %s78, %s79
    %p88 = scmp.eq.s32.totalorder %s14, 0
    %p89 = por %p87, %p88
    %p90 = scmp.ne.s32.totalorder %s78, %s79
    %p91 = scmp.eq.s32.totalorder %s15, 1
    %p92 = por %p90, %p91
    %p94 = scmp.ne.s32.totalorder %s79, %s93
    %p95 = scmp.eq.s32.totalorder %s15, 0
    %p96 = por %p94, %p95
    %s97 = ssub.s32 %s16, %s28
    %s98 = ssub.s32 %s17, %s24
    %s99 = sor.u32 %s97, %s98
    %p100 = scmp.eq.s32.totalorder %s99, 0
    %s102 = sadd.s32 %s101, 1
    %s103 = scalar_select %p100, %s101, %s102
    %p106 = pneg %p100
    %p107 = scmp.eq.s32.totalorder %s9, 1
    %p108 = por %p106, %p107
    %p109 = scmp.ne.s32.totalorder %s101, %s104
    %p110 = scmp.eq.s32.totalorder %s9, 0
    %p111 = por %p109, %p110
    %p112 = scmp.ne.s32.totalorder %s101, %s104
    %p113 = scmp.eq.s32.totalorder %s14, 1
    %p114 = por %p112, %p113
    %p115 = scmp.ne.s32.totalorder %s104, %s105
    %p116 = scmp.eq.s32.totalorder %s14, 0
    %p117 = por %p115, %p116
    %p118 = scmp.ne.s32.totalorder %s104, %s105
    %p119 = scmp.eq.s32.totalorder %s15, 1
    %p120 = por %p118, %p119
    %p122 = scmp.ne.s32.totalorder %s105, %s121
    %p123 = scmp.eq.s32.totalorder %s15, 0
    %p124 = por %p122, %p123
    %p125 = scmp.le.s32.totalorder 1, %s9
    %p126 = scmp.lt.s32.totalorder %s9, 3
    %p127 = pnand %p125, %p126
    %p128 = pneg %p127
    // Predicated region
    $region9: #{deconv_block_forward.1} parent=5 // pred_check
      _
    $region10: #{deconv_block_forward.1} parent=5 // pred_check_branch
      %130 = sbr.rel (%p127) target = $region12
    $region11: #{deconv_block_forward.1} parent=5 // pred_region
      %s131 = ssub.s32 %s9, 1
      // Predicated region
      $region13: #{deconv_block_forward.1} parent=11 // pred_check
        %p132 = pneg %p68
      $region14: #{deconv_block_forward.1} parent=11 // pred_check_branch
        %134 = sbr.rel (%p132) target = $region16
      $region15: #{deconv_block_forward.1} parent=11 // pred_region
        _
      $region16: #{deconv_block_forward.1} parent=11 // pred_fallthru
        _
      // Predicated region
      $region17: #{deconv_block_forward.1} parent=11 // pred_check
        %p135 = pneg %p89
      $region18: #{deconv_block_forward.1} parent=11 // pred_check_branch
        %137 = sbr.rel (%p135) target = $region20
      $region19: #{deconv_block_forward.1} parent=11 // pred_region
        _
      $region20: #{deconv_block_forward.1} parent=11 // pred_fallthru
        _
    $region12: #{deconv_block_forward.1} parent=5 // pred_fallthru
      _
    %p138 = scmp.lt.s32.totalorder %s9, 2
    // Predicated region
    $region21: #{deconv_block_forward.1} parent=5 // pred_check
      %p139 = pneg %p138
    $region22: #{deconv_block_forward.1} parent=5 // pred_check_branch
      %141 = sbr.rel (%p139) target = $region24
    $region23: #{deconv_block_forward.1} parent=5 // pred_region
      // Predicated region
      $region25: #{deconv_block_forward.1} parent=23 // pred_check
        %p142 = pneg %p41
      $region26: #{deconv_block_forward.1} parent=23 // pred_check_branch
        %144 = sbr.rel (%p142) target = $region28
      $region27: #{deconv_block_forward.1} parent=23 // pred_region
        %p145 = scmp.lt.s32.totalorder %s16, 1
        %s146 = scalar_select %p145, %s16, 1
        %s147 = smul.addr %s146, 10
        %s148 = smul.addr %s147, 4
        %s149 = scalar_lea.vmem %s0, %s148
      $region28: #{deconv_block_forward.1} parent=23 // pred_fallthru
        _
    $region24: #{deconv_block_forward.1} parent=5 // pred_fallthru
      _
    %p150 = scmp.le.s32.totalorder 1, %s9
    %p151 = scmp.lt.s32.totalorder %s9, 3
    %p152 = pnand %p150, %p151
    %p153 = pneg %p152
    // Predicated region
    $region29: #{deconv_block_forward.1} parent=5 // pred_check
      _
    $region30: #{deconv_block_forward.1} parent=5 // pred_check_branch
      %155 = sbr.rel (%p152) target = $region32
    $region31: #{deconv_block_forward.1} parent=5 // pred_region
      %s156 = ssub.s32 %s9, 1
      %p157 = scmp.lt.s32.totalorder %s18, 1
      %s158 = scalar_select %p157, %s18, 1
      %s159 = smul.addr %s158, 10
      %s160 = smul.addr %s159, 4
      %s161 = scalar_lea.vmem %s0, %s160
      %p162 = pneg %p47
      %p163 = pneg %p44
      %p164 = pneg %p68
      %p165 = pneg %p65
      %p166 = pneg %p89
      %p167 = pneg %p86
      %p168 = pneg %p117
      %p169 = pneg %p114
      %s170 = smul.u32 5, %s19
      %p171 = scmp.lt.s32.totalorder %s18, 1
      %s172 = scalar_select %p171, %s18, 1
      %p173 = scmp.lt.s32.totalorder %s170, 4
      %s174 = scalar_select %p173, %s170, 4
      %s175 = smul.addr %s172, 40
      %s176 = sadd.s32 %s174, %s175
      %s177 = smul.addr %s176, 8
      %s178 = scalar_lea.vmem %s3, %s177
      %p179 = scmp.lt.s32.totalorder %s18, 1
      %s180 = scalar_select %p179, %s18, 1
      %s181 = smul.addr %s180, 10
      %s182 = smul.addr %s181, 4
      %s183 = scalar_lea.vmem %s0, %s182
      %s184 = smul.u32 5, %s19
      %p185 = scmp.lt.s32.totalorder %s18, 1
      %s186 = scalar_select %p185, %s18, 1
      %p187 = scmp.lt.s32.totalorder %s184, 4
      %s188 = scalar_select %p187, %s184, 4
      %s189 = smul.addr %s186, 40
      %s190 = sadd.s32 %s188, %s189
      %s191 = smul.addr %s190, 8
      %s192 = scalar_lea.vmem %s3, %s191
      %s193 = smul.u32 5, %s19
      %v194 = vld [vmem:[%s183] sm:$0xff]
      %v195 = vld [vmem:[%s183 + $0x8] sm:$0xff]
      %v196 = vld [vmem:[%s183 + $0x10] sm:$0xff]
      %v197 = vld [vmem:[%s183 + $0x18] sm:$0xff]
      %v198 = vld [vmem:[%s183 + $0x20] sm:$0xff]
      %v199 = vld [vmem:[%s1] sm:$0xff]
      %s200 = scalar_lea.vmem %s1, 8
      %v201 = vld [vmem:[%s200] sm:$0xff]
      %v207 = vcombine.high %v194, %v194
      %v208 = vcombine.high %v195, %v195
      %v209 = vcombine.high %v196, %v196
      %v210 = vcombine.high %v197, %v197
      %v211 = vcombine.high %v198, %v198
      %212 = vrot.lane.b32.xlu0 %v194, 127
      %v213 = vpop.permute.xlu0 %212
      %214 = vrot.lane.b32.xlu0 %v207, 127
      %v215 = vpop.permute.xlu0 %214
      %216 = vrot.lane.b32.xlu0 %v195, 127
      %v217 = vpop.permute.xlu0 %216
      %218 = vrot.lane.b32.xlu0 %v208, 127
      %v219 = vpop.permute.xlu0 %218
      %220 = vrot.lane.b32.xlu0 %v196, 127
      %v221 = vpop.permute.xlu0 %220
      %222 = vrot.lane.b32.xlu0 %v209, 127
      %v223 = vpop.permute.xlu0 %222
      %224 = vrot.lane.b32.xlu0 %v197, 127
      %v225 = vpop.permute.xlu0 %224
      %226 = vrot.lane.b32.xlu0 %v210, 127
      %v227 = vpop.permute.xlu0 %226
      %228 = vrot.lane.b32.xlu0 %v198, 127
      %v229 = vpop.permute.xlu0 %228
      %230 = vrot.lane.b32.xlu0 %v211, 127
      %v231 = vpop.permute.xlu0 %230
      %vm232 = vcmask 1039360
      %v233 = vsel %vm232, %v213, %v215
      %v234 = vsel %vm232, %v215, %v217
      %v235 = vsel %vm232, %v217, %v219
      %v236 = vsel %vm232, %v219, %v221
      %v237 = vsel %vm232, %v221, %v223
      %v238 = vsel %vm232, %v223, %v225
      %v239 = vsel %vm232, %v225, %v227
      %v240 = vsel %vm232, %v227, %v229
      %v241 = vsel %vm232, %v229, %v231
      %vm242 = vcmask 31744
      %v244 = vsel %vm242, %v201, 0
      %vm246 = vcmask 1043456
      %v247 = vsel %vm246, %v233, 0
      %v249 = vsel %vm246, %v234, 0
      %v251 = vsel %vm246, %v235, 0
      %v253 = vsel %vm246, %v236, 0
      %v255 = vsel %vm246, %v237, 0
      %v257 = vsel %vm246, %v238, 0
      %v259 = vsel %vm246, %v239, 0
      %v261 = vsel %vm246, %v240, 0
      %v263 = vsel %vm246, %v241, 0
      %v265 = vsel %vm246, %v231, 0
      %267 = vmatprep.subr.mxu0 0.0
      %268 = vmatpush1.msra.mxu0 0.0
      %269 = vmatprep.subr.mxu0 0.0
      %270 = vmatpush1.msra.mxu0 0.0
      %271 = vmatprep.subr.mxu0 0.0
      %272 = vmatpush1.msra.mxu0 0.0
      %273 = vmatprep.subr.mxu0 0.0
      %274 = vmatpush1.msra.mxu0 0.0
      %275 = vmatprep.subr.mxu0 0.0
      %276 = vmatpush1.msra.mxu0 0.0
      %277 = vmatprep.subr.mxu0 0.0
      %278 = vmatpush1.msra.mxu0 0.0
      %279 = vmatprep.subr.mxu0 0.0
      %280 = vmatpush1.msra.mxu0 0.0
      %281 = vmatprep.subr.mxu0 0.0
      %282 = vmatpush1.msra.mxu0 0.0
      %283 = vmatprep.subr.mxu0 0.0
      %284 = vmatpush1.msra.mxu0 0.0
      %285 = vmatprep.subr.mxu0 0.0
      %286 = vmatpush1.msra.mxu0 0.0
      %287 = vmatprep.subr.mxu0 0.0
      %288 = vmatpush1.msra.mxu0 0.0
      %289 = vmatprep.subr.mxu0 0.0
      %290 = vmatpush1.msra.mxu0 0.0
      %291 = vmatprep.subr.mxu0 0.0
      %292 = vmatpush1.msra.mxu0 0.0
      %293 = vmatprep.subr.mxu0 0.0
      %294 = vmatpush1.msra.mxu0 0.0
      %295 = vmatprep.subr.mxu0 0.0
      %296 = vmatpush1.msra.mxu0 0.0
      %297 = vmatprep.subr.mxu0 %v249
      %298 = vmatpush1.msra.mxu0 %v247
      %299 = vmatprep.subr.mxu0 0.0
      %300 = vmatpush2.msra.mxu0 0.0
      %301 = vmatprep.subr.mxu0 0.0
      %302 = vmatpush2.msra.mxu0 0.0
      %303 = vmatprep.subr.mxu0 0.0
      %304 = vmatpush2.msra.mxu0 0.0
      %305 = vmatprep.subr.mxu0 0.0
      %306 = vmatpush2.msra.mxu0 0.0
      %307 = vmatprep.subr.mxu0 0.0
      %308 = vmatpush2.msra.mxu0 0.0
      %309 = vmatprep.subr.mxu0 0.0
      %310 = vmatpush2.msra.mxu0 0.0
      %311 = vmatprep.subr.mxu0 0.0
      %312 = vmatpush2.msra.mxu0 0.0
      %313 = vmatprep.subr.mxu0 0.0
      %314 = vmatpush2.msra.mxu0 0.0
      %315 = vmatprep.subr.mxu0 0.0
      %316 = vmatpush2.msra.mxu0 0.0
      %317 = vmatprep.subr.mxu0 0.0
      %318 = vmatpush2.msra.mxu0 0.0
      %319 = vmatprep.subr.mxu0 0.0
      %320 = vmatpush2.msra.mxu0 0.0
      %321 = vmatprep.subr.mxu0 0.0
      %322 = vmatpush2.msra.mxu0 0.0
      %323 = vmatprep.subr.mxu0 0.0
      %324 = vmatpush2.msra.mxu0 0.0
      %325 = vmatprep.subr.mxu0 0.0
      %326 = vmatpush2.msra.mxu0 0.0
      %327 = vmatprep.subr.mxu0 0.0
      %328 = vmatpush2.msra.mxu0 0.0
      %329 = vmatprep.subr.mxu0 0.0
      %330 = vmatpush2.msra.mxu0 0.0
      %331 = vmatprep.mubr.f32.mxu0 0.0
      %332 = vmatmul.mubr.f32.gmra.mxu0 %v244
      %v333 = vpop.f32.mrf.mxu0
      %v334 = vadd.f32 0.0, %v333
      %v335 = vpop.f32.mrf.mxu0
      %v336 = vadd.f32 0.0, %v335
      %337 = vdwg.mxu0
      %338 = vmatprep.subr.mxu0 0.0
      %339 = vmatpush1.msra.mxu0 0.0
      %340 = vmatprep.subr.mxu0 0.0
      %341 = vmatpush1.msra.mxu0 0.0
      %342 = vmatprep.subr.mxu0 0.0
      %343 = vmatpush1.msra.mxu0 0.0
      %344 = vmatprep.subr.mxu0 0.0
      %345 = vmatpush1.msra.mxu0 0.0
      %346 = vmatprep.subr.mxu0 0.0
      %347 = vmatpush1.msra.mxu0 0.0
      %348 = vmatprep.subr.mxu0 0.0
      %349 = vmatpush1.msra.mxu0 0.0
      %350 = vmatprep.subr.mxu0 0.0
      %351 = vmatpush1.msra.mxu0 0.0
      %352 = vmatprep.subr.mxu0 0.0
      %353 = vmatpush1.msra.mxu0 0.0
      %354 = vmatprep.subr.mxu0 0.0
      %355 = vmatpush1.msra.mxu0 0.0
      %356 = vmatprep.subr.mxu0 0.0
      %357 = vmatpush1.msra.mxu0 0.0
      %358 = vmatprep.subr.mxu0 0.0
      %359 = vmatpush1.msra.mxu0 0.0
      %360 = vmatprep.subr.mxu0 0.0
      %361 = vmatpush1.msra.mxu0 0.0
      %362 = vmatprep.subr.mxu0 0.0
      %363 = vmatpush1.msra.mxu0 0.0
      %364 = vmatprep.subr.mxu0 0.0
      %365 = vmatpush1.msra.mxu0 0.0
      %366 = vmatprep.subr.mxu0 0.0
      %367 = vmatpush1.msra.mxu0 0.0
      %368 = vmatprep.subr.mxu0 %v253
      %369 = vmatpush1.msra.mxu0 %v251
      %370 = vmatprep.subr.mxu0 0.0
      %371 = vmatpush2.msra.mxu0 0.0
      %372 = vmatprep.subr.mxu0 0.0
      %373 = vmatpush2.msra.mxu0 0.0
      %374 = vmatprep.subr.mxu0 0.0
      %375 = vmatpush2.msra.mxu0 0.0
      %376 = vmatprep.subr.mxu0 0.0
      %377 = vmatpush2.msra.mxu0 0.0
      %378 = vmatprep.subr.mxu0 0.0
      %379 = vmatpush2.msra.mxu0 0.0
      %380 = vmatprep.subr.mxu0 0.0
      %381 = vmatpush2.msra.mxu0 0.0
      %382 = vmatprep.subr.mxu0 0.0
      %383 = vmatpush2.msra.mxu0 0.0
      %384 = vmatprep.subr.mxu0 0.0
      %385 = vmatpush2.msra.mxu0 0.0
      %386 = vmatprep.subr.mxu0 0.0
      %387 = vmatpush2.msra.mxu0 0.0
      %388 = vmatprep.subr.mxu0 0.0
      %389 = vmatpush2.msra.mxu0 0.0
      %390 = vmatprep.subr.mxu0 0.0
      %391 = vmatpush2.msra.mxu0 0.0
      %392 = vmatprep.subr.mxu0 0.0
      %393 = vmatpush2.msra.mxu0 0.0
      %394 = vmatprep.subr.mxu0 0.0
      %395 = vmatpush2.msra.mxu0 0.0
      %396 = vmatprep.subr.mxu0 0.0
      %397 = vmatpush2.msra.mxu0 0.0
      %398 = vmatprep.subr.mxu0 0.0
      %399 = vmatpush2.msra.mxu0 0.0
      %400 = vmatprep.subr.mxu0 0.0
      %401 = vmatpush2.msra.mxu0 0.0
      %402 = vmatprep.mubr.f32.mxu0 0.0
      %403 = vmatmul.mubr.f32.gmra.mxu0 %v244
      %v404 = vpop.f32.mrf.mxu0
      %v405 = vadd.f32 0.0, %v404
      %v406 = vpop.f32.mrf.mxu0
      %v407 = vadd.f32 0.0, %v406
      %408 = vdwg.mxu0
      %409 = vmatprep.subr.mxu0 0.0
      %410 = vmatpush1.msra.mxu0 0.0
      %411 = vmatprep.subr.mxu0 0.0
      %412 = vmatpush1.msra.mxu0 0.0
      %413 = vmatprep.subr.mxu0 0.0
      %414 = vmatpush1.msra.mxu0 0.0
      %415 = vmatprep.subr.mxu0 0.0
      %416 = vmatpush1.msra.mxu0 0.0
      %417 = vmatprep.subr.mxu0 0.0
      %418 = vmatpush1.msra.mxu0 0.0
      %419 = vmatprep.subr.mxu0 0.0
      %420 = vmatpush1.msra.mxu0 0.0
      %421 = vmatprep.subr.mxu0 0.0
      %422 = vmatpush1.msra.mxu0 0.0
      %423 = vmatprep.subr.mxu0 0.0
      %424 = vmatpush1.msra.mxu0 0.0
      %425 = vmatprep.subr.mxu0 0.0
      %426 = vmatpush1.msra.mxu0 0.0
      %427 = vmatprep.subr.mxu0 0.0
      %428 = vmatpush1.msra.mxu0 0.0
      %429 = vmatprep.subr.mxu0 0.0
      %430 = vmatpush1.msra.mxu0 0.0
      %431 = vmatprep.subr.mxu0 0.0
      %432 = vmatpush1.msra.mxu0 0.0
      %433 = vmatprep.subr.mxu0 0.0
      %434 = vmatpush1.msra.mxu0 0.0
      %435 = vmatprep.subr.mxu0 0.0
      %436 = vmatpush1.msra.mxu0 0.0
      %437 = vmatprep.subr.mxu0 0.0
      %438 = vmatpush1.msra.mxu0 0.0
      %439 = vmatprep.subr.mxu0 %v257
      %440 = vmatpush1.msra.mxu0 %v255
      %441 = vmatprep.subr.mxu0 0.0
      %442 = vmatpush2.msra.mxu0 0.0
      %443 = vmatprep.subr.mxu0 0.0
      %444 = vmatpush2.msra.mxu0 0.0
      %445 = vmatprep.subr.mxu0 0.0
      %446 = vmatpush2.msra.mxu0 0.0
      %447 = vmatprep.subr.mxu0 0.0
      %448 = vmatpush2.msra.mxu0 0.0
      %449 = vmatprep.subr.mxu0 0.0
      %450 = vmatpush2.msra.mxu0 0.0
      %451 = vmatprep.subr.mxu0 0.0
      %452 = vmatpush2.msra.mxu0 0.0
      %453 = vmatprep.subr.mxu0 0.0
      %454 = vmatpush2.msra.mxu0 0.0
      %455 = vmatprep.subr.mxu0 0.0
      %456 = vmatpush2.msra.mxu0 0.0
      %457 = vmatprep.subr.mxu0 0.0
      %458 = vmatpush2.msra.mxu0 0.0
      %459 = vmatprep.subr.mxu0 0.0
      %460 = vmatpush2.msra.mxu0 0.0
      %461 = vmatprep.subr.mxu0 0.0
      %462 = vmatpush2.msra.mxu0 0.0
      %463 = vmatprep.subr.mxu0 0.0
      %464 = vmatpush2.msra.mxu0 0.0
      %465 = vmatprep.subr.mxu0 0.0
      %466 = vmatpush2.msra.mxu0 0.0
      %467 = vmatprep.subr.mxu0 0.0
      %468 = vmatpush2.msra.mxu0 0.0
      %469 = vmatprep.subr.mxu0 0.0
      %470 = vmatpush2.msra.mxu0 0.0
      %471 = vmatprep.subr.mxu0 0.0
      %472 = vmatpush2.msra.mxu0 0.0
      %473 = vmatprep.mubr.f32.mxu0 0.0
      %474 = vmatmul.mubr.f32.gmra.mxu0 %v244
      %v475 = vpop.f32.mrf.mxu0
      %v476 = vadd.f32 0.0, %v475
      %v477 = vpop.f32.mrf.mxu0
      %v478 = vadd.f32 0.0, %v477
      %479 = vdwg.mxu0
      %480 = vmatprep.subr.mxu0 0.0
      %481 = vmatpush1.msra.mxu0 0.0
      %482 = vmatprep.subr.mxu0 0.0
      %483 = vmatpush1.msra.mxu0 0.0
      %484 = vmatprep.subr.mxu0 0.0
      %485 = vmatpush1.msra.mxu0 0.0
      %486 = vmatprep.subr.mxu0 0.0
      %487 = vmatpush1.msra.mxu0 0.0
      %488 = vmatprep.subr.mxu0 0.0
      %489 = vmatpush1.msra.mxu0 0.0
      %490 = vmatprep.subr.mxu0 0.0
      %491 = vmatpush1.msra.mxu0 0.0
      %492 = vmatprep.subr.mxu0 0.0
      %493 = vmatpush1.msra.mxu0 0.0
      %494 = vmatprep.subr.mxu0 0.0
      %495 = vmatpush1.msra.mxu0 0.0
      %496 = vmatprep.subr.mxu0 0.0
      %497 = vmatpush1.msra.mxu0 0.0
      %498 = vmatprep.subr.mxu0 0.0
      %499 = vmatpush1.msra.mxu0 0.0
      %500 = vmatprep.subr.mxu0 0.0
      %501 = vmatpush1.msra.mxu0 0.0
      %502 = vmatprep.subr.mxu0 0.0
      %503 = vmatpush1.msra.mxu0 0.0
      %504 = vmatprep.subr.mxu0 0.0
      %505 = vmatpush1.msra.mxu0 0.0
      %506 = vmatprep.subr.mxu0 0.0
      %507 = vmatpush1.msra.mxu0 0.0
      %508 = vmatprep.subr.mxu0 0.0
      %509 = vmatpush1.msra.mxu0 0.0
      %510 = vmatprep.subr.mxu0 %v261
      %511 = vmatpush1.msra.mxu0 %v259
      %512 = vmatprep.subr.mxu0 0.0
      %513 = vmatpush2.msra.mxu0 0.0
      %514 = vmatprep.subr.mxu0 0.0
      %515 = vmatpush2.msra.mxu0 0.0
      %516 = vmatprep.subr.mxu0 0.0
      %517 = vmatpush2.msra.mxu0 0.0
      %518 = vmatprep.subr.mxu0 0.0
      %519 = vmatpush2.msra.mxu0 0.0
      %520 = vmatprep.subr.mxu0 0.0
      %521 = vmatpush2.msra.mxu0 0.0
      %522 = vmatprep.subr.mxu0 0.0
      %523 = vmatpush2.msra.mxu0 0.0
      %524 = vmatprep.subr.mxu0 0.0
      %525 = vmatpush2.msra.mxu0 0.0
      %526 = vmatprep.subr.mxu0 0.0
      %527 = vmatpush2.msra.mxu0 0.0
      %528 = vmatprep.subr.mxu0 0.0
      %529 = vmatpush2.msra.mxu0 0.0
      %530 = vmatprep.subr.mxu0 0.0
      %531 = vmatpush2.msra.mxu0 0.0
      %532 = vmatprep.subr.mxu0 0.0
      %533 = vmatpush2.msra.mxu0 0.0
      %534 = vmatprep.subr.mxu0 0.0
      %535 = vmatpush2.msra.mxu0 0.0
      %536 = vmatprep.subr.mxu0 0.0
      %537 = vmatpush2.msra.mxu0 0.0
      %538 = vmatprep.subr.mxu0 0.0
      %539 = vmatpush2.msra.mxu0 0.0
      %540 = vmatprep.subr.mxu0 0.0
      %541 = vmatpush2.msra.mxu0 0.0
      %542 = vmatprep.subr.mxu0 0.0
      %543 = vmatpush2.msra.mxu0 0.0
      %544 = vmatprep.mubr.f32.mxu0 0.0
      %545 = vmatmul.mubr.f32.gmra.mxu0 %v244
      %v546 = vpop.f32.mrf.mxu0
      %v547 = vadd.f32 0.0, %v546
      %v548 = vpop.f32.mrf.mxu0
      %v549 = vadd.f32 0.0, %v548
      %550 = vdwg.mxu0
      %551 = vmatprep.subr.mxu0 0.0
      %552 = vmatpush1.msra.mxu0 0.0
      %553 = vmatprep.subr.mxu0 0.0
      %554 = vmatpush1.msra.mxu0 0.0
      %555 = vmatprep.subr.mxu0 0.0
      %556 = vmatpush1.msra.mxu0 0.0
      %557 = vmatprep.subr.mxu0 0.0
      %558 = vmatpush1.msra.mxu0 0.0
      %559 = vmatprep.subr.mxu0 0.0
      %560 = vmatpush1.msra.mxu0 0.0
      %561 = vmatprep.subr.mxu0 0.0
      %562 = vmatpush1.msra.mxu0 0.0
      %563 = vmatprep.subr.mxu0 0.0
      %564 = vmatpush1.msra.mxu0 0.0
      %565 = vmatprep.subr.mxu0 0.0
      %566 = vmatpush1.msra.mxu0 0.0
      %567 = vmatprep.subr.mxu0 0.0
      %568 = vmatpush1.msra.mxu0 0.0
      %569 = vmatprep.subr.mxu0 0.0
      %570 = vmatpush1.msra.mxu0 0.0
      %571 = vmatprep.subr.mxu0 0.0
      %572 = vmatpush1.msra.mxu0 0.0
      %573 = vmatprep.subr.mxu0 0.0
      %574 = vmatpush1.msra.mxu0 0.0
      %575 = vmatprep.subr.mxu0 0.0
      %576 = vmatpush1.msra.mxu0 0.0
      %577 = vmatprep.subr.mxu0 0.0
      %578 = vmatpush1.msra.mxu0 0.0
      %579 = vmatprep.subr.mxu0 0.0
      %580 = vmatpush1.msra.mxu0 0.0
      %581 = vmatprep.subr.mxu0 %v265
      %582 = vmatpush1.msra.mxu0 %v263
      %583 = vmatprep.subr.mxu0 0.0
      %584 = vmatpush2.msra.mxu0 0.0
      %585 = vmatprep.subr.mxu0 0.0
      %586 = vmatpush2.msra.mxu0 0.0
      %587 = vmatprep.subr.mxu0 0.0
      %588 = vmatpush2.msra.mxu0 0.0
      %589 = vmatprep.subr.mxu0 0.0
      %590 = vmatpush2.msra.mxu0 0.0
      %591 = vmatprep.subr.mxu0 0.0
      %592 = vmatpush2.msra.mxu0 0.0
      %593 = vmatprep.subr.mxu0 0.0
      %594 = vmatpush2.msra.mxu0 0.0
      %595 = vmatprep.subr.mxu0 0.0
      %596 = vmatpush2.msra.mxu0 0.0
      %597 = vmatprep.subr.mxu0 0.0
      %598 = vmatpush2.msra.mxu0 0.0
      %599 = vmatprep.subr.mxu0 0.0
      %600 = vmatpush2.msra.mxu0 0.0
      %601 = vmatprep.subr.mxu0 0.0
      %602 = vmatpush2.msra.mxu0 0.0
      %603 = vmatprep.subr.mxu0 0.0
      %604 = vmatpush2.msra.mxu0 0.0
      %605 = vmatprep.subr.mxu0 0.0
      %606 = vmatpush2.msra.mxu0 0.0
      %607 = vmatprep.subr.mxu0 0.0
      %608 = vmatpush2.msra.mxu0 0.0
      %609 = vmatprep.subr.mxu0 0.0
      %610 = vmatpush2.msra.mxu0 0.0
      %611 = vmatprep.subr.mxu0 0.0
      %612 = vmatpush2.msra.mxu0 0.0
      %613 = vmatprep.subr.mxu0 0.0
      %614 = vmatpush2.msra.mxu0 0.0
      %615 = vmatprep.mubr.f32.mxu0 0.0
      %616 = vmatmul.mubr.f32.gmra.mxu0 %v244
      %v617 = vpop.f32.mrf.mxu0
      %v618 = vadd.f32 0.0, %v617
      %v619 = vpop.f32.mrf.mxu0
      %v620 = vadd.f32 0.0, %v619
      %621 = vdwg.mxu0
      %v623 = vsel %vm242, %v199, 0
      %v625 = vsel %vm246, %v194, 0
      %v627 = vsel %vm246, %v207, 0
      %v629 = vsel %vm246, %v195, 0
      %v631 = vsel %vm246, %v208, 0
      %v633 = vsel %vm246, %v196, 0
      %v635 = vsel %vm246, %v209, 0
      %v637 = vsel %vm246, %v197, 0
      %v639 = vsel %vm246, %v210, 0
      %v641 = vsel %vm246, %v198, 0
      %v643 = vsel %vm246, %v211, 0
      %645 = vmatprep.subr.mxu0 0.0
      %646 = vmatpush1.msra.mxu0 0.0
      %647 = vmatprep.subr.mxu0 0.0
      %648 = vmatpush1.msra.mxu0 0.0
      %649 = vmatprep.subr.mxu0 0.0
      %650 = vmatpush1.msra.mxu0 0.0
      %651 = vmatprep.subr.mxu0 0.0
      %652 = vmatpush1.msra.mxu0 0.0
      %653 = vmatprep.subr.mxu0 0.0
      %654 = vmatpush1.msra.mxu0 0.0
      %655 = vmatprep.subr.mxu0 0.0
      %656 = vmatpush1.msra.mxu0 0.0
      %657 = vmatprep.subr.mxu0 0.0
      %658 = vmatpush1.msra.mxu0 0.0
      %659 = vmatprep.subr.mxu0 0.0
      %660 = vmatpush1.msra.mxu0 0.0
      %661 = vmatprep.subr.mxu0 0.0
      %662 = vmatpush1.msra.mxu0 0.0
      %663 = vmatprep.subr.mxu0 0.0
      %664 = vmatpush1.msra.mxu0 0.0
      %665 = vmatprep.subr.mxu0 0.0
      %666 = vmatpush1.msra.mxu0 0.0
      %667 = vmatprep.subr.mxu0 0.0
      %668 = vmatpush1.msra.mxu0 0.0
      %669 = vmatprep.subr.mxu0 0.0
      %670 = vmatpush1.msra.mxu0 0.0
      %671 = vmatprep.subr.mxu0 0.0
      %672 = vmatpush1.msra.mxu0 0.0
      %673 = vmatprep.subr.mxu0 0.0
      %674 = vmatpush1.msra.mxu0 0.0
      %675 = vmatprep.subr.mxu0 %v627
      %676 = vmatpush1.msra.mxu0 %v625
      %677 = vmatprep.subr.mxu0 0.0
      %678 = vmatpush2.msra.mxu0 0.0
      %679 = vmatprep.subr.mxu0 0.0
      %680 = vmatpush2.msra.mxu0 0.0
      %681 = vmatprep.subr.mxu0 0.0
      %682 = vmatpush2.msra.mxu0 0.0
      %683 = vmatprep.subr.mxu0 0.0
      %684 = vmatpush2.msra.mxu0 0.0
      %685 = vmatprep.subr.mxu0 0.0
      %686 = vmatpush2.msra.mxu0 0.0
      %687 = vmatprep.subr.mxu0 0.0
      %688 = vmatpush2.msra.mxu0 0.0
      %689 = vmatprep.subr.mxu0 0.0
      %690 = vmatpush2.msra.mxu0 0.0
      %691 = vmatprep.subr.mxu0 0.0
      %692 = vmatpush2.msra.mxu0 0.0
      %693 = vmatprep.subr.mxu0 0.0
      %694 = vmatpush2.msra.mxu0 0.0
      %695 = vmatprep.subr.mxu0 0.0
      %696 = vmatpush2.msra.mxu0 0.0
      %697 = vmatprep.subr.mxu0 0.0
      %698 = vmatpush2.msra.mxu0 0.0
      %699 = vmatprep.subr.mxu0 0.0
      %700 = vmatpush2.msra.mxu0 0.0
      %701 = vmatprep.subr.mxu0 0.0
      %702 = vmatpush2.msra.mxu0 0.0
      %703 = vmatprep.subr.mxu0 0.0
      %704 = vmatpush2.msra.mxu0 0.0
      %705 = vmatprep.subr.mxu0 0.0
      %706 = vmatpush2.msra.mxu0 0.0
      %707 = vmatprep.subr.mxu0 0.0
      %708 = vmatpush2.msra.mxu0 0.0
      %709 = vmatprep.mubr.f32.mxu0 0.0
      %710 = vmatmul.mubr.f32.gmra.mxu0 %v623
      %v711 = vpop.f32.mrf.mxu0
      %v712 = vadd.f32 %v334, %v711
      %v713 = vpop.f32.mrf.mxu0
      %v714 = vadd.f32 %v336, %v713
      %715 = vdwg.mxu0
      %716 = vmatprep.subr.mxu0 0.0
      %717 = vmatpush1.msra.mxu0 0.0
      %718 = vmatprep.subr.mxu0 0.0
      %719 = vmatpush1.msra.mxu0 0.0
      %720 = vmatprep.subr.mxu0 0.0
      %721 = vmatpush1.msra.mxu0 0.0
      %722 = vmatprep.subr.mxu0 0.0
      %723 = vmatpush1.msra.mxu0 0.0
      %724 = vmatprep.subr.mxu0 0.0
      %725 = vmatpush1.msra.mxu0 0.0
      %726 = vmatprep.subr.mxu0 0.0
      %727 = vmatpush1.msra.mxu0 0.0
      %728 = vmatprep.subr.mxu0 0.0
      %729 = vmatpush1.msra.mxu0 0.0
      %730 = vmatprep.subr.mxu0 0.0
      %731 = vmatpush1.msra.mxu0 0.0
      %732 = vmatprep.subr.mxu0 0.0
      %733 = vmatpush1.msra.mxu0 0.0
      %734 = vmatprep.subr.mxu0 0.0
      %735 = vmatpush1.msra.mxu0 0.0
      %736 = vmatprep.subr.mxu0 0.0
      %737 = vmatpush1.msra.mxu0 0.0
      %738 = vmatprep.subr.mxu0 0.0
      %739 = vmatpush1.msra.mxu0 0.0
      %740 = vmatprep.subr.mxu0 0.0
      %741 = vmatpush1.msra.mxu0 0.0
      %742 = vmatprep.subr.mxu0 0.0
      %743 = vmatpush1.msra.mxu0 0.0
      %744 = vmatprep.subr.mxu0 0.0
      %745 = vmatpush1.msra.mxu0 0.0
      %746 = vmatprep.subr.mxu0 %v631
      %747 = vmatpush1.msra.mxu0 %v629
      %748 = vmatprep.subr.mxu0 0.0
      %749 = vmatpush2.msra.mxu0 0.0
      %750 = vmatprep.subr.mxu0 0.0
      %751 = vmatpush2.msra.mxu0 0.0
      %752 = vmatprep.subr.mxu0 0.0
      %753 = vmatpush2.msra.mxu0 0.0
      %754 = vmatprep.subr.mxu0 0.0
      %755 = vmatpush2.msra.mxu0 0.0
      %756 = vmatprep.subr.mxu0 0.0
      %757 = vmatpush2.msra.mxu0 0.0
      %758 = vmatprep.subr.mxu0 0.0
      %759 = vmatpush2.msra.mxu0 0.0
      %760 = vmatprep.subr.mxu0 0.0
      %761 = vmatpush2.msra.mxu0 0.0
      %762 = vmatprep.subr.mxu0 0.0
      %763 = vmatpush2.msra.mxu0 0.0
      %764 = vmatprep.subr.mxu0 0.0
      %765 = vmatpush2.msra.mxu0 0.0
      %766 = vmatprep.subr.mxu0 0.0
      %767 = vmatpush2.msra.mxu0 0.0
      %768 = vmatprep.subr.mxu0 0.0
      %769 = vmatpush2.msra.mxu0 0.0
      %770 = vmatprep.subr.mxu0 0.0
      %771 = vmatpush2.msra.mxu0 0.0
      %772 = vmatprep.subr.mxu0 0.0
      %773 = vmatpush2.msra.mxu0 0.0
      %774 = vmatprep.subr.mxu0 0.0
      %775 = vmatpush2.msra.mxu0 0.0
      %776 = vmatprep.subr.mxu0 0.0
      %777 = vmatpush2.msra.mxu0 0.0
      %778 = vmatprep.subr.mxu0 0.0
      %779 = vmatpush2.msra.mxu0 0.0
      %780 = vmatprep.mubr.f32.mxu0 0.0
      %781 = vmatmul.mubr.f32.gmra.mxu0 %v623
      %v782 = vpop.f32.mrf.mxu0
      %v783 = vadd.f32 %v405, %v782
      %v784 = vpop.f32.mrf.mxu0
      %v785 = vadd.f32 %v407, %v784
      %786 = vdwg.mxu0
      %787 = vmatprep.subr.mxu0 0.0
      %788 = vmatpush1.msra.mxu0 0.0
      %789 = vmatprep.subr.mxu0 0.0
      %790 = vmatpush1.msra.mxu0 0.0
      %791 = vmatprep.subr.mxu0 0.0
      %792 = vmatpush1.msra.mxu0 0.0
      %793 = vmatprep.subr.mxu0 0.0
      %794 = vmatpush1.msra.mxu0 0.0
      %795 = vmatprep.subr.mxu0 0.0
      %796 = vmatpush1.msra.mxu0 0.0
      %797 = vmatprep.subr.mxu0 0.0
      %798 = vmatpush1.msra.mxu0 0.0
      %799 = vmatprep.subr.mxu0 0.0
      %800 = vmatpush1.msra.mxu0 0.0
      %801 = vmatprep.subr.mxu0 0.0
      %802 = vmatpush1.msra.mxu0 0.0
      %803 = vmatprep.subr.mxu0 0.0
      %804 = vmatpush1.msra.mxu0 0.0
      %805 = vmatprep.subr.mxu0 0.0
      %806 = vmatpush1.msra.mxu0 0.0
      %807 = vmatprep.subr.mxu0 0.0
      %808 = vmatpush1.msra.mxu0 0.0
      %809 = vmatprep.subr.mxu0 0.0
      %810 = vmatpush1.msra.mxu0 0.0
      %811 = vmatprep.subr.mxu0 0.0
      %812 = vmatpush1.msra.mxu0 0.0
      %813 = vmatprep.subr.mxu0 0.0
      %814 = vmatpush1.msra.mxu0 0.0
      %815 = vmatprep.subr.mxu0 0.0
      %816 = vmatpush1.msra.mxu0 0.0
      %817 = vmatprep.subr.mxu0 %v635
      %818 = vmatpush1.msra.mxu0 %v633
      %819 = vmatprep.subr.mxu0 0.0
      %820 = vmatpush2.msra.mxu0 0.0
      %821 = vmatprep.subr.mxu0 0.0
      %822 = vmatpush2.msra.mxu0 0.0
      %823 = vmatprep.subr.mxu0 0.0
      %824 = vmatpush2.msra.mxu0 0.0
      %825 = vmatprep.subr.mxu0 0.0
      %826 = vmatpush2.msra.mxu0 0.0
      %827 = vmatprep.subr.mxu0 0.0
      %828 = vmatpush2.msra.mxu0 0.0
      %829 = vmatprep.subr.mxu0 0.0
      %830 = vmatpush2.msra.mxu0 0.0
      %831 = vmatprep.subr.mxu0 0.0
      %832 = vmatpush2.msra.mxu0 0.0
      %833 = vmatprep.subr.mxu0 0.0
      %834 = vmatpush2.msra.mxu0 0.0
      %835 = vmatprep.subr.mxu0 0.0
      %836 = vmatpush2.msra.mxu0 0.0
      %837 = vmatprep.subr.mxu0 0.0
      %838 = vmatpush2.msra.mxu0 0.0
      %839 = vmatprep.subr.mxu0 0.0
      %840 = vmatpush2.msra.mxu0 0.0
      %841 = vmatprep.subr.mxu0 0.0
      %842 = vmatpush2.msra.mxu0 0.0
      %843 = vmatprep.subr.mxu0 0.0
      %844 = vmatpush2.msra.mxu0 0.0
      %845 = vmatprep.subr.mxu0 0.0
      %846 = vmatpush2.msra.mxu0 0.0
      %847 = vmatprep.subr.mxu0 0.0
      %848 = vmatpush2.msra.mxu0 0.0
      %849 = vmatprep.subr.mxu0 0.0
      %850 = vmatpush2.msra.mxu0 0.0
      %851 = vmatprep.mubr.f32.mxu0 0.0
      %852 = vmatmul.mubr.f32.gmra.mxu0 %v623
      %v853 = vpop.f32.mrf.mxu0
      %v854 = vadd.f32 %v476, %v853
      %v855 = vpop.f32.mrf.mxu0
      %v856 = vadd.f32 %v478, %v855
      %857 = vdwg.mxu0
      %858 = vmatprep.subr.mxu0 0.0
      %859 = vmatpush1.msra.mxu0 0.0
      %860 = vmatprep.subr.mxu0 0.0
      %861 = vmatpush1.msra.mxu0 0.0
      %862 = vmatprep.subr.mxu0 0.0
      %863 = vmatpush1.msra.mxu0 0.0
      %864 = vmatprep.subr.mxu0 0.0
      %865 = vmatpush1.msra.mxu0 0.0
      %866 = vmatprep.subr.mxu0 0.0
      %867 = vmatpush1.msra.mxu0 0.0
      %868 = vmatprep.subr.mxu0 0.0
      %869 = vmatpush1.msra.mxu0 0.0
      %870 = vmatprep.subr.mxu0 0.0
      %871 = vmatpush1.msra.mxu0 0.0
      %872 = vmatprep.subr.mxu0 0.0
      %873 = vmatpush1.msra.mxu0 0.0
      %874 = vmatprep.subr.mxu0 0.0
      %875 = vmatpush1.msra.mxu0 0.0
      %876 = vmatprep.subr.mxu0 0.0
      %877 = vmatpush1.msra.mxu0 0.0
      %878 = vmatprep.subr.mxu0 0.0
      %879 = vmatpush1.msra.mxu0 0.0
      %880 = vmatprep.subr.mxu0 0.0
      %881 = vmatpush1.msra.mxu0 0.0
      %882 = vmatprep.subr.mxu0 0.0
      %883 = vmatpush1.msra.mxu0 0.0
      %884 = vmatprep.subr.mxu0 0.0
      %885 = vmatpush1.msra.mxu0 0.0
      %886 = vmatprep.subr.mxu0 0.0
      %887 = vmatpush1.msra.mxu0 0.0
      %888 = vmatprep.subr.mxu0 %v639
      %889 = vmatpush1.msra.mxu0 %v637
      %890 = vmatprep.subr.mxu0 0.0
      %891 = vmatpush2.msra.mxu0 0.0
      %892 = vmatprep.subr.mxu0 0.0
      %893 = vmatpush2.msra.mxu0 0.0
      %894 = vmatprep.subr.mxu0 0.0
      %895 = vmatpush2.msra.mxu0 0.0
      %896 = vmatprep.subr.mxu0 0.0
      %897 = vmatpush2.msra.mxu0 0.0
      %898 = vmatprep.subr.mxu0 0.0
      %899 = vmatpush2.msra.mxu0 0.0
      %900 = vmatprep.subr.mxu0 0.0
      %901 = vmatpush2.msra.mxu0 0.0
      %902 = vmatprep.subr.mxu0 0.0
      %903 = vmatpush2.msra.mxu0 0.0
      %904 = vmatprep.subr.mxu0 0.0
      %905 = vmatpush2.msra.mxu0 0.0
      %906 = vmatprep.subr.mxu0 0.0
      %907 = vmatpush2.msra.mxu0 0.0
      %908 = vmatprep.subr.mxu0 0.0
      %909 = vmatpush2.msra.mxu0 0.0
      %910 = vmatprep.subr.mxu0 0.0
      %911 = vmatpush2.msra.mxu0 0.0
      %912 = vmatprep.subr.mxu0 0.0
      %913 = vmatpush2.msra.mxu0 0.0
      %914 = vmatprep.subr.mxu0 0.0
      %915 = vmatpush2.msra.mxu0 0.0
      %916 = vmatprep.subr.mxu0 0.0
      %917 = vmatpush2.msra.mxu0 0.0
      %918 = vmatprep.subr.mxu0 0.0
      %919 = vmatpush2.msra.mxu0 0.0
      %920 = vmatprep.subr.mxu0 0.0
      %921 = vmatpush2.msra.mxu0 0.0
      %922 = vmatprep.mubr.f32.mxu0 0.0
      %923 = vmatmul.mubr.f32.gmra.mxu0 %v623
      %v924 = vpop.f32.mrf.mxu0
      %v925 = vadd.f32 %v547, %v924
      %v926 = vpop.f32.mrf.mxu0
      %v927 = vadd.f32 %v549, %v926
      %928 = vdwg.mxu0
      %929 = vmatprep.subr.mxu0 0.0
      %930 = vmatpush1.msra.mxu0 0.0
      %931 = vmatprep.subr.mxu0 0.0
      %932 = vmatpush1.msra.mxu0 0.0
      %933 = vmatprep.subr.mxu0 0.0
      %934 = vmatpush1.msra.mxu0 0.0
      %935 = vmatprep.subr.mxu0 0.0
      %936 = vmatpush1.msra.mxu0 0.0
      %937 = vmatprep.subr.mxu0 0.0
      %938 = vmatpush1.msra.mxu0 0.0
      %939 = vmatprep.subr.mxu0 0.0
      %940 = vmatpush1.msra.mxu0 0.0
      %941 = vmatprep.subr.mxu0 0.0
      %942 = vmatpush1.msra.mxu0 0.0
      %943 = vmatprep.subr.mxu0 0.0
      %944 = vmatpush1.msra.mxu0 0.0
      %945 = vmatprep.subr.mxu0 0.0
      %946 = vmatpush1.msra.mxu0 0.0
      %947 = vmatprep.subr.mxu0 0.0
      %948 = vmatpush1.msra.mxu0 0.0
      %949 = vmatprep.subr.mxu0 0.0
      %950 = vmatpush1.msra.mxu0 0.0
      %951 = vmatprep.subr.mxu0 0.0
      %952 = vmatpush1.msra.mxu0 0.0
      %953 = vmatprep.subr.mxu0 0.0
      %954 = vmatpush1.msra.mxu0 0.0
      %955 = vmatprep.subr.mxu0 0.0
      %956 = vmatpush1.msra.mxu0 0.0
      %957 = vmatprep.subr.mxu0 0.0
      %958 = vmatpush1.msra.mxu0 0.0
      %959 = vmatprep.subr.mxu0 %v643
      %960 = vmatpush1.msra.mxu0 %v641
      %961 = vmatprep.subr.mxu0 0.0
      %962 = vmatpush2.msra.mxu0 0.0
      %963 = vmatprep.subr.mxu0 0.0
      %964 = vmatpush2.msra.mxu0 0.0
      %965 = vmatprep.subr.mxu0 0.0
      %966 = vmatpush2.msra.mxu0 0.0
      %967 = vmatprep.subr.mxu0 0.0
      %968 = vmatpush2.msra.mxu0 0.0
      %969 = vmatprep.subr.mxu0 0.0
      %970 = vmatpush2.msra.mxu0 0.0
      %971 = vmatprep.subr.mxu0 0.0
      %972 = vmatpush2.msra.mxu0 0.0
      %973 = vmatprep.subr.mxu0 0.0
      %974 = vmatpush2.msra.mxu0 0.0
      %975 = vmatprep.subr.mxu0 0.0
      %976 = vmatpush2.msra.mxu0 0.0
      %977 = vmatprep.subr.mxu0 0.0
      %978 = vmatpush2.msra.mxu0 0.0
      %979 = vmatprep.subr.mxu0 0.0
      %980 = vmatpush2.msra.mxu0 0.0
      %981 = vmatprep.subr.mxu0 0.0
      %982 = vmatpush2.msra.mxu0 0.0
      %983 = vmatprep.subr.mxu0 0.0
      %984 = vmatpush2.msra.mxu0 0.0
      %985 = vmatprep.subr.mxu0 0.0
      %986 = vmatpush2.msra.mxu0 0.0
      %987 = vmatprep.subr.mxu0 0.0
      %988 = vmatpush2.msra.mxu0 0.0
      %989 = vmatprep.subr.mxu0 0.0
      %990 = vmatpush2.msra.mxu0 0.0
      %991 = vmatprep.subr.mxu0 0.0
      %992 = vmatpush2.msra.mxu0 0.0
      %993 = vmatprep.mubr.f32.mxu0 0.0
      %994 = vmatmul.mubr.f32.gmra.mxu0 %v623
      %v995 = vpop.f32.mrf.mxu0
      %v996 = vadd.f32 %v618, %v995
      %v997 = vpop.f32.mrf.mxu0
      %v998 = vadd.f32 %v620, %v997
      %999 = vdwg.mxu0
      %v1000 = vld [vmem:[%s183] sm:$0xff]
      %v1001 = vld [vmem:[%s183 + $0x8] sm:$0xff]
      %v1002 = vld [vmem:[%s183 + $0x10] sm:$0xff]
      %v1003 = vld [vmem:[%s183 + $0x18] sm:$0xff]
      %v1004 = vld [vmem:[%s183 + $0x20] sm:$0xff]
      %s1005 = scalar_lea.vmem %s1, 16
      %v1006 = vld [vmem:[%s1005] sm:$0xff]
      %v1012 = vcombine.high %v1000, %v1000
      %v1013 = vcombine.high %v1001, %v1001
      %v1014 = vcombine.high %v1002, %v1002
      %v1015 = vcombine.high %v1003, %v1003
      %v1016 = vcombine.high %v1004, %v1004
      %1017 = vrot.lane.b32.xlu0 %v1000, 126
      %v1018 = vpop.permute.xlu0 %1017
      %1019 = vrot.lane.b32.xlu0 %v1012, 126
      %v1020 = vpop.permute.xlu0 %1019
      %1021 = vrot.lane.b32.xlu0 %v1001, 126
      %v1022 = vpop.permute.xlu0 %1021
      %1023 = vrot.lane.b32.xlu0 %v1013, 126
      %v1024 = vpop.permute.xlu0 %1023
      %1025 = vrot.lane.b32.xlu0 %v1002, 126
      %v1026 = vpop.permute.xlu0 %1025
      %1027 = vrot.lane.b32.xlu0 %v1014, 126
      %v1028 = vpop.permute.xlu0 %1027
      %1029 = vrot.lane.b32.xlu0 %v1003, 126
      %v1030 = vpop.permute.xlu0 %1029
      %1031 = vrot.lane.b32.xlu0 %v1015, 126
      %v1032 = vpop.permute.xlu0 %1031
      %1033 = vrot.lane.b32.xlu0 %v1004, 126
      %v1034 = vpop.permute.xlu0 %1033
      %1035 = vrot.lane.b32.xlu0 %v1016, 126
      %v1036 = vpop.permute.xlu0 %1035
      %vm1037 = vcmask 1031168
      %v1038 = vsel %vm1037, %v1018, %v1020
      %v1039 = vsel %vm1037, %v1020, %v1022
      %v1040 = vsel %vm1037, %v1022, %v1024
      %v1041 = vsel %vm1037, %v1024, %v1026
      %v1042 = vsel %vm1037, %v1026, %v1028
      %v1043 = vsel %vm1037, %v1028, %v1030
      %v1044 = vsel %vm1037, %v1030, %v1032
      %v1045 = vsel %vm1037, %v1032, %v1034
      %v1046 = vsel %vm1037, %v1034, %v1036
      %v1048 = vsel %vm242, %v1006, 0
      %v1050 = vsel %vm246, %v1038, 0
      %v1052 = vsel %vm246, %v1039, 0
      %v1054 = vsel %vm246, %v1040, 0
      %v1056 = vsel %vm246, %v1041, 0
      %v1058 = vsel %vm246, %v1042, 0
      %v1060 = vsel %vm246, %v1043, 0
      %v1062 = vsel %vm246, %v1044, 0
      %v1064 = vsel %vm246, %v1045, 0
      %v1066 = vsel %vm246, %v1046, 0
      %v1068 = vsel %vm246, %v1036, 0
      %1070 = vmatprep.subr.mxu0 0.0
      %1071 = vmatpush1.msra.mxu0 0.0
      %1072 = vmatprep.subr.mxu0 0.0
      %1073 = vmatpush1.msra.mxu0 0.0
      %1074 = vmatprep.subr.mxu0 0.0
      %1075 = vmatpush1.msra.mxu0 0.0
      %1076 = vmatprep.subr.mxu0 0.0
      %1077 = vmatpush1.msra.mxu0 0.0
      %1078 = vmatprep.subr.mxu0 0.0
      %1079 = vmatpush1.msra.mxu0 0.0
      %1080 = vmatprep.subr.mxu0 0.0
      %1081 = vmatpush1.msra.mxu0 0.0
      %1082 = vmatprep.subr.mxu0 0.0
      %1083 = vmatpush1.msra.mxu0 0.0
      %1084 = vmatprep.subr.mxu0 0.0
      %1085 = vmatpush1.msra.mxu0 0.0
      %1086 = vmatprep.subr.mxu0 0.0
      %1087 = vmatpush1.msra.mxu0 0.0
      %1088 = vmatprep.subr.mxu0 0.0
      %1089 = vmatpush1.msra.mxu0 0.0
      %1090 = vmatprep.subr.mxu0 0.0
      %1091 = vmatpush1.msra.mxu0 0.0
      %1092 = vmatprep.subr.mxu0 0.0
      %1093 = vmatpush1.msra.mxu0 0.0
      %1094 = vmatprep.subr.mxu0 0.0
      %1095 = vmatpush1.msra.mxu0 0.0
      %1096 = vmatprep.subr.mxu0 0.0
      %1097 = vmatpush1.msra.mxu0 0.0
      %1098 = vmatprep.subr.mxu0 0.0
      %1099 = vmatpush1.msra.mxu0 0.0
      %1100 = vmatprep.subr.mxu0 %v1052
      %1101 = vmatpush1.msra.mxu0 %v1050
      %1102 = vmatprep.subr.mxu0 0.0
      %1103 = vmatpush2.msra.mxu0 0.0
      %1104 = vmatprep.subr.mxu0 0.0
      %1105 = vmatpush2.msra.mxu0 0.0
      %1106 = vmatprep.subr.mxu0 0.0
      %1107 = vmatpush2.msra.mxu0 0.0
      %1108 = vmatprep.subr.mxu0 0.0
      %1109 = vmatpush2.msra.mxu0 0.0
      %1110 = vmatprep.subr.mxu0 0.0
      %1111 = vmatpush2.msra.mxu0 0.0
      %1112 = vmatprep.subr.mxu0 0.0
      %1113 = vmatpush2.msra.mxu0 0.0
      %1114 = vmatprep.subr.mxu0 0.0
      %1115 = vmatpush2.msra.mxu0 0.0
      %1116 = vmatprep.subr.mxu0 0.0
      %1117 = vmatpush2.msra.mxu0 0.0
      %1118 = vmatprep.subr.mxu0 0.0
      %1119 = vmatpush2.msra.mxu0 0.0
      %1120 = vmatprep.subr.mxu0 0.0
      %1121 = vmatpush2.msra.mxu0 0.0
      %1122 = vmatprep.subr.mxu0 0.0
      %1123 = vmatpush2.msra.mxu0 0.0
      %1124 = vmatprep.subr.mxu0 0.0
      %1125 = vmatpush2.msra.mxu0 0.0
      %1126 = vmatprep.subr.mxu0 0.0
      %1127 = vmatpush2.msra.mxu0 0.0
      %1128 = vmatprep.subr.mxu0 0.0
      %1129 = vmatpush2.msra.mxu0 0.0
      %1130 = vmatprep.subr.mxu0 0.0
      %1131 = vmatpush2.msra.mxu0 0.0
      %1132 = vmatprep.subr.mxu0 0.0
      %1133 = vmatpush2.msra.mxu0 0.0
      %1134 = vmatprep.mubr.f32.mxu0 0.0
      %1135 = vmatmul.mubr.f32.gmra.mxu0 %v1048
      %v1136 = vpop.f32.mrf.mxu0
      %v1137 = vadd.f32 0.0, %v1136
      %v1138 = vpop.f32.mrf.mxu0
      %v1139 = vadd.f32 0.0, %v1138
      %1140 = vdwg.mxu0
      %1141 = vmatprep.subr.mxu0 0.0
      %1142 = vmatpush1.msra.mxu0 0.0
      %1143 = vmatprep.subr.mxu0 0.0
      %1144 = vmatpush1.msra.mxu0 0.0
      %1145 = vmatprep.subr.mxu0 0.0
      %1146 = vmatpush1.msra.mxu0 0.0
      %1147 = vmatprep.subr.mxu0 0.0
      %1148 = vmatpush1.msra.mxu0 0.0
      %1149 = vmatprep.subr.mxu0 0.0
      %1150 = vmatpush1.msra.mxu0 0.0
      %1151 = vmatprep.subr.mxu0 0.0
      %1152 = vmatpush1.msra.mxu0 0.0
      %1153 = vmatprep.subr.mxu0 0.0
      %1154 = vmatpush1.msra.mxu0 0.0
      %1155 = vmatprep.subr.mxu0 0.0
      %1156 = vmatpush1.msra.mxu0 0.0
      %1157 = vmatprep.subr.mxu0 0.0
      %1158 = vmatpush1.msra.mxu0 0.0
      %1159 = vmatprep.subr.mxu0 0.0
      %1160 = vmatpush1.msra.mxu0 0.0
      %1161 = vmatprep.subr.mxu0 0.0
      %1162 = vmatpush1.msra.mxu0 0.0
      %1163 = vmatprep.subr.mxu0 0.0
      %1164 = vmatpush1.msra.mxu0 0.0
      %1165 = vmatprep.subr.mxu0 0.0
      %1166 = vmatpush1.msra.mxu0 0.0
      %1167 = vmatprep.subr.mxu0 0.0
      %1168 = vmatpush1.msra.mxu0 0.0
      %1169 = vmatprep.subr.mxu0 0.0
      %1170 = vmatpush1.msra.mxu0 0.0
      %1171 = vmatprep.subr.mxu0 %v1056
      %1172 = vmatpush1.msra.mxu0 %v1054
      %1173 = vmatprep.subr.mxu0 0.0
      %1174 = vmatpush2.msra.mxu0 0.0
      %1175 = vmatprep.subr.mxu0 0.0
      %1176 = vmatpush2.msra.mxu0 0.0
      %1177 = vmatprep.subr.mxu0 0.0
      %1178 = vmatpush2.msra.mxu0 0.0
      %1179 = vmatprep.subr.mxu0 0.0
      %1180 = vmatpush2.msra.mxu0 0.0
      %1181 = vmatprep.subr.mxu0 0.0
      %1182 = vmatpush2.msra.mxu0 0.0
      %1183 = vmatprep.subr.mxu0 0.0
      %1184 = vmatpush2.msra.mxu0 0.0
      %1185 = vmatprep.subr.mxu0 0.0
      %1186 = vmatpush2.msra.mxu0 0.0
      %1187 = vmatprep.subr.mxu0 0.0
      %1188 = vmatpush2.msra.mxu0 0.0
      %1189 = vmatprep.subr.mxu0 0.0
      %1190 = vmatpush2.msra.mxu0 0.0
      %1191 = vmatprep.subr.mxu0 0.0
      %1192 = vmatpush2.msra.mxu0 0.0
      %1193 = vmatprep.subr.mxu0 0.0
      %1194 = vmatpush2.msra.mxu0 0.0
      %1195 = vmatprep.subr.mxu0 0.0
      %1196 = vmatpush2.msra.mxu0 0.0
      %1197 = vmatprep.subr.mxu0 0.0
      %1198 = vmatpush2.msra.mxu0 0.0
      %1199 = vmatprep.subr.mxu0 0.0
      %1200 = vmatpush2.msra.mxu0 0.0
      %1201 = vmatprep.subr.mxu0 0.0
      %1202 = vmatpush2.msra.mxu0 0.0
      %1203 = vmatprep.subr.mxu0 0.0
      %1204 = vmatpush2.msra.mxu0 0.0
      %1205 = vmatprep.mubr.f32.mxu0 0.0
      %1206 = vmatmul.mubr.f32.gmra.mxu0 %v1048
      %v1207 = vpop.f32.mrf.mxu0
      %v1208 = vadd.f32 0.0, %v1207
      %v1209 = vpop.f32.mrf.mxu0
      %v1210 = vadd.f32 0.0, %v1209
      %1211 = vdwg.mxu0
      %1212 = vmatprep.subr.mxu0 0.0
      %1213 = vmatpush1.msra.mxu0 0.0
      %1214 = vmatprep.subr.mxu0 0.0
      %1215 = vmatpush1.msra.mxu0 0.0
      %1216 = vmatprep.subr.mxu0 0.0
      %1217 = vmatpush1.msra.mxu0 0.0
      %1218 = vmatprep.subr.mxu0 0.0
      %1219 = vmatpush1.msra.mxu0 0.0
      %1220 = vmatprep.subr.mxu0 0.0
      %1221 = vmatpush1.msra.mxu0 0.0
      %1222 = vmatprep.subr.mxu0 0.0
      %1223 = vmatpush1.msra.mxu0 0.0
      %1224 = vmatprep.subr.mxu0 0.0
      %1225 = vmatpush1.msra.mxu0 0.0
      %1226 = vmatprep.subr.mxu0 0.0
      %1227 = vmatpush1.msra.mxu0 0.0
      %1228 = vmatprep.subr.mxu0 0.0
      %1229 = vmatpush1.msra.mxu0 0.0
      %1230 = vmatprep.subr.mxu0 0.0
      %1231 = vmatpush1.msra.mxu0 0.0
      %1232 = vmatprep.subr.mxu0 0.0
      %1233 = vmatpush1.msra.mxu0 0.0
      %1234 = vmatprep.subr.mxu0 0.0
      %1235 = vmatpush1.msra.mxu0 0.0
      %1236 = vmatprep.subr.mxu0 0.0
      %1237 = vmatpush1.msra.mxu0 0.0
      %1238 = vmatprep.subr.mxu0 0.0
      %1239 = vmatpush1.msra.mxu0 0.0
      %1240 = vmatprep.subr.mxu0 0.0
      %1241 = vmatpush1.msra.mxu0 0.0
      %1242 = vmatprep.subr.mxu0 %v1060
      %1243 = vmatpush1.msra.mxu0 %v1058
      %1244 = vmatprep.subr.mxu0 0.0
      %1245 = vmatpush2.msra.mxu0 0.0
      %1246 = vmatprep.subr.mxu0 0.0
      %1247 = vmatpush2.msra.mxu0 0.0
      %1248 = vmatprep.subr.mxu0 0.0
      %1249 = vmatpush2.msra.mxu0 0.0
      %1250 = vmatprep.subr.mxu0 0.0
      %1251 = vmatpush2.msra.mxu0 0.0
      %1252 = vmatprep.subr.mxu0 0.0
      %1253 = vmatpush2.msra.mxu0 0.0
      %1254 = vmatprep.subr.mxu0 0.0
      %1255 = vmatpush2.msra.mxu0 0.0
      %1256 = vmatprep.subr.mxu0 0.0
      %1257 = vmatpush2.msra.mxu0 0.0
      %1258 = vmatprep.subr.mxu0 0.0
      %1259 = vmatpush2.msra.mxu0 0.0
      %1260 = vmatprep.subr.mxu0 0.0
      %1261 = vmatpush2.msra.mxu0 0.0
      %1262 = vmatprep.subr.mxu0 0.0
      %1263 = vmatpush2.msra.mxu0 0.0
      %1264 = vmatprep.subr.mxu0 0.0
      %1265 = vmatpush2.msra.mxu0 0.0
      %1266 = vmatprep.subr.mxu0 0.0
      %1267 = vmatpush2.msra.mxu0 0.0
      %1268 = vmatprep.subr.mxu0 0.0
      %1269 = vmatpush2.msra.mxu0 0.0
      %1270 = vmatprep.subr.mxu0 0.0
      %1271 = vmatpush2.msra.mxu0 0.0
      %1272 = vmatprep.subr.mxu0 0.0
      %1273 = vmatpush2.msra.mxu0 0.0
      %1274 = vmatprep.subr.mxu0 0.0
      %1275 = vmatpush2.msra.mxu0 0.0
      %1276 = vmatprep.mubr.f32.mxu0 0.0
      %1277 = vmatmul.mubr.f32.gmra.mxu0 %v1048
      %v1278 = vpop.f32.mrf.mxu0
      %v1279 = vadd.f32 0.0, %v1278
      %v1280 = vpop.f32.mrf.mxu0
      %v1281 = vadd.f32 0.0, %v1280
      %1282 = vdwg.mxu0
      %1283 = vmatprep.subr.mxu0 0.0
      %1284 = vmatpush1.msra.mxu0 0.0
      %1285 = vmatprep.subr.mxu0 0.0
      %1286 = vmatpush1.msra.mxu0 0.0
      %1287 = vmatprep.subr.mxu0 0.0
      %1288 = vmatpush1.msra.mxu0 0.0
      %1289 = vmatprep.subr.mxu0 0.0
      %1290 = vmatpush1.msra.mxu0 0.0
      %1291 = vmatprep.subr.mxu0 0.0
      %1292 = vmatpush1.msra.mxu0 0.0
      %1293 = vmatprep.subr.mxu0 0.0
      %1294 = vmatpush1.msra.mxu0 0.0
      %1295 = vmatprep.subr.mxu0 0.0
      %1296 = vmatpush1.msra.mxu0 0.0
      %1297 = vmatprep.subr.mxu0 0.0
      %1298 = vmatpush1.msra.mxu0 0.0
      %1299 = vmatprep.subr.mxu0 0.0
      %1300 = vmatpush1.msra.mxu0 0.0
      %1301 = vmatprep.subr.mxu0 0.0
      %1302 = vmatpush1.msra.mxu0 0.0
      %1303 = vmatprep.subr.mxu0 0.0
      %1304 = vmatpush1.msra.mxu0 0.0
      %1305 = vmatprep.subr.mxu0 0.0
      %1306 = vmatpush1.msra.mxu0 0.0
      %1307 = vmatprep.subr.mxu0 0.0
      %1308 = vmatpush1.msra.mxu0 0.0
      %1309 = vmatprep.subr.mxu0 0.0
      %1310 = vmatpush1.msra.mxu0 0.0
      %1311 = vmatprep.subr.mxu0 0.0
      %1312 = vmatpush1.msra.mxu0 0.0
      %1313 = vmatprep.subr.mxu0 %v1064
      %1314 = vmatpush1.msra.mxu0 %v1062
      %1315 = vmatprep.subr.mxu0 0.0
      %1316 = vmatpush2.msra.mxu0 0.0
      %1317 = vmatprep.subr.mxu0 0.0
      %1318 = vmatpush2.msra.mxu0 0.0
      %1319 = vmatprep.subr.mxu0 0.0
      %1320 = vmatpush2.msra.mxu0 0.0
      %1321 = vmatprep.subr.mxu0 0.0
      %1322 = vmatpush2.msra.mxu0 0.0
      %1323 = vmatprep.subr.mxu0 0.0
      %1324 = vmatpush2.msra.mxu0 0.0
      %1325 = vmatprep.subr.mxu0 0.0
      %1326 = vmatpush2.msra.mxu0 0.0
      %1327 = vmatprep.subr.mxu0 0.0
      %1328 = vmatpush2.msra.mxu0 0.0
      %1329 = vmatprep.subr.mxu0 0.0
      %1330 = vmatpush2.msra.mxu0 0.0
      %1331 = vmatprep.subr.mxu0 0.0
      %1332 = vmatpush2.msra.mxu0 0.0
      %1333 = vmatprep.subr.mxu0 0.0
      %1334 = vmatpush2.msra.mxu0 0.0
      %1335 = vmatprep.subr.mxu0 0.0
      %1336 = vmatpush2.msra.mxu0 0.0
      %1337 = vmatprep.subr.mxu0 0.0
      %1338 = vmatpush2.msra.mxu0 0.0
      %1339 = vmatprep.subr.mxu0 0.0
      %1340 = vmatpush2.msra.mxu0 0.0
      %1341 = vmatprep.subr.mxu0 0.0
      %1342 = vmatpush2.msra.mxu0 0.0
      %1343 = vmatprep.subr.mxu0 0.0
      %1344 = vmatpush2.msra.mxu0 0.0
      %1345 = vmatprep.subr.mxu0 0.0
      %1346 = vmatpush2.msra.mxu0 0.0
      %1347 = vmatprep.mubr.f32.mxu0 0.0
      %1348 = vmatmul.mubr.f32.gmra.mxu0 %v1048
      %v1349 = vpop.f32.mrf.mxu0
      %v1350 = vadd.f32 0.0, %v1349
      %v1351 = vpop.f32.mrf.mxu0
      %v1352 = vadd.f32 0.0, %v1351
      %1353 = vdwg.mxu0
      %1354 = vmatprep.subr.mxu0 0.0
      %1355 = vmatpush1.msra.mxu0 0.0
      %1356 = vmatprep.subr.mxu0 0.0
      %1357 = vmatpush1.msra.mxu0 0.0
      %1358 = vmatprep.subr.mxu0 0.0
      %1359 = vmatpush1.msra.mxu0 0.0
      %1360 = vmatprep.subr.mxu0 0.0
      %1361 = vmatpush1.msra.mxu0 0.0
      %1362 = vmatprep.subr.mxu0 0.0
      %1363 = vmatpush1.msra.mxu0 0.0
      %1364 = vmatprep.subr.mxu0 0.0
      %1365 = vmatpush1.msra.mxu0 0.0
      %1366 = vmatprep.subr.mxu0 0.0
      %1367 = vmatpush1.msra.mxu0 0.0
      %1368 = vmatprep.subr.mxu0 0.0
      %1369 = vmatpush1.msra.mxu0 0.0
      %1370 = vmatprep.subr.mxu0 0.0
      %1371 = vmatpush1.msra.mxu0 0.0
      %1372 = vmatprep.subr.mxu0 0.0
      %1373 = vmatpush1.msra.mxu0 0.0
      %1374 = vmatprep.subr.mxu0 0.0
      %1375 = vmatpush1.msra.mxu0 0.0
      %1376 = vmatprep.subr.mxu0 0.0
      %1377 = vmatpush1.msra.mxu0 0.0
      %1378 = vmatprep.subr.mxu0 0.0
      %1379 = vmatpush1.msra.mxu0 0.0
      %1380 = vmatprep.subr.mxu0 0.0
      %1381 = vmatpush1.msra.mxu0 0.0
      %1382 = vmatprep.subr.mxu0 0.0
      %1383 = vmatpush1.msra.mxu0 0.0
      %1384 = vmatprep.subr.mxu0 %v1068
      %1385 = vmatpush1.msra.mxu0 %v1066
      %1386 = vmatprep.subr.mxu0 0.0
      %1387 = vmatpush2.msra.mxu0 0.0
      %1388 = vmatprep.subr.mxu0 0.0
      %1389 = vmatpush2.msra.mxu0 0.0
      %1390 = vmatprep.subr.mxu0 0.0
      %1391 = vmatpush2.msra.mxu0 0.0
      %1392 = vmatprep.subr.mxu0 0.0
      %1393 = vmatpush2.msra.mxu0 0.0
      %1394 = vmatprep.subr.mxu0 0.0
      %1395 = vmatpush2.msra.mxu0 0.0
      %1396 = vmatprep.subr.mxu0 0.0
      %1397 = vmatpush2.msra.mxu0 0.0
      %1398 = vmatprep.subr.mxu0 0.0
      %1399 = vmatpush2.msra.mxu0 0.0
      %1400 = vmatprep.subr.mxu0 0.0
      %1401 = vmatpush2.msra.mxu0 0.0
      %1402 = vmatprep.subr.mxu0 0.0
      %1403 = vmatpush2.msra.mxu0 0.0
      %1404 = vmatprep.subr.mxu0 0.0
      %1405 = vmatpush2.msra.mxu0 0.0
      %1406 = vmatprep.subr.mxu0 0.0
      %1407 = vmatpush2.msra.mxu0 0.0
      %1408 = vmatprep.subr.mxu0 0.0
      %1409 = vmatpush2.msra.mxu0 0.0
      %1410 = vmatprep.subr.mxu0 0.0
      %1411 = vmatpush2.msra.mxu0 0.0
      %1412 = vmatprep.subr.mxu0 0.0
      %1413 = vmatpush2.msra.mxu0 0.0
      %1414 = vmatprep.subr.mxu0 0.0
      %1415 = vmatpush2.msra.mxu0 0.0
      %1416 = vmatprep.subr.mxu0 0.0
      %1417 = vmatpush2.msra.mxu0 0.0
      %1418 = vmatprep.mubr.f32.mxu0 0.0
      %1419 = vmatmul.mubr.f32.gmra.mxu0 %v1048
      %v1420 = vpop.f32.mrf.mxu0
      %v1421 = vadd.f32 0.0, %v1420
      %v1422 = vpop.f32.mrf.mxu0
      %v1423 = vadd.f32 0.0, %v1422
      %1424 = vdwg.mxu0
      %v1425 = vadd.f32 %v712, %v1137
      %v1426 = vadd.f32 %v714, %v1139
      %v1427 = vadd.f32 %v783, %v1208
      %v1428 = vadd.f32 %v785, %v1210
      %v1429 = vadd.f32 %v854, %v1279
      %v1430 = vadd.f32 %v856, %v1281
      %v1431 = vadd.f32 %v925, %v1350
      %v1432 = vadd.f32 %v927, %v1352
      %v1433 = vadd.f32 %v996, %v1421
      %v1434 = vadd.f32 %v998, %v1423
      %v1435 = vld [vmem:[%s183] sm:$0xff]
      %v1436 = vld [vmem:[%s183 + $0x8] sm:$0xff]
      %v1437 = vld [vmem:[%s183 + $0x10] sm:$0xff]
      %v1438 = vld [vmem:[%s183 + $0x18] sm:$0xff]
      %v1439 = vld [vmem:[%s183 + $0x20] sm:$0xff]
      %s1440 = scalar_lea.vmem %s1, 24
      %v1441 = vld [vmem:[%s1440] sm:$0xff]
      %v1447 = vcombine.high %v1435, %v1435
      %v1448 = vcombine.high %v1436, %v1436
      %v1449 = vcombine.high %v1437, %v1437
      %v1450 = vcombine.high %v1438, %v1438
      %v1451 = vcombine.high %v1439, %v1439
      %1452 = vrot.lane.b32.xlu0 %v1435, 93
      %v1453 = vpop.permute.xlu0 %1452
      %1454 = vrot.lane.b32.xlu0 %v1447, 93
      %v1455 = vpop.permute.xlu0 %1454
      %1456 = vrot.lane.b32.xlu0 %v1436, 93
      %v1457 = vpop.permute.xlu0 %1456
      %1458 = vrot.lane.b32.xlu0 %v1448, 93
      %v1459 = vpop.permute.xlu0 %1458
      %1460 = vrot.lane.b32.xlu0 %v1437, 93
      %v1461 = vpop.permute.xlu0 %1460
      %1462 = vrot.lane.b32.xlu0 %v1449, 93
      %v1463 = vpop.permute.xlu0 %1462
      %1464 = vrot.lane.b32.xlu0 %v1438, 93
      %v1465 = vpop.permute.xlu0 %1464
      %1466 = vrot.lane.b32.xlu0 %v1450, 93
      %v1467 = vpop.permute.xlu0 %1466
      %1468 = vrot.lane.b32.xlu0 %v1439, 93
      %v1469 = vpop.permute.xlu0 %1468
      %1470 = vrot.lane.b32.xlu0 %v1451, 93
      %v1471 = vpop.permute.xlu0 %1470
      %vm1472 = vcmask 760832
      %v1473 = vsel %vm1472, %v1453, %v1455
      %v1474 = vsel %vm1472, %v1455, %v1457
      %v1475 = vsel %vm1472, %v1457, %v1459
      %v1476 = vsel %vm1472, %v1459, %v1461
      %v1477 = vsel %vm1472, %v1461, %v1463
      %v1478 = vsel %vm1472, %v1463, %v1465
      %v1479 = vsel %vm1472, %v1465, %v1467
      %v1480 = vsel %vm1472, %v1467, %v1469
      %v1481 = vsel %vm1472, %v1469, %v1471
      %v1483 = vsel %vm242, %v1441, 0
      %v1485 = vsel %vm246, %v1473, 0
      %v1487 = vsel %vm246, %v1474, 0
      %v1489 = vsel %vm246, %v1475, 0
      %v1491 = vsel %vm246, %v1476, 0
      %v1493 = vsel %vm246, %v1477, 0
      %v1495 = vsel %vm246, %v1478, 0
      %v1497 = vsel %vm246, %v1479, 0
      %v1499 = vsel %vm246, %v1480, 0
      %v1501 = vsel %vm246, %v1481, 0
      %v1503 = vsel %vm246, %v1471, 0
      %1505 = vmatprep.subr.mxu0 0.0
      %1506 = vmatpush1.msra.mxu0 0.0
      %1507 = vmatprep.subr.mxu0 0.0
      %1508 = vmatpush1.msra.mxu0 0.0
      %1509 = vmatprep.subr.mxu0 0.0
      %1510 = vmatpush1.msra.mxu0 0.0
      %1511 = vmatprep.subr.mxu0 0.0
      %1512 = vmatpush1.msra.mxu0 0.0
      %1513 = vmatprep.subr.mxu0 0.0
      %1514 = vmatpush1.msra.mxu0 0.0
      %1515 = vmatprep.subr.mxu0 0.0
      %1516 = vmatpush1.msra.mxu0 0.0
      %1517 = vmatprep.subr.mxu0 0.0
      %1518 = vmatpush1.msra.mxu0 0.0
      %1519 = vmatprep.subr.mxu0 0.0
      %1520 = vmatpush1.msra.mxu0 0.0
      %1521 = vmatprep.subr.mxu0 0.0
      %1522 = vmatpush1.msra.mxu0 0.0
      %1523 = vmatprep.subr.mxu0 0.0
      %1524 = vmatpush1.msra.mxu0 0.0
      %1525 = vmatprep.subr.mxu0 0.0
      %1526 = vmatpush1.msra.mxu0 0.0
      %1527 = vmatprep.subr.mxu0 0.0
      %1528 = vmatpush1.msra.mxu0 0.0
      %1529 = vmatprep.subr.mxu0 0.0
      %1530 = vmatpush1.msra.mxu0 0.0
      %1531 = vmatprep.subr.mxu0 0.0
      %1532 = vmatpush1.msra.mxu0 0.0
      %1533 = vmatprep.subr.mxu0 0.0
      %1534 = vmatpush1.msra.mxu0 0.0
      %1535 = vmatprep.subr.mxu0 %v1487
      %1536 = vmatpush1.msra.mxu0 %v1485
      %1537 = vmatprep.subr.mxu0 0.0
      %1538 = vmatpush2.msra.mxu0 0.0
      %1539 = vmatprep.subr.mxu0 0.0
      %1540 = vmatpush2.msra.mxu0 0.0
      %1541 = vmatprep.subr.mxu0 0.0
      %1542 = vmatpush2.msra.mxu0 0.0
      %1543 = vmatprep.subr.mxu0 0.0
      %1544 = vmatpush2.msra.mxu0 0.0
      %1545 = vmatprep.subr.mxu0 0.0
      %1546 = vmatpush2.msra.mxu0 0.0
      %1547 = vmatprep.subr.mxu0 0.0
      %1548 = vmatpush2.msra.mxu0 0.0
      %1549 = vmatprep.subr.mxu0 0.0
      %1550 = vmatpush2.msra.mxu0 0.0
      %1551 = vmatprep.subr.mxu0 0.0
      %1552 = vmatpush2.msra.mxu0 0.0
      %1553 = vmatprep.subr.mxu0 0.0
      %1554 = vmatpush2.msra.mxu0 0.0
      %1555 = vmatprep.subr.mxu0 0.0
      %1556 = vmatpush2.msra.mxu0 0.0
      %1557 = vmatprep.subr.mxu0 0.0
      %1558 = vmatpush2.msra.mxu0 0.0
      %1559 = vmatprep.subr.mxu0 0.0
      %1560 = vmatpush2.msra.mxu0 0.0
      %1561 = vmatprep.subr.mxu0 0.0
      %1562 = vmatpush2.msra.mxu0 0.0
      %1563 = vmatprep.subr.mxu0 0.0
      %1564 = vmatpush2.msra.mxu0 0.0
      %1565 = vmatprep.subr.mxu0 0.0
      %1566 = vmatpush2.msra.mxu0 0.0
      %1567 = vmatprep.subr.mxu0 0.0
      %1568 = vmatpush2.msra.mxu0 0.0
      %1569 = vmatprep.mubr.f32.mxu0 0.0
      %1570 = vmatmul.mubr.f32.gmra.mxu0 %v1483
      %v1571 = vpop.f32.mrf.mxu0
      %v1572 = vadd.f32 0.0, %v1571
      %v1573 = vpop.f32.mrf.mxu0
      %v1574 = vadd.f32 0.0, %v1573
      %1575 = vdwg.mxu0
      %1576 = vmatprep.subr.mxu0 0.0
      %1577 = vmatpush1.msra.mxu0 0.0
      %1578 = vmatprep.subr.mxu0 0.0
      %1579 = vmatpush1.msra.mxu0 0.0
      %1580 = vmatprep.subr.mxu0 0.0
      %1581 = vmatpush1.msra.mxu0 0.0
      %1582 = vmatprep.subr.mxu0 0.0
      %1583 = vmatpush1.msra.mxu0 0.0
      %1584 = vmatprep.subr.mxu0 0.0
      %1585 = vmatpush1.msra.mxu0 0.0
      %1586 = vmatprep.subr.mxu0 0.0
      %1587 = vmatpush1.msra.mxu0 0.0
      %1588 = vmatprep.subr.mxu0 0.0
      %1589 = vmatpush1.msra.mxu0 0.0
      %1590 = vmatprep.subr.mxu0 0.0
      %1591 = vmatpush1.msra.mxu0 0.0
      %1592 = vmatprep.subr.mxu0 0.0
      %1593 = vmatpush1.msra.mxu0 0.0
      %1594 = vmatprep.subr.mxu0 0.0
      %1595 = vmatpush1.msra.mxu0 0.0
      %1596 = vmatprep.subr.mxu0 0.0
      %1597 = vmatpush1.msra.mxu0 0.0
      %1598 = vmatprep.subr.mxu0 0.0
      %1599 = vmatpush1.msra.mxu0 0.0
      %1600 = vmatprep.subr.mxu0 0.0
      %1601 = vmatpush1.msra.mxu0 0.0
      %1602 = vmatprep.subr.mxu0 0.0
      %1603 = vmatpush1.msra.mxu0 0.0
      %1604 = vmatprep.subr.mxu0 0.0
      %1605 = vmatpush1.msra.mxu0 0.0
      %1606 = vmatprep.subr.mxu0 %v1491
      %1607 = vmatpush1.msra.mxu0 %v1489
      %1608 = vmatprep.subr.mxu0 0.0
      %1609 = vmatpush2.msra.mxu0 0.0
      %1610 = vmatprep.subr.mxu0 0.0
      %1611 = vmatpush2.msra.mxu0 0.0
      %1612 = vmatprep.subr.mxu0 0.0
      %1613 = vmatpush2.msra.mxu0 0.0
      %1614 = vmatprep.subr.mxu0 0.0
      %1615 = vmatpush2.msra.mxu0 0.0
      %1616 = vmatprep.subr.mxu0 0.0
      %1617 = vmatpush2.msra.mxu0 0.0
      %1618 = vmatprep.subr.mxu0 0.0
      %1619 = vmatpush2.msra.mxu0 0.0
      %1620 = vmatprep.subr.mxu0 0.0
      %1621 = vmatpush2.msra.mxu0 0.0
      %1622 = vmatprep.subr.mxu0 0.0
      %1623 = vmatpush2.msra.mxu0 0.0
      %1624 = vmatprep.subr.mxu0 0.0
      %1625 = vmatpush2.msra.mxu0 0.0
      %1626 = vmatprep.subr.mxu0 0.0
      %1627 = vmatpush2.msra.mxu0 0.0
      %1628 = vmatprep.subr.mxu0 0.0
      %1629 = vmatpush2.msra.mxu0 0.0
      %1630 = vmatprep.subr.mxu0 0.0
      %1631 = vmatpush2.msra.mxu0 0.0
      %1632 = vmatprep.subr.mxu0 0.0
      %1633 = vmatpush2.msra.mxu0 0.0
      %1634 = vmatprep.subr.mxu0 0.0
      %1635 = vmatpush2.msra.mxu0 0.0
      %1636 = vmatprep.subr.mxu0 0.0
      %1637 = vmatpush2.msra.mxu0 0.0
      %1638 = vmatprep.subr.mxu0 0.0
      %1639 = vmatpush2.msra.mxu0 0.0
      %1640 = vmatprep.mubr.f32.mxu0 0.0
      %1641 = vmatmul.mubr.f32.gmra.mxu0 %v1483
      %v1642 = vpop.f32.mrf.mxu0
      %v1643 = vadd.f32 0.0, %v1642
      %v1644 = vpop.f32.mrf.mxu0
      %v1645 = vadd.f32 0.0, %v1644
      %1646 = vdwg.mxu0
      %1647 = vmatprep.subr.mxu0 0.0
      %1648 = vmatpush1.msra.mxu0 0.0
      %1649 = vmatprep.subr.mxu0 0.0
      %1650 = vmatpush1.msra.mxu0 0.0
      %1651 = vmatprep.subr.mxu0 0.0
      %1652 = vmatpush1.msra.mxu0 0.0
      %1653 = vmatprep.subr.mxu0 0.0
      %1654 = vmatpush1.msra.mxu0 0.0
      %1655 = vmatprep.subr.mxu0 0.0
      %1656 = vmatpush1.msra.mxu0 0.0
      %1657 = vmatprep.subr.mxu0 0.0
      %1658 = vmatpush1.msra.mxu0 0.0
      %1659 = vmatprep.subr.mxu0 0.0
      %1660 = vmatpush1.msra.mxu0 0.0
      %1661 = vmatprep.subr.mxu0 0.0
      %1662 = vmatpush1.msra.mxu0 0.0
      %1663 = vmatprep.subr.mxu0 0.0
      %1664 = vmatpush1.msra.mxu0 0.0
      %1665 = vmatprep.subr.mxu0 0.0
      %1666 = vmatpush1.msra.mxu0 0.0
      %1667 = vmatprep.subr.mxu0 0.0
      %1668 = vmatpush1.msra.mxu0 0.0
      %1669 = vmatprep.subr.mxu0 0.0
      %1670 = vmatpush1.msra.mxu0 0.0
      %1671 = vmatprep.subr.mxu0 0.0
      %1672 = vmatpush1.msra.mxu0 0.0
      %1673 = vmatprep.subr.mxu0 0.0
      %1674 = vmatpush1.msra.mxu0 0.0
      %1675 = vmatprep.subr.mxu0 0.0
      %1676 = vmatpush1.msra.mxu0 0.0
      %1677 = vmatprep.subr.mxu0 %v1495
      %1678 = vmatpush1.msra.mxu0 %v1493
      %1679 = vmatprep.subr.mxu0 0.0
      %1680 = vmatpush2.msra.mxu0 0.0
      %1681 = vmatprep.subr.mxu0 0.0
      %1682 = vmatpush2.msra.mxu0 0.0
      %1683 = vmatprep.subr.mxu0 0.0
      %1684 = vmatpush2.msra.mxu0 0.0
      %1685 = vmatprep.subr.mxu0 0.0
      %1686 = vmatpush2.msra.mxu0 0.0
      %1687 = vmatprep.subr.mxu0 0.0
      %1688 = vmatpush2.msra.mxu0 0.0
      %1689 = vmatprep.subr.mxu0 0.0
      %1690 = vmatpush2.msra.mxu0 0.0
      %1691 = vmatprep.subr.mxu0 0.0
      %1692 = vmatpush2.msra.mxu0 0.0
      %1693 = vmatprep.subr.mxu0 0.0
      %1694 = vmatpush2.msra.mxu0 0.0
      %1695 = vmatprep.subr.mxu0 0.0
      %1696 = vmatpush2.msra.mxu0 0.0
      %1697 = vmatprep.subr.mxu0 0.0
      %1698 = vmatpush2.msra.mxu0 0.0
      %1699 = vmatprep.subr.mxu0 0.0
      %1700 = vmatpush2.msra.mxu0 0.0
      %1701 = vmatprep.subr.mxu0 0.0
      %1702 = vmatpush2.msra.mxu0 0.0
      %1703 = vmatprep.subr.mxu0 0.0
      %1704 = vmatpush2.msra.mxu0 0.0
      %1705 = vmatprep.subr.mxu0 0.0
      %1706 = vmatpush2.msra.mxu0 0.0
      %1707 = vmatprep.subr.mxu0 0.0
      %1708 = vmatpush2.msra.mxu0 0.0
      %1709 = vmatprep.subr.mxu0 0.0
      %1710 = vmatpush2.msra.mxu0 0.0
      %1711 = vmatprep.mubr.f32.mxu0 0.0
      %1712 = vmatmul.mubr.f32.gmra.mxu0 %v1483
      %v1713 = vpop.f32.mrf.mxu0
      %v1714 = vadd.f32 0.0, %v1713
      %v1715 = vpop.f32.mrf.mxu0
      %v1716 = vadd.f32 0.0, %v1715
      %1717 = vdwg.mxu0
      %1718 = vmatprep.subr.mxu0 0.0
      %1719 = vmatpush1.msra.mxu0 0.0
      %1720 = vmatprep.subr.mxu0 0.0
      %1721 = vmatpush1.msra.mxu0 0.0
      %1722 = vmatprep.subr.mxu0 0.0
      %1723 = vmatpush1.msra.mxu0 0.0
      %1724 = vmatprep.subr.mxu0 0.0
      %1725 = vmatpush1.msra.mxu0 0.0
      %1726 = vmatprep.subr.mxu0 0.0
      %1727 = vmatpush1.msra.mxu0 0.0
      %1728 = vmatprep.subr.mxu0 0.0
      %1729 = vmatpush1.msra.mxu0 0.0
      %1730 = vmatprep.subr.mxu0 0.0
      %1731 = vmatpush1.msra.mxu0 0.0
      %1732 = vmatprep.subr.mxu0 0.0
      %1733 = vmatpush1.msra.mxu0 0.0
      %1734 = vmatprep.subr.mxu0 0.0
      %1735 = vmatpush1.msra.mxu0 0.0
      %1736 = vmatprep.subr.mxu0 0.0
      %1737 = vmatpush1.msra.mxu0 0.0
      %1738 = vmatprep.subr.mxu0 0.0
      %1739 = vmatpush1.msra.mxu0 0.0
      %1740 = vmatprep.subr.mxu0 0.0
      %1741 = vmatpush1.msra.mxu0 0.0
      %1742 = vmatprep.subr.mxu0 0.0
      %1743 = vmatpush1.msra.mxu0 0.0
      %1744 = vmatprep.subr.mxu0 0.0
      %1745 = vmatpush1.msra.mxu0 0.0
      %1746 = vmatprep.subr.mxu0 0.0
      %1747 = vmatpush1.msra.mxu0 0.0
      %1748 = vmatprep.subr.mxu0 %v1499
      %1749 = vmatpush1.msra.mxu0 %v1497
      %1750 = vmatprep.subr.mxu0 0.0
      %1751 = vmatpush2.msra.mxu0 0.0
      %1752 = vmatprep.subr.mxu0 0.0
      %1753 = vmatpush2.msra.mxu0 0.0
      %1754 = vmatprep.subr.mxu0 0.0
      %1755 = vmatpush2.msra.mxu0 0.0
      %1756 = vmatprep.subr.mxu0 0.0
      %1757 = vmatpush2.msra.mxu0 0.0
      %1758 = vmatprep.subr.mxu0 0.0
      %1759 = vmatpush2.msra.mxu0 0.0
      %1760 = vmatprep.subr.mxu0 0.0
      %1761 = vmatpush2.msra.mxu0 0.0
      %1762 = vmatprep.subr.mxu0 0.0
      %1763 = vmatpush2.msra.mxu0 0.0
      %1764 = vmatprep.subr.mxu0 0.0
      %1765 = vmatpush2.msra.mxu0 0.0
      %1766 = vmatprep.subr.mxu0 0.0
      %1767 = vmatpush2.msra.mxu0 0.0
      %1768 = vmatprep.subr.mxu0 0.0
      %1769 = vmatpush2.msra.mxu0 0.0
      %1770 = vmatprep.subr.mxu0 0.0
      %1771 = vmatpush2.msra.mxu0 0.0
      %1772 = vmatprep.subr.mxu0 0.0
      %1773 = vmatpush2.msra.mxu0 0.0
      %1774 = vmatprep.subr.mxu0 0.0
      %1775 = vmatpush2.msra.mxu0 0.0
      %1776 = vmatprep.subr.mxu0 0.0
      %1777 = vmatpush2.msra.mxu0 0.0
      %1778 = vmatprep.subr.mxu0 0.0
      %1779 = vmatpush2.msra.mxu0 0.0
      %1780 = vmatprep.subr.mxu0 0.0
      %1781 = vmatpush2.msra.mxu0 0.0
      %1782 = vmatprep.mubr.f32.mxu0 0.0
      %1783 = vmatmul.mubr.f32.gmra.mxu0 %v1483
      %v1784 = vpop.f32.mrf.mxu0
      %v1785 = vadd.f32 0.0, %v1784
      %v1786 = vpop.f32.mrf.mxu0
      %v1787 = vadd.f32 0.0, %v1786
      %1788 = vdwg.mxu0
      %1789 = vmatprep.subr.mxu0 0.0
      %1790 = vmatpush1.msra.mxu0 0.0
      %1791 = vmatprep.subr.mxu0 0.0
      %1792 = vmatpush1.msra.mxu0 0.0
      %1793 = vmatprep.subr.mxu0 0.0
      %1794 = vmatpush1.msra.mxu0 0.0
      %1795 = vmatprep.subr.mxu0 0.0
      %1796 = vmatpush1.msra.mxu0 0.0
      %1797 = vmatprep.subr.mxu0 0.0
      %1798 = vmatpush1.msra.mxu0 0.0
      %1799 = vmatprep.subr.mxu0 0.0
      %1800 = vmatpush1.msra.mxu0 0.0
      %1801 = vmatprep.subr.mxu0 0.0
      %1802 = vmatpush1.msra.mxu0 0.0
      %1803 = vmatprep.subr.mxu0 0.0
      %1804 = vmatpush1.msra.mxu0 0.0
      %1805 = vmatprep.subr.mxu0 0.0
      %1806 = vmatpush1.msra.mxu0 0.0
      %1807 = vmatprep.subr.mxu0 0.0
      %1808 = vmatpush1.msra.mxu0 0.0
      %1809 = vmatprep.subr.mxu0 0.0
      %1810 = vmatpush1.msra.mxu0 0.0
      %1811 = vmatprep.subr.mxu0 0.0
      %1812 = vmatpush1.msra.mxu0 0.0
      %1813 = vmatprep.subr.mxu0 0.0
      %1814 = vmatpush1.msra.mxu0 0.0
      %1815 = vmatprep.subr.mxu0 0.0
      %1816 = vmatpush1.msra.mxu0 0.0
      %1817 = vmatprep.subr.mxu0 0.0
      %1818 = vmatpush1.msra.mxu0 0.0
      %1819 = vmatprep.subr.mxu0 %v1503
      %1820 = vmatpush1.msra.mxu0 %v1501
      %1821 = vmatprep.subr.mxu0 0.0
      %1822 = vmatpush2.msra.mxu0 0.0
      %1823 = vmatprep.subr.mxu0 0.0
      %1824 = vmatpush2.msra.mxu0 0.0
      %1825 = vmatprep.subr.mxu0 0.0
      %1826 = vmatpush2.msra.mxu0 0.0
      %1827 = vmatprep.subr.mxu0 0.0
      %1828 = vmatpush2.msra.mxu0 0.0
      %1829 = vmatprep.subr.mxu0 0.0
      %1830 = vmatpush2.msra.mxu0 0.0
      %1831 = vmatprep.subr.mxu0 0.0
      %1832 = vmatpush2.msra.mxu0 0.0
      %1833 = vmatprep.subr.mxu0 0.0
      %1834 = vmatpush2.msra.mxu0 0.0
      %1835 = vmatprep.subr.mxu0 0.0
      %1836 = vmatpush2.msra.mxu0 0.0
      %1837 = vmatprep.subr.mxu0 0.0
      %1838 = vmatpush2.msra.mxu0 0.0
      %1839 = vmatprep.subr.mxu0 0.0
      %1840 = vmatpush2.msra.mxu0 0.0
      %1841 = vmatprep.subr.mxu0 0.0
      %1842 = vmatpush2.msra.mxu0 0.0
      %1843 = vmatprep.subr.mxu0 0.0
      %1844 = vmatpush2.msra.mxu0 0.0
      %1845 = vmatprep.subr.mxu0 0.0
      %1846 = vmatpush2.msra.mxu0 0.0
      %1847 = vmatprep.subr.mxu0 0.0
      %1848 = vmatpush2.msra.mxu0 0.0
      %1849 = vmatprep.subr.mxu0 0.0
      %1850 = vmatpush2.msra.mxu0 0.0
      %1851 = vmatprep.subr.mxu0 0.0
      %1852 = vmatpush2.msra.mxu0 0.0
      %1853 = vmatprep.mubr.f32.mxu0 0.0
      %1854 = vmatmul.mubr.f32.gmra.mxu0 %v1483
      %v1855 = vpop.f32.mrf.mxu0
      %v1856 = vadd.f32 0.0, %v1855
      %v1857 = vpop.f32.mrf.mxu0
      %v1858 = vadd.f32 0.0, %v1857
      %1859 = vdwg.mxu0
      %v1860 = vadd.f32 %v1425, %v1572
      %v1861 = vadd.f32 %v1426, %v1574
      %v1862 = vadd.f32 %v1427, %v1643
      %v1863 = vadd.f32 %v1428, %v1645
      %v1864 = vadd.f32 %v1429, %v1714
      %v1865 = vadd.f32 %v1430, %v1716
      %v1866 = vadd.f32 %v1431, %v1785
      %v1867 = vadd.f32 %v1432, %v1787
      %v1868 = vadd.f32 %v1433, %v1856
      %v1869 = vadd.f32 %v1434, %v1858
      %v1870 = vld [vmem:[%s183] sm:$0xff]
      %v1871 = vld [vmem:[%s183 + $0x8] sm:$0xff]
      %v1872 = vld [vmem:[%s183 + $0x10] sm:$0xff]
      %v1873 = vld [vmem:[%s183 + $0x18] sm:$0xff]
      %v1874 = vld [vmem:[%s183 + $0x20] sm:$0xff]
      %s1875 = scalar_lea.vmem %s1, 32
      %v1876 = vld [vmem:[%s1875] sm:$0xff]
      %v1882 = vcombine.high %v1870, %v1870
      %v1883 = vcombine.high %v1871, %v1871
      %v1884 = vcombine.high %v1872, %v1872
      %v1885 = vcombine.high %v1873, %v1873
      %v1886 = vcombine.high %v1874, %v1874
      %1887 = vrot.lane.b32.xlu0 %v1870, 92
      %v1888 = vpop.permute.xlu0 %1887
      %1889 = vrot.lane.b32.xlu0 %v1882, 92
      %v1890 = vpop.permute.xlu0 %1889
      %1891 = vrot.lane.b32.xlu0 %v1871, 92
      %v1892 = vpop.permute.xlu0 %1891
      %1893 = vrot.lane.b32.xlu0 %v1883, 92
      %v1894 = vpop.permute.xlu0 %1893
      %1895 = vrot.lane.b32.xlu0 %v1872, 92
      %v1896 = vpop.permute.xlu0 %1895
      %1897 = vrot.lane.b32.xlu0 %v1884, 92
      %v1898 = vpop.permute.xlu0 %1897
      %1899 = vrot.lane.b32.xlu0 %v1873, 92
      %v1900 = vpop.permute.xlu0 %1899
      %1901 = vrot.lane.b32.xlu0 %v1885, 92
      %v1902 = vpop.permute.xlu0 %1901
      %1903 = vrot.lane.b32.xlu0 %v1874, 92
      %v1904 = vpop.permute.xlu0 %1903
      %1905 = vrot.lane.b32.xlu0 %v1886, 92
      %v1906 = vpop.permute.xlu0 %1905
      %vm1907 = vcmask 752640
      %v1908 = vsel %vm1907, %v1888, %v1890
      %v1909 = vsel %vm1907, %v1890, %v1892
      %v1910 = vsel %vm1907, %v1892, %v1894
      %v1911 = vsel %vm1907, %v1894, %v1896
      %v1912 = vsel %vm1907, %v1896, %v1898
      %v1913 = vsel %vm1907, %v1898, %v1900
      %v1914 = vsel %vm1907, %v1900, %v1902
      %v1915 = vsel %vm1907, %v1902, %v1904
      %v1916 = vsel %vm1907, %v1904, %v1906
      %v1918 = vsel %vm242, %v1876, 0
      %v1920 = vsel %vm246, %v1908, 0
      %v1922 = vsel %vm246, %v1909, 0
      %v1924 = vsel %vm246, %v1910, 0
      %v1926 = vsel %vm246, %v1911, 0
      %v1928 = vsel %vm246, %v1912, 0
      %v1930 = vsel %vm246, %v1913, 0
      %v1932 = vsel %vm246, %v1914, 0
      %v1934 = vsel %vm246, %v1915, 0
      %v1936 = vsel %vm246, %v1916, 0
      %v1938 = vsel %vm246, %v1906, 0
      %1940 = vmatprep.subr.mxu0 0.0
      %1941 = vmatpush1.msra.mxu0 0.0
      %1942 = vmatprep.subr.mxu0 0.0
      %1943 = vmatpush1.msra.mxu0 0.0
      %1944 = vmatprep.subr.mxu0 0.0
      %1945 = vmatpush1.msra.mxu0 0.0
      %1946 = vmatprep.subr.mxu0 0.0
      %1947 = vmatpush1.msra.mxu0 0.0
      %1948 = vmatprep.subr.mxu0 0.0
      %1949 = vmatpush1.msra.mxu0 0.0
      %1950 = vmatprep.subr.mxu0 0.0
      %1951 = vmatpush1.msra.mxu0 0.0
      %1952 = vmatprep.subr.mxu0 0.0
      %1953 = vmatpush1.msra.mxu0 0.0
      %1954 = vmatprep.subr.mxu0 0.0
      %1955 = vmatpush1.msra.mxu0 0.0
      %1956 = vmatprep.subr.mxu0 0.0
      %1957 = vmatpush1.msra.mxu0 0.0
      %1958 = vmatprep.subr.mxu0 0.0
      %1959 = vmatpush1.msra.mxu0 0.0
      %1960 = vmatprep.subr.mxu0 0.0
      %1961 = vmatpush1.msra.mxu0 0.0
      %1962 = vmatprep.subr.mxu0 0.0
      %1963 = vmatpush1.msra.mxu0 0.0
      %1964 = vmatprep.subr.mxu0 0.0
      %1965 = vmatpush1.msra.mxu0 0.0
      %1966 = vmatprep.subr.mxu0 0.0
      %1967 = vmatpush1.msra.mxu0 0.0
      %1968 = vmatprep.subr.mxu0 0.0
      %1969 = vmatpush1.msra.mxu0 0.0
      %1970 = vmatprep.subr.mxu0 %v1922
      %1971 = vmatpush1.msra.mxu0 %v1920
      %1972 = vmatprep.subr.mxu0 0.0
      %1973 = vmatpush2.msra.mxu0 0.0
      %1974 = vmatprep.subr.mxu0 0.0
      %1975 = vmatpush2.msra.mxu0 0.0
      %1976 = vmatprep.subr.mxu0 0.0
      %1977 = vmatpush2.msra.mxu0 0.0
      %1978 = vmatprep.subr.mxu0 0.0
      %1979 = vmatpush2.msra.mxu0 0.0
      %1980 = vmatprep.subr.mxu0 0.0
      %1981 = vmatpush2.msra.mxu0 0.0
      %1982 = vmatprep.subr.mxu0 0.0
      %1983 = vmatpush2.msra.mxu0 0.0
      %1984 = vmatprep.subr.mxu0 0.0
      %1985 = vmatpush2.msra.mxu0 0.0
      %1986 = vmatprep.subr.mxu0 0.0
      %1987 = vmatpush2.msra.mxu0 0.0
      %1988 = vmatprep.subr.mxu0 0.0
      %1989 = vmatpush2.msra.mxu0 0.0
      %1990 = vmatprep.subr.mxu0 0.0
      %1991 = vmatpush2.msra.mxu0 0.0
      %1992 = vmatprep.subr.mxu0 0.0
      %1993 = vmatpush2.msra.mxu0 0.0
      %1994 = vmatprep.subr.mxu0 0.0
      %1995 = vmatpush2.msra.mxu0 0.0
      %1996 = vmatprep.subr.mxu0 0.0
      %1997 = vmatpush2.msra.mxu0 0.0
      %1998 = vmatprep.subr.mxu0 0.0
      %1999 = vmatpush2.msra.mxu0 0.0
      %2000 = vmatprep.subr.mxu0 0.0
      %2001 = vmatpush2.msra.mxu0 0.0
      %2002 = vmatprep.subr.mxu0 0.0
      %2003 = vmatpush2.msra.mxu0 0.0
      %2004 = vmatprep.mubr.f32.mxu0 0.0
      %2005 = vmatmul.mubr.f32.gmra.mxu0 %v1918
      %v2006 = vpop.f32.mrf.mxu0
      %v2007 = vadd.f32 0.0, %v2006
      %v2008 = vpop.f32.mrf.mxu0
      %v2009 = vadd.f32 0.0, %v2008
      %2010 = vdwg.mxu0
      %2011 = vmatprep.subr.mxu0 0.0
      %2012 = vmatpush1.msra.mxu0 0.0
      %2013 = vmatprep.subr.mxu0 0.0
      %2014 = vmatpush1.msra.mxu0 0.0
      %2015 = vmatprep.subr.mxu0 0.0
      %2016 = vmatpush1.msra.mxu0 0.0
      %2017 = vmatprep.subr.mxu0 0.0
      %2018 = vmatpush1.msra.mxu0 0.0
      %2019 = vmatprep.subr.mxu0 0.0
      %2020 = vmatpush1.msra.mxu0 0.0
      %2021 = vmatprep.subr.mxu0 0.0
      %2022 = vmatpush1.msra.mxu0 0.0
      %2023 = vmatprep.subr.mxu0 0.0
      %2024 = vmatpush1.msra.mxu0 0.0
      %2025 = vmatprep.subr.mxu0 0.0
      %2026 = vmatpush1.msra.mxu0 0.0
      %2027 = vmatprep.subr.mxu0 0.0
      %2028 = vmatpush1.msra.mxu0 0.0
      %2029 = vmatprep.subr.mxu0 0.0
      %2030 = vmatpush1.msra.mxu0 0.0
      %2031 = vmatprep.subr.mxu0 0.0
      %2032 = vmatpush1.msra.mxu0 0.0
      %2033 = vmatprep.subr.mxu0 0.0
      %2034 = vmatpush1.msra.mxu0 0.0
      %2035 = vmatprep.subr.mxu0 0.0
      %2036 = vmatpush1.msra.mxu0 0.0
      %2037 = vmatprep.subr.mxu0 0.0
      %2038 = vmatpush1.msra.mxu0 0.0
      %2039 = vmatprep.subr.mxu0 0.0
      %2040 = vmatpush1.msra.mxu0 0.0
      %2041 = vmatprep.subr.mxu0 %v1926
      %2042 = vmatpush1.msra.mxu0 %v1924
      %2043 = vmatprep.subr.mxu0 0.0
      %2044 = vmatpush2.msra.mxu0 0.0
      %2045 = vmatprep.subr.mxu0 0.0
      %2046 = vmatpush2.msra.mxu0 0.0
      %2047 = vmatprep.subr.mxu0 0.0
      %2048 = vmatpush2.msra.mxu0 0.0
      %2049 = vmatprep.subr.mxu0 0.0
      %2050 = vmatpush2.msra.mxu0 0.0
      %2051 = vmatprep.subr.mxu0 0.0
      %2052 = vmatpush2.msra.mxu0 0.0
      %2053 = vmatprep.subr.mxu0 0.0
      %2054 = vmatpush2.msra.mxu0 0.0
      %2055 = vmatprep.subr.mxu0 0.0
      %2056 = vmatpush2.msra.mxu0 0.0
      %2057 = vmatprep.subr.mxu0 0.0
      %2058 = vmatpush2.msra.mxu0 0.0
      %2059 = vmatprep.subr.mxu0 0.0
      %2060 = vmatpush2.msra.mxu0 0.0
      %2061 = vmatprep.subr.mxu0 0.0
      %2062 = vmatpush2.msra.mxu0 0.0
      %2063 = vmatprep.subr.mxu0 0.0
      %2064 = vmatpush2.msra.mxu0 0.0
      %2065 = vmatprep.subr.mxu0 0.0
      %2066 = vmatpush2.msra.mxu0 0.0
      %2067 = vmatprep.subr.mxu0 0.0
      %2068 = vmatpush2.msra.mxu0 0.0
      %2069 = vmatprep.subr.mxu0 0.0
      %2070 = vmatpush2.msra.mxu0 0.0
      %2071 = vmatprep.subr.mxu0 0.0
      %2072 = vmatpush2.msra.mxu0 0.0
      %2073 = vmatprep.subr.mxu0 0.0
      %2074 = vmatpush2.msra.mxu0 0.0
      %2075 = vmatprep.mubr.f32.mxu0 0.0
      %2076 = vmatmul.mubr.f32.gmra.mxu0 %v1918
      %v2077 = vpop.f32.mrf.mxu0
      %v2078 = vadd.f32 0.0, %v2077
      %v2079 = vpop.f32.mrf.mxu0
      %v2080 = vadd.f32 0.0, %v2079
      %2081 = vdwg.mxu0
      %2082 = vmatprep.subr.mxu0 0.0
      %2083 = vmatpush1.msra.mxu0 0.0
      %2084 = vmatprep.subr.mxu0 0.0
      %2085 = vmatpush1.msra.mxu0 0.0
      %2086 = vmatprep.subr.mxu0 0.0
      %2087 = vmatpush1.msra.mxu0 0.0
      %2088 = vmatprep.subr.mxu0 0.0
      %2089 = vmatpush1.msra.mxu0 0.0
      %2090 = vmatprep.subr.mxu0 0.0
      %2091 = vmatpush1.msra.mxu0 0.0
      %2092 = vmatprep.subr.mxu0 0.0
      %2093 = vmatpush1.msra.mxu0 0.0
      %2094 = vmatprep.subr.mxu0 0.0
      %2095 = vmatpush1.msra.mxu0 0.0
      %2096 = vmatprep.subr.mxu0 0.0
      %2097 = vmatpush1.msra.mxu0 0.0
      %2098 = vmatprep.subr.mxu0 0.0
      %2099 = vmatpush1.msra.mxu0 0.0
      %2100 = vmatprep.subr.mxu0 0.0
      %2101 = vmatpush1.msra.mxu0 0.0
      %2102 = vmatprep.subr.mxu0 0.0
      %2103 = vmatpush1.msra.mxu0 0.0
      %2104 = vmatprep.subr.mxu0 0.0
      %2105 = vmatpush1.msra.mxu0 0.0
      %2106 = vmatprep.subr.mxu0 0.0
      %2107 = vmatpush1.msra.mxu0 0.0
      %2108 = vmatprep.subr.mxu0 0.0
      %2109 = vmatpush1.msra.mxu0 0.0
      %2110 = vmatprep.subr.mxu0 0.0
      %2111 = vmatpush1.msra.mxu0 0.0
      %2112 = vmatprep.subr.mxu0 %v1930
      %2113 = vmatpush1.msra.mxu0 %v1928
      %2114 = vmatprep.subr.mxu0 0.0
      %2115 = vmatpush2.msra.mxu0 0.0
      %2116 = vmatprep.subr.mxu0 0.0
      %2117 = vmatpush2.msra.mxu0 0.0
      %2118 = vmatprep.subr.mxu0 0.0
      %2119 = vmatpush2.msra.mxu0 0.0
      %2120 = vmatprep.subr.mxu0 0.0
      %2121 = vmatpush2.msra.mxu0 0.0
      %2122 = vmatprep.subr.mxu0 0.0
      %2123 = vmatpush2.msra.mxu0 0.0
      %2124 = vmatprep.subr.mxu0 0.0
      %2125 = vmatpush2.msra.mxu0 0.0
      %2126 = vmatprep.subr.mxu0 0.0
      %2127 = vmatpush2.msra.mxu0 0.0
      %2128 = vmatprep.subr.mxu0 0.0
      %2129 = vmatpush2.msra.mxu0 0.0
      %2130 = vmatprep.subr.mxu0 0.0
      %2131 = vmatpush2.msra.mxu0 0.0
      %2132 = vmatprep.subr.mxu0 0.0
      %2133 = vmatpush2.msra.mxu0 0.0
      %2134 = vmatprep.subr.mxu0 0.0
      %2135 = vmatpush2.msra.mxu0 0.0
      %2136 = vmatprep.subr.mxu0 0.0
      %2137 = vmatpush2.msra.mxu0 0.0
      %2138 = vmatprep.subr.mxu0 0.0
      %2139 = vmatpush2.msra.mxu0 0.0
      %2140 = vmatprep.subr.mxu0 0.0
      %2141 = vmatpush2.msra.mxu0 0.0
      %2142 = vmatprep.subr.mxu0 0.0
      %2143 = vmatpush2.msra.mxu0 0.0
      %2144 = vmatprep.subr.mxu0 0.0
      %2145 = vmatpush2.msra.mxu0 0.0
      %2146 = vmatprep.mubr.f32.mxu0 0.0
      %2147 = vmatmul.mubr.f32.gmra.mxu0 %v1918
      %v2148 = vpop.f32.mrf.mxu0
      %v2149 = vadd.f32 0.0, %v2148
      %v2150 = vpop.f32.mrf.mxu0
      %v2151 = vadd.f32 0.0, %v2150
      %2152 = vdwg.mxu0
      %2153 = vmatprep.subr.mxu0 0.0
      %2154 = vmatpush1.msra.mxu0 0.0
      %2155 = vmatprep.subr.mxu0 0.0
      %2156 = vmatpush1.msra.mxu0 0.0
      %2157 = vmatprep.subr.mxu0 0.0
      %2158 = vmatpush1.msra.mxu0 0.0
      %2159 = vmatprep.subr.mxu0 0.0
      %2160 = vmatpush1.msra.mxu0 0.0
      %2161 = vmatprep.subr.mxu0 0.0
      %2162 = vmatpush1.msra.mxu0 0.0
      %2163 = vmatprep.subr.mxu0 0.0
      %2164 = vmatpush1.msra.mxu0 0.0
      %2165 = vmatprep.subr.mxu0 0.0
      %2166 = vmatpush1.msra.mxu0 0.0
      %2167 = vmatprep.subr.mxu0 0.0
      %2168 = vmatpush1.msra.mxu0 0.0
      %2169 = vmatprep.subr.mxu0 0.0
      %2170 = vmatpush1.msra.mxu0 0.0
      %2171 = vmatprep.subr.mxu0 0.0
      %2172 = vmatpush1.msra.mxu0 0.0
      %2173 = vmatprep.subr.mxu0 0.0
      %2174 = vmatpush1.msra.mxu0 0.0
      %2175 = vmatprep.subr.mxu0 0.0
      %2176 = vmatpush1.msra.mxu0 0.0
      %2177 = vmatprep.subr.mxu0 0.0
      %2178 = vmatpush1.msra.mxu0 0.0
      %2179 = vmatprep.subr.mxu0 0.0
      %2180 = vmatpush1.msra.mxu0 0.0
      %2181 = vmatprep.subr.mxu0 0.0
      %2182 = vmatpush1.msra.mxu0 0.0
      %2183 = vmatprep.subr.mxu0 %v1934
      %2184 = vmatpush1.msra.mxu0 %v1932
      %2185 = vmatprep.subr.mxu0 0.0
      %2186 = vmatpush2.msra.mxu0 0.0
      %2187 = vmatprep.subr.mxu0 0.0
      %2188 = vmatpush2.msra.mxu0 0.0
      %2189 = vmatprep.subr.mxu0 0.0
      %2190 = vmatpush2.msra.mxu0 0.0
      %2191 = vmatprep.subr.mxu0 0.0
      %2192 = vmatpush2.msra.mxu0 0.0
      %2193 = vmatprep.subr.mxu0 0.0
      %2194 = vmatpush2.msra.mxu0 0.0
      %2195 = vmatprep.subr.mxu0 0.0
      %2196 = vmatpush2.msra.mxu0 0.0
      %2197 = vmatprep.subr.mxu0 0.0
      %2198 = vmatpush2.msra.mxu0 0.0
      %2199 = vmatprep.subr.mxu0 0.0
      %2200 = vmatpush2.msra.mxu0 0.0
      %2201 = vmatprep.subr.mxu0 0.0
      %2202 = vmatpush2.msra.mxu0 0.0
      %2203 = vmatprep.subr.mxu0 0.0
      %2204 = vmatpush2.msra.mxu0 0.0
      %2205 = vmatprep.subr.mxu0 0.0
      %2206 = vmatpush2.msra.mxu0 0.0
      %2207 = vmatprep.subr.mxu0 0.0
      %2208 = vmatpush2.msra.mxu0 0.0
      %2209 = vmatprep.subr.mxu0 0.0
      %2210 = vmatpush2.msra.mxu0 0.0
      %2211 = vmatprep.subr.mxu0 0.0
      %2212 = vmatpush2.msra.mxu0 0.0
      %2213 = vmatprep.subr.mxu0 0.0
      %2214 = vmatpush2.msra.mxu0 0.0
      %2215 = vmatprep.subr.mxu0 0.0
      %2216 = vmatpush2.msra.mxu0 0.0
      %2217 = vmatprep.mubr.f32.mxu0 0.0
      %2218 = vmatmul.mubr.f32.gmra.mxu0 %v1918
      %v2219 = vpop.f32.mrf.mxu0
      %v2220 = vadd.f32 0.0, %v2219
      %v2221 = vpop.f32.mrf.mxu0
      %v2222 = vadd.f32 0.0, %v2221
      %2223 = vdwg.mxu0
      %2224 = vmatprep.subr.mxu0 0.0
      %2225 = vmatpush1.msra.mxu0 0.0
      %2226 = vmatprep.subr.mxu0 0.0
      %2227 = vmatpush1.msra.mxu0 0.0
      %2228 = vmatprep.subr.mxu0 0.0
      %2229 = vmatpush1.msra.mxu0 0.0
      %2230 = vmatprep.subr.mxu0 0.0
      %2231 = vmatpush1.msra.mxu0 0.0
      %2232 = vmatprep.subr.mxu0 0.0
      %2233 = vmatpush1.msra.mxu0 0.0
      %2234 = vmatprep.subr.mxu0 0.0
      %2235 = vmatpush1.msra.mxu0 0.0
      %2236 = vmatprep.subr.mxu0 0.0
      %2237 = vmatpush1.msra.mxu0 0.0
      %2238 = vmatprep.subr.mxu0 0.0
      %2239 = vmatpush1.msra.mxu0 0.0
      %2240 = vmatprep.subr.mxu0 0.0
      %2241 = vmatpush1.msra.mxu0 0.0
      %2242 = vmatprep.subr.mxu0 0.0
      %2243 = vmatpush1.msra.mxu0 0.0
      %2244 = vmatprep.subr.mxu0 0.0
      %2245 = vmatpush1.msra.mxu0 0.0
      %2246 = vmatprep.subr.mxu0 0.0
      %2247 = vmatpush1.msra.mxu0 0.0
      %2248 = vmatprep.subr.mxu0 0.0
      %2249 = vmatpush1.msra.mxu0 0.0
      %2250 = vmatprep.subr.mxu0 0.0
      %2251 = vmatpush1.msra.mxu0 0.0
      %2252 = vmatprep.subr.mxu0 0.0
      %2253 = vmatpush1.msra.mxu0 0.0
      %2254 = vmatprep.subr.mxu0 %v1938
      %2255 = vmatpush1.msra.mxu0 %v1936
      %2256 = vmatprep.subr.mxu0 0.0
      %2257 = vmatpush2.msra.mxu0 0.0
      %2258 = vmatprep.subr.mxu0 0.0
      %2259 = vmatpush2.msra.mxu0 0.0
      %2260 = vmatprep.subr.mxu0 0.0
      %2261 = vmatpush2.msra.mxu0 0.0
      %2262 = vmatprep.subr.mxu0 0.0
      %2263 = vmatpush2.msra.mxu0 0.0
      %2264 = vmatprep.subr.mxu0 0.0
      %2265 = vmatpush2.msra.mxu0 0.0
      %2266 = vmatprep.subr.mxu0 0.0
      %2267 = vmatpush2.msra.mxu0 0.0
      %2268 = vmatprep.subr.mxu0 0.0
      %2269 = vmatpush2.msra.mxu0 0.0
      %2270 = vmatprep.subr.mxu0 0.0
      %2271 = vmatpush2.msra.mxu0 0.0
      %2272 = vmatprep.subr.mxu0 0.0
      %2273 = vmatpush2.msra.mxu0 0.0
      %2274 = vmatprep.subr.mxu0 0.0
      %2275 = vmatpush2.msra.mxu0 0.0
      %2276 = vmatprep.subr.mxu0 0.0
      %2277 = vmatpush2.msra.mxu0 0.0
      %2278 = vmatprep.subr.mxu0 0.0
      %2279 = vmatpush2.msra.mxu0 0.0
      %2280 = vmatprep.subr.mxu0 0.0
      %2281 = vmatpush2.msra.mxu0 0.0
      %2282 = vmatprep.subr.mxu0 0.0
      %2283 = vmatpush2.msra.mxu0 0.0
      %2284 = vmatprep.subr.mxu0 0.0
      %2285 = vmatpush2.msra.mxu0 0.0
      %2286 = vmatprep.subr.mxu0 0.0
      %2287 = vmatpush2.msra.mxu0 0.0
      %2288 = vmatprep.mubr.f32.mxu0 0.0
      %2289 = vmatmul.mubr.f32.gmra.mxu0 %v1918
      %v2290 = vpop.f32.mrf.mxu0
      %v2291 = vadd.f32 0.0, %v2290
      %v2292 = vpop.f32.mrf.mxu0
      %v2293 = vadd.f32 0.0, %v2292
      %2294 = vdwg.mxu0
      %v2295 = vadd.f32 %v1860, %v2007
      %v2296 = vadd.f32 %v1861, %v2009
      %v2297 = vadd.f32 %v1862, %v2078
      %v2298 = vadd.f32 %v1863, %v2080
      %v2299 = vadd.f32 %v1864, %v2149
      %v2300 = vadd.f32 %v1865, %v2151
      %v2301 = vadd.f32 %v1866, %v2220
      %v2302 = vadd.f32 %v1867, %v2222
      %v2303 = vadd.f32 %v1868, %v2291
      %v2304 = vadd.f32 %v1869, %v2293
      %v2305 = vld [vmem:[%s183] sm:$0xff]
      %v2306 = vld [vmem:[%s183 + $0x8] sm:$0xff]
      %v2307 = vld [vmem:[%s183 + $0x10] sm:$0xff]
      %v2308 = vld [vmem:[%s183 + $0x18] sm:$0xff]
      %v2309 = vld [vmem:[%s183 + $0x20] sm:$0xff]
      %s2310 = scalar_lea.vmem %s1, 40
      %v2311 = vld [vmem:[%s2310] sm:$0xff]
      %v2317 = vcombine.high %v2305, %v2305
      %v2318 = vcombine.high %v2306, %v2306
      %v2319 = vcombine.high %v2307, %v2307
      %v2320 = vcombine.high %v2308, %v2308
      %v2321 = vcombine.high %v2309, %v2309
      %2322 = vrot.lane.b32.xlu0 %v2305, 91
      %v2323 = vpop.permute.xlu0 %2322
      %2324 = vrot.lane.b32.xlu0 %v2317, 91
      %v2325 = vpop.permute.xlu0 %2324
      %2326 = vrot.lane.b32.xlu0 %v2306, 91
      %v2327 = vpop.permute.xlu0 %2326
      %2328 = vrot.lane.b32.xlu0 %v2318, 91
      %v2329 = vpop.permute.xlu0 %2328
      %2330 = vrot.lane.b32.xlu0 %v2307, 91
      %v2331 = vpop.permute.xlu0 %2330
      %2332 = vrot.lane.b32.xlu0 %v2319, 91
      %v2333 = vpop.permute.xlu0 %2332
      %2334 = vrot.lane.b32.xlu0 %v2308, 91
      %v2335 = vpop.permute.xlu0 %2334
      %2336 = vrot.lane.b32.xlu0 %v2320, 91
      %v2337 = vpop.permute.xlu0 %2336
      %2338 = vrot.lane.b32.xlu0 %v2309, 91
      %v2339 = vpop.permute.xlu0 %2338
      %2340 = vrot.lane.b32.xlu0 %v2321, 91
      %v2341 = vpop.permute.xlu0 %2340
      %vm2342 = vcmask 744448
      %v2343 = vsel %vm2342, %v2323, %v2325
      %v2344 = vsel %vm2342, %v2325, %v2327
      %v2345 = vsel %vm2342, %v2327, %v2329
      %v2346 = vsel %vm2342, %v2329, %v2331
      %v2347 = vsel %vm2342, %v2331, %v2333
      %v2348 = vsel %vm2342, %v2333, %v2335
      %v2349 = vsel %vm2342, %v2335, %v2337
      %v2350 = vsel %vm2342, %v2337, %v2339
      %v2351 = vsel %vm2342, %v2339, %v2341
      %v2353 = vsel %vm242, %v2311, 0
      %v2355 = vsel %vm246, %v2343, 0
      %v2357 = vsel %vm246, %v2344, 0
      %v2359 = vsel %vm246, %v2345, 0
      %v2361 = vsel %vm246, %v2346, 0
      %v2363 = vsel %vm246, %v2347, 0
      %v2365 = vsel %vm246, %v2348, 0
      %v2367 = vsel %vm246, %v2349, 0
      %v2369 = vsel %vm246, %v2350, 0
      %v2371 = vsel %vm246, %v2351, 0
      %v2373 = vsel %vm246, %v2341, 0
      %2375 = vmatprep.subr.mxu0 0.0
      %2376 = vmatpush1.msra.mxu0 0.0
      %2377 = vmatprep.subr.mxu0 0.0
      %2378 = vmatpush1.msra.mxu0 0.0
      %2379 = vmatprep.subr.mxu0 0.0
      %2380 = vmatpush1.msra.mxu0 0.0
      %2381 = vmatprep.subr.mxu0 0.0
      %2382 = vmatpush1.msra.mxu0 0.0
      %2383 = vmatprep.subr.mxu0 0.0
      %2384 = vmatpush1.msra.mxu0 0.0
      %2385 = vmatprep.subr.mxu0 0.0
      %2386 = vmatpush1.msra.mxu0 0.0
      %2387 = vmatprep.subr.mxu0 0.0
      %2388 = vmatpush1.msra.mxu0 0.0
      %2389 = vmatprep.subr.mxu0 0.0
      %2390 = vmatpush1.msra.mxu0 0.0
      %2391 = vmatprep.subr.mxu0 0.0
      %2392 = vmatpush1.msra.mxu0 0.0
      %2393 = vmatprep.subr.mxu0 0.0
      %2394 = vmatpush1.msra.mxu0 0.0
      %2395 = vmatprep.subr.mxu0 0.0
      %2396 = vmatpush1.msra.mxu0 0.0
      %2397 = vmatprep.subr.mxu0 0.0
      %2398 = vmatpush1.msra.mxu0 0.0
      %2399 = vmatprep.subr.mxu0 0.0
      %2400 = vmatpush1.msra.mxu0 0.0
      %2401 = vmatprep.subr.mxu0 0.0
      %2402 = vmatpush1.msra.mxu0 0.0
      %2403 = vmatprep.subr.mxu0 0.0
      %2404 = vmatpush1.msra.mxu0 0.0
      %2405 = vmatprep.subr.mxu0 %v2357
      %2406 = vmatpush1.msra.mxu0 %v2355
      %2407 = vmatprep.subr.mxu0 0.0
      %2408 = vmatpush2.msra.mxu0 0.0
      %2409 = vmatprep.subr.mxu0 0.0
      %2410 = vmatpush2.msra.mxu0 0.0
      %2411 = vmatprep.subr.mxu0 0.0
      %2412 = vmatpush2.msra.mxu0 0.0
      %2413 = vmatprep.subr.mxu0 0.0
      %2414 = vmatpush2.msra.mxu0 0.0
      %2415 = vmatprep.subr.mxu0 0.0
      %2416 = vmatpush2.msra.mxu0 0.0
      %2417 = vmatprep.subr.mxu0 0.0
      %2418 = vmatpush2.msra.mxu0 0.0
      %2419 = vmatprep.subr.mxu0 0.0
      %2420 = vmatpush2.msra.mxu0 0.0
      %2421 = vmatprep.subr.mxu0 0.0
      %2422 = vmatpush2.msra.mxu0 0.0
      %2423 = vmatprep.subr.mxu0 0.0
      %2424 = vmatpush2.msra.mxu0 0.0
      %2425 = vmatprep.subr.mxu0 0.0
      %2426 = vmatpush2.msra.mxu0 0.0
      %2427 = vmatprep.subr.mxu0 0.0
      %2428 = vmatpush2.msra.mxu0 0.0
      %2429 = vmatprep.subr.mxu0 0.0
      %2430 = vmatpush2.msra.mxu0 0.0
      %2431 = vmatprep.subr.mxu0 0.0
      %2432 = vmatpush2.msra.mxu0 0.0
      %2433 = vmatprep.subr.mxu0 0.0
      %2434 = vmatpush2.msra.mxu0 0.0
      %2435 = vmatprep.subr.mxu0 0.0
      %2436 = vmatpush2.msra.mxu0 0.0
      %2437 = vmatprep.subr.mxu0 0.0
      %2438 = vmatpush2.msra.mxu0 0.0
      %2439 = vmatprep.mubr.f32.mxu0 0.0
      %2440 = vmatmul.mubr.f32.gmra.mxu0 %v2353
      %v2441 = vpop.f32.mrf.mxu0
      %v2442 = vadd.f32 0.0, %v2441
      %v2443 = vpop.f32.mrf.mxu0
      %v2444 = vadd.f32 0.0, %v2443
      %2445 = vdwg.mxu0
      %2446 = vmatprep.subr.mxu0 0.0
      %2447 = vmatpush1.msra.mxu0 0.0
      %2448 = vmatprep.subr.mxu0 0.0
      %2449 = vmatpush1.msra.mxu0 0.0
      %2450 = vmatprep.subr.mxu0 0.0
      %2451 = vmatpush1.msra.mxu0 0.0
      %2452 = vmatprep.subr.mxu0 0.0
      %2453 = vmatpush1.msra.mxu0 0.0
      %2454 = vmatprep.subr.mxu0 0.0
      %2455 = vmatpush1.msra.mxu0 0.0
      %2456 = vmatprep.subr.mxu0 0.0
      %2457 = vmatpush1.msra.mxu0 0.0
      %2458 = vmatprep.subr.mxu0 0.0
      %2459 = vmatpush1.msra.mxu0 0.0
      %2460 = vmatprep.subr.mxu0 0.0
      %2461 = vmatpush1.msra.mxu0 0.0
      %2462 = vmatprep.subr.mxu0 0.0
      %2463 = vmatpush1.msra.mxu0 0.0
      %2464 = vmatprep.subr.mxu0 0.0
      %2465 = vmatpush1.msra.mxu0 0.0
      %2466 = vmatprep.subr.mxu0 0.0
      %2467 = vmatpush1.msra.mxu0 0.0
      %2468 = vmatprep.subr.mxu0 0.0
      %2469 = vmatpush1.msra.mxu0 0.0
      %2470 = vmatprep.subr.mxu0 0.0
      %2471 = vmatpush1.msra.mxu0 0.0
      %2472 = vmatprep.subr.mxu0 0.0
      %2473 = vmatpush1.msra.mxu0 0.0
      %2474 = vmatprep.subr.mxu0 0.0
      %2475 = vmatpush1.msra.mxu0 0.0
      %2476 = vmatprep.subr.mxu0 %v2361
      %2477 = vmatpush1.msra.mxu0 %v2359
      %2478 = vmatprep.subr.mxu0 0.0
      %2479 = vmatpush2.msra.mxu0 0.0
      %2480 = vmatprep.subr.mxu0 0.0
      %2481 = vmatpush2.msra.mxu0 0.0
      %2482 = vmatprep.subr.mxu0 0.0
      %2483 = vmatpush2.msra.mxu0 0.0
      %2484 = vmatprep.subr.mxu0 0.0
      %2485 = vmatpush2.msra.mxu0 0.0
      %2486 = vmatprep.subr.mxu0 0.0
      %2487 = vmatpush2.msra.mxu0 0.0
      %2488 = vmatprep.subr.mxu0 0.0
      %2489 = vmatpush2.msra.mxu0 0.0
      %2490 = vmatprep.subr.mxu0 0.0
      %2491 = vmatpush2.msra.mxu0 0.0
      %2492 = vmatprep.subr.mxu0 0.0
      %2493 = vmatpush2.msra.mxu0 0.0
      %2494 = vmatprep.subr.mxu0 0.0
      %2495 = vmatpush2.msra.mxu0 0.0
      %2496 = vmatprep.subr.mxu0 0.0
      %2497 = vmatpush2.msra.mxu0 0.0
      %2498 = vmatprep.subr.mxu0 0.0
      %2499 = vmatpush2.msra.mxu0 0.0
      %2500 = vmatprep.subr.mxu0 0.0
      %2501 = vmatpush2.msra.mxu0 0.0
      %2502 = vmatprep.subr.mxu0 0.0
      %2503 = vmatpush2.msra.mxu0 0.0
      %2504 = vmatprep.subr.mxu0 0.0
      %2505 = vmatpush2.msra.mxu0 0.0
      %2506 = vmatprep.subr.mxu0 0.0
      %2507 = vmatpush2.msra.mxu0 0.0
      %2508 = vmatprep.subr.mxu0 0.0
      %2509 = vmatpush2.msra.mxu0 0.0
      %2510 = vmatprep.mubr.f32.mxu0 0.0
      %2511 = vmatmul.mubr.f32.gmra.mxu0 %v2353
      %v2512 = vpop.f32.mrf.mxu0
      %v2513 = vadd.f32 0.0, %v2512
      %v2514 = vpop.f32.mrf.mxu0
      %v2515 = vadd.f32 0.0, %v2514
      %2516 = vdwg.mxu0
      %2517 = vmatprep.subr.mxu0 0.0
      %2518 = vmatpush1.msra.mxu0 0.0
      %2519 = vmatprep.subr.mxu0 0.0
      %2520 = vmatpush1.msra.mxu0 0.0
      %2521 = vmatprep.subr.mxu0 0.0
      %2522 = vmatpush1.msra.mxu0 0.0
      %2523 = vmatprep.subr.mxu0 0.0
      %2524 = vmatpush1.msra.mxu0 0.0
      %2525 = vmatprep.subr.mxu0 0.0
      %2526 = vmatpush1.msra.mxu0 0.0
      %2527 = vmatprep.subr.mxu0 0.0
      %2528 = vmatpush1.msra.mxu0 0.0
      %2529 = vmatprep.subr.mxu0 0.0
      %2530 = vmatpush1.msra.mxu0 0.0
      %2531 = vmatprep.subr.mxu0 0.0
      %2532 = vmatpush1.msra.mxu0 0.0
      %2533 = vmatprep.subr.mxu0 0.0
      %2534 = vmatpush1.msra.mxu0 0.0
      %2535 = vmatprep.subr.mxu0 0.0
      %2536 = vmatpush1.msra.mxu0 0.0
      %2537 = vmatprep.subr.mxu0 0.0
      %2538 = vmatpush1.msra.mxu0 0.0
      %2539 = vmatprep.subr.mxu0 0.0
      %2540 = vmatpush1.msra.mxu0 0.0
      %2541 = vmatprep.subr.mxu0 0.0
      %2542 = vmatpush1.msra.mxu0 0.0
      %2543 = vmatprep.subr.mxu0 0.0
      %2544 = vmatpush1.msra.mxu0 0.0
      %2545 = vmatprep.subr.mxu0 0.0
      %2546 = vmatpush1.msra.mxu0 0.0
      %2547 = vmatprep.subr.mxu0 %v2365
      %2548 = vmatpush1.msra.mxu0 %v2363
      %2549 = vmatprep.subr.mxu0 0.0
      %2550 = vmatpush2.msra.mxu0 0.0
      %2551 = vmatprep.subr.mxu0 0.0
      %2552 = vmatpush2.msra.mxu0 0.0
      %2553 = vmatprep.subr.mxu0 0.0
      %2554 = vmatpush2.msra.mxu0 0.0
      %2555 = vmatprep.subr.mxu0 0.0
      %2556 = vmatpush2.msra.mxu0 0.0
      %2557 = vmatprep.subr.mxu0 0.0
      %2558 = vmatpush2.msra.mxu0 0.0
      %2559 = vmatprep.subr.mxu0 0.0
      %2560 = vmatpush2.msra.mxu0 0.0
      %2561 = vmatprep.subr.mxu0 0.0
      %2562 = vmatpush2.msra.mxu0 0.0
      %2563 = vmatprep.subr.mxu0 0.0
      %2564 = vmatpush2.msra.mxu0 0.0
      %2565 = vmatprep.subr.mxu0 0.0
      %2566 = vmatpush2.msra.mxu0 0.0
      %2567 = vmatprep.subr.mxu0 0.0
      %2568 = vmatpush2.msra.mxu0 0.0
      %2569 = vmatprep.subr.mxu0 0.0
      %2570 = vmatpush2.msra.mxu0 0.0
      %2571 = vmatprep.subr.mxu0 0.0
      %2572 = vmatpush2.msra.mxu0 0.0
      %2573 = vmatprep.subr.mxu0 0.0
      %2574 = vmatpush2.msra.mxu0 0.0
      %2575 = vmatprep.subr.mxu0 0.0
      %2576 = vmatpush2.msra.mxu0 0.0
      %2577 = vmatprep.subr.mxu0 0.0
      %2578 = vmatpush2.msra.mxu0 0.0
      %2579 = vmatprep.subr.mxu0 0.0
      %2580 = vmatpush2.msra.mxu0 0.0
      %2581 = vmatprep.mubr.f32.mxu0 0.0
      %2582 = vmatmul.mubr.f32.gmra.mxu0 %v2353
      %v2583 = vpop.f32.mrf.mxu0
      %v2584 = vadd.f32 0.0, %v2583
      %v2585 = vpop.f32.mrf.mxu0
      %v2586 = vadd.f32 0.0, %v2585
      %2587 = vdwg.mxu0
      %2588 = vmatprep.subr.mxu0 0.0
      %2589 = vmatpush1.msra.mxu0 0.0
      %2590 = vmatprep.subr.mxu0 0.0
      %2591 = vmatpush1.msra.mxu0 0.0
      %2592 = vmatprep.subr.mxu0 0.0
      %2593 = vmatpush1.msra.mxu0 0.0
      %2594 = vmatprep.subr.mxu0 0.0
      %2595 = vmatpush1.msra.mxu0 0.0
      %2596 = vmatprep.subr.mxu0 0.0
      %2597 = vmatpush1.msra.mxu0 0.0
      %2598 = vmatprep.subr.mxu0 0.0
      %2599 = vmatpush1.msra.mxu0 0.0
      %2600 = vmatprep.subr.mxu0 0.0
      %2601 = vmatpush1.msra.mxu0 0.0
      %2602 = vmatprep.subr.mxu0 0.0
      %2603 = vmatpush1.msra.mxu0 0.0
      %2604 = vmatprep.subr.mxu0 0.0
      %2605 = vmatpush1.msra.mxu0 0.0
      %2606 = vmatprep.subr.mxu0 0.0
      %2607 = vmatpush1.msra.mxu0 0.0
      %2608 = vmatprep.subr.mxu0 0.0
      %2609 = vmatpush1.msra.mxu0 0.0
      %2610 = vmatprep.subr.mxu0 0.0
      %2611 = vmatpush1.msra.mxu0 0.0
      %2612 = vmatprep.subr.mxu0 0.0
      %2613 = vmatpush1.msra.mxu0 0.0
      %2614 = vmatprep.subr.mxu0 0.0
      %2615 = vmatpush1.msra.mxu0 0.0
      %2616 = vmatprep.subr.mxu0 0.0
      %2617 = vmatpush1.msra.mxu0 0.0
      %2618 = vmatprep.subr.mxu0 %v2369
      %2619 = vmatpush1.msra.mxu0 %v2367
      %2620 = vmatprep.subr.mxu0 0.0
      %2621 = vmatpush2.msra.mxu0 0.0
      %2622 = vmatprep.subr.mxu0 0.0
      %2623 = vmatpush2.msra.mxu0 0.0
      %2624 = vmatprep.subr.mxu0 0.0
      %2625 = vmatpush2.msra.mxu0 0.0
      %2626 = vmatprep.subr.mxu0 0.0
      %2627 = vmatpush2.msra.mxu0 0.0
      %2628 = vmatprep.subr.mxu0 0.0
      %2629 = vmatpush2.msra.mxu0 0.0
      %2630 = vmatprep.subr.mxu0 0.0
      %2631 = vmatpush2.msra.mxu0 0.0
      %2632 = vmatprep.subr.mxu0 0.0
      %2633 = vmatpush2.msra.mxu0 0.0
      %2634 = vmatprep.subr.mxu0 0.0
      %2635 = vmatpush2.msra.mxu0 0.0
      %2636 = vmatprep.subr.mxu0 0.0
      %2637 = vmatpush2.msra.mxu0 0.0
      %2638 = vmatprep.subr.mxu0 0.0
      %2639 = vmatpush2.msra.mxu0 0.0
      %2640 = vmatprep.subr.mxu0 0.0
      %2641 = vmatpush2.msra.mxu0 0.0
      %2642 = vmatprep.subr.mxu0 0.0
      %2643 = vmatpush2.msra.mxu0 0.0
      %2644 = vmatprep.subr.mxu0 0.0
      %2645 = vmatpush2.msra.mxu0 0.0
      %2646 = vmatprep.subr.mxu0 0.0
      %2647 = vmatpush2.msra.mxu0 0.0
      %2648 = vmatprep.subr.mxu0 0.0
      %2649 = vmatpush2.msra.mxu0 0.0
      %2650 = vmatprep.subr.mxu0 0.0
      %2651 = vmatpush2.msra.mxu0 0.0
      %2652 = vmatprep.mubr.f32.mxu0 0.0
      %2653 = vmatmul.mubr.f32.gmra.mxu0 %v2353
      %v2654 = vpop.f32.mrf.mxu0
      %v2655 = vadd.f32 0.0, %v2654
      %v2656 = vpop.f32.mrf.mxu0
      %v2657 = vadd.f32 0.0, %v2656
      %2658 = vdwg.mxu0
      %2659 = vmatprep.subr.mxu0 0.0
      %2660 = vmatpush1.msra.mxu0 0.0
      %2661 = vmatprep.subr.mxu0 0.0
      %2662 = vmatpush1.msra.mxu0 0.0
      %2663 = vmatprep.subr.mxu0 0.0
      %2664 = vmatpush1.msra.mxu0 0.0
      %2665 = vmatprep.subr.mxu0 0.0
      %2666 = vmatpush1.msra.mxu0 0.0
      %2667 = vmatprep.subr.mxu0 0.0
      %2668 = vmatpush1.msra.mxu0 0.0
      %2669 = vmatprep.subr.mxu0 0.0
      %2670 = vmatpush1.msra.mxu0 0.0
      %2671 = vmatprep.subr.mxu0 0.0
      %2672 = vmatpush1.msra.mxu0 0.0
      %2673 = vmatprep.subr.mxu0 0.0
      %2674 = vmatpush1.msra.mxu0 0.0
      %2675 = vmatprep.subr.mxu0 0.0
      %2676 = vmatpush1.msra.mxu0 0.0
      %2677 = vmatprep.subr.mxu0 0.0
      %2678 = vmatpush1.msra.mxu0 0.0
      %2679 = vmatprep.subr.mxu0 0.0
      %2680 = vmatpush1.msra.mxu0 0.0
      %2681 = vmatprep.subr.mxu0 0.0
      %2682 = vmatpush1.msra.mxu0 0.0
      %2683 = vmatprep.subr.mxu0 0.0
      %2684 = vmatpush1.msra.mxu0 0.0
      %2685 = vmatprep.subr.mxu0 0.0
      %2686 = vmatpush1.msra.mxu0 0.0
      %2687 = vmatprep.subr.mxu0 0.0
      %2688 = vmatpush1.msra.mxu0 0.0
      %2689 = vmatprep.subr.mxu0 %v2373
      %2690 = vmatpush1.msra.mxu0 %v2371
      %2691 = vmatprep.subr.mxu0 0.0
      %2692 = vmatpush2.msra.mxu0 0.0
      %2693 = vmatprep.subr.mxu0 0.0
      %2694 = vmatpush2.msra.mxu0 0.0
      %2695 = vmatprep.subr.mxu0 0.0
      %2696 = vmatpush2.msra.mxu0 0.0
      %2697 = vmatprep.subr.mxu0 0.0
      %2698 = vmatpush2.msra.mxu0 0.0
      %2699 = vmatprep.subr.mxu0 0.0
      %2700 = vmatpush2.msra.mxu0 0.0
      %2701 = vmatprep.subr.mxu0 0.0
      %2702 = vmatpush2.msra.mxu0 0.0
      %2703 = vmatprep.subr.mxu0 0.0
      %2704 = vmatpush2.msra.mxu0 0.0
      %2705 = vmatprep.subr.mxu0 0.0
      %2706 = vmatpush2.msra.mxu0 0.0
      %2707 = vmatprep.subr.mxu0 0.0
      %2708 = vmatpush2.msra.mxu0 0.0
      %2709 = vmatprep.subr.mxu0 0.0
      %2710 = vmatpush2.msra.mxu0 0.0
      %2711 = vmatprep.subr.mxu0 0.0
      %2712 = vmatpush2.msra.mxu0 0.0
      %2713 = vmatprep.subr.mxu0 0.0
      %2714 = vmatpush2.msra.mxu0 0.0
      %2715 = vmatprep.subr.mxu0 0.0
      %2716 = vmatpush2.msra.mxu0 0.0
      %2717 = vmatprep.subr.mxu0 0.0
      %2718 = vmatpush2.msra.mxu0 0.0
      %2719 = vmatprep.subr.mxu0 0.0
      %2720 = vmatpush2.msra.mxu0 0.0
      %2721 = vmatprep.subr.mxu0 0.0
      %2722 = vmatpush2.msra.mxu0 0.0
      %2723 = vmatprep.mubr.f32.mxu0 0.0
      %2724 = vmatmul.mubr.f32.gmra.mxu0 %v2353
      %v2725 = vpop.f32.mrf.mxu0
      %v2726 = vadd.f32 0.0, %v2725
      %v2727 = vpop.f32.mrf.mxu0
      %v2728 = vadd.f32 0.0, %v2727
      %2729 = vdwg.mxu0
      %v2730 = vadd.f32 %v2295, %v2442
      %v2731 = vadd.f32 %v2296, %v2444
      %v2732 = vadd.f32 %v2297, %v2513
      %v2733 = vadd.f32 %v2298, %v2515
      %v2734 = vadd.f32 %v2299, %v2584
      %v2735 = vadd.f32 %v2300, %v2586
      %v2736 = vadd.f32 %v2301, %v2655
      %v2737 = vadd.f32 %v2302, %v2657
      %v2738 = vadd.f32 %v2303, %v2726
      %v2739 = vadd.f32 %v2304, %v2728
      %v2740 = vld [vmem:[%s183] sm:$0xff]
      %v2741 = vld [vmem:[%s183 + $0x8] sm:$0xff]
      %v2742 = vld [vmem:[%s183 + $0x10] sm:$0xff]
      %v2743 = vld [vmem:[%s183 + $0x18] sm:$0xff]
      %v2744 = vld [vmem:[%s183 + $0x20] sm:$0xff]
      %s2745 = scalar_lea.vmem %s1, 48
      %v2746 = vld [vmem:[%s2745] sm:$0xff]
      %v2752 = vcombine.high %v2740, %v2740
      %v2753 = vcombine.high %v2741, %v2741
      %v2754 = vcombine.high %v2742, %v2742
      %v2755 = vcombine.high %v2743, %v2743
      %v2756 = vcombine.high %v2744, %v2744
      %2757 = vrot.lane.b32.xlu0 %v2740, 58
      %v2758 = vpop.permute.xlu0 %2757
      %2759 = vrot.lane.b32.xlu0 %v2752, 58
      %v2760 = vpop.permute.xlu0 %2759
      %2761 = vrot.lane.b32.xlu0 %v2741, 58
      %v2762 = vpop.permute.xlu0 %2761
      %2763 = vrot.lane.b32.xlu0 %v2753, 58
      %v2764 = vpop.permute.xlu0 %2763
      %2765 = vrot.lane.b32.xlu0 %v2742, 58
      %v2766 = vpop.permute.xlu0 %2765
      %2767 = vrot.lane.b32.xlu0 %v2754, 58
      %v2768 = vpop.permute.xlu0 %2767
      %2769 = vrot.lane.b32.xlu0 %v2743, 58
      %v2770 = vpop.permute.xlu0 %2769
      %2771 = vrot.lane.b32.xlu0 %v2755, 58
      %v2772 = vpop.permute.xlu0 %2771
      %2773 = vrot.lane.b32.xlu0 %v2744, 58
      %v2774 = vpop.permute.xlu0 %2773
      %2775 = vrot.lane.b32.xlu0 %v2756, 58
      %v2776 = vpop.permute.xlu0 %2775
      %vm2777 = vcmask 474112
      %v2778 = vsel %vm2777, %v2758, %v2760
      %v2779 = vsel %vm2777, %v2760, %v2762
      %v2780 = vsel %vm2777, %v2762, %v2764
      %v2781 = vsel %vm2777, %v2764, %v2766
      %v2782 = vsel %vm2777, %v2766, %v2768
      %v2783 = vsel %vm2777, %v2768, %v2770
      %v2784 = vsel %vm2777, %v2770, %v2772
      %v2785 = vsel %vm2777, %v2772, %v2774
      %v2786 = vsel %vm2777, %v2774, %v2776
      %v2788 = vsel %vm242, %v2746, 0
      %v2790 = vsel %vm246, %v2778, 0
      %v2792 = vsel %vm246, %v2779, 0
      %v2794 = vsel %vm246, %v2780, 0
      %v2796 = vsel %vm246, %v2781, 0
      %v2798 = vsel %vm246, %v2782, 0
      %v2800 = vsel %vm246, %v2783, 0
      %v2802 = vsel %vm246, %v2784, 0
      %v2804 = vsel %vm246, %v2785, 0
      %v2806 = vsel %vm246, %v2786, 0
      %v2808 = vsel %vm246, %v2776, 0
      %2810 = vmatprep.subr.mxu0 0.0
      %2811 = vmatpush1.msra.mxu0 0.0
      %2812 = vmatprep.subr.mxu0 0.0
      %2813 = vmatpush1.msra.mxu0 0.0
      %2814 = vmatprep.subr.mxu0 0.0
      %2815 = vmatpush1.msra.mxu0 0.0
      %2816 = vmatprep.subr.mxu0 0.0
      %2817 = vmatpush1.msra.mxu0 0.0
      %2818 = vmatprep.subr.mxu0 0.0
      %2819 = vmatpush1.msra.mxu0 0.0
      %2820 = vmatprep.subr.mxu0 0.0
      %2821 = vmatpush1.msra.mxu0 0.0
      %2822 = vmatprep.subr.mxu0 0.0
      %2823 = vmatpush1.msra.mxu0 0.0
      %2824 = vmatprep.subr.mxu0 0.0
      %2825 = vmatpush1.msra.mxu0 0.0
      %2826 = vmatprep.subr.mxu0 0.0
      %2827 = vmatpush1.msra.mxu0 0.0
      %2828 = vmatprep.subr.mxu0 0.0
      %2829 = vmatpush1.msra.mxu0 0.0
      %2830 = vmatprep.subr.mxu0 0.0
      %2831 = vmatpush1.msra.mxu0 0.0
      %2832 = vmatprep.subr.mxu0 0.0
      %2833 = vmatpush1.msra.mxu0 0.0
      %2834 = vmatprep.subr.mxu0 0.0
      %2835 = vmatpush1.msra.mxu0 0.0
      %2836 = vmatprep.subr.mxu0 0.0
      %2837 = vmatpush1.msra.mxu0 0.0
      %2838 = vmatprep.subr.mxu0 0.0
      %2839 = vmatpush1.msra.mxu0 0.0
      %2840 = vmatprep.subr.mxu0 %v2792
      %2841 = vmatpush1.msra.mxu0 %v2790
      %2842 = vmatprep.subr.mxu0 0.0
      %2843 = vmatpush2.msra.mxu0 0.0
      %2844 = vmatprep.subr.mxu0 0.0
      %2845 = vmatpush2.msra.mxu0 0.0
      %2846 = vmatprep.subr.mxu0 0.0
      %2847 = vmatpush2.msra.mxu0 0.0
      %2848 = vmatprep.subr.mxu0 0.0
      %2849 = vmatpush2.msra.mxu0 0.0
      %2850 = vmatprep.subr.mxu0 0.0
      %2851 = vmatpush2.msra.mxu0 0.0
      %2852 = vmatprep.subr.mxu0 0.0
      %2853 = vmatpush2.msra.mxu0 0.0
      %2854 = vmatprep.subr.mxu0 0.0
      %2855 = vmatpush2.msra.mxu0 0.0
      %2856 = vmatprep.subr.mxu0 0.0
      %2857 = vmatpush2.msra.mxu0 0.0
      %2858 = vmatprep.subr.mxu0 0.0
      %2859 = vmatpush2.msra.mxu0 0.0
      %2860 = vmatprep.subr.mxu0 0.0
      %2861 = vmatpush2.msra.mxu0 0.0
      %2862 = vmatprep.subr.mxu0 0.0
      %2863 = vmatpush2.msra.mxu0 0.0
      %2864 = vmatprep.subr.mxu0 0.0
      %2865 = vmatpush2.msra.mxu0 0.0
      %2866 = vmatprep.subr.mxu0 0.0
      %2867 = vmatpush2.msra.mxu0 0.0
      %2868 = vmatprep.subr.mxu0 0.0
      %2869 = vmatpush2.msra.mxu0 0.0
      %2870 = vmatprep.subr.mxu0 0.0
      %2871 = vmatpush2.msra.mxu0 0.0
      %2872 = vmatprep.subr.mxu0 0.0
      %2873 = vmatpush2.msra.mxu0 0.0
      %2874 = vmatprep.mubr.f32.mxu0 0.0
      %2875 = vmatmul.mubr.f32.gmra.mxu0 %v2788
      %v2876 = vpop.f32.mrf.mxu0
      %v2877 = vadd.f32 0.0, %v2876
      %v2878 = vpop.f32.mrf.mxu0
      %v2879 = vadd.f32 0.0, %v2878
      %2880 = vdwg.mxu0
      %2881 = vmatprep.subr.mxu0 0.0
      %2882 = vmatpush1.msra.mxu0 0.0
      %2883 = vmatprep.subr.mxu0 0.0
      %2884 = vmatpush1.msra.mxu0 0.0
      %2885 = vmatprep.subr.mxu0 0.0
      %2886 = vmatpush1.msra.mxu0 0.0
      %2887 = vmatprep.subr.mxu0 0.0
      %2888 = vmatpush1.msra.mxu0 0.0
      %2889 = vmatprep.subr.mxu0 0.0
      %2890 = vmatpush1.msra.mxu0 0.0
      %2891 = vmatprep.subr.mxu0 0.0
      %2892 = vmatpush1.msra.mxu0 0.0
      %2893 = vmatprep.subr.mxu0 0.0
      %2894 = vmatpush1.msra.mxu0 0.0
      %2895 = vmatprep.subr.mxu0 0.0
      %2896 = vmatpush1.msra.mxu0 0.0
      %2897 = vmatprep.subr.mxu0 0.0
      %2898 = vmatpush1.msra.mxu0 0.0
      %2899 = vmatprep.subr.mxu0 0.0
      %2900 = vmatpush1.msra.mxu0 0.0
      %2901 = vmatprep.subr.mxu0 0.0
      %2902 = vmatpush1.msra.mxu0 0.0
      %2903 = vmatprep.subr.mxu0 0.0
      %2904 = vmatpush1.msra.mxu0 0.0
      %2905 = vmatprep.subr.mxu0 0.0
      %2906 = vmatpush1.msra.mxu0 0.0
      %2907 = vmatprep.subr.mxu0 0.0
      %2908 = vmatpush1.msra.mxu0 0.0
      %2909 = vmatprep.subr.mxu0 0.0
      %2910 = vmatpush1.msra.mxu0 0.0
      %2911 = vmatprep.subr.mxu0 %v2796
      %2912 = vmatpush1.msra.mxu0 %v2794
      %2913 = vmatprep.subr.mxu0 0.0
      %2914 = vmatpush2.msra.mxu0 0.0
      %2915 = vmatprep.subr.mxu0 0.0
      %2916 = vmatpush2.msra.mxu0 0.0
      %2917 = vmatprep.subr.mxu0 0.0
      %2918 = vmatpush2.msra.mxu0 0.0
      %2919 = vmatprep.subr.mxu0 0.0
      %2920 = vmatpush2.msra.mxu0 0.0
      %2921 = vmatprep.subr.mxu0 0.0
      %2922 = vmatpush2.msra.mxu0 0.0
      %2923 = vmatprep.subr.mxu0 0.0
      %2924 = vmatpush2.msra.mxu0 0.0
      %2925 = vmatprep.subr.mxu0 0.0
      %2926 = vmatpush2.msra.mxu0 0.0
      %2927 = vmatprep.subr.mxu0 0.0
      %2928 = vmatpush2.msra.mxu0 0.0
      %2929 = vmatprep.subr.mxu0 0.0
      %2930 = vmatpush2.msra.mxu0 0.0
      %2931 = vmatprep.subr.mxu0 0.0
      %2932 = vmatpush2.msra.mxu0 0.0
      %2933 = vmatprep.subr.mxu0 0.0
      %2934 = vmatpush2.msra.mxu0 0.0
      %2935 = vmatprep.subr.mxu0 0.0
      %2936 = vmatpush2.msra.mxu0 0.0
      %2937 = vmatprep.subr.mxu0 0.0
      %2938 = vmatpush2.msra.mxu0 0.0
      %2939 = vmatprep.subr.mxu0 0.0
      %2940 = vmatpush2.msra.mxu0 0.0
      %2941 = vmatprep.subr.mxu0 0.0
      %2942 = vmatpush2.msra.mxu0 0.0
      %2943 = vmatprep.subr.mxu0 0.0
      %2944 = vmatpush2.msra.mxu0 0.0
      %2945 = vmatprep.mubr.f32.mxu0 0.0
      %2946 = vmatmul.mubr.f32.gmra.mxu0 %v2788
      %v2947 = vpop.f32.mrf.mxu0
      %v2948 = vadd.f32 0.0, %v2947
      %v2949 = vpop.f32.mrf.mxu0
      %v2950 = vadd.f32 0.0, %v2949
      %2951 = vdwg.mxu0
      %2952 = vmatprep.subr.mxu0 0.0
      %2953 = vmatpush1.msra.mxu0 0.0
      %2954 = vmatprep.subr.mxu0 0.0
      %2955 = vmatpush1.msra.mxu0 0.0
      %2956 = vmatprep.subr.mxu0 0.0
      %2957 = vmatpush1.msra.mxu0 0.0
      %2958 = vmatprep.subr.mxu0 0.0
      %2959 = vmatpush1.msra.mxu0 0.0
      %2960 = vmatprep.subr.mxu0 0.0
      %2961 = vmatpush1.msra.mxu0 0.0
      %2962 = vmatprep.subr.mxu0 0.0
      %2963 = vmatpush1.msra.mxu0 0.0
      %2964 = vmatprep.subr.mxu0 0.0
      %2965 = vmatpush1.msra.mxu0 0.0
      %2966 = vmatprep.subr.mxu0 0.0
      %2967 = vmatpush1.msra.mxu0 0.0
      %2968 = vmatprep.subr.mxu0 0.0
      %2969 = vmatpush1.msra.mxu0 0.0
      %2970 = vmatprep.subr.mxu0 0.0
      %2971 = vmatpush1.msra.mxu0 0.0
      %2972 = vmatprep.subr.mxu0 0.0
      %2973 = vmatpush1.msra.mxu0 0.0
      %2974 = vmatprep.subr.mxu0 0.0
      %2975 = vmatpush1.msra.mxu0 0.0
      %2976 = vmatprep.subr.mxu0 0.0
      %2977 = vmatpush1.msra.mxu0 0.0
      %2978 = vmatprep.subr.mxu0 0.0
      %2979 = vmatpush1.msra.mxu0 0.0
      %2980 = vmatprep.subr.mxu0 0.0
      %2981 = vmatpush1.msra.mxu0 0.0
      %2982 = vmatprep.subr.mxu0 %v2800
      %2983 = vmatpush1.msra.mxu0 %v2798
      %2984 = vmatprep.subr.mxu0 0.0
      %2985 = vmatpush2.msra.mxu0 0.0
      %2986 = vmatprep.subr.mxu0 0.0
      %2987 = vmatpush2.msra.mxu0 0.0
      %2988 = vmatprep.subr.mxu0 0.0
      %2989 = vmatpush2.msra.mxu0 0.0
      %2990 = vmatprep.subr.mxu0 0.0
      %2991 = vmatpush2.msra.mxu0 0.0
      %2992 = vmatprep.subr.mxu0 0.0
      %2993 = vmatpush2.msra.mxu0 0.0
      %2994 = vmatprep.subr.mxu0 0.0
      %2995 = vmatpush2.msra.mxu0 0.0
      %2996 = vmatprep.subr.mxu0 0.0
      %2997 = vmatpush2.msra.mxu0 0.0
      %2998 = vmatprep.subr.mxu0 0.0
      %2999 = vmatpush2.msra.mxu0 0.0
      %3000 = vmatprep.subr.mxu0 0.0
      %3001 = vmatpush2.msra.mxu0 0.0
      %3002 = vmatprep.subr.mxu0 0.0
      %3003 = vmatpush2.msra.mxu0 0.0
      %3004 = vmatprep.subr.mxu0 0.0
      %3005 = vmatpush2.msra.mxu0 0.0
      %3006 = vmatprep.subr.mxu0 0.0
      %3007 = vmatpush2.msra.mxu0 0.0
      %3008 = vmatprep.subr.mxu0 0.0
      %3009 = vmatpush2.msra.mxu0 0.0
      %3010 = vmatprep.subr.mxu0 0.0
      %3011 = vmatpush2.msra.mxu0 0.0
      %3012 = vmatprep.subr.mxu0 0.0
      %3013 = vmatpush2.msra.mxu0 0.0
      %3014 = vmatprep.subr.mxu0 0.0
      %3015 = vmatpush2.msra.mxu0 0.0
      %3016 = vmatprep.mubr.f32.mxu0 0.0
      %3017 = vmatmul.mubr.f32.gmra.mxu0 %v2788
      %v3018 = vpop.f32.mrf.mxu0
      %v3019 = vadd.f32 0.0, %v3018
      %v3020 = vpop.f32.mrf.mxu0
      %v3021 = vadd.f32 0.0, %v3020
      %3022 = vdwg.mxu0
      %3023 = vmatprep.subr.mxu0 0.0
      %3024 = vmatpush1.msra.mxu0 0.0
      %3025 = vmatprep.subr.mxu0 0.0
      %3026 = vmatpush1.msra.mxu0 0.0
      %3027 = vmatprep.subr.mxu0 0.0
      %3028 = vmatpush1.msra.mxu0 0.0
      %3029 = vmatprep.subr.mxu0 0.0
      %3030 = vmatpush1.msra.mxu0 0.0
      %3031 = vmatprep.subr.mxu0 0.0
      %3032 = vmatpush1.msra.mxu0 0.0
      %3033 = vmatprep.subr.mxu0 0.0
      %3034 = vmatpush1.msra.mxu0 0.0
      %3035 = vmatprep.subr.mxu0 0.0
      %3036 = vmatpush1.msra.mxu0 0.0
      %3037 = vmatprep.subr.mxu0 0.0
      %3038 = vmatpush1.msra.mxu0 0.0
      %3039 = vmatprep.subr.mxu0 0.0
      %3040 = vmatpush1.msra.mxu0 0.0
      %3041 = vmatprep.subr.mxu0 0.0
      %3042 = vmatpush1.msra.mxu0 0.0
      %3043 = vmatprep.subr.mxu0 0.0
      %3044 = vmatpush1.msra.mxu0 0.0
      %3045 = vmatprep.subr.mxu0 0.0
      %3046 = vmatpush1.msra.mxu0 0.0
      %3047 = vmatprep.subr.mxu0 0.0
      %3048 = vmatpush1.msra.mxu0 0.0
      %3049 = vmatprep.subr.mxu0 0.0
      %3050 = vmatpush1.msra.mxu0 0.0
      %3051 = vmatprep.subr.mxu0 0.0
      %3052 = vmatpush1.msra.mxu0 0.0
      %3053 = vmatprep.subr.mxu0 %v2804
      %3054 = vmatpush1.msra.mxu0 %v2802
      %3055 = vmatprep.subr.mxu0 0.0
      %3056 = vmatpush2.msra.mxu0 0.0
      %3057 = vmatprep.subr.mxu0 0.0
      %3058 = vmatpush2.msra.mxu0 0.0
      %3059 = vmatprep.subr.mxu0 0.0
      %3060 = vmatpush2.msra.mxu0 0.0
      %3061 = vmatprep.subr.mxu0 0.0
      %3062 = vmatpush2.msra.mxu0 0.0
      %3063 = vmatprep.subr.mxu0 0.0
      %3064 = vmatpush2.msra.mxu0 0.0
      %3065 = vmatprep.subr.mxu0 0.0
      %3066 = vmatpush2.msra.mxu0 0.0
      %3067 = vmatprep.subr.mxu0 0.0
      %3068 = vmatpush2.msra.mxu0 0.0
      %3069 = vmatprep.subr.mxu0 0.0
      %3070 = vmatpush2.msra.mxu0 0.0
      %3071 = vmatprep.subr.mxu0 0.0
      %3072 = vmatpush2.msra.mxu0 0.0
      %3073 = vmatprep.subr.mxu0 0.0
      %3074 = vmatpush2.msra.mxu0 0.0
      %3075 = vmatprep.subr.mxu0 0.0
      %3076 = vmatpush2.msra.mxu0 0.0
      %3077 = vmatprep.subr.mxu0 0.0
      %3078 = vmatpush2.msra.mxu0 0.0
      %3079 = vmatprep.subr.mxu0 0.0
      %3080 = vmatpush2.msra.mxu0 0.0
      %3081 = vmatprep.subr.mxu0 0.0
      %3082 = vmatpush2.msra.mxu0 0.0
      %3083 = vmatprep.subr.mxu0 0.0
      %3084 = vmatpush2.msra.mxu0 0.0
      %3085 = vmatprep.subr.mxu0 0.0
      %3086 = vmatpush2.msra.mxu0 0.0
      %3087 = vmatprep.mubr.f32.mxu0 0.0
      %3088 = vmatmul.mubr.f32.gmra.mxu0 %v2788
      %v3089 = vpop.f32.mrf.mxu0
      %v3090 = vadd.f32 0.0, %v3089
      %v3091 = vpop.f32.mrf.mxu0
      %v3092 = vadd.f32 0.0, %v3091
      %3093 = vdwg.mxu0
      %3094 = vmatprep.subr.mxu0 0.0
      %3095 = vmatpush1.msra.mxu0 0.0
      %3096 = vmatprep.subr.mxu0 0.0
      %3097 = vmatpush1.msra.mxu0 0.0
      %3098 = vmatprep.subr.mxu0 0.0
      %3099 = vmatpush1.msra.mxu0 0.0
      %3100 = vmatprep.subr.mxu0 0.0
      %3101 = vmatpush1.msra.mxu0 0.0
      %3102 = vmatprep.subr.mxu0 0.0
      %3103 = vmatpush1.msra.mxu0 0.0
      %3104 = vmatprep.subr.mxu0 0.0
      %3105 = vmatpush1.msra.mxu0 0.0
      %3106 = vmatprep.subr.mxu0 0.0
      %3107 = vmatpush1.msra.mxu0 0.0
      %3108 = vmatprep.subr.mxu0 0.0
      %3109 = vmatpush1.msra.mxu0 0.0
      %3110 = vmatprep.subr.mxu0 0.0
      %3111 = vmatpush1.msra.mxu0 0.0
      %3112 = vmatprep.subr.mxu0 0.0
      %3113 = vmatpush1.msra.mxu0 0.0
      %3114 = vmatprep.subr.mxu0 0.0
      %3115 = vmatpush1.msra.mxu0 0.0
      %3116 = vmatprep.subr.mxu0 0.0
      %3117 = vmatpush1.msra.mxu0 0.0
      %3118 = vmatprep.subr.mxu0 0.0
      %3119 = vmatpush1.msra.mxu0 0.0
      %3120 = vmatprep.subr.mxu0 0.0
      %3121 = vmatpush1.msra.mxu0 0.0
      %3122 = vmatprep.subr.mxu0 0.0
      %3123 = vmatpush1.msra.mxu0 0.0
      %3124 = vmatprep.subr.mxu0 %v2808
      %3125 = vmatpush1.msra.mxu0 %v2806
      %3126 = vmatprep.subr.mxu0 0.0
      %3127 = vmatpush2.msra.mxu0 0.0
      %3128 = vmatprep.subr.mxu0 0.0
      %3129 = vmatpush2.msra.mxu0 0.0
      %3130 = vmatprep.subr.mxu0 0.0
      %3131 = vmatpush2.msra.mxu0 0.0
      %3132 = vmatprep.subr.mxu0 0.0
      %3133 = vmatpush2.msra.mxu0 0.0
      %3134 = vmatprep.subr.mxu0 0.0
      %3135 = vmatpush2.msra.mxu0 0.0
      %3136 = vmatprep.subr.mxu0 0.0
      %3137 = vmatpush2.msra.mxu0 0.0
      %3138 = vmatprep.subr.mxu0 0.0
      %3139 = vmatpush2.msra.mxu0 0.0
      %3140 = vmatprep.subr.mxu0 0.0
      %3141 = vmatpush2.msra.mxu0 0.0
      %3142 = vmatprep.subr.mxu0 0.0
      %3143 = vmatpush2.msra.mxu0 0.0
      %3144 = vmatprep.subr.mxu0 0.0
      %3145 = vmatpush2.msra.mxu0 0.0
      %3146 = vmatprep.subr.mxu0 0.0
      %3147 = vmatpush2.msra.mxu0 0.0
      %3148 = vmatprep.subr.mxu0 0.0
      %3149 = vmatpush2.msra.mxu0 0.0
      %3150 = vmatprep.subr.mxu0 0.0
      %3151 = vmatpush2.msra.mxu0 0.0
      %3152 = vmatprep.subr.mxu0 0.0
      %3153 = vmatpush2.msra.mxu0 0.0
      %3154 = vmatprep.subr.mxu0 0.0
      %3155 = vmatpush2.msra.mxu0 0.0
      %3156 = vmatprep.subr.mxu0 0.0
      %3157 = vmatpush2.msra.mxu0 0.0
      %3158 = vmatprep.mubr.f32.mxu0 0.0
      %3159 = vmatmul.mubr.f32.gmra.mxu0 %v2788
      %v3160 = vpop.f32.mrf.mxu0
      %v3161 = vadd.f32 0.0, %v3160
      %v3162 = vpop.f32.mrf.mxu0
      %v3163 = vadd.f32 0.0, %v3162
      %3164 = vdwg.mxu0
      %v3165 = vadd.f32 %v2730, %v2877
      %v3166 = vadd.f32 %v2731, %v2879
      %v3167 = vadd.f32 %v2732, %v2948
      %v3168 = vadd.f32 %v2733, %v2950
      %v3169 = vadd.f32 %v2734, %v3019
      %v3170 = vadd.f32 %v2735, %v3021
      %v3171 = vadd.f32 %v2736, %v3090
      %v3172 = vadd.f32 %v2737, %v3092
      %v3173 = vadd.f32 %v2738, %v3161
      %v3174 = vadd.f32 %v2739, %v3163
      %v3175 = vld [vmem:[%s183] sm:$0xff]
      %v3176 = vld [vmem:[%s183 + $0x8] sm:$0xff]
      %v3177 = vld [vmem:[%s183 + $0x10] sm:$0xff]
      %v3178 = vld [vmem:[%s183 + $0x18] sm:$0xff]
      %v3179 = vld [vmem:[%s183 + $0x20] sm:$0xff]
      %s3180 = scalar_lea.vmem %s1, 56
      %v3181 = vld [vmem:[%s3180] sm:$0xff]
      %v3187 = vcombine.high %v3175, %v3175
      %v3188 = vcombine.high %v3176, %v3176
      %v3189 = vcombine.high %v3177, %v3177
      %v3190 = vcombine.high %v3178, %v3178
      %v3191 = vcombine.high %v3179, %v3179
      %3192 = vrot.lane.b32.xlu0 %v3175, 57
      %v3193 = vpop.permute.xlu0 %3192
      %3194 = vrot.lane.b32.xlu0 %v3187, 57
      %v3195 = vpop.permute.xlu0 %3194
      %3196 = vrot.lane.b32.xlu0 %v3176, 57
      %v3197 = vpop.permute.xlu0 %3196
      %3198 = vrot.lane.b32.xlu0 %v3188, 57
      %v3199 = vpop.permute.xlu0 %3198
      %3200 = vrot.lane.b32.xlu0 %v3177, 57
      %v3201 = vpop.permute.xlu0 %3200
      %3202 = vrot.lane.b32.xlu0 %v3189, 57
      %v3203 = vpop.permute.xlu0 %3202
      %3204 = vrot.lane.b32.xlu0 %v3178, 57
      %v3205 = vpop.permute.xlu0 %3204
      %3206 = vrot.lane.b32.xlu0 %v3190, 57
      %v3207 = vpop.permute.xlu0 %3206
      %3208 = vrot.lane.b32.xlu0 %v3179, 57
      %v3209 = vpop.permute.xlu0 %3208
      %3210 = vrot.lane.b32.xlu0 %v3191, 57
      %v3211 = vpop.permute.xlu0 %3210
      %vm3212 = vcmask 465920
      %v3213 = vsel %vm3212, %v3193, %v3195
      %v3214 = vsel %vm3212, %v3195, %v3197
      %v3215 = vsel %vm3212, %v3197, %v3199
      %v3216 = vsel %vm3212, %v3199, %v3201
      %v3217 = vsel %vm3212, %v3201, %v3203
      %v3218 = vsel %vm3212, %v3203, %v3205
      %v3219 = vsel %vm3212, %v3205, %v3207
      %v3220 = vsel %vm3212, %v3207, %v3209
      %v3221 = vsel %vm3212, %v3209, %v3211
      %v3223 = vsel %vm242, %v3181, 0
      %v3225 = vsel %vm246, %v3213, 0
      %v3227 = vsel %vm246, %v3214, 0
      %v3229 = vsel %vm246, %v3215, 0
      %v3231 = vsel %vm246, %v3216, 0
      %v3233 = vsel %vm246, %v3217, 0
      %v3235 = vsel %vm246, %v3218, 0
      %v3237 = vsel %vm246, %v3219, 0
      %v3239 = vsel %vm246, %v3220, 0
      %v3241 = vsel %vm246, %v3221, 0
      %v3243 = vsel %vm246, %v3211, 0
      %3245 = vmatprep.subr.mxu0 0.0
      %3246 = vmatpush1.msra.mxu0 0.0
      %3247 = vmatprep.subr.mxu0 0.0
      %3248 = vmatpush1.msra.mxu0 0.0
      %3249 = vmatprep.subr.mxu0 0.0
      %3250 = vmatpush1.msra.mxu0 0.0
      %3251 = vmatprep.subr.mxu0 0.0
      %3252 = vmatpush1.msra.mxu0 0.0
      %3253 = vmatprep.subr.mxu0 0.0
      %3254 = vmatpush1.msra.mxu0 0.0
      %3255 = vmatprep.subr.mxu0 0.0
      %3256 = vmatpush1.msra.mxu0 0.0
      %3257 = vmatprep.subr.mxu0 0.0
      %3258 = vmatpush1.msra.mxu0 0.0
      %3259 = vmatprep.subr.mxu0 0.0
      %3260 = vmatpush1.msra.mxu0 0.0
      %3261 = vmatprep.subr.mxu0 0.0
      %3262 = vmatpush1.msra.mxu0 0.0
      %3263 = vmatprep.subr.mxu0 0.0
      %3264 = vmatpush1.msra.mxu0 0.0
      %3265 = vmatprep.subr.mxu0 0.0
      %3266 = vmatpush1.msra.mxu0 0.0
      %3267 = vmatprep.subr.mxu0 0.0
      %3268 = vmatpush1.msra.mxu0 0.0
      %3269 = vmatprep.subr.mxu0 0.0
      %3270 = vmatpush1.msra.mxu0 0.0
      %3271 = vmatprep.subr.mxu0 0.0
      %3272 = vmatpush1.msra.mxu0 0.0
      %3273 = vmatprep.subr.mxu0 0.0
      %3274 = vmatpush1.msra.mxu0 0.0
      %3275 = vmatprep.subr.mxu0 %v3227
      %3276 = vmatpush1.msra.mxu0 %v3225
      %3277 = vmatprep.subr.mxu0 0.0
      %3278 = vmatpush2.msra.mxu0 0.0
      %3279 = vmatprep.subr.mxu0 0.0
      %3280 = vmatpush2.msra.mxu0 0.0
      %3281 = vmatprep.subr.mxu0 0.0
      %3282 = vmatpush2.msra.mxu0 0.0
      %3283 = vmatprep.subr.mxu0 0.0
      %3284 = vmatpush2.msra.mxu0 0.0
      %3285 = vmatprep.subr.mxu0 0.0
      %3286 = vmatpush2.msra.mxu0 0.0
      %3287 = vmatprep.subr.mxu0 0.0
      %3288 = vmatpush2.msra.mxu0 0.0
      %3289 = vmatprep.subr.mxu0 0.0
      %3290 = vmatpush2.msra.mxu0 0.0
      %3291 = vmatprep.subr.mxu0 0.0
      %3292 = vmatpush2.msra.mxu0 0.0
      %3293 = vmatprep.subr.mxu0 0.0
      %3294 = vmatpush2.msra.mxu0 0.0
      %3295 = vmatprep.subr.mxu0 0.0
      %3296 = vmatpush2.msra.mxu0 0.0
      %3297 = vmatprep.subr.mxu0 0.0
      %3298 = vmatpush2.msra.mxu0 0.0
      %3299 = vmatprep.subr.mxu0 0.0
      %3300 = vmatpush2.msra.mxu0 0.0
      %3301 = vmatprep.subr.mxu0 0.0
      %3302 = vmatpush2.msra.mxu0 0.0
      %3303 = vmatprep.subr.mxu0 0.0
      %3304 = vmatpush2.msra.mxu0 0.0
      %3305 = vmatprep.subr.mxu0 0.0
      %3306 = vmatpush2.msra.mxu0 0.0
      %3307 = vmatprep.subr.mxu0 0.0
      %3308 = vmatpush2.msra.mxu0 0.0
      %3309 = vmatprep.mubr.f32.mxu0 0.0
      %3310 = vmatmul.mubr.f32.gmra.mxu0 %v3223
      %v3311 = vpop.f32.mrf.mxu0
      %v3312 = vadd.f32 0.0, %v3311
      %v3313 = vpop.f32.mrf.mxu0
      %v3314 = vadd.f32 0.0, %v3313
      %3315 = vdwg.mxu0
      %3316 = vmatprep.subr.mxu0 0.0
      %3317 = vmatpush1.msra.mxu0 0.0
      %3318 = vmatprep.subr.mxu0 0.0
      %3319 = vmatpush1.msra.mxu0 0.0
      %3320 = vmatprep.subr.mxu0 0.0
      %3321 = vmatpush1.msra.mxu0 0.0
      %3322 = vmatprep.subr.mxu0 0.0
      %3323 = vmatpush1.msra.mxu0 0.0
      %3324 = vmatprep.subr.mxu0 0.0
      %3325 = vmatpush1.msra.mxu0 0.0
      %3326 = vmatprep.subr.mxu0 0.0
      %3327 = vmatpush1.msra.mxu0 0.0
      %3328 = vmatprep.subr.mxu0 0.0
      %3329 = vmatpush1.msra.mxu0 0.0
      %3330 = vmatprep.subr.mxu0 0.0
      %3331 = vmatpush1.msra.mxu0 0.0
      %3332 = vmatprep.subr.mxu0 0.0
      %3333 = vmatpush1.msra.mxu0 0.0
      %3334 = vmatprep.subr.mxu0 0.0
      %3335 = vmatpush1.msra.mxu0 0.0
      %3336 = vmatprep.subr.mxu0 0.0
      %3337 = vmatpush1.msra.mxu0 0.0
      %3338 = vmatprep.subr.mxu0 0.0
      %3339 = vmatpush1.msra.mxu0 0.0
      %3340 = vmatprep.subr.mxu0 0.0
      %3341 = vmatpush1.msra.mxu0 0.0
      %3342 = vmatprep.subr.mxu0 0.0
      %3343 = vmatpush1.msra.mxu0 0.0
      %3344 = vmatprep.subr.mxu0 0.0
      %3345 = vmatpush1.msra.mxu0 0.0
      %3346 = vmatprep.subr.mxu0 %v3231
      %3347 = vmatpush1.msra.mxu0 %v3229
      %3348 = vmatprep.subr.mxu0 0.0
      %3349 = vmatpush2.msra.mxu0 0.0
      %3350 = vmatprep.subr.mxu0 0.0
      %3351 = vmatpush2.msra.mxu0 0.0
      %3352 = vmatprep.subr.mxu0 0.0
      %3353 = vmatpush2.msra.mxu0 0.0
      %3354 = vmatprep.subr.mxu0 0.0
      %3355 = vmatpush2.msra.mxu0 0.0
      %3356 = vmatprep.subr.mxu0 0.0
      %3357 = vmatpush2.msra.mxu0 0.0
      %3358 = vmatprep.subr.mxu0 0.0
      %3359 = vmatpush2.msra.mxu0 0.0
      %3360 = vmatprep.subr.mxu0 0.0
      %3361 = vmatpush2.msra.mxu0 0.0
      %3362 = vmatprep.subr.mxu0 0.0
      %3363 = vmatpush2.msra.mxu0 0.0
      %3364 = vmatprep.subr.mxu0 0.0
      %3365 = vmatpush2.msra.mxu0 0.0
      %3366 = vmatprep.subr.mxu0 0.0
      %3367 = vmatpush2.msra.mxu0 0.0
      %3368 = vmatprep.subr.mxu0 0.0
      %3369 = vmatpush2.msra.mxu0 0.0
      %3370 = vmatprep.subr.mxu0 0.0
      %3371 = vmatpush2.msra.mxu0 0.0
      %3372 = vmatprep.subr.mxu0 0.0
      %3373 = vmatpush2.msra.mxu0 0.0
      %3374 = vmatprep.subr.mxu0 0.0
      %3375 = vmatpush2.msra.mxu0 0.0
      %3376 = vmatprep.subr.mxu0 0.0
      %3377 = vmatpush2.msra.mxu0 0.0
      %3378 = vmatprep.subr.mxu0 0.0
      %3379 = vmatpush2.msra.mxu0 0.0
      %3380 = vmatprep.mubr.f32.mxu0 0.0
      %3381 = vmatmul.mubr.f32.gmra.mxu0 %v3223
      %v3382 = vpop.f32.mrf.mxu0
      %v3383 = vadd.f32 0.0, %v3382
      %v3384 = vpop.f32.mrf.mxu0
      %v3385 = vadd.f32 0.0, %v3384
      %3386 = vdwg.mxu0
      %3387 = vmatprep.subr.mxu0 0.0
      %3388 = vmatpush1.msra.mxu0 0.0
      %3389 = vmatprep.subr.mxu0 0.0
      %3390 = vmatpush1.msra.mxu0 0.0
      %3391 = vmatprep.subr.mxu0 0.0
      %3392 = vmatpush1.msra.mxu0 0.0
      %3393 = vmatprep.subr.mxu0 0.0
      %3394 = vmatpush1.msra.mxu0 0.0
      %3395 = vmatprep.subr.mxu0 0.0
      %3396 = vmatpush1.msra.mxu0 0.0
      %3397 = vmatprep.subr.mxu0 0.0
      %3398 = vmatpush1.msra.mxu0 0.0
      %3399 = vmatprep.subr.mxu0 0.0
      %3400 = vmatpush1.msra.mxu0 0.0
      %3401 = vmatprep.subr.mxu0 0.0
      %3402 = vmatpush1.msra.mxu0 0.0
      %3403 = vmatprep.subr.mxu0 0.0
      %3404 = vmatpush1.msra.mxu0 0.0
      %3405 = vmatprep.subr.mxu0 0.0
      %3406 = vmatpush1.msra.mxu0 0.0
      %3407 = vmatprep.subr.mxu0 0.0
      %3408 = vmatpush1.msra.mxu0 0.0
      %3409 = vmatprep.subr.mxu0 0.0
      %3410 = vmatpush1.msra.mxu0 0.0
      %3411 = vmatprep.subr.mxu0 0.0
      %3412 = vmatpush1.msra.mxu0 0.0
      %3413 = vmatprep.subr.mxu0 0.0
      %3414 = vmatpush1.msra.mxu0 0.0
      %3415 = vmatprep.subr.mxu0 0.0
      %3416 = vmatpush1.msra.mxu0 0.0
      %3417 = vmatprep.subr.mxu0 %v3235
      %3418 = vmatpush1.msra.mxu0 %v3233
      %3419 = vmatprep.subr.mxu0 0.0
      %3420 = vmatpush2.msra.mxu0 0.0
      %3421 = vmatprep.subr.mxu0 0.0
      %3422 = vmatpush2.msra.mxu0 0.0
      %3423 = vmatprep.subr.mxu0 0.0
      %3424 = vmatpush2.msra.mxu0 0.0
      %3425 = vmatprep.subr.mxu0 0.0
      %3426 = vmatpush2.msra.mxu0 0.0
      %3427 = vmatprep.subr.mxu0 0.0
      %3428 = vmatpush2.msra.mxu0 0.0
      %3429 = vmatprep.subr.mxu0 0.0
      %3430 = vmatpush2.msra.mxu0 0.0
      %3431 = vmatprep.subr.mxu0 0.0
      %3432 = vmatpush2.msra.mxu0 0.0
      %3433 = vmatprep.subr.mxu0 0.0
      %3434 = vmatpush2.msra.mxu0 0.0
      %3435 = vmatprep.subr.mxu0 0.0
      %3436 = vmatpush2.msra.mxu0 0.0
      %3437 = vmatprep.subr.mxu0 0.0
      %3438 = vmatpush2.msra.mxu0 0.0
      %3439 = vmatprep.subr.mxu0 0.0
      %3440 = vmatpush2.msra.mxu0 0.0
      %3441 = vmatprep.subr.mxu0 0.0
      %3442 = vmatpush2.msra.mxu0 0.0
      %3443 = vmatprep.subr.mxu0 0.0
      %3444 = vmatpush2.msra.mxu0 0.0
      %3445 = vmatprep.subr.mxu0 0.0
      %3446 = vmatpush2.msra.mxu0 0.0
      %3447 = vmatprep.subr.mxu0 0.0
      %3448 = vmatpush2.msra.mxu0 0.0
      %3449 = vmatprep.subr.mxu0 0.0
      %3450 = vmatpush2.msra.mxu0 0.0
      %3451 = vmatprep.mubr.f32.mxu0 0.0
      %3452 = vmatmul.mubr.f32.gmra.mxu0 %v3223
      %v3453 = vpop.f32.mrf.mxu0
      %v3454 = vadd.f32 0.0, %v3453
      %v3455 = vpop.f32.mrf.mxu0
      %v3456 = vadd.f32 0.0, %v3455
      %3457 = vdwg.mxu0
      %3458 = vmatprep.subr.mxu0 0.0
      %3459 = vmatpush1.msra.mxu0 0.0
      %3460 = vmatprep.subr.mxu0 0.0
      %3461 = vmatpush1.msra.mxu0 0.0
      %3462 = vmatprep.subr.mxu0 0.0
      %3463 = vmatpush1.msra.mxu0 0.0
      %3464 = vmatprep.subr.mxu0 0.0
      %3465 = vmatpush1.msra.mxu0 0.0
      %3466 = vmatprep.subr.mxu0 0.0
      %3467 = vmatpush1.msra.mxu0 0.0
      %3468 = vmatprep.subr.mxu0 0.0
      %3469 = vmatpush1.msra.mxu0 0.0
      %3470 = vmatprep.subr.mxu0 0.0
      %3471 = vmatpush1.msra.mxu0 0.0
      %3472 = vmatprep.subr.mxu0 0.0
      %3473 = vmatpush1.msra.mxu0 0.0
      %3474 = vmatprep.subr.mxu0 0.0
      %3475 = vmatpush1.msra.mxu0 0.0
      %3476 = vmatprep.subr.mxu0 0.0
      %3477 = vmatpush1.msra.mxu0 0.0
      %3478 = vmatprep.subr.mxu0 0.0
      %3479 = vmatpush1.msra.mxu0 0.0
      %3480 = vmatprep.subr.mxu0 0.0
      %3481 = vmatpush1.msra.mxu0 0.0
      %3482 = vmatprep.subr.mxu0 0.0
      %3483 = vmatpush1.msra.mxu0 0.0
      %3484 = vmatprep.subr.mxu0 0.0
      %3485 = vmatpush1.msra.mxu0 0.0
      %3486 = vmatprep.subr.mxu0 0.0
      %3487 = vmatpush1.msra.mxu0 0.0
      %3488 = vmatprep.subr.mxu0 %v3239
      %3489 = vmatpush1.msra.mxu0 %v3237
      %3490 = vmatprep.subr.mxu0 0.0
      %3491 = vmatpush2.msra.mxu0 0.0
      %3492 = vmatprep.subr.mxu0 0.0
      %3493 = vmatpush2.msra.mxu0 0.0
      %3494 = vmatprep.subr.mxu0 0.0
      %3495 = vmatpush2.msra.mxu0 0.0
      %3496 = vmatprep.subr.mxu0 0.0
      %3497 = vmatpush2.msra.mxu0 0.0
      %3498 = vmatprep.subr.mxu0 0.0
      %3499 = vmatpush2.msra.mxu0 0.0
      %3500 = vmatprep.subr.mxu0 0.0
      %3501 = vmatpush2.msra.mxu0 0.0
      %3502 = vmatprep.subr.mxu0 0.0
      %3503 = vmatpush2.msra.mxu0 0.0
      %3504 = vmatprep.subr.mxu0 0.0
      %3505 = vmatpush2.msra.mxu0 0.0
      %3506 = vmatprep.subr.mxu0 0.0
      %3507 = vmatpush2.msra.mxu0 0.0
      %3508 = vmatprep.subr.mxu0 0.0
      %3509 = vmatpush2.msra.mxu0 0.0
      %3510 = vmatprep.subr.mxu0 0.0
      %3511 = vmatpush2.msra.mxu0 0.0
      %3512 = vmatprep.subr.mxu0 0.0
      %3513 = vmatpush2.msra.mxu0 0.0
      %3514 = vmatprep.subr.mxu0 0.0
      %3515 = vmatpush2.msra.mxu0 0.0
      %3516 = vmatprep.subr.mxu0 0.0
      %3517 = vmatpush2.msra.mxu0 0.0
      %3518 = vmatprep.subr.mxu0 0.0
      %3519 = vmatpush2.msra.mxu0 0.0
      %3520 = vmatprep.subr.mxu0 0.0
      %3521 = vmatpush2.msra.mxu0 0.0
      %3522 = vmatprep.mubr.f32.mxu0 0.0
      %3523 = vmatmul.mubr.f32.gmra.mxu0 %v3223
      %v3524 = vpop.f32.mrf.mxu0
      %v3525 = vadd.f32 0.0, %v3524
      %v3526 = vpop.f32.mrf.mxu0
      %v3527 = vadd.f32 0.0, %v3526
      %3528 = vdwg.mxu0
      %3529 = vmatprep.subr.mxu0 0.0
      %3530 = vmatpush1.msra.mxu0 0.0
      %3531 = vmatprep.subr.mxu0 0.0
      %3532 = vmatpush1.msra.mxu0 0.0
      %3533 = vmatprep.subr.mxu0 0.0
      %3534 = vmatpush1.msra.mxu0 0.0
      %3535 = vmatprep.subr.mxu0 0.0
      %3536 = vmatpush1.msra.mxu0 0.0
      %3537 = vmatprep.subr.mxu0 0.0
      %3538 = vmatpush1.msra.mxu0 0.0
      %3539 = vmatprep.subr.mxu0 0.0
      %3540 = vmatpush1.msra.mxu0 0.0
      %3541 = vmatprep.subr.mxu0 0.0
      %3542 = vmatpush1.msra.mxu0 0.0
      %3543 = vmatprep.subr.mxu0 0.0
      %3544 = vmatpush1.msra.mxu0 0.0
      %3545 = vmatprep.subr.mxu0 0.0
      %3546 = vmatpush1.msra.mxu0 0.0
      %3547 = vmatprep.subr.mxu0 0.0
      %3548 = vmatpush1.msra.mxu0 0.0
      %3549 = vmatprep.subr.mxu0 0.0
      %3550 = vmatpush1.msra.mxu0 0.0
      %3551 = vmatprep.subr.mxu0 0.0
      %3552 = vmatpush1.msra.mxu0 0.0
      %3553 = vmatprep.subr.mxu0 0.0
      %3554 = vmatpush1.msra.mxu0 0.0
      %3555 = vmatprep.subr.mxu0 0.0
      %3556 = vmatpush1.msra.mxu0 0.0
      %3557 = vmatprep.subr.mxu0 0.0
      %3558 = vmatpush1.msra.mxu0 0.0
      %3559 = vmatprep.subr.mxu0 %v3243
      %3560 = vmatpush1.msra.mxu0 %v3241
      %3561 = vmatprep.subr.mxu0 0.0
      %3562 = vmatpush2.msra.mxu0 0.0
      %3563 = vmatprep.subr.mxu0 0.0
      %3564 = vmatpush2.msra.mxu0 0.0
      %3565 = vmatprep.subr.mxu0 0.0
      %3566 = vmatpush2.msra.mxu0 0.0
      %3567 = vmatprep.subr.mxu0 0.0
      %3568 = vmatpush2.msra.mxu0 0.0
      %3569 = vmatprep.subr.mxu0 0.0
      %3570 = vmatpush2.msra.mxu0 0.0
      %3571 = vmatprep.subr.mxu0 0.0
      %3572 = vmatpush2.msra.mxu0 0.0
      %3573 = vmatprep.subr.mxu0 0.0
      %3574 = vmatpush2.msra.mxu0 0.0
      %3575 = vmatprep.subr.mxu0 0.0
      %3576 = vmatpush2.msra.mxu0 0.0
      %3577 = vmatprep.subr.mxu0 0.0
      %3578 = vmatpush2.msra.mxu0 0.0
      %3579 = vmatprep.subr.mxu0 0.0
      %3580 = vmatpush2.msra.mxu0 0.0
      %3581 = vmatprep.subr.mxu0 0.0
      %3582 = vmatpush2.msra.mxu0 0.0
      %3583 = vmatprep.subr.mxu0 0.0
      %3584 = vmatpush2.msra.mxu0 0.0
      %3585 = vmatprep.subr.mxu0 0.0
      %3586 = vmatpush2.msra.mxu0 0.0
      %3587 = vmatprep.subr.mxu0 0.0
      %3588 = vmatpush2.msra.mxu0 0.0
      %3589 = vmatprep.subr.mxu0 0.0
      %3590 = vmatpush2.msra.mxu0 0.0
      %3591 = vmatprep.subr.mxu0 0.0
      %3592 = vmatpush2.msra.mxu0 0.0
      %3593 = vmatprep.mubr.f32.mxu0 0.0
      %3594 = vmatmul.mubr.f32.gmra.mxu0 %v3223
      %v3595 = vpop.f32.mrf.mxu0
      %v3596 = vadd.f32 0.0, %v3595
      %v3597 = vpop.f32.mrf.mxu0
      %v3598 = vadd.f32 0.0, %v3597
      %3599 = vdwg.mxu0
      %v3600 = vadd.f32 %v3165, %v3312
      %v3601 = vadd.f32 %v3166, %v3314
      %v3602 = vadd.f32 %v3167, %v3383
      %v3603 = vadd.f32 %v3168, %v3385
      %v3604 = vadd.f32 %v3169, %v3454
      %v3605 = vadd.f32 %v3170, %v3456
      %v3606 = vadd.f32 %v3171, %v3525
      %v3607 = vadd.f32 %v3172, %v3527
      %v3608 = vadd.f32 %v3173, %v3596
      %v3609 = vadd.f32 %v3174, %v3598
      %v3610 = vld [vmem:[%s183] sm:$0xff]
      %v3611 = vld [vmem:[%s183 + $0x8] sm:$0xff]
      %v3612 = vld [vmem:[%s183 + $0x10] sm:$0xff]
      %v3613 = vld [vmem:[%s183 + $0x18] sm:$0xff]
      %v3614 = vld [vmem:[%s183 + $0x20] sm:$0xff]
      %s3615 = scalar_lea.vmem %s1, 64
      %v3616 = vld [vmem:[%s3615] sm:$0xff]
      %v3622 = vcombine.high %v3610, %v3610
      %v3623 = vcombine.high %v3611, %v3611
      %v3624 = vcombine.high %v3612, %v3612
      %v3625 = vcombine.high %v3613, %v3613
      %v3626 = vcombine.high %v3614, %v3614
      %3627 = vrot.lane.b32.xlu0 %v3610, 56
      %v3628 = vpop.permute.xlu0 %3627
      %3629 = vrot.lane.b32.xlu0 %v3622, 56
      %v3630 = vpop.permute.xlu0 %3629
      %3631 = vrot.lane.b32.xlu0 %v3611, 56
      %v3632 = vpop.permute.xlu0 %3631
      %3633 = vrot.lane.b32.xlu0 %v3623, 56
      %v3634 = vpop.permute.xlu0 %3633
      %3635 = vrot.lane.b32.xlu0 %v3612, 56
      %v3636 = vpop.permute.xlu0 %3635
      %3637 = vrot.lane.b32.xlu0 %v3624, 56
      %v3638 = vpop.permute.xlu0 %3637
      %3639 = vrot.lane.b32.xlu0 %v3613, 56
      %v3640 = vpop.permute.xlu0 %3639
      %3641 = vrot.lane.b32.xlu0 %v3625, 56
      %v3642 = vpop.permute.xlu0 %3641
      %3643 = vrot.lane.b32.xlu0 %v3614, 56
      %v3644 = vpop.permute.xlu0 %3643
      %3645 = vrot.lane.b32.xlu0 %v3626, 56
      %v3646 = vpop.permute.xlu0 %3645
      %vm3647 = vcmask 457728
      %v3648 = vsel %vm3647, %v3628, %v3630
      %v3649 = vsel %vm3647, %v3630, %v3632
      %v3650 = vsel %vm3647, %v3632, %v3634
      %v3651 = vsel %vm3647, %v3634, %v3636
      %v3652 = vsel %vm3647, %v3636, %v3638
      %v3653 = vsel %vm3647, %v3638, %v3640
      %v3654 = vsel %vm3647, %v3640, %v3642
      %v3655 = vsel %vm3647, %v3642, %v3644
      %v3656 = vsel %vm3647, %v3644, %v3646
      %v3658 = vsel %vm242, %v3616, 0
      %v3660 = vsel %vm246, %v3648, 0
      %v3662 = vsel %vm246, %v3649, 0
      %v3664 = vsel %vm246, %v3650, 0
      %v3666 = vsel %vm246, %v3651, 0
      %v3668 = vsel %vm246, %v3652, 0
      %v3670 = vsel %vm246, %v3653, 0
      %v3672 = vsel %vm246, %v3654, 0
      %v3674 = vsel %vm246, %v3655, 0
      %v3676 = vsel %vm246, %v3656, 0
      %v3678 = vsel %vm246, %v3646, 0
      %3680 = vmatprep.subr.mxu0 0.0
      %3681 = vmatpush1.msra.mxu0 0.0
      %3682 = vmatprep.subr.mxu0 0.0
      %3683 = vmatpush1.msra.mxu0 0.0
      %3684 = vmatprep.subr.mxu0 0.0
      %3685 = vmatpush1.msra.mxu0 0.0
      %3686 = vmatprep.subr.mxu0 0.0
      %3687 = vmatpush1.msra.mxu0 0.0
      %3688 = vmatprep.subr.mxu0 0.0
      %3689 = vmatpush1.msra.mxu0 0.0
      %3690 = vmatprep.subr.mxu0 0.0
      %3691 = vmatpush1.msra.mxu0 0.0
      %3692 = vmatprep.subr.mxu0 0.0
      %3693 = vmatpush1.msra.mxu0 0.0
      %3694 = vmatprep.subr.mxu0 0.0
      %3695 = vmatpush1.msra.mxu0 0.0
      %3696 = vmatprep.subr.mxu0 0.0
      %3697 = vmatpush1.msra.mxu0 0.0
      %3698 = vmatprep.subr.mxu0 0.0
      %3699 = vmatpush1.msra.mxu0 0.0
      %3700 = vmatprep.subr.mxu0 0.0
      %3701 = vmatpush1.msra.mxu0 0.0
      %3702 = vmatprep.subr.mxu0 0.0
      %3703 = vmatpush1.msra.mxu0 0.0
      %3704 = vmatprep.subr.mxu0 0.0
      %3705 = vmatpush1.msra.mxu0 0.0
      %3706 = vmatprep.subr.mxu0 0.0
      %3707 = vmatpush1.msra.mxu0 0.0
      %3708 = vmatprep.subr.mxu0 0.0
      %3709 = vmatpush1.msra.mxu0 0.0
      %3710 = vmatprep.subr.mxu0 %v3662
      %3711 = vmatpush1.msra.mxu0 %v3660
      %3712 = vmatprep.subr.mxu0 0.0
      %3713 = vmatpush2.msra.mxu0 0.0
      %3714 = vmatprep.subr.mxu0 0.0
      %3715 = vmatpush2.msra.mxu0 0.0
      %3716 = vmatprep.subr.mxu0 0.0
      %3717 = vmatpush2.msra.mxu0 0.0
      %3718 = vmatprep.subr.mxu0 0.0
      %3719 = vmatpush2.msra.mxu0 0.0
      %3720 = vmatprep.subr.mxu0 0.0
      %3721 = vmatpush2.msra.mxu0 0.0
      %3722 = vmatprep.subr.mxu0 0.0
      %3723 = vmatpush2.msra.mxu0 0.0
      %3724 = vmatprep.subr.mxu0 0.0
      %3725 = vmatpush2.msra.mxu0 0.0
      %3726 = vmatprep.subr.mxu0 0.0
      %3727 = vmatpush2.msra.mxu0 0.0
      %3728 = vmatprep.subr.mxu0 0.0
      %3729 = vmatpush2.msra.mxu0 0.0
      %3730 = vmatprep.subr.mxu0 0.0
      %3731 = vmatpush2.msra.mxu0 0.0
      %3732 = vmatprep.subr.mxu0 0.0
      %3733 = vmatpush2.msra.mxu0 0.0
      %3734 = vmatprep.subr.mxu0 0.0
      %3735 = vmatpush2.msra.mxu0 0.0
      %3736 = vmatprep.subr.mxu0 0.0
      %3737 = vmatpush2.msra.mxu0 0.0
      %3738 = vmatprep.subr.mxu0 0.0
      %3739 = vmatpush2.msra.mxu0 0.0
      %3740 = vmatprep.subr.mxu0 0.0
      %3741 = vmatpush2.msra.mxu0 0.0
      %3742 = vmatprep.subr.mxu0 0.0
      %3743 = vmatpush2.msra.mxu0 0.0
      %3744 = vmatprep.mubr.f32.mxu0 0.0
      %3745 = vmatmul.mubr.f32.gmra.mxu0 %v3658
      %v3746 = vpop.f32.mrf.mxu0
      %v3747 = vadd.f32 0.0, %v3746
      %v3748 = vpop.f32.mrf.mxu0
      %v3749 = vadd.f32 0.0, %v3748
      %3750 = vdwg.mxu0
      %3751 = vmatprep.subr.mxu0 0.0
      %3752 = vmatpush1.msra.mxu0 0.0
      %3753 = vmatprep.subr.mxu0 0.0
      %3754 = vmatpush1.msra.mxu0 0.0
      %3755 = vmatprep.subr.mxu0 0.0
      %3756 = vmatpush1.msra.mxu0 0.0
      %3757 = vmatprep.subr.mxu0 0.0
      %3758 = vmatpush1.msra.mxu0 0.0
      %3759 = vmatprep.subr.mxu0 0.0
      %3760 = vmatpush1.msra.mxu0 0.0
      %3761 = vmatprep.subr.mxu0 0.0
      %3762 = vmatpush1.msra.mxu0 0.0
      %3763 = vmatprep.subr.mxu0 0.0
      %3764 = vmatpush1.msra.mxu0 0.0
      %3765 = vmatprep.subr.mxu0 0.0
      %3766 = vmatpush1.msra.mxu0 0.0
      %3767 = vmatprep.subr.mxu0 0.0
      %3768 = vmatpush1.msra.mxu0 0.0
      %3769 = vmatprep.subr.mxu0 0.0
      %3770 = vmatpush1.msra.mxu0 0.0
      %3771 = vmatprep.subr.mxu0 0.0
      %3772 = vmatpush1.msra.mxu0 0.0
      %3773 = vmatprep.subr.mxu0 0.0
      %3774 = vmatpush1.msra.mxu0 0.0
      %3775 = vmatprep.subr.mxu0 0.0
      %3776 = vmatpush1.msra.mxu0 0.0
      %3777 = vmatprep.subr.mxu0 0.0
      %3778 = vmatpush1.msra.mxu0 0.0
      %3779 = vmatprep.subr.mxu0 0.0
      %3780 = vmatpush1.msra.mxu0 0.0
      %3781 = vmatprep.subr.mxu0 %v3666
      %3782 = vmatpush1.msra.mxu0 %v3664
      %3783 = vmatprep.subr.mxu0 0.0
      %3784 = vmatpush2.msra.mxu0 0.0
      %3785 = vmatprep.subr.mxu0 0.0
      %3786 = vmatpush2.msra.mxu0 0.0
      %3787 = vmatprep.subr.mxu0 0.0
      %3788 = vmatpush2.msra.mxu0 0.0
      %3789 = vmatprep.subr.mxu0 0.0
      %3790 = vmatpush2.msra.mxu0 0.0
      %3791 = vmatprep.subr.mxu0 0.0
      %3792 = vmatpush2.msra.mxu0 0.0
      %3793 = vmatprep.subr.mxu0 0.0
      %3794 = vmatpush2.msra.mxu0 0.0
      %3795 = vmatprep.subr.mxu0 0.0
      %3796 = vmatpush2.msra.mxu0 0.0
      %3797 = vmatprep.subr.mxu0 0.0
      %3798 = vmatpush2.msra.mxu0 0.0
      %3799 = vmatprep.subr.mxu0 0.0
      %3800 = vmatpush2.msra.mxu0 0.0
      %3801 = vmatprep.subr.mxu0 0.0
      %3802 = vmatpush2.msra.mxu0 0.0
      %3803 = vmatprep.subr.mxu0 0.0
      %3804 = vmatpush2.msra.mxu0 0.0
      %3805 = vmatprep.subr.mxu0 0.0
      %3806 = vmatpush2.msra.mxu0 0.0
      %3807 = vmatprep.subr.mxu0 0.0
      %3808 = vmatpush2.msra.mxu0 0.0
      %3809 = vmatprep.subr.mxu0 0.0
      %3810 = vmatpush2.msra.mxu0 0.0
      %3811 = vmatprep.subr.mxu0 0.0
      %3812 = vmatpush2.msra.mxu0 0.0
      %3813 = vmatprep.subr.mxu0 0.0
      %3814 = vmatpush2.msra.mxu0 0.0
      %3815 = vmatprep.mubr.f32.mxu0 0.0
      %3816 = vmatmul.mubr.f32.gmra.mxu0 %v3658
      %v3817 = vpop.f32.mrf.mxu0
      %v3818 = vadd.f32 0.0, %v3817
      %v3819 = vpop.f32.mrf.mxu0
      %v3820 = vadd.f32 0.0, %v3819
      %3821 = vdwg.mxu0
      %3822 = vmatprep.subr.mxu0 0.0
      %3823 = vmatpush1.msra.mxu0 0.0
      %3824 = vmatprep.subr.mxu0 0.0
      %3825 = vmatpush1.msra.mxu0 0.0
      %3826 = vmatprep.subr.mxu0 0.0
      %3827 = vmatpush1.msra.mxu0 0.0
      %3828 = vmatprep.subr.mxu0 0.0
      %3829 = vmatpush1.msra.mxu0 0.0
      %3830 = vmatprep.subr.mxu0 0.0
      %3831 = vmatpush1.msra.mxu0 0.0
      %3832 = vmatprep.subr.mxu0 0.0
      %3833 = vmatpush1.msra.mxu0 0.0
      %3834 = vmatprep.subr.mxu0 0.0
      %3835 = vmatpush1.msra.mxu0 0.0
      %3836 = vmatprep.subr.mxu0 0.0
      %3837 = vmatpush1.msra.mxu0 0.0
      %3838 = vmatprep.subr.mxu0 0.0
      %3839 = vmatpush1.msra.mxu0 0.0
      %3840 = vmatprep.subr.mxu0 0.0
      %3841 = vmatpush1.msra.mxu0 0.0
      %3842 = vmatprep.subr.mxu0 0.0
      %3843 = vmatpush1.msra.mxu0 0.0
      %3844 = vmatprep.subr.mxu0 0.0
      %3845 = vmatpush1.msra.mxu0 0.0
      %3846 = vmatprep.subr.mxu0 0.0
      %3847 = vmatpush1.msra.mxu0 0.0
      %3848 = vmatprep.subr.mxu0 0.0
      %3849 = vmatpush1.msra.mxu0 0.0
      %3850 = vmatprep.subr.mxu0 0.0
      %3851 = vmatpush1.msra.mxu0 0.0
      %3852 = vmatprep.subr.mxu0 %v3670
      %3853 = vmatpush1.msra.mxu0 %v3668
      %3854 = vmatprep.subr.mxu0 0.0
      %3855 = vmatpush2.msra.mxu0 0.0
      %3856 = vmatprep.subr.mxu0 0.0
      %3857 = vmatpush2.msra.mxu0 0.0
      %3858 = vmatprep.subr.mxu0 0.0
      %3859 = vmatpush2.msra.mxu0 0.0
      %3860 = vmatprep.subr.mxu0 0.0
      %3861 = vmatpush2.msra.mxu0 0.0
      %3862 = vmatprep.subr.mxu0 0.0
      %3863 = vmatpush2.msra.mxu0 0.0
      %3864 = vmatprep.subr.mxu0 0.0
      %3865 = vmatpush2.msra.mxu0 0.0
      %3866 = vmatprep.subr.mxu0 0.0
      %3867 = vmatpush2.msra.mxu0 0.0
      %3868 = vmatprep.subr.mxu0 0.0
      %3869 = vmatpush2.msra.mxu0 0.0
      %3870 = vmatprep.subr.mxu0 0.0
      %3871 = vmatpush2.msra.mxu0 0.0
      %3872 = vmatprep.subr.mxu0 0.0
      %3873 = vmatpush2.msra.mxu0 0.0
      %3874 = vmatprep.subr.mxu0 0.0
      %3875 = vmatpush2.msra.mxu0 0.0
      %3876 = vmatprep.subr.mxu0 0.0
      %3877 = vmatpush2.msra.mxu0 0.0
      %3878 = vmatprep.subr.mxu0 0.0
      %3879 = vmatpush2.msra.mxu0 0.0
      %3880 = vmatprep.subr.mxu0 0.0
      %3881 = vmatpush2.msra.mxu0 0.0
      %3882 = vmatprep.subr.mxu0 0.0
      %3883 = vmatpush2.msra.mxu0 0.0
      %3884 = vmatprep.subr.mxu0 0.0
      %3885 = vmatpush2.msra.mxu0 0.0
      %3886 = vmatprep.mubr.f32.mxu0 0.0
      %3887 = vmatmul.mubr.f32.gmra.mxu0 %v3658
      %v3888 = vpop.f32.mrf.mxu0
      %v3889 = vadd.f32 0.0, %v3888
      %v3890 = vpop.f32.mrf.mxu0
      %v3891 = vadd.f32 0.0, %v3890
      %3892 = vdwg.mxu0
      %3893 = vmatprep.subr.mxu0 0.0
      %3894 = vmatpush1.msra.mxu0 0.0
      %3895 = vmatprep.subr.mxu0 0.0
      %3896 = vmatpush1.msra.mxu0 0.0
      %3897 = vmatprep.subr.mxu0 0.0
      %3898 = vmatpush1.msra.mxu0 0.0
      %3899 = vmatprep.subr.mxu0 0.0
      %3900 = vmatpush1.msra.mxu0 0.0
      %3901 = vmatprep.subr.mxu0 0.0
      %3902 = vmatpush1.msra.mxu0 0.0
      %3903 = vmatprep.subr.mxu0 0.0
      %3904 = vmatpush1.msra.mxu0 0.0
      %3905 = vmatprep.subr.mxu0 0.0
      %3906 = vmatpush1.msra.mxu0 0.0
      %3907 = vmatprep.subr.mxu0 0.0
      %3908 = vmatpush1.msra.mxu0 0.0
      %3909 = vmatprep.subr.mxu0 0.0
      %3910 = vmatpush1.msra.mxu0 0.0
      %3911 = vmatprep.subr.mxu0 0.0
      %3912 = vmatpush1.msra.mxu0 0.0
      %3913 = vmatprep.subr.mxu0 0.0
      %3914 = vmatpush1.msra.mxu0 0.0
      %3915 = vmatprep.subr.mxu0 0.0
      %3916 = vmatpush1.msra.mxu0 0.0
      %3917 = vmatprep.subr.mxu0 0.0
      %3918 = vmatpush1.msra.mxu0 0.0
      %3919 = vmatprep.subr.mxu0 0.0
      %3920 = vmatpush1.msra.mxu0 0.0
      %3921 = vmatprep.subr.mxu0 0.0
      %3922 = vmatpush1.msra.mxu0 0.0
      %3923 = vmatprep.subr.mxu0 %v3674
      %3924 = vmatpush1.msra.mxu0 %v3672
      %3925 = vmatprep.subr.mxu0 0.0
      %3926 = vmatpush2.msra.mxu0 0.0
      %3927 = vmatprep.subr.mxu0 0.0
      %3928 = vmatpush2.msra.mxu0 0.0
      %3929 = vmatprep.subr.mxu0 0.0
      %3930 = vmatpush2.msra.mxu0 0.0
      %3931 = vmatprep.subr.mxu0 0.0
      %3932 = vmatpush2.msra.mxu0 0.0
      %3933 = vmatprep.subr.mxu0 0.0
      %3934 = vmatpush2.msra.mxu0 0.0
      %3935 = vmatprep.subr.mxu0 0.0
      %3936 = vmatpush2.msra.mxu0 0.0
      %3937 = vmatprep.subr.mxu0 0.0
      %3938 = vmatpush2.msra.mxu0 0.0
      %3939 = vmatprep.subr.mxu0 0.0
      %3940 = vmatpush2.msra.mxu0 0.0
      %3941 = vmatprep.subr.mxu0 0.0
      %3942 = vmatpush2.msra.mxu0 0.0
      %3943 = vmatprep.subr.mxu0 0.0
      %3944 = vmatpush2.msra.mxu0 0.0
      %3945 = vmatprep.subr.mxu0 0.0
      %3946 = vmatpush2.msra.mxu0 0.0
      %3947 = vmatprep.subr.mxu0 0.0
      %3948 = vmatpush2.msra.mxu0 0.0
      %3949 = vmatprep.subr.mxu0 0.0
      %3950 = vmatpush2.msra.mxu0 0.0
      %3951 = vmatprep.subr.mxu0 0.0
      %3952 = vmatpush2.msra.mxu0 0.0
      %3953 = vmatprep.subr.mxu0 0.0
      %3954 = vmatpush2.msra.mxu0 0.0
      %3955 = vmatprep.subr.mxu0 0.0
      %3956 = vmatpush2.msra.mxu0 0.0
      %3957 = vmatprep.mubr.f32.mxu0 0.0
      %3958 = vmatmul.mubr.f32.gmra.mxu0 %v3658
      %v3959 = vpop.f32.mrf.mxu0
      %v3960 = vadd.f32 0.0, %v3959
      %v3961 = vpop.f32.mrf.mxu0
      %v3962 = vadd.f32 0.0, %v3961
      %3963 = vdwg.mxu0
      %3964 = vmatprep.subr.mxu0 0.0
      %3965 = vmatpush1.msra.mxu0 0.0
      %3966 = vmatprep.subr.mxu0 0.0
      %3967 = vmatpush1.msra.mxu0 0.0
      %3968 = vmatprep.subr.mxu0 0.0
      %3969 = vmatpush1.msra.mxu0 0.0
      %3970 = vmatprep.subr.mxu0 0.0
      %3971 = vmatpush1.msra.mxu0 0.0
      %3972 = vmatprep.subr.mxu0 0.0
      %3973 = vmatpush1.msra.mxu0 0.0
      %3974 = vmatprep.subr.mxu0 0.0
      %3975 = vmatpush1.msra.mxu0 0.0
      %3976 = vmatprep.subr.mxu0 0.0
      %3977 = vmatpush1.msra.mxu0 0.0
      %3978 = vmatprep.subr.mxu0 0.0
      %3979 = vmatpush1.msra.mxu0 0.0
      %3980 = vmatprep.subr.mxu0 0.0
      %3981 = vmatpush1.msra.mxu0 0.0
      %3982 = vmatprep.subr.mxu0 0.0
      %3983 = vmatpush1.msra.mxu0 0.0
      %3984 = vmatprep.subr.mxu0 0.0
      %3985 = vmatpush1.msra.mxu0 0.0
      %3986 = vmatprep.subr.mxu0 0.0
      %3987 = vmatpush1.msra.mxu0 0.0
      %3988 = vmatprep.subr.mxu0 0.0
      %3989 = vmatpush1.msra.mxu0 0.0
      %3990 = vmatprep.subr.mxu0 0.0
      %3991 = vmatpush1.msra.mxu0 0.0
      %3992 = vmatprep.subr.mxu0 0.0
      %3993 = vmatpush1.msra.mxu0 0.0
      %3994 = vmatprep.subr.mxu0 %v3678
      %3995 = vmatpush1.msra.mxu0 %v3676
      %3996 = vmatprep.subr.mxu0 0.0
      %3997 = vmatpush2.msra.mxu0 0.0
      %3998 = vmatprep.subr.mxu0 0.0
      %3999 = vmatpush2.msra.mxu0 0.0
      %4000 = vmatprep.subr.mxu0 0.0
      %4001 = vmatpush2.msra.mxu0 0.0
      %4002 = vmatprep.subr.mxu0 0.0
      %4003 = vmatpush2.msra.mxu0 0.0
      %4004 = vmatprep.subr.mxu0 0.0
      %4005 = vmatpush2.msra.mxu0 0.0
      %4006 = vmatprep.subr.mxu0 0.0
      %4007 = vmatpush2.msra.mxu0 0.0
      %4008 = vmatprep.subr.mxu0 0.0
      %4009 = vmatpush2.msra.mxu0 0.0
      %4010 = vmatprep.subr.mxu0 0.0
      %4011 = vmatpush2.msra.mxu0 0.0
      %4012 = vmatprep.subr.mxu0 0.0
      %4013 = vmatpush2.msra.mxu0 0.0
      %4014 = vmatprep.subr.mxu0 0.0
      %4015 = vmatpush2.msra.mxu0 0.0
      %4016 = vmatprep.subr.mxu0 0.0
      %4017 = vmatpush2.msra.mxu0 0.0
      %4018 = vmatprep.subr.mxu0 0.0
      %4019 = vmatpush2.msra.mxu0 0.0
      %4020 = vmatprep.subr.mxu0 0.0
      %4021 = vmatpush2.msra.mxu0 0.0
      %4022 = vmatprep.subr.mxu0 0.0
      %4023 = vmatpush2.msra.mxu0 0.0
      %4024 = vmatprep.subr.mxu0 0.0
      %4025 = vmatpush2.msra.mxu0 0.0
      %4026 = vmatprep.subr.mxu0 0.0
      %4027 = vmatpush2.msra.mxu0 0.0
      %4028 = vmatprep.mubr.f32.mxu0 0.0
      %4029 = vmatmul.mubr.f32.gmra.mxu0 %v3658
      %v4030 = vpop.f32.mrf.mxu0
      %v4031 = vadd.f32 0.0, %v4030
      %v4032 = vpop.f32.mrf.mxu0
      %v4033 = vadd.f32 0.0, %v4032
      %4034 = vdwg.mxu0
      %v4035 = vadd.f32 %v3600, %v3747
      %v4036 = vadd.f32 %v3601, %v3749
      %v4037 = vadd.f32 %v3602, %v3818
      %v4038 = vadd.f32 %v3603, %v3820
      %v4039 = vadd.f32 %v3604, %v3889
      %v4040 = vadd.f32 %v3605, %v3891
      %v4041 = vadd.f32 %v3606, %v3960
      %v4042 = vadd.f32 %v3607, %v3962
      %v4043 = vadd.f32 %v3608, %v4031
      %v4044 = vadd.f32 %v3609, %v4033
      %v4045 = vld [vmem:[%s2] sm:$0xff]
      %4047 = vset.pattern.permute.xlu0 0
      %4048 = vperm.xlu0 %4047, %v4045
      %v4049 = vpop.permute.xlu0 %4048
      %v4051 = vadd.f32 %v4035, %v4049
      %v4052 = vadd.f32 %v4036, %v4049
      %v4053 = vadd.f32 %v4037, %v4049
      %v4054 = vadd.f32 %v4038, %v4049
      %v4055 = vadd.f32 %v4039, %v4049
      %v4056 = vadd.f32 %v4040, %v4049
      %v4057 = vadd.f32 %v4041, %v4049
      %v4058 = vadd.f32 %v4042, %v4049
      %v4059 = vadd.f32 %v4043, %v4049
      %v4060 = vadd.f32 %v4044, %v4049
      %vm4061 = vcmp.ge.f32.partialorder %v4051, 0.0
      %vm4062 = vcmp.ge.f32.partialorder %v4052, 0.0
      %vm4063 = vcmp.ge.f32.partialorder %v4053, 0.0
      %vm4064 = vcmp.ge.f32.partialorder %v4054, 0.0
      %vm4065 = vcmp.ge.f32.partialorder %v4055, 0.0
      %vm4066 = vcmp.ge.f32.partialorder %v4056, 0.0
      %vm4067 = vcmp.ge.f32.partialorder %v4057, 0.0
      %vm4068 = vcmp.ge.f32.partialorder %v4058, 0.0
      %vm4069 = vcmp.ge.f32.partialorder %v4059, 0.0
      %vm4070 = vcmp.ge.f32.partialorder %v4060, 0.0
      %v4071 = vmul.f32 %v4051, 0.2
      %v4072 = vmul.f32 %v4052, 0.2
      %v4073 = vmul.f32 %v4053, 0.2
      %v4074 = vmul.f32 %v4054, 0.2
      %v4075 = vmul.f32 %v4055, 0.2
      %v4076 = vmul.f32 %v4056, 0.2
      %v4077 = vmul.f32 %v4057, 0.2
      %v4078 = vmul.f32 %v4058, 0.2
      %v4079 = vmul.f32 %v4059, 0.2
      %v4080 = vmul.f32 %v4060, 0.2
      %v4081 = vsel %vm4061, %v4051, %v4071
      %v4082 = vsel %vm4062, %v4052, %v4072
      %v4083 = vsel %vm4063, %v4053, %v4073
      %v4084 = vsel %vm4064, %v4054, %v4074
      %v4085 = vsel %vm4065, %v4055, %v4075
      %v4086 = vsel %vm4066, %v4056, %v4076
      %v4087 = vsel %vm4067, %v4057, %v4077
      %v4088 = vsel %vm4068, %v4058, %v4078
      %v4089 = vsel %vm4069, %v4059, %v4079
      %v4090 = vsel %vm4070, %v4060, %v4080
      %v4092 = vcombine.high %v4081, %v4081
      %v4094 = vunpack.c.l.s4 1966171168
      %v4095 = vunpack.c.0.s8 %v4094
      %v4096 = vlaneseq
      %v4097 = vshrl.u32 %v4096, 7
      %v4098 = vsub.s32 %v4095, %v4097
      %v4099 = vrot.slane %v4081, %v4098
      %v4101 = vunpack.c.l.s4 1966171168
      %v4102 = vunpack.c.0.s8 %v4101
      %v4103 = vlaneseq
      %v4104 = vshrl.u32 %v4103, 7
      %v4105 = vsub.s32 %v4102, %v4104
      %v4106 = vrot.slane %v4092, %v4105
      %v4107 = vcombine.high %v4099, %v4099
      %v4108 = vcombine.high %v4106, %v4106
      %v4110 = vunpack.c.l.s4 1966171168
      %v4111 = vunpack.c.0.s8 %v4110
      %v4112 = vlaneseq
      %v4113 = vshrl.u32 %v4112, 7
      %v4114 = vsub.s32 %v4111, %v4113
      %v4115 = vrot.slane %v4099, %v4114
      %v4117 = vunpack.c.l.s4 1966171168
      %v4118 = vunpack.c.0.s8 %v4117
      %v4119 = vlaneseq
      %v4120 = vshrl.u32 %v4119, 7
      %v4121 = vsub.s32 %v4118, %v4120
      %v4122 = vrot.slane %v4106, %v4121
      %v4124 = vunpack.c.l.s4 1966171168
      %v4125 = vunpack.c.0.s8 %v4124
      %v4126 = vlaneseq
      %v4127 = vshrl.u32 %v4126, 7
      %v4128 = vsub.s32 %v4125, %v4127
      %v4129 = vrot.slane %v4107, %v4128
      %v4131 = vunpack.c.l.s4 1966171168
      %v4132 = vunpack.c.0.s8 %v4131
      %v4133 = vlaneseq
      %v4134 = vshrl.u32 %v4133, 7
      %v4135 = vsub.s32 %v4132, %v4134
      %v4136 = vrot.slane %v4108, %v4135
      %v4137 = vcombine.high %v4115, %v4115
      %v4138 = vcombine.high %v4122, %v4122
      %v4139 = vcombine.high %v4129, %v4129
      %v4140 = vcombine.high %v4136, %v4136
      %vm4149 = vcmask 262144
      %4150 = vst.msk [vmem:[%s192] sm:$0x1] %vm4149, %v4115
      %4151 = vst.msk [vmem:[%s192 + $0x28] sm:$0x1] %vm4149, %v4129
      %4152 = vst.msk [vmem:[%s192 + $0x50] sm:$0x1] %vm4149, %v4137
      %4153 = vst.msk [vmem:[%s192 + $0x78] sm:$0x1] %vm4149, %v4139
      %4154 = vst.msk [vmem:[%s192 + $0xa0] sm:$0x1] %vm4149, %v4122
      %4155 = vst.msk [vmem:[%s192 + $0xc8] sm:$0x1] %vm4149, %v4136
      %4156 = vst.msk [vmem:[%s192 + $0xf0] sm:$0x1] %vm4149, %v4138
      %4157 = vst.msk [vmem:[%s192 + $0x118] sm:$0x1] %vm4149, %v4140
      %v4158 = vlaneseq
      %v4159 = vshrl.u32 %v4158, 7
      %v4160 = vsub.s32 0, %v4159
      %v4161 = vrot.slane %v4115, %v4160
      %v4162 = vlaneseq
      %v4163 = vshrl.u32 %v4162, 7
      %v4164 = vsub.s32 0, %v4163
      %v4165 = vrot.slane %v4129, %v4164
      %v4166 = vlaneseq
      %v4167 = vshrl.u32 %v4166, 7
      %v4168 = vsub.s32 0, %v4167
      %v4169 = vrot.slane %v4137, %v4168
      %v4170 = vlaneseq
      %v4171 = vshrl.u32 %v4170, 7
      %v4172 = vsub.s32 0, %v4171
      %v4173 = vrot.slane %v4139, %v4172
      %v4174 = vlaneseq
      %v4175 = vshrl.u32 %v4174, 7
      %v4176 = vsub.s32 0, %v4175
      %v4177 = vrot.slane %v4122, %v4176
      %v4178 = vlaneseq
      %v4179 = vshrl.u32 %v4178, 7
      %v4180 = vsub.s32 0, %v4179
      %v4181 = vrot.slane %v4136, %v4180
      %v4182 = vlaneseq
      %v4183 = vshrl.u32 %v4182, 7
      %v4184 = vsub.s32 0, %v4183
      %v4185 = vrot.slane %v4138, %v4184
      %v4186 = vlaneseq
      %v4187 = vshrl.u32 %v4186, 7
      %v4188 = vsub.s32 0, %v4187
      %v4189 = vrot.slane %v4140, %v4188
      %4190 = vrot.lane.b32.xlu0 %v4161, 93
      %v4191 = vpop.permute.xlu0 %4190
      %4192 = vrot.lane.b32.xlu0 %v4165, 93
      %v4193 = vpop.permute.xlu0 %4192
      %4194 = vrot.lane.b32.xlu0 %v4169, 93
      %v4195 = vpop.permute.xlu0 %4194
      %4196 = vrot.lane.b32.xlu0 %v4173, 93
      %v4197 = vpop.permute.xlu0 %4196
      %4198 = vrot.lane.b32.xlu0 %v4177, 93
      %v4199 = vpop.permute.xlu0 %4198
      %4200 = vrot.lane.b32.xlu0 %v4181, 93
      %v4201 = vpop.permute.xlu0 %4200
      %4202 = vrot.lane.b32.xlu0 %v4185, 93
      %v4203 = vpop.permute.xlu0 %4202
      %4204 = vrot.lane.b32.xlu0 %v4189, 93
      %v4205 = vpop.permute.xlu0 %4204
      %4214 = vst.msk [vmem:[%s192 + $0x1] sm:$0x1] %vm4149, %v4191
      %4215 = vst.msk [vmem:[%s192 + $0x29] sm:$0x1] %vm4149, %v4193
      %4216 = vst.msk [vmem:[%s192 + $0x51] sm:$0x1] %vm4149, %v4195
      %4217 = vst.msk [vmem:[%s192 + $0x79] sm:$0x1] %vm4149, %v4197
      %4218 = vst.msk [vmem:[%s192 + $0xa1] sm:$0x1] %vm4149, %v4199
      %4219 = vst.msk [vmem:[%s192 + $0xc9] sm:$0x1] %vm4149, %v4201
      %4220 = vst.msk [vmem:[%s192 + $0xf1] sm:$0x1] %vm4149, %v4203
      %4221 = vst.msk [vmem:[%s192 + $0x119] sm:$0x1] %vm4149, %v4205
      %4222 = vrot.lane.b32.xlu0 %v4161, 58
      %v4223 = vpop.permute.xlu0 %4222
      %4224 = vrot.lane.b32.xlu0 %v4165, 58
      %v4225 = vpop.permute.xlu0 %4224
      %4226 = vrot.lane.b32.xlu0 %v4169, 58
      %v4227 = vpop.permute.xlu0 %4226
      %4228 = vrot.lane.b32.xlu0 %v4173, 58
      %v4229 = vpop.permute.xlu0 %4228
      %4230 = vrot.lane.b32.xlu0 %v4177, 58
      %v4231 = vpop.permute.xlu0 %4230
      %4232 = vrot.lane.b32.xlu0 %v4181, 58
      %v4233 = vpop.permute.xlu0 %4232
      %4234 = vrot.lane.b32.xlu0 %v4185, 58
      %v4235 = vpop.permute.xlu0 %4234
      %4236 = vrot.lane.b32.xlu0 %v4189, 58
      %v4237 = vpop.permute.xlu0 %4236
      %4246 = vst.msk [vmem:[%s192 + $0x2] sm:$0x1] %vm4149, %v4223
      %4247 = vst.msk [vmem:[%s192 + $0x2a] sm:$0x1] %vm4149, %v4225
      %4248 = vst.msk [vmem:[%s192 + $0x52] sm:$0x1] %vm4149, %v4227
      %4249 = vst.msk [vmem:[%s192 + $0x7a] sm:$0x1] %vm4149, %v4229
      %4250 = vst.msk [vmem:[%s192 + $0xa2] sm:$0x1] %vm4149, %v4231
      %4251 = vst.msk [vmem:[%s192 + $0xca] sm:$0x1] %vm4149, %v4233
      %4252 = vst.msk [vmem:[%s192 + $0xf2] sm:$0x1] %vm4149, %v4235
      %4253 = vst.msk [vmem:[%s192 + $0x11a] sm:$0x1] %vm4149, %v4237
      %v4255 = vcombine.low %v4081, %v4082
      %v4256 = vcombine.high %v4081, %v4082
      %v4258 = vunpack.c.l.s4 1966171168
      %v4259 = vunpack.c.0.s8 %v4258
      %v4260 = vlaneseq
      %v4261 = vshrl.u32 %v4260, 7
      %v4262 = vsub.s32 %v4259, %v4261
      %v4263 = vrot.slane %v4255, %v4262
      %v4265 = vunpack.c.l.s4 1966171168
      %v4266 = vunpack.c.0.s8 %v4265
      %v4267 = vlaneseq
      %v4268 = vshrl.u32 %v4267, 7
      %v4269 = vsub.s32 %v4266, %v4268
      %v4270 = vrot.slane %v4256, %v4269
      %v4271 = vcombine.high %v4263, %v4263
      %v4272 = vcombine.high %v4270, %v4270
      %v4274 = vunpack.c.l.s4 1966171168
      %v4275 = vunpack.c.0.s8 %v4274
      %v4276 = vlaneseq
      %v4277 = vshrl.u32 %v4276, 7
      %v4278 = vsub.s32 %v4275, %v4277
      %v4279 = vrot.slane %v4263, %v4278
      %v4281 = vunpack.c.l.s4 1966171168
      %v4282 = vunpack.c.0.s8 %v4281
      %v4283 = vlaneseq
      %v4284 = vshrl.u32 %v4283, 7
      %v4285 = vsub.s32 %v4282, %v4284
      %v4286 = vrot.slane %v4270, %v4285
      %v4288 = vunpack.c.l.s4 1966171168
      %v4289 = vunpack.c.0.s8 %v4288
      %v4290 = vlaneseq
      %v4291 = vshrl.u32 %v4290, 7
      %v4292 = vsub.s32 %v4289, %v4291
      %v4293 = vrot.slane %v4271, %v4292
      %v4295 = vunpack.c.l.s4 1966171168
      %v4296 = vunpack.c.0.s8 %v4295
      %v4297 = vlaneseq
      %v4298 = vshrl.u32 %v4297, 7
      %v4299 = vsub.s32 %v4296, %v4298
      %v4300 = vrot.slane %v4272, %v4299
      %v4301 = vcombine.high %v4279, %v4279
      %v4302 = vcombine.high %v4286, %v4286
      %v4303 = vcombine.high %v4293, %v4293
      %v4304 = vcombine.high %v4300, %v4300
      %v4305 = vlaneseq
      %v4306 = vshrl.u32 %v4305, 7
      %v4307 = vsub.s32 0, %v4306
      %v4308 = vrot.slane %v4279, %v4307
      %v4309 = vlaneseq
      %v4310 = vshrl.u32 %v4309, 7
      %v4311 = vsub.s32 1, %v4310
      %v4312 = vrot.slane %v4279, %v4311
      %v4313 = vlaneseq
      %v4314 = vshrl.u32 %v4313, 7
      %v4315 = vsub.s32 0, %v4314
      %v4316 = vrot.slane %v4293, %v4315
      %v4317 = vlaneseq
      %v4318 = vshrl.u32 %v4317, 7
      %v4319 = vsub.s32 1, %v4318
      %v4320 = vrot.slane %v4293, %v4319
      %v4321 = vlaneseq
      %v4322 = vshrl.u32 %v4321, 7
      %v4323 = vsub.s32 0, %v4322
      %v4324 = vrot.slane %v4301, %v4323
      %v4325 = vlaneseq
      %v4326 = vshrl.u32 %v4325, 7
      %v4327 = vsub.s32 1, %v4326
      %v4328 = vrot.slane %v4301, %v4327
      %v4329 = vlaneseq
      %v4330 = vshrl.u32 %v4329, 7
      %v4331 = vsub.s32 0, %v4330
      %v4332 = vrot.slane %v4303, %v4331
      %v4333 = vlaneseq
      %v4334 = vshrl.u32 %v4333, 7
      %v4335 = vsub.s32 1, %v4334
      %v4336 = vrot.slane %v4303, %v4335
      %v4337 = vlaneseq
      %v4338 = vshrl.u32 %v4337, 7
      %v4339 = vsub.s32 0, %v4338
      %v4340 = vrot.slane %v4286, %v4339
      %v4341 = vlaneseq
      %v4342 = vshrl.u32 %v4341, 7
      %v4343 = vsub.s32 1, %v4342
      %v4344 = vrot.slane %v4286, %v4343
      %v4345 = vlaneseq
      %v4346 = vshrl.u32 %v4345, 7
      %v4347 = vsub.s32 0, %v4346
      %v4348 = vrot.slane %v4300, %v4347
      %v4349 = vlaneseq
      %v4350 = vshrl.u32 %v4349, 7
      %v4351 = vsub.s32 1, %v4350
      %v4352 = vrot.slane %v4300, %v4351
      %v4353 = vlaneseq
      %v4354 = vshrl.u32 %v4353, 7
      %v4355 = vsub.s32 0, %v4354
      %v4356 = vrot.slane %v4302, %v4355
      %v4357 = vlaneseq
      %v4358 = vshrl.u32 %v4357, 7
      %v4359 = vsub.s32 1, %v4358
      %v4360 = vrot.slane %v4302, %v4359
      %v4361 = vlaneseq
      %v4362 = vshrl.u32 %v4361, 7
      %v4363 = vsub.s32 0, %v4362
      %v4364 = vrot.slane %v4304, %v4363
      %v4365 = vlaneseq
      %v4366 = vshrl.u32 %v4365, 7
      %v4367 = vsub.s32 1, %v4366
      %v4368 = vrot.slane %v4304, %v4367
      %4369 = vrot.lane.b32.xlu0 %v4308, 23
      %v4370 = vpop.permute.xlu0 %4369
      %4371 = vrot.lane.b32.xlu0 %v4312, 23
      %v4372 = vpop.permute.xlu0 %4371
      %4373 = vrot.lane.b32.xlu0 %v4316, 23
      %v4374 = vpop.permute.xlu0 %4373
      %4375 = vrot.lane.b32.xlu0 %v4320, 23
      %v4376 = vpop.permute.xlu0 %4375
      %4377 = vrot.lane.b32.xlu0 %v4324, 23
      %v4378 = vpop.permute.xlu0 %4377
      %4379 = vrot.lane.b32.xlu0 %v4328, 23
      %v4380 = vpop.permute.xlu0 %4379
      %4381 = vrot.lane.b32.xlu0 %v4332, 23
      %v4382 = vpop.permute.xlu0 %4381
      %4383 = vrot.lane.b32.xlu0 %v4336, 23
      %v4384 = vpop.permute.xlu0 %4383
      %4385 = vrot.lane.b32.xlu0 %v4340, 23
      %v4386 = vpop.permute.xlu0 %4385
      %4387 = vrot.lane.b32.xlu0 %v4344, 23
      %v4388 = vpop.permute.xlu0 %4387
      %4389 = vrot.lane.b32.xlu0 %v4348, 23
      %v4390 = vpop.permute.xlu0 %4389
      %4391 = vrot.lane.b32.xlu0 %v4352, 23
      %v4392 = vpop.permute.xlu0 %4391
      %4393 = vrot.lane.b32.xlu0 %v4356, 23
      %v4394 = vpop.permute.xlu0 %4393
      %4395 = vrot.lane.b32.xlu0 %v4360, 23
      %v4396 = vpop.permute.xlu0 %4395
      %4397 = vrot.lane.b32.xlu0 %v4364, 23
      %v4398 = vpop.permute.xlu0 %4397
      %4399 = vrot.lane.b32.xlu0 %v4368, 23
      %v4400 = vpop.permute.xlu0 %4399
      %vm4401 = vcmask 187392
      %v4402 = vsel %vm4401, %v4370, %v4372
      %v4403 = vsel %vm4401, %v4374, %v4376
      %v4404 = vsel %vm4401, %v4378, %v4380
      %v4405 = vsel %vm4401, %v4382, %v4384
      %v4406 = vsel %vm4401, %v4386, %v4388
      %v4407 = vsel %vm4401, %v4390, %v4392
      %v4408 = vsel %vm4401, %v4394, %v4396
      %v4409 = vsel %vm4401, %v4398, %v4400
      %4418 = vst.msk [vmem:[%s192 + $0x3] sm:$0x1] %vm4149, %v4402
      %4419 = vst.msk [vmem:[%s192 + $0x2b] sm:$0x1] %vm4149, %v4403
      %4420 = vst.msk [vmem:[%s192 + $0x53] sm:$0x1] %vm4149, %v4404
      %4421 = vst.msk [vmem:[%s192 + $0x7b] sm:$0x1] %vm4149, %v4405
      %4422 = vst.msk [vmem:[%s192 + $0xa3] sm:$0x1] %vm4149, %v4406
      %4423 = vst.msk [vmem:[%s192 + $0xcb] sm:$0x1] %vm4149, %v4407
      %4424 = vst.msk [vmem:[%s192 + $0xf3] sm:$0x1] %vm4149, %v4408
      %4425 = vst.msk [vmem:[%s192 + $0x11b] sm:$0x1] %vm4149, %v4409
      %v4426 = vcombine.high %v4082, %v4082
      %v4428 = vunpack.c.l.s4 1966171168
      %v4429 = vunpack.c.0.s8 %v4428
      %v4430 = vlaneseq
      %v4431 = vshrl.u32 %v4430, 7
      %v4432 = vsub.s32 %v4429, %v4431
      %v4433 = vrot.slane %v4082, %v4432
      %v4435 = vunpack.c.l.s4 1966171168
      %v4436 = vunpack.c.0.s8 %v4435
      %v4437 = vlaneseq
      %v4438 = vshrl.u32 %v4437, 7
      %v4439 = vsub.s32 %v4436, %v4438
      %v4440 = vrot.slane %v4426, %v4439
      %v4441 = vcombine.high %v4433, %v4433
      %v4442 = vcombine.high %v4440, %v4440
      %v4444 = vunpack.c.l.s4 1966171168
      %v4445 = vunpack.c.0.s8 %v4444
      %v4446 = vlaneseq
      %v4447 = vshrl.u32 %v4446, 7
      %v4448 = vsub.s32 %v4445, %v4447
      %v4449 = vrot.slane %v4433, %v4448
      %v4451 = vunpack.c.l.s4 1966171168
      %v4452 = vunpack.c.0.s8 %v4451
      %v4453 = vlaneseq
      %v4454 = vshrl.u32 %v4453, 7
      %v4455 = vsub.s32 %v4452, %v4454
      %v4456 = vrot.slane %v4440, %v4455
      %v4458 = vunpack.c.l.s4 1966171168
      %v4459 = vunpack.c.0.s8 %v4458
      %v4460 = vlaneseq
      %v4461 = vshrl.u32 %v4460, 7
      %v4462 = vsub.s32 %v4459, %v4461
      %v4463 = vrot.slane %v4441, %v4462
      %v4465 = vunpack.c.l.s4 1966171168
      %v4466 = vunpack.c.0.s8 %v4465
      %v4467 = vlaneseq
      %v4468 = vshrl.u32 %v4467, 7
      %v4469 = vsub.s32 %v4466, %v4468
      %v4470 = vrot.slane %v4442, %v4469
      %v4471 = vcombine.high %v4449, %v4449
      %v4472 = vcombine.high %v4456, %v4456
      %v4473 = vcombine.high %v4463, %v4463
      %v4474 = vcombine.high %v4470, %v4470
      %v4475 = vlaneseq
      %v4476 = vshrl.u32 %v4475, 7
      %v4477 = vsub.s32 0, %v4476
      %v4478 = vrot.slane %v4449, %v4477
      %v4479 = vlaneseq
      %v4480 = vshrl.u32 %v4479, 7
      %v4481 = vsub.s32 0, %v4480
      %v4482 = vrot.slane %v4463, %v4481
      %v4483 = vlaneseq
      %v4484 = vshrl.u32 %v4483, 7
      %v4485 = vsub.s32 0, %v4484
      %v4486 = vrot.slane %v4471, %v4485
      %v4487 = vlaneseq
      %v4488 = vshrl.u32 %v4487, 7
      %v4489 = vsub.s32 0, %v4488
      %v4490 = vrot.slane %v4473, %v4489
      %v4491 = vlaneseq
      %v4492 = vshrl.u32 %v4491, 7
      %v4493 = vsub.s32 0, %v4492
      %v4494 = vrot.slane %v4456, %v4493
      %v4495 = vlaneseq
      %v4496 = vshrl.u32 %v4495, 7
      %v4497 = vsub.s32 0, %v4496
      %v4498 = vrot.slane %v4470, %v4497
      %v4499 = vlaneseq
      %v4500 = vshrl.u32 %v4499, 7
      %v4501 = vsub.s32 0, %v4500
      %v4502 = vrot.slane %v4472, %v4501
      %v4503 = vlaneseq
      %v4504 = vshrl.u32 %v4503, 7
      %v4505 = vsub.s32 0, %v4504
      %v4506 = vrot.slane %v4474, %v4505
      %4507 = vrot.lane.b32.xlu0 %v4478, 116
      %v4508 = vpop.permute.xlu0 %4507
      %4509 = vrot.lane.b32.xlu0 %v4482, 116
      %v4510 = vpop.permute.xlu0 %4509
      %4511 = vrot.lane.b32.xlu0 %v4486, 116
      %v4512 = vpop.permute.xlu0 %4511
      %4513 = vrot.lane.b32.xlu0 %v4490, 116
      %v4514 = vpop.permute.xlu0 %4513
      %4515 = vrot.lane.b32.xlu0 %v4494, 116
      %v4516 = vpop.permute.xlu0 %4515
      %4517 = vrot.lane.b32.xlu0 %v4498, 116
      %v4518 = vpop.permute.xlu0 %4517
      %4519 = vrot.lane.b32.xlu0 %v4502, 116
      %v4520 = vpop.permute.xlu0 %4519
      %4521 = vrot.lane.b32.xlu0 %v4506, 116
      %v4522 = vpop.permute.xlu0 %4521
      %4531 = vst.msk [vmem:[%s192 + $0x4] sm:$0x1] %vm4149, %v4508
      %4532 = vst.msk [vmem:[%s192 + $0x2c] sm:$0x1] %vm4149, %v4510
      %4533 = vst.msk [vmem:[%s192 + $0x54] sm:$0x1] %vm4149, %v4512
      %4534 = vst.msk [vmem:[%s192 + $0x7c] sm:$0x1] %vm4149, %v4514
      %4535 = vst.msk [vmem:[%s192 + $0xa4] sm:$0x1] %vm4149, %v4516
      %4536 = vst.msk [vmem:[%s192 + $0xcc] sm:$0x1] %vm4149, %v4518
      %4537 = vst.msk [vmem:[%s192 + $0xf4] sm:$0x1] %vm4149, %v4520
      %4538 = vst.msk [vmem:[%s192 + $0x11c] sm:$0x1] %vm4149, %v4522
      %4539 = vrot.lane.b32.xlu0 %v4478, 81
      %v4540 = vpop.permute.xlu0 %4539
      %4541 = vrot.lane.b32.xlu0 %v4482, 81
      %v4542 = vpop.permute.xlu0 %4541
      %4543 = vrot.lane.b32.xlu0 %v4486, 81
      %v4544 = vpop.permute.xlu0 %4543
      %4545 = vrot.lane.b32.xlu0 %v4490, 81
      %v4546 = vpop.permute.xlu0 %4545
      %4547 = vrot.lane.b32.xlu0 %v4494, 81
      %v4548 = vpop.permute.xlu0 %4547
      %4549 = vrot.lane.b32.xlu0 %v4498, 81
      %v4550 = vpop.permute.xlu0 %4549
      %4551 = vrot.lane.b32.xlu0 %v4502, 81
      %v4552 = vpop.permute.xlu0 %4551
      %4553 = vrot.lane.b32.xlu0 %v4506, 81
      %v4554 = vpop.permute.xlu0 %4553
      %4563 = vst.msk [vmem:[%s192 + $0x5] sm:$0x1] %vm4149, %v4540
      %4564 = vst.msk [vmem:[%s192 + $0x2d] sm:$0x1] %vm4149, %v4542
      %4565 = vst.msk [vmem:[%s192 + $0x55] sm:$0x1] %vm4149, %v4544
      %4566 = vst.msk [vmem:[%s192 + $0x7d] sm:$0x1] %vm4149, %v4546
      %4567 = vst.msk [vmem:[%s192 + $0xa5] sm:$0x1] %vm4149, %v4548
      %4568 = vst.msk [vmem:[%s192 + $0xcd] sm:$0x1] %vm4149, %v4550
      %4569 = vst.msk [vmem:[%s192 + $0xf5] sm:$0x1] %vm4149, %v4552
      %4570 = vst.msk [vmem:[%s192 + $0x11d] sm:$0x1] %vm4149, %v4554
      %4571 = vrot.lane.b32.xlu0 %v4478, 46
      %v4572 = vpop.permute.xlu0 %4571
      %4573 = vrot.lane.b32.xlu0 %v4482, 46
      %v4574 = vpop.permute.xlu0 %4573
      %4575 = vrot.lane.b32.xlu0 %v4486, 46
      %v4576 = vpop.permute.xlu0 %4575
      %4577 = vrot.lane.b32.xlu0 %v4490, 46
      %v4578 = vpop.permute.xlu0 %4577
      %4579 = vrot.lane.b32.xlu0 %v4494, 46
      %v4580 = vpop.permute.xlu0 %4579
      %4581 = vrot.lane.b32.xlu0 %v4498, 46
      %v4582 = vpop.permute.xlu0 %4581
      %4583 = vrot.lane.b32.xlu0 %v4502, 46
      %v4584 = vpop.permute.xlu0 %4583
      %4585 = vrot.lane.b32.xlu0 %v4506, 46
      %v4586 = vpop.permute.xlu0 %4585
      %4595 = vst.msk [vmem:[%s192 + $0x6] sm:$0x1] %vm4149, %v4572
      %4596 = vst.msk [vmem:[%s192 + $0x2e] sm:$0x1] %vm4149, %v4574
      %4597 = vst.msk [vmem:[%s192 + $0x56] sm:$0x1] %vm4149, %v4576
      %4598 = vst.msk [vmem:[%s192 + $0x7e] sm:$0x1] %vm4149, %v4578
      %4599 = vst.msk [vmem:[%s192 + $0xa6] sm:$0x1] %vm4149, %v4580
      %4600 = vst.msk [vmem:[%s192 + $0xce] sm:$0x1] %vm4149, %v4582
      %4601 = vst.msk [vmem:[%s192 + $0xf6] sm:$0x1] %vm4149, %v4584
      %4602 = vst.msk [vmem:[%s192 + $0x11e] sm:$0x1] %vm4149, %v4586
      %v4604 = vcombine.low %v4082, %v4083
      %v4605 = vcombine.high %v4082, %v4083
      %v4607 = vunpack.c.l.s4 1966171168
      %v4608 = vunpack.c.0.s8 %v4607
      %v4609 = vlaneseq
      %v4610 = vshrl.u32 %v4609, 7
      %v4611 = vsub.s32 %v4608, %v4610
      %v4612 = vrot.slane %v4604, %v4611
      %v4614 = vunpack.c.l.s4 1966171168
      %v4615 = vunpack.c.0.s8 %v4614
      %v4616 = vlaneseq
      %v4617 = vshrl.u32 %v4616, 7
      %v4618 = vsub.s32 %v4615, %v4617
      %v4619 = vrot.slane %v4605, %v4618
      %v4620 = vcombine.high %v4612, %v4612
      %v4621 = vcombine.high %v4619, %v4619
      %v4623 = vunpack.c.l.s4 1966171168
      %v4624 = vunpack.c.0.s8 %v4623
      %v4625 = vlaneseq
      %v4626 = vshrl.u32 %v4625, 7
      %v4627 = vsub.s32 %v4624, %v4626
      %v4628 = vrot.slane %v4612, %v4627
      %v4630 = vunpack.c.l.s4 1966171168
      %v4631 = vunpack.c.0.s8 %v4630
      %v4632 = vlaneseq
      %v4633 = vshrl.u32 %v4632, 7
      %v4634 = vsub.s32 %v4631, %v4633
      %v4635 = vrot.slane %v4619, %v4634
      %v4637 = vunpack.c.l.s4 1966171168
      %v4638 = vunpack.c.0.s8 %v4637
      %v4639 = vlaneseq
      %v4640 = vshrl.u32 %v4639, 7
      %v4641 = vsub.s32 %v4638, %v4640
      %v4642 = vrot.slane %v4620, %v4641
      %v4644 = vunpack.c.l.s4 1966171168
      %v4645 = vunpack.c.0.s8 %v4644
      %v4646 = vlaneseq
      %v4647 = vshrl.u32 %v4646, 7
      %v4648 = vsub.s32 %v4645, %v4647
      %v4649 = vrot.slane %v4621, %v4648
      %v4650 = vcombine.high %v4628, %v4628
      %v4651 = vcombine.high %v4635, %v4635
      %v4652 = vcombine.high %v4642, %v4642
      %v4653 = vcombine.high %v4649, %v4649
      %v4654 = vlaneseq
      %v4655 = vshrl.u32 %v4654, 7
      %v4656 = vsub.s32 0, %v4655
      %v4657 = vrot.slane %v4628, %v4656
      %v4658 = vlaneseq
      %v4659 = vshrl.u32 %v4658, 7
      %v4660 = vsub.s32 1, %v4659
      %v4661 = vrot.slane %v4628, %v4660
      %v4662 = vlaneseq
      %v4663 = vshrl.u32 %v4662, 7
      %v4664 = vsub.s32 0, %v4663
      %v4665 = vrot.slane %v4642, %v4664
      %v4666 = vlaneseq
      %v4667 = vshrl.u32 %v4666, 7
      %v4668 = vsub.s32 1, %v4667
      %v4669 = vrot.slane %v4642, %v4668
      %v4670 = vlaneseq
      %v4671 = vshrl.u32 %v4670, 7
      %v4672 = vsub.s32 0, %v4671
      %v4673 = vrot.slane %v4650, %v4672
      %v4674 = vlaneseq
      %v4675 = vshrl.u32 %v4674, 7
      %v4676 = vsub.s32 1, %v4675
      %v4677 = vrot.slane %v4650, %v4676
      %v4678 = vlaneseq
      %v4679 = vshrl.u32 %v4678, 7
      %v4680 = vsub.s32 0, %v4679
      %v4681 = vrot.slane %v4652, %v4680
      %v4682 = vlaneseq
      %v4683 = vshrl.u32 %v4682, 7
      %v4684 = vsub.s32 1, %v4683
      %v4685 = vrot.slane %v4652, %v4684
      %v4686 = vlaneseq
      %v4687 = vshrl.u32 %v4686, 7
      %v4688 = vsub.s32 0, %v4687
      %v4689 = vrot.slane %v4635, %v4688
      %v4690 = vlaneseq
      %v4691 = vshrl.u32 %v4690, 7
      %v4692 = vsub.s32 1, %v4691
      %v4693 = vrot.slane %v4635, %v4692
      %v4694 = vlaneseq
      %v4695 = vshrl.u32 %v4694, 7
      %v4696 = vsub.s32 0, %v4695
      %v4697 = vrot.slane %v4649, %v4696
      %v4698 = vlaneseq
      %v4699 = vshrl.u32 %v4698, 7
      %v4700 = vsub.s32 1, %v4699
      %v4701 = vrot.slane %v4649, %v4700
      %v4702 = vlaneseq
      %v4703 = vshrl.u32 %v4702, 7
      %v4704 = vsub.s32 0, %v4703
      %v4705 = vrot.slane %v4651, %v4704
      %v4706 = vlaneseq
      %v4707 = vshrl.u32 %v4706, 7
      %v4708 = vsub.s32 1, %v4707
      %v4709 = vrot.slane %v4651, %v4708
      %v4710 = vlaneseq
      %v4711 = vshrl.u32 %v4710, 7
      %v4712 = vsub.s32 0, %v4711
      %v4713 = vrot.slane %v4653, %v4712
      %v4714 = vlaneseq
      %v4715 = vshrl.u32 %v4714, 7
      %v4716 = vsub.s32 1, %v4715
      %v4717 = vrot.slane %v4653, %v4716
      %4718 = vrot.lane.b32.xlu0 %v4657, 11
      %v4719 = vpop.permute.xlu0 %4718
      %4720 = vrot.lane.b32.xlu0 %v4661, 11
      %v4721 = vpop.permute.xlu0 %4720
      %4722 = vrot.lane.b32.xlu0 %v4665, 11
      %v4723 = vpop.permute.xlu0 %4722
      %4724 = vrot.lane.b32.xlu0 %v4669, 11
      %v4725 = vpop.permute.xlu0 %4724
      %4726 = vrot.lane.b32.xlu0 %v4673, 11
      %v4727 = vpop.permute.xlu0 %4726
      %4728 = vrot.lane.b32.xlu0 %v4677, 11
      %v4729 = vpop.permute.xlu0 %4728
      %4730 = vrot.lane.b32.xlu0 %v4681, 11
      %v4731 = vpop.permute.xlu0 %4730
      %4732 = vrot.lane.b32.xlu0 %v4685, 11
      %v4733 = vpop.permute.xlu0 %4732
      %4734 = vrot.lane.b32.xlu0 %v4689, 11
      %v4735 = vpop.permute.xlu0 %4734
      %4736 = vrot.lane.b32.xlu0 %v4693, 11
      %v4737 = vpop.permute.xlu0 %4736
      %4738 = vrot.lane.b32.xlu0 %v4697, 11
      %v4739 = vpop.permute.xlu0 %4738
      %4740 = vrot.lane.b32.xlu0 %v4701, 11
      %v4741 = vpop.permute.xlu0 %4740
      %4742 = vrot.lane.b32.xlu0 %v4705, 11
      %v4743 = vpop.permute.xlu0 %4742
      %4744 = vrot.lane.b32.xlu0 %v4709, 11
      %v4745 = vpop.permute.xlu0 %4744
      %4746 = vrot.lane.b32.xlu0 %v4713, 11
      %v4747 = vpop.permute.xlu0 %4746
      %4748 = vrot.lane.b32.xlu0 %v4717, 11
      %v4749 = vpop.permute.xlu0 %4748
      %vm4750 = vcmask 89088
      %v4751 = vsel %vm4750, %v4719, %v4721
      %v4752 = vsel %vm4750, %v4723, %v4725
      %v4753 = vsel %vm4750, %v4727, %v4729
      %v4754 = vsel %vm4750, %v4731, %v4733
      %v4755 = vsel %vm4750, %v4735, %v4737
      %v4756 = vsel %vm4750, %v4739, %v4741
      %v4757 = vsel %vm4750, %v4743, %v4745
      %v4758 = vsel %vm4750, %v4747, %v4749
      %4767 = vst.msk [vmem:[%s192 + $0x7] sm:$0x1] %vm4149, %v4751
      %4768 = vst.msk [vmem:[%s192 + $0x2f] sm:$0x1] %vm4149, %v4752
      %4769 = vst.msk [vmem:[%s192 + $0x57] sm:$0x1] %vm4149, %v4753
      %4770 = vst.msk [vmem:[%s192 + $0x7f] sm:$0x1] %vm4149, %v4754
      %4771 = vst.msk [vmem:[%s192 + $0xa7] sm:$0x1] %vm4149, %v4755
      %4772 = vst.msk [vmem:[%s192 + $0xcf] sm:$0x1] %vm4149, %v4756
      %4773 = vst.msk [vmem:[%s192 + $0xf7] sm:$0x1] %vm4149, %v4757
      %4774 = vst.msk [vmem:[%s192 + $0x11f] sm:$0x1] %vm4149, %v4758
      %v4775 = vcombine.high %v4083, %v4083
      %v4777 = vunpack.c.l.s4 1966171168
      %v4778 = vunpack.c.0.s8 %v4777
      %v4779 = vlaneseq
      %v4780 = vshrl.u32 %v4779, 7
      %v4781 = vsub.s32 %v4778, %v4780
      %v4782 = vrot.slane %v4083, %v4781
      %v4784 = vunpack.c.l.s4 1966171168
      %v4785 = vunpack.c.0.s8 %v4784
      %v4786 = vlaneseq
      %v4787 = vshrl.u32 %v4786, 7
      %v4788 = vsub.s32 %v4785, %v4787
      %v4789 = vrot.slane %v4775, %v4788
      %v4790 = vcombine.high %v4782, %v4782
      %v4791 = vcombine.high %v4789, %v4789
      %v4793 = vunpack.c.l.s4 1966171168
      %v4794 = vunpack.c.0.s8 %v4793
      %v4795 = vlaneseq
      %v4796 = vshrl.u32 %v4795, 7
      %v4797 = vsub.s32 %v4794, %v4796
      %v4798 = vrot.slane %v4782, %v4797
      %v4800 = vunpack.c.l.s4 1966171168
      %v4801 = vunpack.c.0.s8 %v4800
      %v4802 = vlaneseq
      %v4803 = vshrl.u32 %v4802, 7
      %v4804 = vsub.s32 %v4801, %v4803
      %v4805 = vrot.slane %v4789, %v4804
      %v4807 = vunpack.c.l.s4 1966171168
      %v4808 = vunpack.c.0.s8 %v4807
      %v4809 = vlaneseq
      %v4810 = vshrl.u32 %v4809, 7
      %v4811 = vsub.s32 %v4808, %v4810
      %v4812 = vrot.slane %v4790, %v4811
      %v4814 = vunpack.c.l.s4 1966171168
      %v4815 = vunpack.c.0.s8 %v4814
      %v4816 = vlaneseq
      %v4817 = vshrl.u32 %v4816, 7
      %v4818 = vsub.s32 %v4815, %v4817
      %v4819 = vrot.slane %v4791, %v4818
      %v4820 = vcombine.high %v4798, %v4798
      %v4821 = vcombine.high %v4805, %v4805
      %v4822 = vcombine.high %v4812, %v4812
      %v4823 = vcombine.high %v4819, %v4819
      %v4824 = vlaneseq
      %v4825 = vshrl.u32 %v4824, 7
      %v4826 = vsub.s32 0, %v4825
      %v4827 = vrot.slane %v4798, %v4826
      %v4828 = vlaneseq
      %v4829 = vshrl.u32 %v4828, 7
      %v4830 = vsub.s32 0, %v4829
      %v4831 = vrot.slane %v4812, %v4830
      %v4832 = vlaneseq
      %v4833 = vshrl.u32 %v4832, 7
      %v4834 = vsub.s32 0, %v4833
      %v4835 = vrot.slane %v4820, %v4834
      %v4836 = vlaneseq
      %v4837 = vshrl.u32 %v4836, 7
      %v4838 = vsub.s32 0, %v4837
      %v4839 = vrot.slane %v4822, %v4838
      %v4840 = vlaneseq
      %v4841 = vshrl.u32 %v4840, 7
      %v4842 = vsub.s32 0, %v4841
      %v4843 = vrot.slane %v4805, %v4842
      %v4844 = vlaneseq
      %v4845 = vshrl.u32 %v4844, 7
      %v4846 = vsub.s32 0, %v4845
      %v4847 = vrot.slane %v4819, %v4846
      %v4848 = vlaneseq
      %v4849 = vshrl.u32 %v4848, 7
      %v4850 = vsub.s32 0, %v4849
      %v4851 = vrot.slane %v4821, %v4850
      %v4852 = vlaneseq
      %v4853 = vshrl.u32 %v4852, 7
      %v4854 = vsub.s32 0, %v4853
      %v4855 = vrot.slane %v4823, %v4854
      %4856 = vrot.lane.b32.xlu0 %v4827, 104
      %v4857 = vpop.permute.xlu0 %4856
      %4858 = vrot.lane.b32.xlu0 %v4831, 104
      %v4859 = vpop.permute.xlu0 %4858
      %4860 = vrot.lane.b32.xlu0 %v4835, 104
      %v4861 = vpop.permute.xlu0 %4860
      %4862 = vrot.lane.b32.xlu0 %v4839, 104
      %v4863 = vpop.permute.xlu0 %4862
      %4864 = vrot.lane.b32.xlu0 %v4843, 104
      %v4865 = vpop.permute.xlu0 %4864
      %4866 = vrot.lane.b32.xlu0 %v4847, 104
      %v4867 = vpop.permute.xlu0 %4866
      %4868 = vrot.lane.b32.xlu0 %v4851, 104
      %v4869 = vpop.permute.xlu0 %4868
      %4870 = vrot.lane.b32.xlu0 %v4855, 104
      %v4871 = vpop.permute.xlu0 %4870
      %4880 = vst.msk [vmem:[%s192 + $0x8] sm:$0x1] %vm4149, %v4857
      %4881 = vst.msk [vmem:[%s192 + $0x30] sm:$0x1] %vm4149, %v4859
      %4882 = vst.msk [vmem:[%s192 + $0x58] sm:$0x1] %vm4149, %v4861
      %4883 = vst.msk [vmem:[%s192 + $0x80] sm:$0x1] %vm4149, %v4863
      %4884 = vst.msk [vmem:[%s192 + $0xa8] sm:$0x1] %vm4149, %v4865
      %4885 = vst.msk [vmem:[%s192 + $0xd0] sm:$0x1] %vm4149, %v4867
      %4886 = vst.msk [vmem:[%s192 + $0xf8] sm:$0x1] %vm4149, %v4869
      %4887 = vst.msk [vmem:[%s192 + $0x120] sm:$0x1] %vm4149, %v4871
      %4888 = vrot.lane.b32.xlu0 %v4827, 69
      %v4889 = vpop.permute.xlu0 %4888
      %4890 = vrot.lane.b32.xlu0 %v4831, 69
      %v4891 = vpop.permute.xlu0 %4890
      %4892 = vrot.lane.b32.xlu0 %v4835, 69
      %v4893 = vpop.permute.xlu0 %4892
      %4894 = vrot.lane.b32.xlu0 %v4839, 69
      %v4895 = vpop.permute.xlu0 %4894
      %4896 = vrot.lane.b32.xlu0 %v4843, 69
      %v4897 = vpop.permute.xlu0 %4896
      %4898 = vrot.lane.b32.xlu0 %v4847, 69
      %v4899 = vpop.permute.xlu0 %4898
      %4900 = vrot.lane.b32.xlu0 %v4851, 69
      %v4901 = vpop.permute.xlu0 %4900
      %4902 = vrot.lane.b32.xlu0 %v4855, 69
      %v4903 = vpop.permute.xlu0 %4902
      %4912 = vst.msk [vmem:[%s192 + $0x9] sm:$0x1] %vm4149, %v4889
      %4913 = vst.msk [vmem:[%s192 + $0x31] sm:$0x1] %vm4149, %v4891
      %4914 = vst.msk [vmem:[%s192 + $0x59] sm:$0x1] %vm4149, %v4893
      %4915 = vst.msk [vmem:[%s192 + $0x81] sm:$0x1] %vm4149, %v4895
      %4916 = vst.msk [vmem:[%s192 + $0xa9] sm:$0x1] %vm4149, %v4897
      %4917 = vst.msk [vmem:[%s192 + $0xd1] sm:$0x1] %vm4149, %v4899
      %4918 = vst.msk [vmem:[%s192 + $0xf9] sm:$0x1] %vm4149, %v4901
      %4919 = vst.msk [vmem:[%s192 + $0x121] sm:$0x1] %vm4149, %v4903
      %4920 = vrot.lane.b32.xlu0 %v4827, 34
      %v4921 = vpop.permute.xlu0 %4920
      %4922 = vrot.lane.b32.xlu0 %v4831, 34
      %v4923 = vpop.permute.xlu0 %4922
      %4924 = vrot.lane.b32.xlu0 %v4835, 34
      %v4925 = vpop.permute.xlu0 %4924
      %4926 = vrot.lane.b32.xlu0 %v4839, 34
      %v4927 = vpop.permute.xlu0 %4926
      %4928 = vrot.lane.b32.xlu0 %v4843, 34
      %v4929 = vpop.permute.xlu0 %4928
      %4930 = vrot.lane.b32.xlu0 %v4847, 34
      %v4931 = vpop.permute.xlu0 %4930
      %4932 = vrot.lane.b32.xlu0 %v4851, 34
      %v4933 = vpop.permute.xlu0 %4932
      %4934 = vrot.lane.b32.xlu0 %v4855, 34
      %v4935 = vpop.permute.xlu0 %4934
      %4944 = vst.msk [vmem:[%s192 + $0xa] sm:$0x1] %vm4149, %v4921
      %4945 = vst.msk [vmem:[%s192 + $0x32] sm:$0x1] %vm4149, %v4923
      %4946 = vst.msk [vmem:[%s192 + $0x5a] sm:$0x1] %vm4149, %v4925
      %4947 = vst.msk [vmem:[%s192 + $0x82] sm:$0x1] %vm4149, %v4927
      %4948 = vst.msk [vmem:[%s192 + $0xaa] sm:$0x1] %vm4149, %v4929
      %4949 = vst.msk [vmem:[%s192 + $0xd2] sm:$0x1] %vm4149, %v4931
      %4950 = vst.msk [vmem:[%s192 + $0xfa] sm:$0x1] %vm4149, %v4933
      %4951 = vst.msk [vmem:[%s192 + $0x122] sm:$0x1] %vm4149, %v4935
      %v4953 = vcombine.high %v4084, %v4084
      %v4955 = vunpack.c.l.s4 1966171168
      %v4956 = vunpack.c.0.s8 %v4955
      %v4957 = vlaneseq
      %v4958 = vshrl.u32 %v4957, 7
      %v4959 = vsub.s32 %v4956, %v4958
      %v4960 = vrot.slane %v4084, %v4959
      %v4962 = vunpack.c.l.s4 1966171168
      %v4963 = vunpack.c.0.s8 %v4962
      %v4964 = vlaneseq
      %v4965 = vshrl.u32 %v4964, 7
      %v4966 = vsub.s32 %v4963, %v4965
      %v4967 = vrot.slane %v4953, %v4966
      %v4968 = vcombine.high %v4960, %v4960
      %v4969 = vcombine.high %v4967, %v4967
      %v4971 = vunpack.c.l.s4 1966171168
      %v4972 = vunpack.c.0.s8 %v4971
      %v4973 = vlaneseq
      %v4974 = vshrl.u32 %v4973, 7
      %v4975 = vsub.s32 %v4972, %v4974
      %v4976 = vrot.slane %v4960, %v4975
      %v4978 = vunpack.c.l.s4 1966171168
      %v4979 = vunpack.c.0.s8 %v4978
      %v4980 = vlaneseq
      %v4981 = vshrl.u32 %v4980, 7
      %v4982 = vsub.s32 %v4979, %v4981
      %v4983 = vrot.slane %v4967, %v4982
      %v4985 = vunpack.c.l.s4 1966171168
      %v4986 = vunpack.c.0.s8 %v4985
      %v4987 = vlaneseq
      %v4988 = vshrl.u32 %v4987, 7
      %v4989 = vsub.s32 %v4986, %v4988
      %v4990 = vrot.slane %v4968, %v4989
      %v4992 = vunpack.c.l.s4 1966171168
      %v4993 = vunpack.c.0.s8 %v4992
      %v4994 = vlaneseq
      %v4995 = vshrl.u32 %v4994, 7
      %v4996 = vsub.s32 %v4993, %v4995
      %v4997 = vrot.slane %v4969, %v4996
      %v4998 = vcombine.high %v4976, %v4976
      %v4999 = vcombine.high %v4983, %v4983
      %v5000 = vcombine.high %v4990, %v4990
      %v5001 = vcombine.high %v4997, %v4997
      %v5002 = vlaneseq
      %v5003 = vshrl.u32 %v5002, 7
      %v5004 = vsub.s32 0, %v5003
      %v5005 = vrot.slane %v4976, %v5004
      %v5006 = vlaneseq
      %v5007 = vshrl.u32 %v5006, 7
      %v5008 = vsub.s32 0, %v5007
      %v5009 = vrot.slane %v4990, %v5008
      %v5010 = vlaneseq
      %v5011 = vshrl.u32 %v5010, 7
      %v5012 = vsub.s32 0, %v5011
      %v5013 = vrot.slane %v4998, %v5012
      %v5014 = vlaneseq
      %v5015 = vshrl.u32 %v5014, 7
      %v5016 = vsub.s32 0, %v5015
      %v5017 = vrot.slane %v5000, %v5016
      %v5018 = vlaneseq
      %v5019 = vshrl.u32 %v5018, 7
      %v5020 = vsub.s32 0, %v5019
      %v5021 = vrot.slane %v4983, %v5020
      %v5022 = vlaneseq
      %v5023 = vshrl.u32 %v5022, 7
      %v5024 = vsub.s32 0, %v5023
      %v5025 = vrot.slane %v4997, %v5024
      %v5026 = vlaneseq
      %v5027 = vshrl.u32 %v5026, 7
      %v5028 = vsub.s32 0, %v5027
      %v5029 = vrot.slane %v4999, %v5028
      %v5030 = vlaneseq
      %v5031 = vshrl.u32 %v5030, 7
      %v5032 = vsub.s32 0, %v5031
      %v5033 = vrot.slane %v5001, %v5032
      %5034 = vrot.lane.b32.xlu0 %v5005, 127
      %v5035 = vpop.permute.xlu0 %5034
      %5036 = vrot.lane.b32.xlu0 %v5009, 127
      %v5037 = vpop.permute.xlu0 %5036
      %5038 = vrot.lane.b32.xlu0 %v5013, 127
      %v5039 = vpop.permute.xlu0 %5038
      %5040 = vrot.lane.b32.xlu0 %v5017, 127
      %v5041 = vpop.permute.xlu0 %5040
      %5042 = vrot.lane.b32.xlu0 %v5021, 127
      %v5043 = vpop.permute.xlu0 %5042
      %5044 = vrot.lane.b32.xlu0 %v5025, 127
      %v5045 = vpop.permute.xlu0 %5044
      %5046 = vrot.lane.b32.xlu0 %v5029, 127
      %v5047 = vpop.permute.xlu0 %5046
      %5048 = vrot.lane.b32.xlu0 %v5033, 127
      %v5049 = vpop.permute.xlu0 %5048
      %5058 = vst.msk [vmem:[%s192 + $0xb] sm:$0x1] %vm4149, %v5035
      %5059 = vst.msk [vmem:[%s192 + $0x33] sm:$0x1] %vm4149, %v5037
      %5060 = vst.msk [vmem:[%s192 + $0x5b] sm:$0x1] %vm4149, %v5039
      %5061 = vst.msk [vmem:[%s192 + $0x83] sm:$0x1] %vm4149, %v5041
      %5062 = vst.msk [vmem:[%s192 + $0xab] sm:$0x1] %vm4149, %v5043
      %5063 = vst.msk [vmem:[%s192 + $0xd3] sm:$0x1] %vm4149, %v5045
      %5064 = vst.msk [vmem:[%s192 + $0xfb] sm:$0x1] %vm4149, %v5047
      %5065 = vst.msk [vmem:[%s192 + $0x123] sm:$0x1] %vm4149, %v5049
      %5066 = vrot.lane.b32.xlu0 %v5005, 92
      %v5067 = vpop.permute.xlu0 %5066
      %5068 = vrot.lane.b32.xlu0 %v5009, 92
      %v5069 = vpop.permute.xlu0 %5068
      %5070 = vrot.lane.b32.xlu0 %v5013, 92
      %v5071 = vpop.permute.xlu0 %5070
      %5072 = vrot.lane.b32.xlu0 %v5017, 92
      %v5073 = vpop.permute.xlu0 %5072
      %5074 = vrot.lane.b32.xlu0 %v5021, 92
      %v5075 = vpop.permute.xlu0 %5074
      %5076 = vrot.lane.b32.xlu0 %v5025, 92
      %v5077 = vpop.permute.xlu0 %5076
      %5078 = vrot.lane.b32.xlu0 %v5029, 92
      %v5079 = vpop.permute.xlu0 %5078
      %5080 = vrot.lane.b32.xlu0 %v5033, 92
      %v5081 = vpop.permute.xlu0 %5080
      %5090 = vst.msk [vmem:[%s192 + $0xc] sm:$0x1] %vm4149, %v5067
      %5091 = vst.msk [vmem:[%s192 + $0x34] sm:$0x1] %vm4149, %v5069
      %5092 = vst.msk [vmem:[%s192 + $0x5c] sm:$0x1] %vm4149, %v5071
      %5093 = vst.msk [vmem:[%s192 + $0x84] sm:$0x1] %vm4149, %v5073
      %5094 = vst.msk [vmem:[%s192 + $0xac] sm:$0x1] %vm4149, %v5075
      %5095 = vst.msk [vmem:[%s192 + $0xd4] sm:$0x1] %vm4149, %v5077
      %5096 = vst.msk [vmem:[%s192 + $0xfc] sm:$0x1] %vm4149, %v5079
      %5097 = vst.msk [vmem:[%s192 + $0x124] sm:$0x1] %vm4149, %v5081
      %5098 = vrot.lane.b32.xlu0 %v5005, 57
      %v5099 = vpop.permute.xlu0 %5098
      %5100 = vrot.lane.b32.xlu0 %v5009, 57
      %v5101 = vpop.permute.xlu0 %5100
      %5102 = vrot.lane.b32.xlu0 %v5013, 57
      %v5103 = vpop.permute.xlu0 %5102
      %5104 = vrot.lane.b32.xlu0 %v5017, 57
      %v5105 = vpop.permute.xlu0 %5104
      %5106 = vrot.lane.b32.xlu0 %v5021, 57
      %v5107 = vpop.permute.xlu0 %5106
      %5108 = vrot.lane.b32.xlu0 %v5025, 57
      %v5109 = vpop.permute.xlu0 %5108
      %5110 = vrot.lane.b32.xlu0 %v5029, 57
      %v5111 = vpop.permute.xlu0 %5110
      %5112 = vrot.lane.b32.xlu0 %v5033, 57
      %v5113 = vpop.permute.xlu0 %5112
      %5122 = vst.msk [vmem:[%s192 + $0xd] sm:$0x1] %vm4149, %v5099
      %5123 = vst.msk [vmem:[%s192 + $0x35] sm:$0x1] %vm4149, %v5101
      %5124 = vst.msk [vmem:[%s192 + $0x5d] sm:$0x1] %vm4149, %v5103
      %5125 = vst.msk [vmem:[%s192 + $0x85] sm:$0x1] %vm4149, %v5105
      %5126 = vst.msk [vmem:[%s192 + $0xad] sm:$0x1] %vm4149, %v5107
      %5127 = vst.msk [vmem:[%s192 + $0xd5] sm:$0x1] %vm4149, %v5109
      %5128 = vst.msk [vmem:[%s192 + $0xfd] sm:$0x1] %vm4149, %v5111
      %5129 = vst.msk [vmem:[%s192 + $0x125] sm:$0x1] %vm4149, %v5113
      %v5131 = vcombine.low %v4084, %v4085
      %v5132 = vcombine.high %v4084, %v4085
      %v5134 = vunpack.c.l.s4 1966171168
      %v5135 = vunpack.c.0.s8 %v5134
      %v5136 = vlaneseq
      %v5137 = vshrl.u32 %v5136, 7
      %v5138 = vsub.s32 %v5135, %v5137
      %v5139 = vrot.slane %v5131, %v5138
      %v5141 = vunpack.c.l.s4 1966171168
      %v5142 = vunpack.c.0.s8 %v5141
      %v5143 = vlaneseq
      %v5144 = vshrl.u32 %v5143, 7
      %v5145 = vsub.s32 %v5142, %v5144
      %v5146 = vrot.slane %v5132, %v5145
      %v5147 = vcombine.high %v5139, %v5139
      %v5148 = vcombine.high %v5146, %v5146
      %v5150 = vunpack.c.l.s4 1966171168
      %v5151 = vunpack.c.0.s8 %v5150
      %v5152 = vlaneseq
      %v5153 = vshrl.u32 %v5152, 7
      %v5154 = vsub.s32 %v5151, %v5153
      %v5155 = vrot.slane %v5139, %v5154
      %v5157 = vunpack.c.l.s4 1966171168
      %v5158 = vunpack.c.0.s8 %v5157
      %v5159 = vlaneseq
      %v5160 = vshrl.u32 %v5159, 7
      %v5161 = vsub.s32 %v5158, %v5160
      %v5162 = vrot.slane %v5146, %v5161
      %v5164 = vunpack.c.l.s4 1966171168
      %v5165 = vunpack.c.0.s8 %v5164
      %v5166 = vlaneseq
      %v5167 = vshrl.u32 %v5166, 7
      %v5168 = vsub.s32 %v5165, %v5167
      %v5169 = vrot.slane %v5147, %v5168
      %v5171 = vunpack.c.l.s4 1966171168
      %v5172 = vunpack.c.0.s8 %v5171
      %v5173 = vlaneseq
      %v5174 = vshrl.u32 %v5173, 7
      %v5175 = vsub.s32 %v5172, %v5174
      %v5176 = vrot.slane %v5148, %v5175
      %v5177 = vcombine.high %v5155, %v5155
      %v5178 = vcombine.high %v5162, %v5162
      %v5179 = vcombine.high %v5169, %v5169
      %v5180 = vcombine.high %v5176, %v5176
      %v5181 = vlaneseq
      %v5182 = vshrl.u32 %v5181, 7
      %v5183 = vsub.s32 0, %v5182
      %v5184 = vrot.slane %v5155, %v5183
      %v5185 = vlaneseq
      %v5186 = vshrl.u32 %v5185, 7
      %v5187 = vsub.s32 1, %v5186
      %v5188 = vrot.slane %v5155, %v5187
      %v5189 = vlaneseq
      %v5190 = vshrl.u32 %v5189, 7
      %v5191 = vsub.s32 0, %v5190
      %v5192 = vrot.slane %v5169, %v5191
      %v5193 = vlaneseq
      %v5194 = vshrl.u32 %v5193, 7
      %v5195 = vsub.s32 1, %v5194
      %v5196 = vrot.slane %v5169, %v5195
      %v5197 = vlaneseq
      %v5198 = vshrl.u32 %v5197, 7
      %v5199 = vsub.s32 0, %v5198
      %v5200 = vrot.slane %v5177, %v5199
      %v5201 = vlaneseq
      %v5202 = vshrl.u32 %v5201, 7
      %v5203 = vsub.s32 1, %v5202
      %v5204 = vrot.slane %v5177, %v5203
      %v5205 = vlaneseq
      %v5206 = vshrl.u32 %v5205, 7
      %v5207 = vsub.s32 0, %v5206
      %v5208 = vrot.slane %v5179, %v5207
      %v5209 = vlaneseq
      %v5210 = vshrl.u32 %v5209, 7
      %v5211 = vsub.s32 1, %v5210
      %v5212 = vrot.slane %v5179, %v5211
      %v5213 = vlaneseq
      %v5214 = vshrl.u32 %v5213, 7
      %v5215 = vsub.s32 0, %v5214
      %v5216 = vrot.slane %v5162, %v5215
      %v5217 = vlaneseq
      %v5218 = vshrl.u32 %v5217, 7
      %v5219 = vsub.s32 1, %v5218
      %v5220 = vrot.slane %v5162, %v5219
      %v5221 = vlaneseq
      %v5222 = vshrl.u32 %v5221, 7
      %v5223 = vsub.s32 0, %v5222
      %v5224 = vrot.slane %v5176, %v5223
      %v5225 = vlaneseq
      %v5226 = vshrl.u32 %v5225, 7
      %v5227 = vsub.s32 1, %v5226
      %v5228 = vrot.slane %v5176, %v5227
      %v5229 = vlaneseq
      %v5230 = vshrl.u32 %v5229, 7
      %v5231 = vsub.s32 0, %v5230
      %v5232 = vrot.slane %v5178, %v5231
      %v5233 = vlaneseq
      %v5234 = vshrl.u32 %v5233, 7
      %v5235 = vsub.s32 1, %v5234
      %v5236 = vrot.slane %v5178, %v5235
      %v5237 = vlaneseq
      %v5238 = vshrl.u32 %v5237, 7
      %v5239 = vsub.s32 0, %v5238
      %v5240 = vrot.slane %v5180, %v5239
      %v5241 = vlaneseq
      %v5242 = vshrl.u32 %v5241, 7
      %v5243 = vsub.s32 1, %v5242
      %v5244 = vrot.slane %v5180, %v5243
      %5245 = vrot.lane.b32.xlu0 %v5184, 22
      %v5246 = vpop.permute.xlu0 %5245
      %5247 = vrot.lane.b32.xlu0 %v5188, 22
      %v5248 = vpop.permute.xlu0 %5247
      %5249 = vrot.lane.b32.xlu0 %v5192, 22
      %v5250 = vpop.permute.xlu0 %5249
      %5251 = vrot.lane.b32.xlu0 %v5196, 22
      %v5252 = vpop.permute.xlu0 %5251
      %5253 = vrot.lane.b32.xlu0 %v5200, 22
      %v5254 = vpop.permute.xlu0 %5253
      %5255 = vrot.lane.b32.xlu0 %v5204, 22
      %v5256 = vpop.permute.xlu0 %5255
      %5257 = vrot.lane.b32.xlu0 %v5208, 22
      %v5258 = vpop.permute.xlu0 %5257
      %5259 = vrot.lane.b32.xlu0 %v5212, 22
      %v5260 = vpop.permute.xlu0 %5259
      %5261 = vrot.lane.b32.xlu0 %v5216, 22
      %v5262 = vpop.permute.xlu0 %5261
      %5263 = vrot.lane.b32.xlu0 %v5220, 22
      %v5264 = vpop.permute.xlu0 %5263
      %5265 = vrot.lane.b32.xlu0 %v5224, 22
      %v5266 = vpop.permute.xlu0 %5265
      %5267 = vrot.lane.b32.xlu0 %v5228, 22
      %v5268 = vpop.permute.xlu0 %5267
      %5269 = vrot.lane.b32.xlu0 %v5232, 22
      %v5270 = vpop.permute.xlu0 %5269
      %5271 = vrot.lane.b32.xlu0 %v5236, 22
      %v5272 = vpop.permute.xlu0 %5271
      %5273 = vrot.lane.b32.xlu0 %v5240, 22
      %v5274 = vpop.permute.xlu0 %5273
      %5275 = vrot.lane.b32.xlu0 %v5244, 22
      %v5276 = vpop.permute.xlu0 %5275
      %vm5277 = vcmask 179200
      %v5278 = vsel %vm5277, %v5246, %v5248
      %v5279 = vsel %vm5277, %v5250, %v5252
      %v5280 = vsel %vm5277, %v5254, %v5256
      %v5281 = vsel %vm5277, %v5258, %v5260
      %v5282 = vsel %vm5277, %v5262, %v5264
      %v5283 = vsel %vm5277, %v5266, %v5268
      %v5284 = vsel %vm5277, %v5270, %v5272
      %v5285 = vsel %vm5277, %v5274, %v5276
      %5294 = vst.msk [vmem:[%s192 + $0xe] sm:$0x1] %vm4149, %v5278
      %5295 = vst.msk [vmem:[%s192 + $0x36] sm:$0x1] %vm4149, %v5279
      %5296 = vst.msk [vmem:[%s192 + $0x5e] sm:$0x1] %vm4149, %v5280
      %5297 = vst.msk [vmem:[%s192 + $0x86] sm:$0x1] %vm4149, %v5281
      %5298 = vst.msk [vmem:[%s192 + $0xae] sm:$0x1] %vm4149, %v5282
      %5299 = vst.msk [vmem:[%s192 + $0xd6] sm:$0x1] %vm4149, %v5283
      %5300 = vst.msk [vmem:[%s192 + $0xfe] sm:$0x1] %vm4149, %v5284
      %5301 = vst.msk [vmem:[%s192 + $0x126] sm:$0x1] %vm4149, %v5285
      %v5302 = vcombine.high %v4085, %v4085
      %v5304 = vunpack.c.l.s4 1966171168
      %v5305 = vunpack.c.0.s8 %v5304
      %v5306 = vlaneseq
      %v5307 = vshrl.u32 %v5306, 7
      %v5308 = vsub.s32 %v5305, %v5307
      %v5309 = vrot.slane %v4085, %v5308
      %v5311 = vunpack.c.l.s4 1966171168
      %v5312 = vunpack.c.0.s8 %v5311
      %v5313 = vlaneseq
      %v5314 = vshrl.u32 %v5313, 7
      %v5315 = vsub.s32 %v5312, %v5314
      %v5316 = vrot.slane %v5302, %v5315
      %v5317 = vcombine.high %v5309, %v5309
      %v5318 = vcombine.high %v5316, %v5316
      %v5320 = vunpack.c.l.s4 1966171168
      %v5321 = vunpack.c.0.s8 %v5320
      %v5322 = vlaneseq
      %v5323 = vshrl.u32 %v5322, 7
      %v5324 = vsub.s32 %v5321, %v5323
      %v5325 = vrot.slane %v5309, %v5324
      %v5327 = vunpack.c.l.s4 1966171168
      %v5328 = vunpack.c.0.s8 %v5327
      %v5329 = vlaneseq
      %v5330 = vshrl.u32 %v5329, 7
      %v5331 = vsub.s32 %v5328, %v5330
      %v5332 = vrot.slane %v5316, %v5331
      %v5334 = vunpack.c.l.s4 1966171168
      %v5335 = vunpack.c.0.s8 %v5334
      %v5336 = vlaneseq
      %v5337 = vshrl.u32 %v5336, 7
      %v5338 = vsub.s32 %v5335, %v5337
      %v5339 = vrot.slane %v5317, %v5338
      %v5341 = vunpack.c.l.s4 1966171168
      %v5342 = vunpack.c.0.s8 %v5341
      %v5343 = vlaneseq
      %v5344 = vshrl.u32 %v5343, 7
      %v5345 = vsub.s32 %v5342, %v5344
      %v5346 = vrot.slane %v5318, %v5345
      %v5347 = vcombine.high %v5325, %v5325
      %v5348 = vcombine.high %v5332, %v5332
      %v5349 = vcombine.high %v5339, %v5339
      %v5350 = vcombine.high %v5346, %v5346
      %v5351 = vlaneseq
      %v5352 = vshrl.u32 %v5351, 7
      %v5353 = vsub.s32 0, %v5352
      %v5354 = vrot.slane %v5325, %v5353
      %v5355 = vlaneseq
      %v5356 = vshrl.u32 %v5355, 7
      %v5357 = vsub.s32 0, %v5356
      %v5358 = vrot.slane %v5339, %v5357
      %v5359 = vlaneseq
      %v5360 = vshrl.u32 %v5359, 7
      %v5361 = vsub.s32 0, %v5360
      %v5362 = vrot.slane %v5347, %v5361
      %v5363 = vlaneseq
      %v5364 = vshrl.u32 %v5363, 7
      %v5365 = vsub.s32 0, %v5364
      %v5366 = vrot.slane %v5349, %v5365
      %v5367 = vlaneseq
      %v5368 = vshrl.u32 %v5367, 7
      %v5369 = vsub.s32 0, %v5368
      %v5370 = vrot.slane %v5332, %v5369
      %v5371 = vlaneseq
      %v5372 = vshrl.u32 %v5371, 7
      %v5373 = vsub.s32 0, %v5372
      %v5374 = vrot.slane %v5346, %v5373
      %v5375 = vlaneseq
      %v5376 = vshrl.u32 %v5375, 7
      %v5377 = vsub.s32 0, %v5376
      %v5378 = vrot.slane %v5348, %v5377
      %v5379 = vlaneseq
      %v5380 = vshrl.u32 %v5379, 7
      %v5381 = vsub.s32 0, %v5380
      %v5382 = vrot.slane %v5350, %v5381
      %5383 = vrot.lane.b32.xlu0 %v5354, 115
      %v5384 = vpop.permute.xlu0 %5383
      %5385 = vrot.lane.b32.xlu0 %v5358, 115
      %v5386 = vpop.permute.xlu0 %5385
      %5387 = vrot.lane.b32.xlu0 %v5362, 115
      %v5388 = vpop.permute.xlu0 %5387
      %5389 = vrot.lane.b32.xlu0 %v5366, 115
      %v5390 = vpop.permute.xlu0 %5389
      %5391 = vrot.lane.b32.xlu0 %v5370, 115
      %v5392 = vpop.permute.xlu0 %5391
      %5393 = vrot.lane.b32.xlu0 %v5374, 115
      %v5394 = vpop.permute.xlu0 %5393
      %5395 = vrot.lane.b32.xlu0 %v5378, 115
      %v5396 = vpop.permute.xlu0 %5395
      %5397 = vrot.lane.b32.xlu0 %v5382, 115
      %v5398 = vpop.permute.xlu0 %5397
      %5407 = vst.msk [vmem:[%s192 + $0xf] sm:$0x1] %vm4149, %v5384
      %5408 = vst.msk [vmem:[%s192 + $0x37] sm:$0x1] %vm4149, %v5386
      %5409 = vst.msk [vmem:[%s192 + $0x5f] sm:$0x1] %vm4149, %v5388
      %5410 = vst.msk [vmem:[%s192 + $0x87] sm:$0x1] %vm4149, %v5390
      %5411 = vst.msk [vmem:[%s192 + $0xaf] sm:$0x1] %vm4149, %v5392
      %5412 = vst.msk [vmem:[%s192 + $0xd7] sm:$0x1] %vm4149, %v5394
      %5413 = vst.msk [vmem:[%s192 + $0xff] sm:$0x1] %vm4149, %v5396
      %5414 = vst.msk [vmem:[%s192 + $0x127] sm:$0x1] %vm4149, %v5398
      %5415 = vrot.lane.b32.xlu0 %v5354, 80
      %v5416 = vpop.permute.xlu0 %5415
      %5417 = vrot.lane.b32.xlu0 %v5358, 80
      %v5418 = vpop.permute.xlu0 %5417
      %5419 = vrot.lane.b32.xlu0 %v5362, 80
      %v5420 = vpop.permute.xlu0 %5419
      %5421 = vrot.lane.b32.xlu0 %v5366, 80
      %v5422 = vpop.permute.xlu0 %5421
      %5423 = vrot.lane.b32.xlu0 %v5370, 80
      %v5424 = vpop.permute.xlu0 %5423
      %5425 = vrot.lane.b32.xlu0 %v5374, 80
      %v5426 = vpop.permute.xlu0 %5425
      %5427 = vrot.lane.b32.xlu0 %v5378, 80
      %v5428 = vpop.permute.xlu0 %5427
      %5429 = vrot.lane.b32.xlu0 %v5382, 80
      %v5430 = vpop.permute.xlu0 %5429
      %5439 = vst.msk [vmem:[%s192 + $0x10] sm:$0x1] %vm4149, %v5416
      %5440 = vst.msk [vmem:[%s192 + $0x38] sm:$0x1] %vm4149, %v5418
      %5441 = vst.msk [vmem:[%s192 + $0x60] sm:$0x1] %vm4149, %v5420
      %5442 = vst.msk [vmem:[%s192 + $0x88] sm:$0x1] %vm4149, %v5422
      %5443 = vst.msk [vmem:[%s192 + $0xb0] sm:$0x1] %vm4149, %v5424
      %5444 = vst.msk [vmem:[%s192 + $0xd8] sm:$0x1] %vm4149, %v5426
      %5445 = vst.msk [vmem:[%s192 + $0x100] sm:$0x1] %vm4149, %v5428
      %5446 = vst.msk [vmem:[%s192 + $0x128] sm:$0x1] %vm4149, %v5430
      %5447 = vrot.lane.b32.xlu0 %v5354, 45
      %v5448 = vpop.permute.xlu0 %5447
      %5449 = vrot.lane.b32.xlu0 %v5358, 45
      %v5450 = vpop.permute.xlu0 %5449
      %5451 = vrot.lane.b32.xlu0 %v5362, 45
      %v5452 = vpop.permute.xlu0 %5451
      %5453 = vrot.lane.b32.xlu0 %v5366, 45
      %v5454 = vpop.permute.xlu0 %5453
      %5455 = vrot.lane.b32.xlu0 %v5370, 45
      %v5456 = vpop.permute.xlu0 %5455
      %5457 = vrot.lane.b32.xlu0 %v5374, 45
      %v5458 = vpop.permute.xlu0 %5457
      %5459 = vrot.lane.b32.xlu0 %v5378, 45
      %v5460 = vpop.permute.xlu0 %5459
      %5461 = vrot.lane.b32.xlu0 %v5382, 45
      %v5462 = vpop.permute.xlu0 %5461
      %5471 = vst.msk [vmem:[%s192 + $0x11] sm:$0x1] %vm4149, %v5448
      %5472 = vst.msk [vmem:[%s192 + $0x39] sm:$0x1] %vm4149, %v5450
      %5473 = vst.msk [vmem:[%s192 + $0x61] sm:$0x1] %vm4149, %v5452
      %5474 = vst.msk [vmem:[%s192 + $0x89] sm:$0x1] %vm4149, %v5454
      %5475 = vst.msk [vmem:[%s192 + $0xb1] sm:$0x1] %vm4149, %v5456
      %5476 = vst.msk [vmem:[%s192 + $0xd9] sm:$0x1] %vm4149, %v5458
      %5477 = vst.msk [vmem:[%s192 + $0x101] sm:$0x1] %vm4149, %v5460
      %5478 = vst.msk [vmem:[%s192 + $0x129] sm:$0x1] %vm4149, %v5462
      %v5480 = vcombine.low %v4085, %v4086
      %v5481 = vcombine.high %v4085, %v4086
      %v5483 = vunpack.c.l.s4 1966171168
      %v5484 = vunpack.c.0.s8 %v5483
      %v5485 = vlaneseq
      %v5486 = vshrl.u32 %v5485, 7
      %v5487 = vsub.s32 %v5484, %v5486
      %v5488 = vrot.slane %v5480, %v5487
      %v5490 = vunpack.c.l.s4 1966171168
      %v5491 = vunpack.c.0.s8 %v5490
      %v5492 = vlaneseq
      %v5493 = vshrl.u32 %v5492, 7
      %v5494 = vsub.s32 %v5491, %v5493
      %v5495 = vrot.slane %v5481, %v5494
      %v5496 = vcombine.high %v5488, %v5488
      %v5497 = vcombine.high %v5495, %v5495
      %v5499 = vunpack.c.l.s4 1966171168
      %v5500 = vunpack.c.0.s8 %v5499
      %v5501 = vlaneseq
      %v5502 = vshrl.u32 %v5501, 7
      %v5503 = vsub.s32 %v5500, %v5502
      %v5504 = vrot.slane %v5488, %v5503
      %v5506 = vunpack.c.l.s4 1966171168
      %v5507 = vunpack.c.0.s8 %v5506
      %v5508 = vlaneseq
      %v5509 = vshrl.u32 %v5508, 7
      %v5510 = vsub.s32 %v5507, %v5509
      %v5511 = vrot.slane %v5495, %v5510
      %v5513 = vunpack.c.l.s4 1966171168
      %v5514 = vunpack.c.0.s8 %v5513
      %v5515 = vlaneseq
      %v5516 = vshrl.u32 %v5515, 7
      %v5517 = vsub.s32 %v5514, %v5516
      %v5518 = vrot.slane %v5496, %v5517
      %v5520 = vunpack.c.l.s4 1966171168
      %v5521 = vunpack.c.0.s8 %v5520
      %v5522 = vlaneseq
      %v5523 = vshrl.u32 %v5522, 7
      %v5524 = vsub.s32 %v5521, %v5523
      %v5525 = vrot.slane %v5497, %v5524
      %v5526 = vcombine.high %v5504, %v5504
      %v5527 = vcombine.high %v5511, %v5511
      %v5528 = vcombine.high %v5518, %v5518
      %v5529 = vcombine.high %v5525, %v5525
      %v5530 = vlaneseq
      %v5531 = vshrl.u32 %v5530, 7
      %v5532 = vsub.s32 0, %v5531
      %v5533 = vrot.slane %v5504, %v5532
      %v5534 = vlaneseq
      %v5535 = vshrl.u32 %v5534, 7
      %v5536 = vsub.s32 1, %v5535
      %v5537 = vrot.slane %v5504, %v5536
      %v5538 = vlaneseq
      %v5539 = vshrl.u32 %v5538, 7
      %v5540 = vsub.s32 0, %v5539
      %v5541 = vrot.slane %v5518, %v5540
      %v5542 = vlaneseq
      %v5543 = vshrl.u32 %v5542, 7
      %v5544 = vsub.s32 1, %v5543
      %v5545 = vrot.slane %v5518, %v5544
      %v5546 = vlaneseq
      %v5547 = vshrl.u32 %v5546, 7
      %v5548 = vsub.s32 0, %v5547
      %v5549 = vrot.slane %v5526, %v5548
      %v5550 = vlaneseq
      %v5551 = vshrl.u32 %v5550, 7
      %v5552 = vsub.s32 1, %v5551
      %v5553 = vrot.slane %v5526, %v5552
      %v5554 = vlaneseq
      %v5555 = vshrl.u32 %v5554, 7
      %v5556 = vsub.s32 0, %v5555
      %v5557 = vrot.slane %v5528, %v5556
      %v5558 = vlaneseq
      %v5559 = vshrl.u32 %v5558, 7
      %v5560 = vsub.s32 1, %v5559
      %v5561 = vrot.slane %v5528, %v5560
      %v5562 = vlaneseq
      %v5563 = vshrl.u32 %v5562, 7
      %v5564 = vsub.s32 0, %v5563
      %v5565 = vrot.slane %v5511, %v5564
      %v5566 = vlaneseq
      %v5567 = vshrl.u32 %v5566, 7
      %v5568 = vsub.s32 1, %v5567
      %v5569 = vrot.slane %v5511, %v5568
      %v5570 = vlaneseq
      %v5571 = vshrl.u32 %v5570, 7
      %v5572 = vsub.s32 0, %v5571
      %v5573 = vrot.slane %v5525, %v5572
      %v5574 = vlaneseq
      %v5575 = vshrl.u32 %v5574, 7
      %v5576 = vsub.s32 1, %v5575
      %v5577 = vrot.slane %v5525, %v5576
      %v5578 = vlaneseq
      %v5579 = vshrl.u32 %v5578, 7
      %v5580 = vsub.s32 0, %v5579
      %v5581 = vrot.slane %v5527, %v5580
      %v5582 = vlaneseq
      %v5583 = vshrl.u32 %v5582, 7
      %v5584 = vsub.s32 1, %v5583
      %v5585 = vrot.slane %v5527, %v5584
      %v5586 = vlaneseq
      %v5587 = vshrl.u32 %v5586, 7
      %v5588 = vsub.s32 0, %v5587
      %v5589 = vrot.slane %v5529, %v5588
      %v5590 = vlaneseq
      %v5591 = vshrl.u32 %v5590, 7
      %v5592 = vsub.s32 1, %v5591
      %v5593 = vrot.slane %v5529, %v5592
      %5594 = vrot.lane.b32.xlu0 %v5533, 10
      %v5595 = vpop.permute.xlu0 %5594
      %5596 = vrot.lane.b32.xlu0 %v5537, 10
      %v5597 = vpop.permute.xlu0 %5596
      %5598 = vrot.lane.b32.xlu0 %v5541, 10
      %v5599 = vpop.permute.xlu0 %5598
      %5600 = vrot.lane.b32.xlu0 %v5545, 10
      %v5601 = vpop.permute.xlu0 %5600
      %5602 = vrot.lane.b32.xlu0 %v5549, 10
      %v5603 = vpop.permute.xlu0 %5602
      %5604 = vrot.lane.b32.xlu0 %v5553, 10
      %v5605 = vpop.permute.xlu0 %5604
      %5606 = vrot.lane.b32.xlu0 %v5557, 10
      %v5607 = vpop.permute.xlu0 %5606
      %5608 = vrot.lane.b32.xlu0 %v5561, 10
      %v5609 = vpop.permute.xlu0 %5608
      %5610 = vrot.lane.b32.xlu0 %v5565, 10
      %v5611 = vpop.permute.xlu0 %5610
      %5612 = vrot.lane.b32.xlu0 %v5569, 10
      %v5613 = vpop.permute.xlu0 %5612
      %5614 = vrot.lane.b32.xlu0 %v5573, 10
      %v5615 = vpop.permute.xlu0 %5614
      %5616 = vrot.lane.b32.xlu0 %v5577, 10
      %v5617 = vpop.permute.xlu0 %5616
      %5618 = vrot.lane.b32.xlu0 %v5581, 10
      %v5619 = vpop.permute.xlu0 %5618
      %5620 = vrot.lane.b32.xlu0 %v5585, 10
      %v5621 = vpop.permute.xlu0 %5620
      %5622 = vrot.lane.b32.xlu0 %v5589, 10
      %v5623 = vpop.permute.xlu0 %5622
      %5624 = vrot.lane.b32.xlu0 %v5593, 10
      %v5625 = vpop.permute.xlu0 %5624
      %vm5626 = vcmask 80896
      %v5627 = vsel %vm5626, %v5595, %v5597
      %v5628 = vsel %vm5626, %v5599, %v5601
      %v5629 = vsel %vm5626, %v5603, %v5605
      %v5630 = vsel %vm5626, %v5607, %v5609
      %v5631 = vsel %vm5626, %v5611, %v5613
      %v5632 = vsel %vm5626, %v5615, %v5617
      %v5633 = vsel %vm5626, %v5619, %v5621
      %v5634 = vsel %vm5626, %v5623, %v5625
      %5643 = vst.msk [vmem:[%s192 + $0x12] sm:$0x1] %vm4149, %v5627
      %5644 = vst.msk [vmem:[%s192 + $0x3a] sm:$0x1] %vm4149, %v5628
      %5645 = vst.msk [vmem:[%s192 + $0x62] sm:$0x1] %vm4149, %v5629
      %5646 = vst.msk [vmem:[%s192 + $0x8a] sm:$0x1] %vm4149, %v5630
      %5647 = vst.msk [vmem:[%s192 + $0xb2] sm:$0x1] %vm4149, %v5631
      %5648 = vst.msk [vmem:[%s192 + $0xda] sm:$0x1] %vm4149, %v5632
      %5649 = vst.msk [vmem:[%s192 + $0x102] sm:$0x1] %vm4149, %v5633
      %5650 = vst.msk [vmem:[%s192 + $0x12a] sm:$0x1] %vm4149, %v5634
      %v5651 = vcombine.high %v4086, %v4086
      %v5653 = vunpack.c.l.s4 1966171168
      %v5654 = vunpack.c.0.s8 %v5653
      %v5655 = vlaneseq
      %v5656 = vshrl.u32 %v5655, 7
      %v5657 = vsub.s32 %v5654, %v5656
      %v5658 = vrot.slane %v4086, %v5657
      %v5660 = vunpack.c.l.s4 1966171168
      %v5661 = vunpack.c.0.s8 %v5660
      %v5662 = vlaneseq
      %v5663 = vshrl.u32 %v5662, 7
      %v5664 = vsub.s32 %v5661, %v5663
      %v5665 = vrot.slane %v5651, %v5664
      %v5666 = vcombine.high %v5658, %v5658
      %v5667 = vcombine.high %v5665, %v5665
      %v5669 = vunpack.c.l.s4 1966171168
      %v5670 = vunpack.c.0.s8 %v5669
      %v5671 = vlaneseq
      %v5672 = vshrl.u32 %v5671, 7
      %v5673 = vsub.s32 %v5670, %v5672
      %v5674 = vrot.slane %v5658, %v5673
      %v5676 = vunpack.c.l.s4 1966171168
      %v5677 = vunpack.c.0.s8 %v5676
      %v5678 = vlaneseq
      %v5679 = vshrl.u32 %v5678, 7
      %v5680 = vsub.s32 %v5677, %v5679
      %v5681 = vrot.slane %v5665, %v5680
      %v5683 = vunpack.c.l.s4 1966171168
      %v5684 = vunpack.c.0.s8 %v5683
      %v5685 = vlaneseq
      %v5686 = vshrl.u32 %v5685, 7
      %v5687 = vsub.s32 %v5684, %v5686
      %v5688 = vrot.slane %v5666, %v5687
      %v5690 = vunpack.c.l.s4 1966171168
      %v5691 = vunpack.c.0.s8 %v5690
      %v5692 = vlaneseq
      %v5693 = vshrl.u32 %v5692, 7
      %v5694 = vsub.s32 %v5691, %v5693
      %v5695 = vrot.slane %v5667, %v5694
      %v5696 = vcombine.high %v5674, %v5674
      %v5697 = vcombine.high %v5681, %v5681
      %v5698 = vcombine.high %v5688, %v5688
      %v5699 = vcombine.high %v5695, %v5695
      %v5700 = vlaneseq
      %v5701 = vshrl.u32 %v5700, 7
      %v5702 = vsub.s32 0, %v5701
      %v5703 = vrot.slane %v5674, %v5702
      %v5704 = vlaneseq
      %v5705 = vshrl.u32 %v5704, 7
      %v5706 = vsub.s32 0, %v5705
      %v5707 = vrot.slane %v5688, %v5706
      %v5708 = vlaneseq
      %v5709 = vshrl.u32 %v5708, 7
      %v5710 = vsub.s32 0, %v5709
      %v5711 = vrot.slane %v5696, %v5710
      %v5712 = vlaneseq
      %v5713 = vshrl.u32 %v5712, 7
      %v5714 = vsub.s32 0, %v5713
      %v5715 = vrot.slane %v5698, %v5714
      %v5716 = vlaneseq
      %v5717 = vshrl.u32 %v5716, 7
      %v5718 = vsub.s32 0, %v5717
      %v5719 = vrot.slane %v5681, %v5718
      %v5720 = vlaneseq
      %v5721 = vshrl.u32 %v5720, 7
      %v5722 = vsub.s32 0, %v5721
      %v5723 = vrot.slane %v5695, %v5722
      %v5724 = vlaneseq
      %v5725 = vshrl.u32 %v5724, 7
      %v5726 = vsub.s32 0, %v5725
      %v5727 = vrot.slane %v5697, %v5726
      %v5728 = vlaneseq
      %v5729 = vshrl.u32 %v5728, 7
      %v5730 = vsub.s32 0, %v5729
      %v5731 = vrot.slane %v5699, %v5730
      %5732 = vrot.lane.b32.xlu0 %v5703, 103
      %v5733 = vpop.permute.xlu0 %5732
      %5734 = vrot.lane.b32.xlu0 %v5707, 103
      %v5735 = vpop.permute.xlu0 %5734
      %5736 = vrot.lane.b32.xlu0 %v5711, 103
      %v5737 = vpop.permute.xlu0 %5736
      %5738 = vrot.lane.b32.xlu0 %v5715, 103
      %v5739 = vpop.permute.xlu0 %5738
      %5740 = vrot.lane.b32.xlu0 %v5719, 103
      %v5741 = vpop.permute.xlu0 %5740
      %5742 = vrot.lane.b32.xlu0 %v5723, 103
      %v5743 = vpop.permute.xlu0 %5742
      %5744 = vrot.lane.b32.xlu0 %v5727, 103
      %v5745 = vpop.permute.xlu0 %5744
      %5746 = vrot.lane.b32.xlu0 %v5731, 103
      %v5747 = vpop.permute.xlu0 %5746
      %5756 = vst.msk [vmem:[%s192 + $0x13] sm:$0x1] %vm4149, %v5733
      %5757 = vst.msk [vmem:[%s192 + $0x3b] sm:$0x1] %vm4149, %v5735
      %5758 = vst.msk [vmem:[%s192 + $0x63] sm:$0x1] %vm4149, %v5737
      %5759 = vst.msk [vmem:[%s192 + $0x8b] sm:$0x1] %vm4149, %v5739
      %5760 = vst.msk [vmem:[%s192 + $0xb3] sm:$0x1] %vm4149, %v5741
      %5761 = vst.msk [vmem:[%s192 + $0xdb] sm:$0x1] %vm4149, %v5743
      %5762 = vst.msk [vmem:[%s192 + $0x103] sm:$0x1] %vm4149, %v5745
      %5763 = vst.msk [vmem:[%s192 + $0x12b] sm:$0x1] %vm4149, %v5747
      %5764 = vrot.lane.b32.xlu0 %v5703, 68
      %v5765 = vpop.permute.xlu0 %5764
      %5766 = vrot.lane.b32.xlu0 %v5707, 68
      %v5767 = vpop.permute.xlu0 %5766
      %5768 = vrot.lane.b32.xlu0 %v5711, 68
      %v5769 = vpop.permute.xlu0 %5768
      %5770 = vrot.lane.b32.xlu0 %v5715, 68
      %v5771 = vpop.permute.xlu0 %5770
      %5772 = vrot.lane.b32.xlu0 %v5719, 68
      %v5773 = vpop.permute.xlu0 %5772
      %5774 = vrot.lane.b32.xlu0 %v5723, 68
      %v5775 = vpop.permute.xlu0 %5774
      %5776 = vrot.lane.b32.xlu0 %v5727, 68
      %v5777 = vpop.permute.xlu0 %5776
      %5778 = vrot.lane.b32.xlu0 %v5731, 68
      %v5779 = vpop.permute.xlu0 %5778
      %5788 = vst.msk [vmem:[%s192 + $0x14] sm:$0x1] %vm4149, %v5765
      %5789 = vst.msk [vmem:[%s192 + $0x3c] sm:$0x1] %vm4149, %v5767
      %5790 = vst.msk [vmem:[%s192 + $0x64] sm:$0x1] %vm4149, %v5769
      %5791 = vst.msk [vmem:[%s192 + $0x8c] sm:$0x1] %vm4149, %v5771
      %5792 = vst.msk [vmem:[%s192 + $0xb4] sm:$0x1] %vm4149, %v5773
      %5793 = vst.msk [vmem:[%s192 + $0xdc] sm:$0x1] %vm4149, %v5775
      %5794 = vst.msk [vmem:[%s192 + $0x104] sm:$0x1] %vm4149, %v5777
      %5795 = vst.msk [vmem:[%s192 + $0x12c] sm:$0x1] %vm4149, %v5779
      %5796 = vrot.lane.b32.xlu0 %v5703, 33
      %v5797 = vpop.permute.xlu0 %5796
      %5798 = vrot.lane.b32.xlu0 %v5707, 33
      %v5799 = vpop.permute.xlu0 %5798
      %5800 = vrot.lane.b32.xlu0 %v5711, 33
      %v5801 = vpop.permute.xlu0 %5800
      %5802 = vrot.lane.b32.xlu0 %v5715, 33
      %v5803 = vpop.permute.xlu0 %5802
      %5804 = vrot.lane.b32.xlu0 %v5719, 33
      %v5805 = vpop.permute.xlu0 %5804
      %5806 = vrot.lane.b32.xlu0 %v5723, 33
      %v5807 = vpop.permute.xlu0 %5806
      %5808 = vrot.lane.b32.xlu0 %v5727, 33
      %v5809 = vpop.permute.xlu0 %5808
      %5810 = vrot.lane.b32.xlu0 %v5731, 33
      %v5811 = vpop.permute.xlu0 %5810
      %5820 = vst.msk [vmem:[%s192 + $0x15] sm:$0x1] %vm4149, %v5797
      %5821 = vst.msk [vmem:[%s192 + $0x3d] sm:$0x1] %vm4149, %v5799
      %5822 = vst.msk [vmem:[%s192 + $0x65] sm:$0x1] %vm4149, %v5801
      %5823 = vst.msk [vmem:[%s192 + $0x8d] sm:$0x1] %vm4149, %v5803
      %5824 = vst.msk [vmem:[%s192 + $0xb5] sm:$0x1] %vm4149, %v5805
      %5825 = vst.msk [vmem:[%s192 + $0xdd] sm:$0x1] %vm4149, %v5807
      %5826 = vst.msk [vmem:[%s192 + $0x105] sm:$0x1] %vm4149, %v5809
      %5827 = vst.msk [vmem:[%s192 + $0x12d] sm:$0x1] %vm4149, %v5811
      %v5829 = vcombine.high %v4087, %v4087
      %v5831 = vunpack.c.l.s4 1966171168
      %v5832 = vunpack.c.0.s8 %v5831
      %v5833 = vlaneseq
      %v5834 = vshrl.u32 %v5833, 7
      %v5835 = vsub.s32 %v5832, %v5834
      %v5836 = vrot.slane %v4087, %v5835
      %v5838 = vunpack.c.l.s4 1966171168
      %v5839 = vunpack.c.0.s8 %v5838
      %v5840 = vlaneseq
      %v5841 = vshrl.u32 %v5840, 7
      %v5842 = vsub.s32 %v5839, %v5841
      %v5843 = vrot.slane %v5829, %v5842
      %v5844 = vcombine.high %v5836, %v5836
      %v5845 = vcombine.high %v5843, %v5843
      %v5847 = vunpack.c.l.s4 1966171168
      %v5848 = vunpack.c.0.s8 %v5847
      %v5849 = vlaneseq
      %v5850 = vshrl.u32 %v5849, 7
      %v5851 = vsub.s32 %v5848, %v5850
      %v5852 = vrot.slane %v5836, %v5851
      %v5854 = vunpack.c.l.s4 1966171168
      %v5855 = vunpack.c.0.s8 %v5854
      %v5856 = vlaneseq
      %v5857 = vshrl.u32 %v5856, 7
      %v5858 = vsub.s32 %v5855, %v5857
      %v5859 = vrot.slane %v5843, %v5858
      %v5861 = vunpack.c.l.s4 1966171168
      %v5862 = vunpack.c.0.s8 %v5861
      %v5863 = vlaneseq
      %v5864 = vshrl.u32 %v5863, 7
      %v5865 = vsub.s32 %v5862, %v5864
      %v5866 = vrot.slane %v5844, %v5865
      %v5868 = vunpack.c.l.s4 1966171168
      %v5869 = vunpack.c.0.s8 %v5868
      %v5870 = vlaneseq
      %v5871 = vshrl.u32 %v5870, 7
      %v5872 = vsub.s32 %v5869, %v5871
      %v5873 = vrot.slane %v5845, %v5872
      %v5874 = vcombine.high %v5852, %v5852
      %v5875 = vcombine.high %v5859, %v5859
      %v5876 = vcombine.high %v5866, %v5866
      %v5877 = vcombine.high %v5873, %v5873
      %v5878 = vlaneseq
      %v5879 = vshrl.u32 %v5878, 7
      %v5880 = vsub.s32 0, %v5879
      %v5881 = vrot.slane %v5852, %v5880
      %v5882 = vlaneseq
      %v5883 = vshrl.u32 %v5882, 7
      %v5884 = vsub.s32 0, %v5883
      %v5885 = vrot.slane %v5866, %v5884
      %v5886 = vlaneseq
      %v5887 = vshrl.u32 %v5886, 7
      %v5888 = vsub.s32 0, %v5887
      %v5889 = vrot.slane %v5874, %v5888
      %v5890 = vlaneseq
      %v5891 = vshrl.u32 %v5890, 7
      %v5892 = vsub.s32 0, %v5891
      %v5893 = vrot.slane %v5876, %v5892
      %v5894 = vlaneseq
      %v5895 = vshrl.u32 %v5894, 7
      %v5896 = vsub.s32 0, %v5895
      %v5897 = vrot.slane %v5859, %v5896
      %v5898 = vlaneseq
      %v5899 = vshrl.u32 %v5898, 7
      %v5900 = vsub.s32 0, %v5899
      %v5901 = vrot.slane %v5873, %v5900
      %v5902 = vlaneseq
      %v5903 = vshrl.u32 %v5902, 7
      %v5904 = vsub.s32 0, %v5903
      %v5905 = vrot.slane %v5875, %v5904
      %v5906 = vlaneseq
      %v5907 = vshrl.u32 %v5906, 7
      %v5908 = vsub.s32 0, %v5907
      %v5909 = vrot.slane %v5877, %v5908
      %5910 = vrot.lane.b32.xlu0 %v5881, 126
      %v5911 = vpop.permute.xlu0 %5910
      %5912 = vrot.lane.b32.xlu0 %v5885, 126
      %v5913 = vpop.permute.xlu0 %5912
      %5914 = vrot.lane.b32.xlu0 %v5889, 126
      %v5915 = vpop.permute.xlu0 %5914
      %5916 = vrot.lane.b32.xlu0 %v5893, 126
      %v5917 = vpop.permute.xlu0 %5916
      %5918 = vrot.lane.b32.xlu0 %v5897, 126
      %v5919 = vpop.permute.xlu0 %5918
      %5920 = vrot.lane.b32.xlu0 %v5901, 126
      %v5921 = vpop.permute.xlu0 %5920
      %5922 = vrot.lane.b32.xlu0 %v5905, 126
      %v5923 = vpop.permute.xlu0 %5922
      %5924 = vrot.lane.b32.xlu0 %v5909, 126
      %v5925 = vpop.permute.xlu0 %5924
      %5934 = vst.msk [vmem:[%s192 + $0x16] sm:$0x1] %vm4149, %v5911
      %5935 = vst.msk [vmem:[%s192 + $0x3e] sm:$0x1] %vm4149, %v5913
      %5936 = vst.msk [vmem:[%s192 + $0x66] sm:$0x1] %vm4149, %v5915
      %5937 = vst.msk [vmem:[%s192 + $0x8e] sm:$0x1] %vm4149, %v5917
      %5938 = vst.msk [vmem:[%s192 + $0xb6] sm:$0x1] %vm4149, %v5919
      %5939 = vst.msk [vmem:[%s192 + $0xde] sm:$0x1] %vm4149, %v5921
      %5940 = vst.msk [vmem:[%s192 + $0x106] sm:$0x1] %vm4149, %v5923
      %5941 = vst.msk [vmem:[%s192 + $0x12e] sm:$0x1] %vm4149, %v5925
      %5942 = vrot.lane.b32.xlu0 %v5881, 91
      %v5943 = vpop.permute.xlu0 %5942
      %5944 = vrot.lane.b32.xlu0 %v5885, 91
      %v5945 = vpop.permute.xlu0 %5944
      %5946 = vrot.lane.b32.xlu0 %v5889, 91
      %v5947 = vpop.permute.xlu0 %5946
      %5948 = vrot.lane.b32.xlu0 %v5893, 91
      %v5949 = vpop.permute.xlu0 %5948
      %5950 = vrot.lane.b32.xlu0 %v5897, 91
      %v5951 = vpop.permute.xlu0 %5950
      %5952 = vrot.lane.b32.xlu0 %v5901, 91
      %v5953 = vpop.permute.xlu0 %5952
      %5954 = vrot.lane.b32.xlu0 %v5905, 91
      %v5955 = vpop.permute.xlu0 %5954
      %5956 = vrot.lane.b32.xlu0 %v5909, 91
      %v5957 = vpop.permute.xlu0 %5956
      %5966 = vst.msk [vmem:[%s192 + $0x17] sm:$0x1] %vm4149, %v5943
      %5967 = vst.msk [vmem:[%s192 + $0x3f] sm:$0x1] %vm4149, %v5945
      %5968 = vst.msk [vmem:[%s192 + $0x67] sm:$0x1] %vm4149, %v5947
      %5969 = vst.msk [vmem:[%s192 + $0x8f] sm:$0x1] %vm4149, %v5949
      %5970 = vst.msk [vmem:[%s192 + $0xb7] sm:$0x1] %vm4149, %v5951
      %5971 = vst.msk [vmem:[%s192 + $0xdf] sm:$0x1] %vm4149, %v5953
      %5972 = vst.msk [vmem:[%s192 + $0x107] sm:$0x1] %vm4149, %v5955
      %5973 = vst.msk [vmem:[%s192 + $0x12f] sm:$0x1] %vm4149, %v5957
      %5974 = vrot.lane.b32.xlu0 %v5881, 56
      %v5975 = vpop.permute.xlu0 %5974
      %5976 = vrot.lane.b32.xlu0 %v5885, 56
      %v5977 = vpop.permute.xlu0 %5976
      %5978 = vrot.lane.b32.xlu0 %v5889, 56
      %v5979 = vpop.permute.xlu0 %5978
      %5980 = vrot.lane.b32.xlu0 %v5893, 56
      %v5981 = vpop.permute.xlu0 %5980
      %5982 = vrot.lane.b32.xlu0 %v5897, 56
      %v5983 = vpop.permute.xlu0 %5982
      %5984 = vrot.lane.b32.xlu0 %v5901, 56
      %v5985 = vpop.permute.xlu0 %5984
      %5986 = vrot.lane.b32.xlu0 %v5905, 56
      %v5987 = vpop.permute.xlu0 %5986
      %5988 = vrot.lane.b32.xlu0 %v5909, 56
      %v5989 = vpop.permute.xlu0 %5988
      %5998 = vst.msk [vmem:[%s192 + $0x18] sm:$0x1] %vm4149, %v5975
      %5999 = vst.msk [vmem:[%s192 + $0x40] sm:$0x1] %vm4149, %v5977
      %6000 = vst.msk [vmem:[%s192 + $0x68] sm:$0x1] %vm4149, %v5979
      %6001 = vst.msk [vmem:[%s192 + $0x90] sm:$0x1] %vm4149, %v5981
      %6002 = vst.msk [vmem:[%s192 + $0xb8] sm:$0x1] %vm4149, %v5983
      %6003 = vst.msk [vmem:[%s192 + $0xe0] sm:$0x1] %vm4149, %v5985
      %6004 = vst.msk [vmem:[%s192 + $0x108] sm:$0x1] %vm4149, %v5987
      %6005 = vst.msk [vmem:[%s192 + $0x130] sm:$0x1] %vm4149, %v5989
      %v6007 = vcombine.low %v4087, %v4088
      %v6008 = vcombine.high %v4087, %v4088
      %v6010 = vunpack.c.l.s4 1966171168
      %v6011 = vunpack.c.0.s8 %v6010
      %v6012 = vlaneseq
      %v6013 = vshrl.u32 %v6012, 7
      %v6014 = vsub.s32 %v6011, %v6013
      %v6015 = vrot.slane %v6007, %v6014
      %v6017 = vunpack.c.l.s4 1966171168
      %v6018 = vunpack.c.0.s8 %v6017
      %v6019 = vlaneseq
      %v6020 = vshrl.u32 %v6019, 7
      %v6021 = vsub.s32 %v6018, %v6020
      %v6022 = vrot.slane %v6008, %v6021
      %v6023 = vcombine.high %v6015, %v6015
      %v6024 = vcombine.high %v6022, %v6022
      %v6026 = vunpack.c.l.s4 1966171168
      %v6027 = vunpack.c.0.s8 %v6026
      %v6028 = vlaneseq
      %v6029 = vshrl.u32 %v6028, 7
      %v6030 = vsub.s32 %v6027, %v6029
      %v6031 = vrot.slane %v6015, %v6030
      %v6033 = vunpack.c.l.s4 1966171168
      %v6034 = vunpack.c.0.s8 %v6033
      %v6035 = vlaneseq
      %v6036 = vshrl.u32 %v6035, 7
      %v6037 = vsub.s32 %v6034, %v6036
      %v6038 = vrot.slane %v6022, %v6037
      %v6040 = vunpack.c.l.s4 1966171168
      %v6041 = vunpack.c.0.s8 %v6040
      %v6042 = vlaneseq
      %v6043 = vshrl.u32 %v6042, 7
      %v6044 = vsub.s32 %v6041, %v6043
      %v6045 = vrot.slane %v6023, %v6044
      %v6047 = vunpack.c.l.s4 1966171168
      %v6048 = vunpack.c.0.s8 %v6047
      %v6049 = vlaneseq
      %v6050 = vshrl.u32 %v6049, 7
      %v6051 = vsub.s32 %v6048, %v6050
      %v6052 = vrot.slane %v6024, %v6051
      %v6053 = vcombine.high %v6031, %v6031
      %v6054 = vcombine.high %v6038, %v6038
      %v6055 = vcombine.high %v6045, %v6045
      %v6056 = vcombine.high %v6052, %v6052
      %v6057 = vlaneseq
      %v6058 = vshrl.u32 %v6057, 7
      %v6059 = vsub.s32 0, %v6058
      %v6060 = vrot.slane %v6031, %v6059
      %v6061 = vlaneseq
      %v6062 = vshrl.u32 %v6061, 7
      %v6063 = vsub.s32 1, %v6062
      %v6064 = vrot.slane %v6031, %v6063
      %v6065 = vlaneseq
      %v6066 = vshrl.u32 %v6065, 7
      %v6067 = vsub.s32 0, %v6066
      %v6068 = vrot.slane %v6045, %v6067
      %v6069 = vlaneseq
      %v6070 = vshrl.u32 %v6069, 7
      %v6071 = vsub.s32 1, %v6070
      %v6072 = vrot.slane %v6045, %v6071
      %v6073 = vlaneseq
      %v6074 = vshrl.u32 %v6073, 7
      %v6075 = vsub.s32 0, %v6074
      %v6076 = vrot.slane %v6053, %v6075
      %v6077 = vlaneseq
      %v6078 = vshrl.u32 %v6077, 7
      %v6079 = vsub.s32 1, %v6078
      %v6080 = vrot.slane %v6053, %v6079
      %v6081 = vlaneseq
      %v6082 = vshrl.u32 %v6081, 7
      %v6083 = vsub.s32 0, %v6082
      %v6084 = vrot.slane %v6055, %v6083
      %v6085 = vlaneseq
      %v6086 = vshrl.u32 %v6085, 7
      %v6087 = vsub.s32 1, %v6086
      %v6088 = vrot.slane %v6055, %v6087
      %v6089 = vlaneseq
      %v6090 = vshrl.u32 %v6089, 7
      %v6091 = vsub.s32 0, %v6090
      %v6092 = vrot.slane %v6038, %v6091
      %v6093 = vlaneseq
      %v6094 = vshrl.u32 %v6093, 7
      %v6095 = vsub.s32 1, %v6094
      %v6096 = vrot.slane %v6038, %v6095
      %v6097 = vlaneseq
      %v6098 = vshrl.u32 %v6097, 7
      %v6099 = vsub.s32 0, %v6098
      %v6100 = vrot.slane %v6052, %v6099
      %v6101 = vlaneseq
      %v6102 = vshrl.u32 %v6101, 7
      %v6103 = vsub.s32 1, %v6102
      %v6104 = vrot.slane %v6052, %v6103
      %v6105 = vlaneseq
      %v6106 = vshrl.u32 %v6105, 7
      %v6107 = vsub.s32 0, %v6106
      %v6108 = vrot.slane %v6054, %v6107
      %v6109 = vlaneseq
      %v6110 = vshrl.u32 %v6109, 7
      %v6111 = vsub.s32 1, %v6110
      %v6112 = vrot.slane %v6054, %v6111
      %v6113 = vlaneseq
      %v6114 = vshrl.u32 %v6113, 7
      %v6115 = vsub.s32 0, %v6114
      %v6116 = vrot.slane %v6056, %v6115
      %v6117 = vlaneseq
      %v6118 = vshrl.u32 %v6117, 7
      %v6119 = vsub.s32 1, %v6118
      %v6120 = vrot.slane %v6056, %v6119
      %6121 = vrot.lane.b32.xlu0 %v6060, 21
      %v6122 = vpop.permute.xlu0 %6121
      %6123 = vrot.lane.b32.xlu0 %v6064, 21
      %v6124 = vpop.permute.xlu0 %6123
      %6125 = vrot.lane.b32.xlu0 %v6068, 21
      %v6126 = vpop.permute.xlu0 %6125
      %6127 = vrot.lane.b32.xlu0 %v6072, 21
      %v6128 = vpop.permute.xlu0 %6127
      %6129 = vrot.lane.b32.xlu0 %v6076, 21
      %v6130 = vpop.permute.xlu0 %6129
      %6131 = vrot.lane.b32.xlu0 %v6080, 21
      %v6132 = vpop.permute.xlu0 %6131
      %6133 = vrot.lane.b32.xlu0 %v6084, 21
      %v6134 = vpop.permute.xlu0 %6133
      %6135 = vrot.lane.b32.xlu0 %v6088, 21
      %v6136 = vpop.permute.xlu0 %6135
      %6137 = vrot.lane.b32.xlu0 %v6092, 21
      %v6138 = vpop.permute.xlu0 %6137
      %6139 = vrot.lane.b32.xlu0 %v6096, 21
      %v6140 = vpop.permute.xlu0 %6139
      %6141 = vrot.lane.b32.xlu0 %v6100, 21
      %v6142 = vpop.permute.xlu0 %6141
      %6143 = vrot.lane.b32.xlu0 %v6104, 21
      %v6144 = vpop.permute.xlu0 %6143
      %6145 = vrot.lane.b32.xlu0 %v6108, 21
      %v6146 = vpop.permute.xlu0 %6145
      %6147 = vrot.lane.b32.xlu0 %v6112, 21
      %v6148 = vpop.permute.xlu0 %6147
      %6149 = vrot.lane.b32.xlu0 %v6116, 21
      %v6150 = vpop.permute.xlu0 %6149
      %6151 = vrot.lane.b32.xlu0 %v6120, 21
      %v6152 = vpop.permute.xlu0 %6151
      %vm6153 = vcmask 171008
      %v6154 = vsel %vm6153, %v6122, %v6124
      %v6155 = vsel %vm6153, %v6126, %v6128
      %v6156 = vsel %vm6153, %v6130, %v6132
      %v6157 = vsel %vm6153, %v6134, %v6136
      %v6158 = vsel %vm6153, %v6138, %v6140
      %v6159 = vsel %vm6153, %v6142, %v6144
      %v6160 = vsel %vm6153, %v6146, %v6148
      %v6161 = vsel %vm6153, %v6150, %v6152
      %6170 = vst.msk [vmem:[%s192 + $0x19] sm:$0x1] %vm4149, %v6154
      %6171 = vst.msk [vmem:[%s192 + $0x41] sm:$0x1] %vm4149, %v6155
      %6172 = vst.msk [vmem:[%s192 + $0x69] sm:$0x1] %vm4149, %v6156
      %6173 = vst.msk [vmem:[%s192 + $0x91] sm:$0x1] %vm4149, %v6157
      %6174 = vst.msk [vmem:[%s192 + $0xb9] sm:$0x1] %vm4149, %v6158
      %6175 = vst.msk [vmem:[%s192 + $0xe1] sm:$0x1] %vm4149, %v6159
      %6176 = vst.msk [vmem:[%s192 + $0x109] sm:$0x1] %vm4149, %v6160
      %6177 = vst.msk [vmem:[%s192 + $0x131] sm:$0x1] %vm4149, %v6161
      %v6178 = vcombine.high %v4088, %v4088
      %v6180 = vunpack.c.l.s4 1966171168
      %v6181 = vunpack.c.0.s8 %v6180
      %v6182 = vlaneseq
      %v6183 = vshrl.u32 %v6182, 7
      %v6184 = vsub.s32 %v6181, %v6183
      %v6185 = vrot.slane %v4088, %v6184
      %v6187 = vunpack.c.l.s4 1966171168
      %v6188 = vunpack.c.0.s8 %v6187
      %v6189 = vlaneseq
      %v6190 = vshrl.u32 %v6189, 7
      %v6191 = vsub.s32 %v6188, %v6190
      %v6192 = vrot.slane %v6178, %v6191
      %v6193 = vcombine.high %v6185, %v6185
      %v6194 = vcombine.high %v6192, %v6192
      %v6196 = vunpack.c.l.s4 1966171168
      %v6197 = vunpack.c.0.s8 %v6196
      %v6198 = vlaneseq
      %v6199 = vshrl.u32 %v6198, 7
      %v6200 = vsub.s32 %v6197, %v6199
      %v6201 = vrot.slane %v6185, %v6200
      %v6203 = vunpack.c.l.s4 1966171168
      %v6204 = vunpack.c.0.s8 %v6203
      %v6205 = vlaneseq
      %v6206 = vshrl.u32 %v6205, 7
      %v6207 = vsub.s32 %v6204, %v6206
      %v6208 = vrot.slane %v6192, %v6207
      %v6210 = vunpack.c.l.s4 1966171168
      %v6211 = vunpack.c.0.s8 %v6210
      %v6212 = vlaneseq
      %v6213 = vshrl.u32 %v6212, 7
      %v6214 = vsub.s32 %v6211, %v6213
      %v6215 = vrot.slane %v6193, %v6214
      %v6217 = vunpack.c.l.s4 1966171168
      %v6218 = vunpack.c.0.s8 %v6217
      %v6219 = vlaneseq
      %v6220 = vshrl.u32 %v6219, 7
      %v6221 = vsub.s32 %v6218, %v6220
      %v6222 = vrot.slane %v6194, %v6221
      %v6223 = vcombine.high %v6201, %v6201
      %v6224 = vcombine.high %v6208, %v6208
      %v6225 = vcombine.high %v6215, %v6215
      %v6226 = vcombine.high %v6222, %v6222
      %v6227 = vlaneseq
      %v6228 = vshrl.u32 %v6227, 7
      %v6229 = vsub.s32 0, %v6228
      %v6230 = vrot.slane %v6201, %v6229
      %v6231 = vlaneseq
      %v6232 = vshrl.u32 %v6231, 7
      %v6233 = vsub.s32 0, %v6232
      %v6234 = vrot.slane %v6215, %v6233
      %v6235 = vlaneseq
      %v6236 = vshrl.u32 %v6235, 7
      %v6237 = vsub.s32 0, %v6236
      %v6238 = vrot.slane %v6223, %v6237
      %v6239 = vlaneseq
      %v6240 = vshrl.u32 %v6239, 7
      %v6241 = vsub.s32 0, %v6240
      %v6242 = vrot.slane %v6225, %v6241
      %v6243 = vlaneseq
      %v6244 = vshrl.u32 %v6243, 7
      %v6245 = vsub.s32 0, %v6244
      %v6246 = vrot.slane %v6208, %v6245
      %v6247 = vlaneseq
      %v6248 = vshrl.u32 %v6247, 7
      %v6249 = vsub.s32 0, %v6248
      %v6250 = vrot.slane %v6222, %v6249
      %v6251 = vlaneseq
      %v6252 = vshrl.u32 %v6251, 7
      %v6253 = vsub.s32 0, %v6252
      %v6254 = vrot.slane %v6224, %v6253
      %v6255 = vlaneseq
      %v6256 = vshrl.u32 %v6255, 7
      %v6257 = vsub.s32 0, %v6256
      %v6258 = vrot.slane %v6226, %v6257
      %6259 = vrot.lane.b32.xlu0 %v6230, 114
      %v6260 = vpop.permute.xlu0 %6259
      %6261 = vrot.lane.b32.xlu0 %v6234, 114
      %v6262 = vpop.permute.xlu0 %6261
      %6263 = vrot.lane.b32.xlu0 %v6238, 114
      %v6264 = vpop.permute.xlu0 %6263
      %6265 = vrot.lane.b32.xlu0 %v6242, 114
      %v6266 = vpop.permute.xlu0 %6265
      %6267 = vrot.lane.b32.xlu0 %v6246, 114
      %v6268 = vpop.permute.xlu0 %6267
      %6269 = vrot.lane.b32.xlu0 %v6250, 114
      %v6270 = vpop.permute.xlu0 %6269
      %6271 = vrot.lane.b32.xlu0 %v6254, 114
      %v6272 = vpop.permute.xlu0 %6271
      %6273 = vrot.lane.b32.xlu0 %v6258, 114
      %v6274 = vpop.permute.xlu0 %6273
      %6283 = vst.msk [vmem:[%s192 + $0x1a] sm:$0x1] %vm4149, %v6260
      %6284 = vst.msk [vmem:[%s192 + $0x42] sm:$0x1] %vm4149, %v6262
      %6285 = vst.msk [vmem:[%s192 + $0x6a] sm:$0x1] %vm4149, %v6264
      %6286 = vst.msk [vmem:[%s192 + $0x92] sm:$0x1] %vm4149, %v6266
      %6287 = vst.msk [vmem:[%s192 + $0xba] sm:$0x1] %vm4149, %v6268
      %6288 = vst.msk [vmem:[%s192 + $0xe2] sm:$0x1] %vm4149, %v6270
      %6289 = vst.msk [vmem:[%s192 + $0x10a] sm:$0x1] %vm4149, %v6272
      %6290 = vst.msk [vmem:[%s192 + $0x132] sm:$0x1] %vm4149, %v6274
      %6291 = vrot.lane.b32.xlu0 %v6230, 79
      %v6292 = vpop.permute.xlu0 %6291
      %6293 = vrot.lane.b32.xlu0 %v6234, 79
      %v6294 = vpop.permute.xlu0 %6293
      %6295 = vrot.lane.b32.xlu0 %v6238, 79
      %v6296 = vpop.permute.xlu0 %6295
      %6297 = vrot.lane.b32.xlu0 %v6242, 79
      %v6298 = vpop.permute.xlu0 %6297
      %6299 = vrot.lane.b32.xlu0 %v6246, 79
      %v6300 = vpop.permute.xlu0 %6299
      %6301 = vrot.lane.b32.xlu0 %v6250, 79
      %v6302 = vpop.permute.xlu0 %6301
      %6303 = vrot.lane.b32.xlu0 %v6254, 79
      %v6304 = vpop.permute.xlu0 %6303
      %6305 = vrot.lane.b32.xlu0 %v6258, 79
      %v6306 = vpop.permute.xlu0 %6305
      %6315 = vst.msk [vmem:[%s192 + $0x1b] sm:$0x1] %vm4149, %v6292
      %6316 = vst.msk [vmem:[%s192 + $0x43] sm:$0x1] %vm4149, %v6294
      %6317 = vst.msk [vmem:[%s192 + $0x6b] sm:$0x1] %vm4149, %v6296
      %6318 = vst.msk [vmem:[%s192 + $0x93] sm:$0x1] %vm4149, %v6298
      %6319 = vst.msk [vmem:[%s192 + $0xbb] sm:$0x1] %vm4149, %v6300
      %6320 = vst.msk [vmem:[%s192 + $0xe3] sm:$0x1] %vm4149, %v6302
      %6321 = vst.msk [vmem:[%s192 + $0x10b] sm:$0x1] %vm4149, %v6304
      %6322 = vst.msk [vmem:[%s192 + $0x133] sm:$0x1] %vm4149, %v6306
      %6323 = vrot.lane.b32.xlu0 %v6230, 44
      %v6324 = vpop.permute.xlu0 %6323
      %6325 = vrot.lane.b32.xlu0 %v6234, 44
      %v6326 = vpop.permute.xlu0 %6325
      %6327 = vrot.lane.b32.xlu0 %v6238, 44
      %v6328 = vpop.permute.xlu0 %6327
      %6329 = vrot.lane.b32.xlu0 %v6242, 44
      %v6330 = vpop.permute.xlu0 %6329
      %6331 = vrot.lane.b32.xlu0 %v6246, 44
      %v6332 = vpop.permute.xlu0 %6331
      %6333 = vrot.lane.b32.xlu0 %v6250, 44
      %v6334 = vpop.permute.xlu0 %6333
      %6335 = vrot.lane.b32.xlu0 %v6254, 44
      %v6336 = vpop.permute.xlu0 %6335
      %6337 = vrot.lane.b32.xlu0 %v6258, 44
      %v6338 = vpop.permute.xlu0 %6337
      %6347 = vst.msk [vmem:[%s192 + $0x1c] sm:$0x1] %vm4149, %v6324
      %6348 = vst.msk [vmem:[%s192 + $0x44] sm:$0x1] %vm4149, %v6326
      %6349 = vst.msk [vmem:[%s192 + $0x6c] sm:$0x1] %vm4149, %v6328
      %6350 = vst.msk [vmem:[%s192 + $0x94] sm:$0x1] %vm4149, %v6330
      %6351 = vst.msk [vmem:[%s192 + $0xbc] sm:$0x1] %vm4149, %v6332
      %6352 = vst.msk [vmem:[%s192 + $0xe4] sm:$0x1] %vm4149, %v6334
      %6353 = vst.msk [vmem:[%s192 + $0x10c] sm:$0x1] %vm4149, %v6336
      %6354 = vst.msk [vmem:[%s192 + $0x134] sm:$0x1] %vm4149, %v6338
      %v6356 = vcombine.low %v4088, %v4089
      %v6357 = vcombine.high %v4088, %v4089
      %v6359 = vunpack.c.l.s4 1966171168
      %v6360 = vunpack.c.0.s8 %v6359
      %v6361 = vlaneseq
      %v6362 = vshrl.u32 %v6361, 7
      %v6363 = vsub.s32 %v6360, %v6362
      %v6364 = vrot.slane %v6356, %v6363
      %v6366 = vunpack.c.l.s4 1966171168
      %v6367 = vunpack.c.0.s8 %v6366
      %v6368 = vlaneseq
      %v6369 = vshrl.u32 %v6368, 7
      %v6370 = vsub.s32 %v6367, %v6369
      %v6371 = vrot.slane %v6357, %v6370
      %v6372 = vcombine.high %v6364, %v6364
      %v6373 = vcombine.high %v6371, %v6371
      %v6375 = vunpack.c.l.s4 1966171168
      %v6376 = vunpack.c.0.s8 %v6375
      %v6377 = vlaneseq
      %v6378 = vshrl.u32 %v6377, 7
      %v6379 = vsub.s32 %v6376, %v6378
      %v6380 = vrot.slane %v6364, %v6379
      %v6382 = vunpack.c.l.s4 1966171168
      %v6383 = vunpack.c.0.s8 %v6382
      %v6384 = vlaneseq
      %v6385 = vshrl.u32 %v6384, 7
      %v6386 = vsub.s32 %v6383, %v6385
      %v6387 = vrot.slane %v6371, %v6386
      %v6389 = vunpack.c.l.s4 1966171168
      %v6390 = vunpack.c.0.s8 %v6389
      %v6391 = vlaneseq
      %v6392 = vshrl.u32 %v6391, 7
      %v6393 = vsub.s32 %v6390, %v6392
      %v6394 = vrot.slane %v6372, %v6393
      %v6396 = vunpack.c.l.s4 1966171168
      %v6397 = vunpack.c.0.s8 %v6396
      %v6398 = vlaneseq
      %v6399 = vshrl.u32 %v6398, 7
      %v6400 = vsub.s32 %v6397, %v6399
      %v6401 = vrot.slane %v6373, %v6400
      %v6402 = vcombine.high %v6380, %v6380
      %v6403 = vcombine.high %v6387, %v6387
      %v6404 = vcombine.high %v6394, %v6394
      %v6405 = vcombine.high %v6401, %v6401
      %v6406 = vlaneseq
      %v6407 = vshrl.u32 %v6406, 7
      %v6408 = vsub.s32 0, %v6407
      %v6409 = vrot.slane %v6380, %v6408
      %v6410 = vlaneseq
      %v6411 = vshrl.u32 %v6410, 7
      %v6412 = vsub.s32 1, %v6411
      %v6413 = vrot.slane %v6380, %v6412
      %v6414 = vlaneseq
      %v6415 = vshrl.u32 %v6414, 7
      %v6416 = vsub.s32 0, %v6415
      %v6417 = vrot.slane %v6394, %v6416
      %v6418 = vlaneseq
      %v6419 = vshrl.u32 %v6418, 7
      %v6420 = vsub.s32 1, %v6419
      %v6421 = vrot.slane %v6394, %v6420
      %v6422 = vlaneseq
      %v6423 = vshrl.u32 %v6422, 7
      %v6424 = vsub.s32 0, %v6423
      %v6425 = vrot.slane %v6402, %v6424
      %v6426 = vlaneseq
      %v6427 = vshrl.u32 %v6426, 7
      %v6428 = vsub.s32 1, %v6427
      %v6429 = vrot.slane %v6402, %v6428
      %v6430 = vlaneseq
      %v6431 = vshrl.u32 %v6430, 7
      %v6432 = vsub.s32 0, %v6431
      %v6433 = vrot.slane %v6404, %v6432
      %v6434 = vlaneseq
      %v6435 = vshrl.u32 %v6434, 7
      %v6436 = vsub.s32 1, %v6435
      %v6437 = vrot.slane %v6404, %v6436
      %v6438 = vlaneseq
      %v6439 = vshrl.u32 %v6438, 7
      %v6440 = vsub.s32 0, %v6439
      %v6441 = vrot.slane %v6387, %v6440
      %v6442 = vlaneseq
      %v6443 = vshrl.u32 %v6442, 7
      %v6444 = vsub.s32 1, %v6443
      %v6445 = vrot.slane %v6387, %v6444
      %v6446 = vlaneseq
      %v6447 = vshrl.u32 %v6446, 7
      %v6448 = vsub.s32 0, %v6447
      %v6449 = vrot.slane %v6401, %v6448
      %v6450 = vlaneseq
      %v6451 = vshrl.u32 %v6450, 7
      %v6452 = vsub.s32 1, %v6451
      %v6453 = vrot.slane %v6401, %v6452
      %v6454 = vlaneseq
      %v6455 = vshrl.u32 %v6454, 7
      %v6456 = vsub.s32 0, %v6455
      %v6457 = vrot.slane %v6403, %v6456
      %v6458 = vlaneseq
      %v6459 = vshrl.u32 %v6458, 7
      %v6460 = vsub.s32 1, %v6459
      %v6461 = vrot.slane %v6403, %v6460
      %v6462 = vlaneseq
      %v6463 = vshrl.u32 %v6462, 7
      %v6464 = vsub.s32 0, %v6463
      %v6465 = vrot.slane %v6405, %v6464
      %v6466 = vlaneseq
      %v6467 = vshrl.u32 %v6466, 7
      %v6468 = vsub.s32 1, %v6467
      %v6469 = vrot.slane %v6405, %v6468
      %6470 = vrot.lane.b32.xlu0 %v6409, 9
      %v6471 = vpop.permute.xlu0 %6470
      %6472 = vrot.lane.b32.xlu0 %v6413, 9
      %v6473 = vpop.permute.xlu0 %6472
      %6474 = vrot.lane.b32.xlu0 %v6417, 9
      %v6475 = vpop.permute.xlu0 %6474
      %6476 = vrot.lane.b32.xlu0 %v6421, 9
      %v6477 = vpop.permute.xlu0 %6476
      %6478 = vrot.lane.b32.xlu0 %v6425, 9
      %v6479 = vpop.permute.xlu0 %6478
      %6480 = vrot.lane.b32.xlu0 %v6429, 9
      %v6481 = vpop.permute.xlu0 %6480
      %6482 = vrot.lane.b32.xlu0 %v6433, 9
      %v6483 = vpop.permute.xlu0 %6482
      %6484 = vrot.lane.b32.xlu0 %v6437, 9
      %v6485 = vpop.permute.xlu0 %6484
      %6486 = vrot.lane.b32.xlu0 %v6441, 9
      %v6487 = vpop.permute.xlu0 %6486
      %6488 = vrot.lane.b32.xlu0 %v6445, 9
      %v6489 = vpop.permute.xlu0 %6488
      %6490 = vrot.lane.b32.xlu0 %v6449, 9
      %v6491 = vpop.permute.xlu0 %6490
      %6492 = vrot.lane.b32.xlu0 %v6453, 9
      %v6493 = vpop.permute.xlu0 %6492
      %6494 = vrot.lane.b32.xlu0 %v6457, 9
      %v6495 = vpop.permute.xlu0 %6494
      %6496 = vrot.lane.b32.xlu0 %v6461, 9
      %v6497 = vpop.permute.xlu0 %6496
      %6498 = vrot.lane.b32.xlu0 %v6465, 9
      %v6499 = vpop.permute.xlu0 %6498
      %6500 = vrot.lane.b32.xlu0 %v6469, 9
      %v6501 = vpop.permute.xlu0 %6500
      %vm6502 = vcmask 72704
      %v6503 = vsel %vm6502, %v6471, %v6473
      %v6504 = vsel %vm6502, %v6475, %v6477
      %v6505 = vsel %vm6502, %v6479, %v6481
      %v6506 = vsel %vm6502, %v6483, %v6485
      %v6507 = vsel %vm6502, %v6487, %v6489
      %v6508 = vsel %vm6502, %v6491, %v6493
      %v6509 = vsel %vm6502, %v6495, %v6497
      %v6510 = vsel %vm6502, %v6499, %v6501
      %6519 = vst.msk [vmem:[%s192 + $0x1d] sm:$0x1] %vm4149, %v6503
      %6520 = vst.msk [vmem:[%s192 + $0x45] sm:$0x1] %vm4149, %v6504
      %6521 = vst.msk [vmem:[%s192 + $0x6d] sm:$0x1] %vm4149, %v6505
      %6522 = vst.msk [vmem:[%s192 + $0x95] sm:$0x1] %vm4149, %v6506
      %6523 = vst.msk [vmem:[%s192 + $0xbd] sm:$0x1] %vm4149, %v6507
      %6524 = vst.msk [vmem:[%s192 + $0xe5] sm:$0x1] %vm4149, %v6508
      %6525 = vst.msk [vmem:[%s192 + $0x10d] sm:$0x1] %vm4149, %v6509
      %6526 = vst.msk [vmem:[%s192 + $0x135] sm:$0x1] %vm4149, %v6510
      %v6527 = vcombine.high %v4089, %v4089
      %v6529 = vunpack.c.l.s4 1966171168
      %v6530 = vunpack.c.0.s8 %v6529
      %v6531 = vlaneseq
      %v6532 = vshrl.u32 %v6531, 7
      %v6533 = vsub.s32 %v6530, %v6532
      %v6534 = vrot.slane %v4089, %v6533
      %v6536 = vunpack.c.l.s4 1966171168
      %v6537 = vunpack.c.0.s8 %v6536
      %v6538 = vlaneseq
      %v6539 = vshrl.u32 %v6538, 7
      %v6540 = vsub.s32 %v6537, %v6539
      %v6541 = vrot.slane %v6527, %v6540
      %v6542 = vcombine.high %v6534, %v6534
      %v6543 = vcombine.high %v6541, %v6541
      %v6545 = vunpack.c.l.s4 1966171168
      %v6546 = vunpack.c.0.s8 %v6545
      %v6547 = vlaneseq
      %v6548 = vshrl.u32 %v6547, 7
      %v6549 = vsub.s32 %v6546, %v6548
      %v6550 = vrot.slane %v6534, %v6549
      %v6552 = vunpack.c.l.s4 1966171168
      %v6553 = vunpack.c.0.s8 %v6552
      %v6554 = vlaneseq
      %v6555 = vshrl.u32 %v6554, 7
      %v6556 = vsub.s32 %v6553, %v6555
      %v6557 = vrot.slane %v6541, %v6556
      %v6559 = vunpack.c.l.s4 1966171168
      %v6560 = vunpack.c.0.s8 %v6559
      %v6561 = vlaneseq
      %v6562 = vshrl.u32 %v6561, 7
      %v6563 = vsub.s32 %v6560, %v6562
      %v6564 = vrot.slane %v6542, %v6563
      %v6566 = vunpack.c.l.s4 1966171168
      %v6567 = vunpack.c.0.s8 %v6566
      %v6568 = vlaneseq
      %v6569 = vshrl.u32 %v6568, 7
      %v6570 = vsub.s32 %v6567, %v6569
      %v6571 = vrot.slane %v6543, %v6570
      %v6572 = vcombine.high %v6550, %v6550
      %v6573 = vcombine.high %v6557, %v6557
      %v6574 = vcombine.high %v6564, %v6564
      %v6575 = vcombine.high %v6571, %v6571
      %v6576 = vlaneseq
      %v6577 = vshrl.u32 %v6576, 7
      %v6578 = vsub.s32 0, %v6577
      %v6579 = vrot.slane %v6550, %v6578
      %v6580 = vlaneseq
      %v6581 = vshrl.u32 %v6580, 7
      %v6582 = vsub.s32 0, %v6581
      %v6583 = vrot.slane %v6564, %v6582
      %v6584 = vlaneseq
      %v6585 = vshrl.u32 %v6584, 7
      %v6586 = vsub.s32 0, %v6585
      %v6587 = vrot.slane %v6572, %v6586
      %v6588 = vlaneseq
      %v6589 = vshrl.u32 %v6588, 7
      %v6590 = vsub.s32 0, %v6589
      %v6591 = vrot.slane %v6574, %v6590
      %v6592 = vlaneseq
      %v6593 = vshrl.u32 %v6592, 7
      %v6594 = vsub.s32 0, %v6593
      %v6595 = vrot.slane %v6557, %v6594
      %v6596 = vlaneseq
      %v6597 = vshrl.u32 %v6596, 7
      %v6598 = vsub.s32 0, %v6597
      %v6599 = vrot.slane %v6571, %v6598
      %v6600 = vlaneseq
      %v6601 = vshrl.u32 %v6600, 7
      %v6602 = vsub.s32 0, %v6601
      %v6603 = vrot.slane %v6573, %v6602
      %v6604 = vlaneseq
      %v6605 = vshrl.u32 %v6604, 7
      %v6606 = vsub.s32 0, %v6605
      %v6607 = vrot.slane %v6575, %v6606
      %6608 = vrot.lane.b32.xlu0 %v6579, 102
      %v6609 = vpop.permute.xlu0 %6608
      %6610 = vrot.lane.b32.xlu0 %v6583, 102
      %v6611 = vpop.permute.xlu0 %6610
      %6612 = vrot.lane.b32.xlu0 %v6587, 102
      %v6613 = vpop.permute.xlu0 %6612
      %6614 = vrot.lane.b32.xlu0 %v6591, 102
      %v6615 = vpop.permute.xlu0 %6614
      %6616 = vrot.lane.b32.xlu0 %v6595, 102
      %v6617 = vpop.permute.xlu0 %6616
      %6618 = vrot.lane.b32.xlu0 %v6599, 102
      %v6619 = vpop.permute.xlu0 %6618
      %6620 = vrot.lane.b32.xlu0 %v6603, 102
      %v6621 = vpop.permute.xlu0 %6620
      %6622 = vrot.lane.b32.xlu0 %v6607, 102
      %v6623 = vpop.permute.xlu0 %6622
      %6632 = vst.msk [vmem:[%s192 + $0x1e] sm:$0x1] %vm4149, %v6609
      %6633 = vst.msk [vmem:[%s192 + $0x46] sm:$0x1] %vm4149, %v6611
      %6634 = vst.msk [vmem:[%s192 + $0x6e] sm:$0x1] %vm4149, %v6613
      %6635 = vst.msk [vmem:[%s192 + $0x96] sm:$0x1] %vm4149, %v6615
      %6636 = vst.msk [vmem:[%s192 + $0xbe] sm:$0x1] %vm4149, %v6617
      %6637 = vst.msk [vmem:[%s192 + $0xe6] sm:$0x1] %vm4149, %v6619
      %6638 = vst.msk [vmem:[%s192 + $0x10e] sm:$0x1] %vm4149, %v6621
      %6639 = vst.msk [vmem:[%s192 + $0x136] sm:$0x1] %vm4149, %v6623
      %6640 = vrot.lane.b32.xlu0 %v6579, 67
      %v6641 = vpop.permute.xlu0 %6640
      %6642 = vrot.lane.b32.xlu0 %v6583, 67
      %v6643 = vpop.permute.xlu0 %6642
      %6644 = vrot.lane.b32.xlu0 %v6587, 67
      %v6645 = vpop.permute.xlu0 %6644
      %6646 = vrot.lane.b32.xlu0 %v6591, 67
      %v6647 = vpop.permute.xlu0 %6646
      %6648 = vrot.lane.b32.xlu0 %v6595, 67
      %v6649 = vpop.permute.xlu0 %6648
      %6650 = vrot.lane.b32.xlu0 %v6599, 67
      %v6651 = vpop.permute.xlu0 %6650
      %6652 = vrot.lane.b32.xlu0 %v6603, 67
      %v6653 = vpop.permute.xlu0 %6652
      %6654 = vrot.lane.b32.xlu0 %v6607, 67
      %v6655 = vpop.permute.xlu0 %6654
      %6664 = vst.msk [vmem:[%s192 + $0x1f] sm:$0x1] %vm4149, %v6641
      %6665 = vst.msk [vmem:[%s192 + $0x47] sm:$0x1] %vm4149, %v6643
      %6666 = vst.msk [vmem:[%s192 + $0x6f] sm:$0x1] %vm4149, %v6645
      %6667 = vst.msk [vmem:[%s192 + $0x97] sm:$0x1] %vm4149, %v6647
      %6668 = vst.msk [vmem:[%s192 + $0xbf] sm:$0x1] %vm4149, %v6649
      %6669 = vst.msk [vmem:[%s192 + $0xe7] sm:$0x1] %vm4149, %v6651
      %6670 = vst.msk [vmem:[%s192 + $0x10f] sm:$0x1] %vm4149, %v6653
      %6671 = vst.msk [vmem:[%s192 + $0x137] sm:$0x1] %vm4149, %v6655
      %v6673 = vcombine.low %v4089, %v4090
      %v6674 = vcombine.high %v4089, %v4090
      %v6676 = vunpack.c.l.s4 1966171168
      %v6677 = vunpack.c.0.s8 %v6676
      %v6678 = vlaneseq
      %v6679 = vshrl.u32 %v6678, 7
      %v6680 = vsub.s32 %v6677, %v6679
      %v6681 = vrot.slane %v6673, %v6680
      %v6683 = vunpack.c.l.s4 1966171168
      %v6684 = vunpack.c.0.s8 %v6683
      %v6685 = vlaneseq
      %v6686 = vshrl.u32 %v6685, 7
      %v6687 = vsub.s32 %v6684, %v6686
      %v6688 = vrot.slane %v6674, %v6687
      %v6689 = vcombine.high %v6681, %v6681
      %v6690 = vcombine.high %v6688, %v6688
      %v6692 = vunpack.c.l.s4 1966171168
      %v6693 = vunpack.c.0.s8 %v6692
      %v6694 = vlaneseq
      %v6695 = vshrl.u32 %v6694, 7
      %v6696 = vsub.s32 %v6693, %v6695
      %v6697 = vrot.slane %v6681, %v6696
      %v6699 = vunpack.c.l.s4 1966171168
      %v6700 = vunpack.c.0.s8 %v6699
      %v6701 = vlaneseq
      %v6702 = vshrl.u32 %v6701, 7
      %v6703 = vsub.s32 %v6700, %v6702
      %v6704 = vrot.slane %v6688, %v6703
      %v6706 = vunpack.c.l.s4 1966171168
      %v6707 = vunpack.c.0.s8 %v6706
      %v6708 = vlaneseq
      %v6709 = vshrl.u32 %v6708, 7
      %v6710 = vsub.s32 %v6707, %v6709
      %v6711 = vrot.slane %v6689, %v6710
      %v6713 = vunpack.c.l.s4 1966171168
      %v6714 = vunpack.c.0.s8 %v6713
      %v6715 = vlaneseq
      %v6716 = vshrl.u32 %v6715, 7
      %v6717 = vsub.s32 %v6714, %v6716
      %v6718 = vrot.slane %v6690, %v6717
      %v6719 = vcombine.high %v6697, %v6697
      %v6720 = vcombine.high %v6704, %v6704
      %v6721 = vcombine.high %v6711, %v6711
      %v6722 = vcombine.high %v6718, %v6718
      %v6723 = vlaneseq
      %v6724 = vshrl.u32 %v6723, 7
      %v6725 = vsub.s32 0, %v6724
      %v6726 = vrot.slane %v6697, %v6725
      %v6727 = vlaneseq
      %v6728 = vshrl.u32 %v6727, 7
      %v6729 = vsub.s32 1, %v6728
      %v6730 = vrot.slane %v6697, %v6729
      %v6731 = vlaneseq
      %v6732 = vshrl.u32 %v6731, 7
      %v6733 = vsub.s32 0, %v6732
      %v6734 = vrot.slane %v6711, %v6733
      %v6735 = vlaneseq
      %v6736 = vshrl.u32 %v6735, 7
      %v6737 = vsub.s32 1, %v6736
      %v6738 = vrot.slane %v6711, %v6737
      %v6739 = vlaneseq
      %v6740 = vshrl.u32 %v6739, 7
      %v6741 = vsub.s32 0, %v6740
      %v6742 = vrot.slane %v6719, %v6741
      %v6743 = vlaneseq
      %v6744 = vshrl.u32 %v6743, 7
      %v6745 = vsub.s32 1, %v6744
      %v6746 = vrot.slane %v6719, %v6745
      %v6747 = vlaneseq
      %v6748 = vshrl.u32 %v6747, 7
      %v6749 = vsub.s32 0, %v6748
      %v6750 = vrot.slane %v6721, %v6749
      %v6751 = vlaneseq
      %v6752 = vshrl.u32 %v6751, 7
      %v6753 = vsub.s32 1, %v6752
      %v6754 = vrot.slane %v6721, %v6753
      %v6755 = vlaneseq
      %v6756 = vshrl.u32 %v6755, 7
      %v6757 = vsub.s32 0, %v6756
      %v6758 = vrot.slane %v6704, %v6757
      %v6759 = vlaneseq
      %v6760 = vshrl.u32 %v6759, 7
      %v6761 = vsub.s32 1, %v6760
      %v6762 = vrot.slane %v6704, %v6761
      %v6763 = vlaneseq
      %v6764 = vshrl.u32 %v6763, 7
      %v6765 = vsub.s32 0, %v6764
      %v6766 = vrot.slane %v6718, %v6765
      %v6767 = vlaneseq
      %v6768 = vshrl.u32 %v6767, 7
      %v6769 = vsub.s32 1, %v6768
      %v6770 = vrot.slane %v6718, %v6769
      %v6771 = vlaneseq
      %v6772 = vshrl.u32 %v6771, 7
      %v6773 = vsub.s32 0, %v6772
      %v6774 = vrot.slane %v6720, %v6773
      %v6775 = vlaneseq
      %v6776 = vshrl.u32 %v6775, 7
      %v6777 = vsub.s32 1, %v6776
      %v6778 = vrot.slane %v6720, %v6777
      %v6779 = vlaneseq
      %v6780 = vshrl.u32 %v6779, 7
      %v6781 = vsub.s32 0, %v6780
      %v6782 = vrot.slane %v6722, %v6781
      %v6783 = vlaneseq
      %v6784 = vshrl.u32 %v6783, 7
      %v6785 = vsub.s32 1, %v6784
      %v6786 = vrot.slane %v6722, %v6785
      %6787 = vrot.lane.b32.xlu0 %v6726, 32
      %v6788 = vpop.permute.xlu0 %6787
      %6789 = vrot.lane.b32.xlu0 %v6730, 32
      %v6790 = vpop.permute.xlu0 %6789
      %6791 = vrot.lane.b32.xlu0 %v6734, 32
      %v6792 = vpop.permute.xlu0 %6791
      %6793 = vrot.lane.b32.xlu0 %v6738, 32
      %v6794 = vpop.permute.xlu0 %6793
      %6795 = vrot.lane.b32.xlu0 %v6742, 32
      %v6796 = vpop.permute.xlu0 %6795
      %6797 = vrot.lane.b32.xlu0 %v6746, 32
      %v6798 = vpop.permute.xlu0 %6797
      %6799 = vrot.lane.b32.xlu0 %v6750, 32
      %v6800 = vpop.permute.xlu0 %6799
      %6801 = vrot.lane.b32.xlu0 %v6754, 32
      %v6802 = vpop.permute.xlu0 %6801
      %6803 = vrot.lane.b32.xlu0 %v6758, 32
      %v6804 = vpop.permute.xlu0 %6803
      %6805 = vrot.lane.b32.xlu0 %v6762, 32
      %v6806 = vpop.permute.xlu0 %6805
      %6807 = vrot.lane.b32.xlu0 %v6766, 32
      %v6808 = vpop.permute.xlu0 %6807
      %6809 = vrot.lane.b32.xlu0 %v6770, 32
      %v6810 = vpop.permute.xlu0 %6809
      %6811 = vrot.lane.b32.xlu0 %v6774, 32
      %v6812 = vpop.permute.xlu0 %6811
      %6813 = vrot.lane.b32.xlu0 %v6778, 32
      %v6814 = vpop.permute.xlu0 %6813
      %6815 = vrot.lane.b32.xlu0 %v6782, 32
      %v6816 = vpop.permute.xlu0 %6815
      %6817 = vrot.lane.b32.xlu0 %v6786, 32
      %v6818 = vpop.permute.xlu0 %6817
      %vm6819 = vcmask 261120
      %v6820 = vsel %vm6819, %v6788, %v6790
      %v6821 = vsel %vm6819, %v6792, %v6794
      %v6822 = vsel %vm6819, %v6796, %v6798
      %v6823 = vsel %vm6819, %v6800, %v6802
      %v6824 = vsel %vm6819, %v6804, %v6806
      %v6825 = vsel %vm6819, %v6808, %v6810
      %v6826 = vsel %vm6819, %v6812, %v6814
      %v6827 = vsel %vm6819, %v6816, %v6818
      %6836 = vst.msk [vmem:[%s192 + $0x20] sm:$0x1] %vm4149, %v6820
      %6837 = vst.msk [vmem:[%s192 + $0x48] sm:$0x1] %vm4149, %v6821
      %6838 = vst.msk [vmem:[%s192 + $0x70] sm:$0x1] %vm4149, %v6822
      %6839 = vst.msk [vmem:[%s192 + $0x98] sm:$0x1] %vm4149, %v6823
      %6840 = vst.msk [vmem:[%s192 + $0xc0] sm:$0x1] %vm4149, %v6824
      %6841 = vst.msk [vmem:[%s192 + $0xe8] sm:$0x1] %vm4149, %v6825
      %6842 = vst.msk [vmem:[%s192 + $0x110] sm:$0x1] %vm4149, %v6826
      %6843 = vst.msk [vmem:[%s192 + $0x138] sm:$0x1] %vm4149, %v6827
      %s6844 = smul.u32 5, %s19
      %p6845 = scmp.lt.s32.totalorder %s18, 1
      %s6846 = scalar_select %p6845, %s18, 1
      %p6847 = scmp.lt.s32.totalorder %s6844, 4
      %s6848 = scalar_select %p6847, %s6844, 4
      %s6849 = smul.addr %s6846, 40
      %s6850 = sadd.s32 %s6848, %s6849
      %s6851 = smul.addr %s6850, 8
      %s6852 = scalar_lea.vmem %s3, %s6851
      // Predicated region
      $region33: #{deconv_block_forward.1} parent=31 // pred_check
        %p6853 = pneg %p114
      $region34: #{deconv_block_forward.1} parent=31 // pred_check_branch
        %6855 = sbr.rel (%p6853) target = $region36
      $region35: #{deconv_block_forward.1} parent=31 // pred_region
        %s6856 = smul.u32 5, %s19
      $region36: #{deconv_block_forward.1} parent=31 // pred_fallthru
        _
    $region32: #{deconv_block_forward.1} parent=5 // pred_fallthru
      _
    %p6857 = scmp.le.s32.totalorder 2, %s9
    // Predicated region
    $region37: #{deconv_block_forward.1} parent=5 // pred_check
      %p6858 = pneg %p6857
    $region38: #{deconv_block_forward.1} parent=5 // pred_check_branch
      %6860 = sbr.rel (%p6858) target = $region40
    $region39: #{deconv_block_forward.1} parent=5 // pred_region
      %s6861 = ssub.s32 %s9, 2
      // Predicated region
      $region41: #{deconv_block_forward.1} parent=39 // pred_check
        %p6862 = pneg %p120
      $region42: #{deconv_block_forward.1} parent=39 // pred_check_branch
        %6864 = sbr.rel (%p6862) target = $region44
      $region43: #{deconv_block_forward.1} parent=39 // pred_region
        %s6865 = smul.u32 5, %s21
        %p6866 = scmp.lt.s32.totalorder %s20, 1
        %s6867 = scalar_select %p6866, %s20, 1
        %p6868 = scmp.lt.s32.totalorder %s6865, 4
        %s6869 = scalar_select %p6868, %s6865, 4
        %s6870 = smul.addr %s6867, 40
        %s6871 = sadd.s32 %s6869, %s6870
        %s6872 = smul.addr %s6871, 8
        %s6873 = scalar_lea.vmem %s3, %s6872
      $region44: #{deconv_block_forward.1} parent=39 // pred_fallthru
        _
    $region40: #{deconv_block_forward.1} parent=5 // pred_fallthru
      _
  $region6: #{deconv_block_forward.1} parent=0 // loop_footer
    %s13 = sadd.s32 1, %s9
  $region7: #{deconv_block_forward.1} parent=0 // loop_footer_branch
    %8 = sbr.rel target = $region3
  $region8: #{deconv_block_forward.1} parent=0 // loop_exit
    _

</llo_original>
